<compile_context>
chip_gen: v7x
topology: tpu7x:2x2x1
jax: 0.10.0
libtpu: 0.0.40
codegen_flags: <defaults>
</compile_context>

<pallas_src>
import functools

import jax
import jax.numpy as jnp
from jax.experimental import pallas as pl
from jax.experimental.pallas import tpu as pltpu


def _vmem_cap_bytes():
    """Per-generation VMEM budget: <= 3/4 of physical VMEM, capped at 100 MiB."""
    phys = 128 * 1024 * 1024
    try:
        v = int(pltpu.get_tpu_info().vmem_capacity_bytes)
        if v > 0:
            phys = v
    except Exception:
        pass
    return max(min((phys * 3) // 4, 100 * 1024 * 1024), 32 * 1024 * 1024)


_VMEM_CAP = _vmem_cap_bytes()


def _tile(dim, preferred, align):
    """Return (tile, padded_dim).

    If dim <= preferred: a single full-dim block (always legal), no padding.
    Otherwise: an `align`-multiple tile <= preferred; if no exact divisor exists the
    dimension is padded up to a multiple of the tile (never a full-dim mega-block)."""
    if dim <= preferred:
        return dim, dim
    t = max(align, (preferred // align) * align)
    d = t
    while d >= align:
        if dim % d == 0:
            return d, dim
        d -= align
    padded = ((dim + t - 1) // t) * t
    return t, padded


# --------------------------- tiled linear (matmul) ---------------------------

def _matmul_kernel(x_ref, w_ref, b_ref, o_ref, acc_ref):
    @pl.when(pl.program_id(2) == 0)
    def _():
        acc_ref[...] = jnp.zeros_like(acc_ref)

    acc_ref[...] += jnp.dot(x_ref[...].astype(jnp.bfloat16), w_ref[...],
                            preferred_element_type=jnp.float32)

    @pl.when(pl.program_id(2) == pl.num_programs(2) - 1)
    def _():
        o_ref[...] = (acc_ref[...] + b_ref[...]).astype(o_ref.dtype)


def matmul_bias(x, w, b, out_dtype=jnp.bfloat16,
                tm_pref=512, tn_pref=512, tk_pref=512):
    """x: [M, K] (any float) @ w: [K, N] (bf16) + b: [N] (f32) -> [M, N] out_dtype."""
    M, K = x.shape
    K2, N = w.shape
    assert K == K2
    tm, Mp = _tile(M, tm_pref, 8)
    tn, Np = _tile(N, tn_pref, 128)
    tk, Kp = _tile(K, tk_pref, 128)
    if (Mp, Kp) != (M, K):
        x = jnp.pad(x, ((0, Mp - M), (0, Kp - K)))
    if (Kp, Np) != (K, N):
        w = jnp.pad(w, ((0, Kp - K), (0, Np - N)))
    b2 = b.astype(jnp.float32).reshape(1, N)
    if Np != N:
        b2 = jnp.pad(b2, ((0, 0), (0, Np - N)))

    grid = (Mp // tm, Np // tn, Kp // tk)
    out = pl.pallas_call(
        _matmul_kernel,
        out_shape=jax.ShapeDtypeStruct((Mp, Np), out_dtype),
        grid=grid,
        in_specs=[
            pl.BlockSpec((tm, tk), lambda i, j, k: (i, k)),
            pl.BlockSpec((tk, tn), lambda i, j, k: (k, j)),
            pl.BlockSpec((1, tn), lambda i, j, k: (0, j)),
        ],
        out_specs=pl.BlockSpec((tm, tn), lambda i, j, k: (i, j)),
        scratch_shapes=[pltpu.VMEM((tm, tn), jnp.float32)],
        compiler_params=pltpu.CompilerParams(
            dimension_semantics=("parallel", "parallel", "arbitrary"),
            vmem_limit_bytes=_VMEM_CAP),
    )(x, w, b2)
    if (Mp, Np) != (M, N):
        out = out[:M, :N]
    return out


# ---------------- fully fused transformer encoder layer (post-LN) ------------
#
# Per batch element: [optional pre-LN] -> per-head QKV dots -> softmax -> PV ->
# per-head out-projection accumulated into (T, D) -> +bias +residual -> LN1 ->
# FFN (lin1 + ReLU + lin2) -> +residual -> LN2.  All intermediates stay in VMEM.

def _layer_kernel(x_ref, ln0_g_ref, ln0_b_ref,
                  wq_ref, wk_ref, wv_ref, bq_ref, bk_ref, bv_ref,
                  wo_ref, bo_ref, ln1_g_ref, ln1_b_ref,
                  w1_ref, b1_ref, w2_ref, b2_ref, ln2_g_ref, ln2_b_ref,
                  y_ref, attn_ref, *, heads, dh, scale, eps, pre_ln):
    def _ln(v, g, b):
        mu = jnp.mean(v, axis=-1, keepdims=True)
        vc = v - mu
        var = jnp.mean(vc * vc, axis=-1, keepdims=True)
        return vc * jax.lax.rsqrt(var + eps) * g + b

    x = x_ref[0].astype(jnp.float32)                       # (T, D)
    if pre_ln:                                             # model-level LayerNorm fused in
        x = _ln(x, ln0_g_ref[...], ln0_b_ref[...])
    xb = x.astype(jnp.bfloat16)
    T, D = x.shape

    p_sum = jnp.zeros((T, T), jnp.float32)
    acc = bo_ref[...] + x                                  # out-proj bias + residual

    for h in range(heads):                                 # heads is small: static unroll
        q = (jnp.dot(xb, wq_ref[h], preferred_element_type=jnp.float32)
             + bq_ref[h]) * scale
        k = jnp.dot(xb, wk_ref[h], preferred_element_type=jnp.float32) + bk_ref[h]
        v = jnp.dot(xb, wv_ref[h], preferred_element_type=jnp.float32) + bv_ref[h]
        # q @ k^T without materializing a transpose: contract the last axes.
        s = jax.lax.dot_general(q.astype(jnp.bfloat16), k.astype(jnp.bfloat16),
                                (((1,), (1,)), ((), ())),
                                preferred_element_type=jnp.float32)
        s = s - jnp.max(s, axis=-1, keepdims=True)
        e = jnp.exp(s)
        p = e * (1.0 / jnp.sum(e, axis=-1, keepdims=True))  # exact: probs are returned
        p_sum = p_sum + p
        ctx_h = jnp.dot(p.astype(jnp.bfloat16), v.astype(jnp.bfloat16),
                        preferred_element_type=jnp.float32)
        # Fold this head's slice of the out-projection: no concat, bounded live ranges.
        acc = acc + jnp.dot(ctx_h.astype(jnp.bfloat16), wo_ref[h],
                            preferred_element_type=jnp.float32)

    attn_ref[0] = (p_sum * (1.0 / heads)).astype(attn_ref.dtype)  # head-averaged

    x1 = _ln(acc, ln1_g_ref[...], ln1_b_ref[...])
    hdn = jnp.dot(x1.astype(jnp.bfloat16), w1_ref[...],
                  preferred_element_type=jnp.float32) + b1_ref[...]
    hdn = jnp.maximum(hdn, 0.0)                            # FFN intermediate stays in VMEM
    y2 = jnp.dot(hdn.astype(jnp.bfloat16), w2_ref[...],
                 preferred_element_type=jnp.float32) + b2_ref[...] + x1
    y_ref[0] = _ln(y2, ln2_g_ref[...], ln2_b_ref[...]).astype(y_ref.dtype)


def fused_layer(x3, lp, ln0_g, ln0_b, *, heads, pre_ln, eps=1e-5):
    """x3: [B, T, D] bf16 -> (y [B, T, D] bf16, head-mean attn probs [B, T, T] bf16)."""
    B, T, D = x3.shape
    dh = D // heads
    F = lp["ff1_w"].shape[1]
    scale = 1.0 / float(dh) ** 0.5

    def _full(shape):
        return pl.BlockSpec(shape, lambda b: (0,) * len(shape))

    kernel = functools.partial(_layer_kernel, heads=heads, dh=dh,
                               scale=scale, eps=eps, pre_ln=pre_ln)
    y, attn = pl.pallas_call(
        kernel,
        out_shape=(jax.ShapeDtypeStruct((B, T, D), jnp.bfloat16),
                   jax.ShapeDtypeStruct((B, T, T), jnp.bfloat16)),
        grid=(B,),
        in_specs=[
            pl.BlockSpec((1, T, D), lambda b: (b, 0, 0)),
            _full((1, D)), _full((1, D)),                               # ln0 (pre-LN)
            _full((heads, D, dh)), _full((heads, D, dh)), _full((heads, D, dh)),
            _full((heads, 1, dh)), _full((heads, 1, dh)), _full((heads, 1, dh)),
            _full((heads, dh, D)), _full((1, D)),                        # wo, bo
            _full((1, D)), _full((1, D)),                                # ln1
            _full((D, F)), _full((1, F)),                                # ff1
            _full((F, D)), _full((1, D)),                                # ff2
            _full((1, D)), _full((1, D)),                                # ln2
        ],
        out_specs=(pl.BlockSpec((1, T, D), lambda b: (b, 0, 0)),
                   pl.BlockSpec((1, T, T), lambda b: (b, 0, 0))),
        compiler_params=pltpu.CompilerParams(
            dimension_semantics=("parallel",),
            vmem_limit_bytes=_VMEM_CAP),
    )(x3,
      ln0_g.reshape(1, D), ln0_b.reshape(1, D),
      lp["wq"], lp["wk"], lp["wv"],
      lp["bq"], lp["bk"], lp["bv"],
      lp["wo"], lp["bo"].reshape(1, D),
      lp["ln1_g"].reshape(1, D), lp["ln1_b"].reshape(1, D),
      lp["ff1_w"], lp["ff1_b"].reshape(1, F),
      lp["ff2_w"], lp["ff2_b"].reshape(1, D),
      lp["ln2_g"].reshape(1, D), lp["ln2_b"].reshape(1, D))
    return y, attn


# ------------------------------ model glue ------------------------------------

def ctran_forward(params, images, mask, *, hidden, heads):
    B, C, H, W = images.shape
    L = params["label_lt"].shape[0]

    # Backbone stand-in: 4x4 average pool + 1x1 conv (C -> hidden) as a tiled matmul.
    # TODO(synk): the real Backbone (ResNet-101) is not defined in the module source;
    # this is a synthetic feature extractor with matching output layout.
    p = 4
    pooled = images.reshape(B, C, H // p, p, W // p, p).mean(axis=(3, 5))
    S = pooled.shape[2] * pooled.shape[3]
    tokens = pooled.reshape(B, C, S).transpose(0, 2, 1).reshape(B * S, C)
    features = matmul_bias(tokens, params["backbone_w"], params["backbone_b"],
                           out_dtype=jnp.bfloat16)
    features = features.reshape(B, S, hidden)     # == features.view(...).permute(0,2,1)

    # label_lt(const_label_input): same label table for every batch element.
    label_init_emb = jnp.broadcast_to(params["label_lt"][None], (B, L, hidden))
    # custom_replace(mask, 0, 1, 2): -1 -> 0, 0 -> 1, 1 -> 2, then known_label_lt lookup.
    idx = jnp.where(mask == -1, 0, jnp.where(mask == 0, 1, 2)).astype(jnp.int32)
    state_embeddings = jnp.take(params["state_weight"], idx, axis=0)
    init_label_embeddings = (label_init_emb + state_embeddings).astype(jnp.bfloat16)

    x = jnp.concatenate([features, init_label_embeddings], axis=1)    # (B, T, D) bf16
    T = S + L

    # Model-level LayerNorm on embeddings is fused into the first layer (pre_ln=True).
    attns = []
    for li, lp in enumerate(params["layers"]):
        x, attn = fused_layer(x, lp, params["ln_g"], params["ln_b"],
                              heads=heads, pre_ln=(li == 0))
        attns.append(attn)

    label_embeddings = x[:, -L:, :].astype(jnp.float32)
    # output_linear + (output * eye).sum(-1) == per-label row-wise dot; tiny -> plain JAX.
    output = jnp.einsum("bld,ld->bl", label_embeddings, params["out_wT"]) \
        + params["out_b"][None, :]
    # TODO(synk): MLDecoder branch skipped (use_ml_head=False in __init__); pos_emb /
    # clip / onehot branches not taken with the default arguments.
    return output, None, attns


# ---------------------------- parameter setup ---------------------------------

def init_params(key, *, in_ch, hidden, num_labels, heads, layers, ffn):
    ks = iter(jax.random.split(key, 16 + 16 * layers))

    def n(shape, s=0.02, dtype=jnp.float32):
        return (s * jax.random.normal(next(ks), shape)).astype(dtype)

    bf = jnp.bfloat16
    dh = hidden // heads
    params = {
        "backbone_w": n((in_ch, hidden), dtype=bf),
        "backbone_b": n((hidden,)),
        "label_lt": n((num_labels, hidden)),
        "state_weight": n((3, hidden)).at[0].set(0.0),        # padding_idx=0 row
        "ln_g": jnp.ones((hidden,), jnp.float32),
        "ln_b": jnp.zeros((hidden,), jnp.float32),
        "out_wT": n((num_labels, hidden)),                    # output_linear W (out, in)
        "out_b": n((num_labels,)),
        "layers": [],
    }
    for _ in range(layers):
        # Attention weights stored pre-split per head (a real checkpoint's in_proj /
        # out_proj just needs a reshape/transpose into this layout).
        params["layers"].append({
            "wq": n((heads, hidden, dh), dtype=bf),
            "wk": n((heads, hidden, dh), dtype=bf),
            "wv": n((heads, hidden, dh), dtype=bf),
            "bq": n((heads, 1, dh)),
            "bk": n((heads, 1, dh)),
            "bv": n((heads, 1, dh)),
            "wo": n((heads, dh, hidden), dtype=bf),
            "bo": n((hidden,)),
            "ff1_w": n((hidden, ffn), dtype=bf),
            "ff1_b": n((ffn,)),
            "ff2_w": n((ffn, hidden), dtype=bf),
            "ff2_b": n((hidden,)),
            "ln1_g": jnp.ones((hidden,), jnp.float32),
            "ln1_b": jnp.zeros((hidden,), jnp.float32),
            "ln2_g": jnp.ones((hidden,), jnp.float32),
            "ln2_b": jnp.zeros((hidden,), jnp.float32),
        })
    return params


if __name__ == "__main__":
    B, C, H, W = 2, 3, 16, 16
    hidden, num_labels, heads, layers = 32, 8, 4, 3
    ffn = hidden  # CTran's SelfAttnLayer uses dim_feedforward = d_model

    key = jax.random.PRNGKey(0)
    k_img, k_mask, k_par = jax.random.split(key, 3)

    images = jax.random.normal(k_img, (B, C, H, W), dtype=jnp.float32)
    mask = jax.random.randint(k_mask, (B, num_labels), -1, 2)   # values in {-1, 0, 1}

    params = init_params(k_par, in_ch=C, hidden=hidden, num_labels=num_labels,
                         heads=heads, layers=layers, ffn=ffn)

    fwd = jax.jit(functools.partial(ctran_forward, hidden=hidden, heads=heads))
    output, _, attns = fwd(params, images, mask)
    jax.block_until_ready((output, attns))

    T = (H // 4) * (W // 4) + num_labels
    assert output.shape == (B, num_labels)
    assert len(attns) == layers and attns[0].shape == (B, T, T)
    assert bool(jnp.all(jnp.isfinite(output)))
    print("KERNEL_OK")
</pallas_src>

<mosaic_0001>
module attributes {stable_mosaic.version = 11 : i64} {
  func.func @_matmul_kernel(%arg0: i32, %arg1: i32, %arg2: i32, %arg3: memref<32x3xf32, #tpu.memory_space<vmem>>, %arg4: memref<3x32xbf16, #tpu.memory_space<vmem>>, %arg5: memref<1x32xf32, #tpu.memory_space<vmem>>, %arg6: memref<32x32xbf16, #tpu.memory_space<vmem>>, %arg7: memref<32x32xf32, #tpu.memory_space<vmem>>) attributes {dimension_semantics = [#tpu.dimension_semantics<parallel>, #tpu.dimension_semantics<parallel>, #tpu.dimension_semantics<arbitrary>], iteration_bounds = array<i64: 1, 1, 1>, scalar_prefetch = 0 : i64, scratch_operands = 1 : i64, tpu.core_type = #tpu.core_type<tc>, window_params = [{transform_indices = @transform_0, window_bounds = array<i64: 32, 3>}, {transform_indices = @transform_1, window_bounds = array<i64: 3, 32>}, {transform_indices = @transform_2, window_bounds = array<i64: 1, 32>}, {transform_indices = @transform_3, window_bounds = array<i64: 32, 32>}]} {
    %c0_i32 = arith.constant 0 : i32
    %0 = arith.cmpi eq, %arg2, %c0_i32 : i32
    %1 = arith.extui %0 : i1 to i32
    %c0_i32_0 = arith.constant 0 : i32
    %2 = arith.cmpi ne, %1, %c0_i32_0 : i32
    scf.if %2 {
      %cst_10 = arith.constant 0.000000e+00 : f32
      %13 = vector.broadcast %cst_10 : f32 to vector<32x32xf32>
      %c0_11 = arith.constant 0 : index
      %c0_12 = arith.constant 0 : index
      %14 = vector.load %arg7[%c0_11, %c0_12] : memref<32x32xf32, #tpu.memory_space<vmem>>, vector<32x32xf32>
      tpu.vector_store %arg7[%c0_11, %c0_12], %13 {strides = array<i32>} : memref<32x32xf32, #tpu.memory_space<vmem>>, vector<32x32xf32>,
    } else {
    }
    %c0 = arith.constant 0 : index
    %c0_1 = arith.constant 0 : index
    %3 = vector.load %arg7[%c0, %c0_1] : memref<32x32xf32, #tpu.memory_space<vmem>>, vector<32x32xf32>
    %c0_2 = arith.constant 0 : index
    %c0_3 = arith.constant 0 : index
    %4 = vector.load %arg3[%c0_2, %c0_3] : memref<32x3xf32, #tpu.memory_space<vmem>>, vector<32x3xf32>
    %5 = arith.truncf %4 : vector<32x3xf32> to vector<32x3xbf16>
    %c0_4 = arith.constant 0 : index
    %c0_5 = arith.constant 0 : index
    %6 = vector.load %arg4[%c0_4, %c0_5] : memref<3x32xbf16, #tpu.memory_space<vmem>>, vector<3x32xbf16>
    %cst = arith.constant dense<0.000000e+00> : vector<32x32xf32>
    %7 = tpu.matmul %5, %6, %cst {dimension_numbers = #tpu.dot_dimension_numbers<[1], [0], [0], [1], [0, 0, 1, 1], [], []>} : vector<32x3xbf16>, vector<3x32xbf16>, vector<32x32xf32> -> vector<32x32xf32>
    %8 = arith.addf %3, %7 : vector<32x32xf32>
    %c0_6 = arith.constant 0 : index
    %c0_7 = arith.constant 0 : index
    %9 = vector.load %arg7[%c0_6, %c0_7] : memref<32x32xf32, #tpu.memory_space<vmem>>, vector<32x32xf32>
    tpu.vector_store %arg7[%c0_6, %c0_7], %8 {strides = array<i32>} : memref<32x32xf32, #tpu.memory_space<vmem>>, vector<32x32xf32>,
    %c0_i32_8 = arith.constant 0 : i32
    %10 = arith.cmpi eq, %arg2, %c0_i32_8 : i32
    %11 = arith.extui %10 : i1 to i32
    %c0_i32_9 = arith.constant 0 : i32
    %12 = arith.cmpi ne, %11, %c0_i32_9 : i32
    scf.if %12 {
      %c0_10 = arith.constant 0 : index
      %c0_11 = arith.constant 0 : index
      %13 = vector.load %arg7[%c0_10, %c0_11] : memref<32x32xf32, #tpu.memory_space<vmem>>, vector<32x32xf32>
      %c0_12 = arith.constant 0 : index
      %c0_13 = arith.constant 0 : index
      %14 = vector.load %arg5[%c0_12, %c0_13] : memref<1x32xf32, #tpu.memory_space<vmem>>, vector<1x32xf32>
      %15 = vector.broadcast %14 : vector<1x32xf32> to vector<32x32xf32>
      %16 = arith.addf %13, %15 : vector<32x32xf32>
      %17 = arith.truncf %16 : vector<32x32xf32> to vector<32x32xbf16>
      %c0_14 = arith.constant 0 : index
      %c0_15 = arith.constant 0 : index
      %18 = vector.load %arg6[%c0_14, %c0_15] : memref<32x32xbf16, #tpu.memory_space<vmem>>, vector<32x32xbf16>
      tpu.vector_store %arg6[%c0_14, %c0_15], %17 {strides = array<i32>} : memref<32x32xbf16, #tpu.memory_space<vmem>>, vector<32x32xbf16>,
    } else {
    }
    return
  }
  func.func @transform_0(%arg0: i32, %arg1: i32, %arg2: i32) -> (i32, i32) {
    %c0_i32 = arith.constant 0 : i32
    return %arg0, %arg2 : i32, i32
  }
  func.func @transform_1(%arg0: i32, %arg1: i32, %arg2: i32) -> (i32, i32) {
    %c0_i32 = arith.constant 0 : i32
    return %arg2, %arg1 : i32, i32
  }
  func.func @transform_2(%arg0: i32, %arg1: i32, %arg2: i32) -> (i32, i32) {
    %c0_i32 = arith.constant 0 : i32
    %c0_i32_0 = arith.constant 0 : i32
    return %c0_i32, %arg1 : i32, i32
  }
  func.func @transform_3(%arg0: i32, %arg1: i32, %arg2: i32) -> (i32, i32) {
    %c0_i32 = arith.constant 0 : i32
    return %arg0, %arg1 : i32, i32
  }
}

module attributes {stable_mosaic.version = 11 : i64} {
  func.func @_layer_kernel(%arg0: i32, %arg1: memref<1x24x32xbf16, #tpu.memory_space<vmem>>, %arg2: memref<1x32xf32, #tpu.memory_space<vmem>>, %arg3: memref<1x32xf32, #tpu.memory_space<vmem>>, %arg4: memref<4x32x8xbf16, #tpu.memory_space<vmem>>, %arg5: memref<4x32x8xbf16, #tpu.memory_space<vmem>>, %arg6: memref<4x32x8xbf16, #tpu.memory_space<vmem>>, %arg7: memref<4x1x8xf32, #tpu.memory_space<vmem>>, %arg8: memref<4x1x8xf32, #tpu.memory_space<vmem>>, %arg9: memref<4x1x8xf32, #tpu.memory_space<vmem>>, %arg10: memref<4x8x32xbf16, #tpu.memory_space<vmem>>, %arg11: memref<1x32xf32, #tpu.memory_space<vmem>>, %arg12: memref<1x32xf32, #tpu.memory_space<vmem>>, %arg13: memref<1x32xf32, #tpu.memory_space<vmem>>, %arg14: memref<32x32xbf16, #tpu.memory_space<vmem>>, %arg15: memref<1x32xf32, #tpu.memory_space<vmem>>, %arg16: memref<32x32xbf16, #tpu.memory_space<vmem>>, %arg17: memref<1x32xf32, #tpu.memory_space<vmem>>, %arg18: memref<1x32xf32, #tpu.memory_space<vmem>>, %arg19: memref<1x32xf32, #tpu.memory_space<vmem>>, %arg20: memref<1x24x32xbf16, #tpu.memory_space<vmem>>, %arg21: memref<1x24x24xbf16, #tpu.memory_space<vmem>>) attributes {dimension_semantics = [#tpu.dimension_semantics<parallel>], iteration_bounds = array<i64: 2>, scalar_prefetch = 0 : i64, scratch_operands = 0 : i64, tpu.core_type = #tpu.core_type<tc>, window_params = [{transform_indices = @transform_0, window_bounds = array<i64: 1, 24, 32>}, {pipeline_mode = #tpu.pipeline_mode<synchronous>, transform_indices = @transform_1, window_bounds = array<i64: 1, 32>}, {pipeline_mode = #tpu.pipeline_mode<synchronous>, transform_indices = @transform_2, window_bounds = array<i64: 1, 32>}, {pipeline_mode = #tpu.pipeline_mode<synchronous>, transform_indices = @transform_3, window_bounds = array<i64: 4, 32, 8>}, {pipeline_mode = #tpu.pipeline_mode<synchronous>, transform_indices = @transform_4, window_bounds = array<i64: 4, 32, 8>}, {pipeline_mode = #tpu.pipeline_mode<synchronous>, transform_indices = @transform_5, window_bounds = array<i64: 4, 32, 8>}, {pipeline_mode = #tpu.pipeline_mode<synchronous>, transform_indices = @transform_6, window_bounds = array<i64: 4, 1, 8>}, {pipeline_mode = #tpu.pipeline_mode<synchronous>, transform_indices = @transform_7, window_bounds = array<i64: 4, 1, 8>}, {pipeline_mode = #tpu.pipeline_mode<synchronous>, transform_indices = @transform_8, window_bounds = array<i64: 4, 1, 8>}, {pipeline_mode = #tpu.pipeline_mode<synchronous>, transform_indices = @transform_9, window_bounds = array<i64: 4, 8, 32>}, {pipeline_mode = #tpu.pipeline_mode<synchronous>, transform_indices = @transform_10, window_bounds = array<i64: 1, 32>}, {pipeline_mode = #tpu.pipeline_mode<synchronous>, transform_indices = @transform_11, window_bounds = array<i64: 1, 32>}, {pipeline_mode = #tpu.pipeline_mode<synchronous>, transform_indices = @transform_12, window_bounds = array<i64: 1, 32>}, {pipeline_mode = #tpu.pipeline_mode<synchronous>, transform_indices = @transform_13, window_bounds = array<i64: 32, 32>}, {pipeline_mode = #tpu.pipeline_mode<synchronous>, transform_indices = @transform_14, window_bounds = array<i64: 1, 32>}, {pipeline_mode = #tpu.pipeline_mode<synchronous>, transform_indices = @transform_15, window_bounds = array<i64: 32, 32>}, {pipeline_mode = #tpu.pipeline_mode<synchronous>, transform_indices = @transform_16, window_bounds = array<i64: 1, 32>}, {pipeline_mode = #tpu.pipeline_mode<synchronous>, transform_indices = @transform_17, window_bounds = array<i64: 1, 32>}, {pipeline_mode = #tpu.pipeline_mode<synchronous>, transform_indices = @transform_18, window_bounds = array<i64: 1, 32>}, {transform_indices = @transform_19, window_bounds = array<i64: 1, 24, 32>}, {transform_indices = @transform_20, window_bounds = array<i64: 1, 24, 24>}]} {
    %c0 = arith.constant 0 : index
    %c0_0 = arith.constant 0 : index
    %c0_1 = arith.constant 0 : index
    %0 = vector.load %arg1[%c0, %c0_0, %c0_1] : memref<1x24x32xbf16, #tpu.memory_space<vmem>>, vector<1x24x32xbf16>
    %1 = vector.shape_cast %0 : vector<1x24x32xbf16> to vector<24x32xbf16>
    %2 = arith.extf %1 : vector<24x32xbf16> to vector<24x32xf32>
    %3 = arith.truncf %2 : vector<24x32xf32> to vector<24x32xbf16>
    %cst = arith.constant 0.000000e+00 : f32
    %4 = vector.broadcast %cst : f32 to vector<24x24xf32>
    %c0_2 = arith.constant 0 : index
    %c0_3 = arith.constant 0 : index
    %5 = vector.load %arg11[%c0_2, %c0_3] : memref<1x32xf32, #tpu.memory_space<vmem>>, vector<1x32xf32>
    %6 = vector.broadcast %5 : vector<1x32xf32> to vector<24x32xf32>
    %7 = arith.addf %6, %2 : vector<24x32xf32>
    %c0_4 = arith.constant 0 : index
    %c0_5 = arith.constant 0 : index
    %c0_6 = arith.constant 0 : index
    %8 = vector.load %arg4[%c0_4, %c0_5, %c0_6] : memref<4x32x8xbf16, #tpu.memory_space<vmem>>, vector<1x32x8xbf16>
    %9 = vector.shape_cast %8 : vector<1x32x8xbf16> to vector<32x8xbf16>
    %cst_7 = arith.constant dense<0.000000e+00> : vector<24x8xf32>
    %10 = tpu.matmul %3, %9, %cst_7 {dimension_numbers = #tpu.dot_dimension_numbers<[1], [0], [0], [1], [0, 0, 1, 1], [], []>} : vector<24x32xbf16>, vector<32x8xbf16>, vector<24x8xf32> -> vector<24x8xf32>
    %c0_8 = arith.constant 0 : index
    %c0_9 = arith.constant 0 : index
    %c0_10 = arith.constant 0 : index
    %11 = vector.load %arg7[%c0_8, %c0_9, %c0_10] : memref<4x1x8xf32, #tpu.memory_space<vmem>>, vector<1x1x8xf32>
    %12 = vector.shape_cast %11 : vector<1x1x8xf32> to vector<1x8xf32>
    %13 = vector.broadcast %12 : vector<1x8xf32> to vector<24x8xf32>
    %14 = arith.addf %10, %13 : vector<24x8xf32>
    %cst_11 = arith.constant 0.353553385 : f32
    %15 = vector.broadcast %cst_11 : f32 to vector<24x8xf32>
    %16 = arith.mulf %14, %15 : vector<24x8xf32>
    %c0_12 = arith.constant 0 : index
    %c0_13 = arith.constant 0 : index
    %c0_14 = arith.constant 0 : index
    %17 = vector.load %arg5[%c0_12, %c0_13, %c0_14] : memref<4x32x8xbf16, #tpu.memory_space<vmem>>, vector<1x32x8xbf16>
    %18 = vector.shape_cast %17 : vector<1x32x8xbf16> to vector<32x8xbf16>
    %cst_15 = arith.constant dense<0.000000e+00> : vector<24x8xf32>
    %19 = tpu.matmul %3, %18, %cst_15 {dimension_numbers = #tpu.dot_dimension_numbers<[1], [0], [0], [1], [0, 0, 1, 1], [], []>} : vector<24x32xbf16>, vector<32x8xbf16>, vector<24x8xf32> -> vector<24x8xf32>
    %c0_16 = arith.constant 0 : index
    %c0_17 = arith.constant 0 : index
    %c0_18 = arith.constant 0 : index
    %20 = vector.load %arg8[%c0_16, %c0_17, %c0_18] : memref<4x1x8xf32, #tpu.memory_space<vmem>>, vector<1x1x8xf32>
    %21 = vector.shape_cast %20 : vector<1x1x8xf32> to vector<1x8xf32>
    %22 = vector.broadcast %21 : vector<1x8xf32> to vector<24x8xf32>
    %23 = arith.addf %19, %22 : vector<24x8xf32>
    %c0_19 = arith.constant 0 : index
    %c0_20 = arith.constant 0 : index
    %c0_21 = arith.constant 0 : index
    %24 = vector.load %arg6[%c0_19, %c0_20, %c0_21] : memref<4x32x8xbf16, #tpu.memory_space<vmem>>, vector<1x32x8xbf16>
    %25 = vector.shape_cast %24 : vector<1x32x8xbf16> to vector<32x8xbf16>
    %cst_22 = arith.constant dense<0.000000e+00> : vector<24x8xf32>
    %26 = tpu.matmul %3, %25, %cst_22 {dimension_numbers = #tpu.dot_dimension_numbers<[1], [0], [0], [1], [0, 0, 1, 1], [], []>} : vector<24x32xbf16>, vector<32x8xbf16>, vector<24x8xf32> -> vector<24x8xf32>
    %c0_23 = arith.constant 0 : index
    %c0_24 = arith.constant 0 : index
    %c0_25 = arith.constant 0 : index
    %27 = vector.load %arg9[%c0_23, %c0_24, %c0_25] : memref<4x1x8xf32, #tpu.memory_space<vmem>>, vector<1x1x8xf32>
    %28 = vector.shape_cast %27 : vector<1x1x8xf32> to vector<1x8xf32>
    %29 = vector.broadcast %28 : vector<1x8xf32> to vector<24x8xf32>
    %30 = arith.addf %26, %29 : vector<24x8xf32>
    %31 = arith.truncf %16 : vector<24x8xf32> to vector<24x8xbf16>
    %32 = arith.truncf %23 : vector<24x8xf32> to vector<24x8xbf16>
    %cst_26 = arith.constant dense<0.000000e+00> : vector<24x24xf32>
    %33 = tpu.matmul %31, %32, %cst_26 {dimension_numbers = #tpu.dot_dimension_numbers<[1], [1], [0], [0], [0, 0, 1, 0], [], []>} : vector<24x8xbf16>, vector<24x8xbf16>, vector<24x24xf32> -> vector<24x24xf32>
    %cst_27 = arith.constant dense<0xFF800000> : vector<24xf32>
    %34 = vector.multi_reduction <maximumf>, %33, %cst_27 [1] : vector<24x24xf32> to vector<24xf32>
    %35 = vector.shape_cast %34 : vector<24xf32> to vector<24x1xf32>
    %36 = vector.broadcast %35 : vector<24x1xf32> to vector<24x24xf32>
    %37 = arith.subf %33, %36 : vector<24x24xf32>
    %38 = math.exp %37 : vector<24x24xf32>
    %cst_28 = arith.constant dense<0.000000e+00> : vector<24xf32>
    %39 = vector.multi_reduction <add>, %38, %cst_28 [1] : vector<24x24xf32> to vector<24xf32>
    %40 = vector.shape_cast %39 : vector<24xf32> to vector<24x1xf32>
    %cst_29 = arith.constant 1.000000e+00 : f32
    %41 = vector.broadcast %cst_29 : f32 to vector<24x1xf32>
    %42 = arith.divf %41, %40 : vector<24x1xf32>
    %43 = vector.broadcast %42 : vector<24x1xf32> to vector<24x24xf32>
    %44 = arith.mulf %38, %43 : vector<24x24xf32>
    %45 = arith.addf %4, %44 : vector<24x24xf32>
    %46 = arith.truncf %44 : vector<24x24xf32> to vector<24x24xbf16>
    %47 = arith.truncf %30 : vector<24x8xf32> to vector<24x8xbf16>
    %cst_30 = arith.constant dense<0.000000e+00> : vector<24x8xf32>
    %48 = tpu.matmul %46, %47, %cst_30 {dimension_numbers = #tpu.dot_dimension_numbers<[1], [0], [0], [1], [0, 0, 1, 1], [], []>} : vector<24x24xbf16>, vector<24x8xbf16>, vector<24x8xf32> -> vector<24x8xf32>
    %49 = arith.truncf %48 : vector<24x8xf32> to vector<24x8xbf16>
    %c0_31 = arith.constant 0 : index
    %c0_32 = arith.constant 0 : index
    %c0_33 = arith.constant 0 : index
    %50 = vector.load %arg10[%c0_31, %c0_32, %c0_33] : memref<4x8x32xbf16, #tpu.memory_space<vmem>>, vector<1x8x32xbf16>
    %51 = vector.shape_cast %50 : vector<1x8x32xbf16> to vector<8x32xbf16>
    %cst_34 = arith.constant dense<0.000000e+00> : vector<24x32xf32>
    %52 = tpu.matmul %49, %51, %cst_34 {dimension_numbers = #tpu.dot_dimension_numbers<[1], [0], [0], [1], [0, 0, 1, 1], [], []>} : vector<24x8xbf16>, vector<8x32xbf16>, vector<24x32xf32> -> vector<24x32xf32>
    %53 = arith.addf %7, %52 : vector<24x32xf32>
    %c1 = arith.constant 1 : index
    %c0_35 = arith.constant 0 : index
    %c0_36 = arith.constant 0 : index
    %54 = vector.load %arg4[%c1, %c0_35, %c0_36] : memref<4x32x8xbf16, #tpu.memory_space<vmem>>, vector<1x32x8xbf16>
    %55 = vector.shape_cast %54 : vector<1x32x8xbf16> to vector<32x8xbf16>
    %cst_37 = arith.constant dense<0.000000e+00> : vector<24x8xf32>
    %56 = tpu.matmul %3, %55, %cst_37 {dimension_numbers = #tpu.dot_dimension_numbers<[1], [0], [0], [1], [0, 0, 1, 1], [], []>} : vector<24x32xbf16>, vector<32x8xbf16>, vector<24x8xf32> -> vector<24x8xf32>
    %c1_38 = arith.constant 1 : index
    %c0_39 = arith.constant 0 : index
    %c0_40 = arith.constant 0 : index
    %57 = vector.load %arg7[%c1_38, %c0_39, %c0_40] : memref<4x1x8xf32, #tpu.memory_space<vmem>>, vector<1x1x8xf32>
    %58 = vector.shape_cast %57 : vector<1x1x8xf32> to vector<1x8xf32>
    %59 = vector.broadcast %58 : vector<1x8xf32> to vector<24x8xf32>
    %60 = arith.addf %56, %59 : vector<24x8xf32>
    %cst_41 = arith.constant 0.353553385 : f32
    %61 = vector.broadcast %cst_41 : f32 to vector<24x8xf32>
    %62 = arith.mulf %60, %61 : vector<24x8xf32>
    %c1_42 = arith.constant 1 : index
    %c0_43 = arith.constant 0 : index
    %c0_44 = arith.constant 0 : index
    %63 = vector.load %arg5[%c1_42, %c0_43, %c0_44] : memref<4x32x8xbf16, #tpu.memory_space<vmem>>, vector<1x32x8xbf16>
    %64 = vector.shape_cast %63 : vector<1x32x8xbf16> to vector<32x8xbf16>
    %cst_45 = arith.constant dense<0.000000e+00> : vector<24x8xf32>
    %65 = tpu.matmul %3, %64, %cst_45 {dimension_numbers = #tpu.dot_dimension_numbers<[1], [0], [0], [1], [0, 0, 1, 1], [], []>} : vector<24x32xbf16>, vector<32x8xbf16>, vector<24x8xf32> -> vector<24x8xf32>
    %c1_46 = arith.constant 1 : index
    %c0_47 = arith.constant 0 : index
    %c0_48 = arith.constant 0 : index
    %66 = vector.load %arg8[%c1_46, %c0_47, %c0_48] : memref<4x1x8xf32, #tpu.memory_space<vmem>>, vector<1x1x8xf32>
    %67 = vector.shape_cast %66 : vector<1x1x8xf32> to vector<1x8xf32>
    %68 = vector.broadcast %67 : vector<1x8xf32> to vector<24x8xf32>
    %69 = arith.addf %65, %68 : vector<24x8xf32>
    %c1_49 = arith.constant 1 : index
    %c0_50 = arith.constant 0 : index
    %c0_51 = arith.constant 0 : index
    %70 = vector.load %arg6[%c1_49, %c0_50, %c0_51] : memref<4x32x8xbf16, #tpu.memory_space<vmem>>, vector<1x32x8xbf16>
    %71 = vector.shape_cast %70 : vector<1x32x8xbf16> to vector<32x8xbf16>
    %cst_52 = arith.constant dense<0.000000e+00> : vector<24x8xf32>
    %72 = tpu.matmul %3, %71, %cst_52 {dimension_numbers = #tpu.dot_dimension_numbers<[1], [0], [0], [1], [0, 0, 1, 1], [], []>} : vector<24x32xbf16>, vector<32x8xbf16>, vector<24x8xf32> -> vector<24x8xf32>
    %c1_53 = arith.constant 1 : index
    %c0_54 = arith.constant 0 : index
    %c0_55 = arith.constant 0 : index
    %73 = vector.load %arg9[%c1_53, %c0_54, %c0_55] : memref<4x1x8xf32, #tpu.memory_space<vmem>>, vector<1x1x8xf32>
    %74 = vector.shape_cast %73 : vector<1x1x8xf32> to vector<1x8xf32>
    %75 = vector.broadcast %74 : vector<1x8xf32> to vector<24x8xf32>
    %76 = arith.addf %72, %75 : vector<24x8xf32>
    %77 = arith.truncf %62 : vector<24x8xf32> to vector<24x8xbf16>
    %78 = arith.truncf %69 : vector<24x8xf32> to vector<24x8xbf16>
    %cst_56 = arith.constant dense<0.000000e+00> : vector<24x24xf32>
    %79 = tpu.matmul %77, %78, %cst_56 {dimension_numbers = #tpu.dot_dimension_numbers<[1], [1], [0], [0], [0, 0, 1, 0], [], []>} : vector<24x8xbf16>, vector<24x8xbf16>, vector<24x24xf32> -> vector<24x24xf32>
    %cst_57 = arith.constant dense<0xFF800000> : vector<24xf32>
    %80 = vector.multi_reduction <maximumf>, %79, %cst_57 [1] : vector<24x24xf32> to vector<24xf32>
    %81 = vector.shape_cast %80 : vector<24xf32> to vector<24x1xf32>
    %82 = vector.broadcast %81 : vector<24x1xf32> to vector<24x24xf32>
    %83 = arith.subf %79, %82 : vector<24x24xf32>
    %84 = math.exp %83 : vector<24x24xf32>
    %cst_58 = arith.constant dense<0.000000e+00> : vector<24xf32>
    %85 = vector.multi_reduction <add>, %84, %cst_58 [1] : vector<24x24xf32> to vector<24xf32>
    %86 = vector.shape_cast %85 : vector<24xf32> to vector<24x1xf32>
    %cst_59 = arith.constant 1.000000e+00 : f32
    %87 = vector.broadcast %cst_59 : f32 to vector<24x1xf32>
    %88 = arith.divf %87, %86 : vector<24x1xf32>
    %89 = vector.broadcast %88 : vector<24x1xf32> to vector<24x24xf32>
    %90 = arith.mulf %84, %89 : vector<24x24xf32>
    %91 = arith.addf %45, %90 : vector<24x24xf32>
    %92 = arith.truncf %90 : vector<24x24xf32> to vector<24x24xbf16>
    %93 = arith.truncf %76 : vector<24x8xf32> to vector<24x8xbf16>
    %cst_60 = arith.constant dense<0.000000e+00> : vector<24x8xf32>
    %94 = tpu.matmul %92, %93, %cst_60 {dimension_numbers = #tpu.dot_dimension_numbers<[1], [0], [0], [1], [0, 0, 1, 1], [], []>} : vector<24x24xbf16>, vector<24x8xbf16>, vector<24x8xf32> -> vector<24x8xf32>
    %95 = arith.truncf %94 : vector<24x8xf32> to vector<24x8xbf16>
    %c1_61 = arith.constant 1 : index
    %c0_62 = arith.constant 0 : index
    %c0_63 = arith.constant 0 : index
    %96 = vector.load %arg10[%c1_61, %c0_62, %c0_63] : memref<4x8x32xbf16, #tpu.memory_space<vmem>>, vector<1x8x32xbf16>
    %97 = vector.shape_cast %96 : vector<1x8x32xbf16> to vector<8x32xbf16>
    %cst_64 = arith.constant dense<0.000000e+00> : vector<24x32xf32>
    %98 = tpu.matmul %95, %97, %cst_64 {dimension_numbers = #tpu.dot_dimension_numbers<[1], [0], [0], [1], [0, 0, 1, 1], [], []>} : vector<24x8xbf16>, vector<8x32xbf16>, vector<24x32xf32> -> vector<24x32xf32>
    %99 = arith.addf %53, %98 : vector<24x32xf32>
    %c2 = arith.constant 2 : index
    %c0_65 = arith.constant 0 : index
    %c0_66 = arith.constant 0 : index
    %100 = vector.load %arg4[%c2, %c0_65, %c0_66] : memref<4x32x8xbf16, #tpu.memory_space<vmem>>, vector<1x32x8xbf16>
    %101 = vector.shape_cast %100 : vector<1x32x8xbf16> to vector<32x8xbf16>
    %cst_67 = arith.constant dense<0.000000e+00> : vector<24x8xf32>
    %102 = tpu.matmul %3, %101, %cst_67 {dimension_numbers = #tpu.dot_dimension_numbers<[1], [0], [0], [1], [0, 0, 1, 1], [], []>} : vector<24x32xbf16>, vector<32x8xbf16>, vector<24x8xf32> -> vector<24x8xf32>
    %c2_68 = arith.constant 2 : index
    %c0_69 = arith.constant 0 : index
    %c0_70 = arith.constant 0 : index
    %103 = vector.load %arg7[%c2_68, %c0_69, %c0_70] : memref<4x1x8xf32, #tpu.memory_space<vmem>>, vector<1x1x8xf32>
    %104 = vector.shape_cast %103 : vector<1x1x8xf32> to vector<1x8xf32>
    %105 = vector.broadcast %104 : vector<1x8xf32> to vector<24x8xf32>
    %106 = arith.addf %102, %105 : vector<24x8xf32>
    %cst_71 = arith.constant 0.353553385 : f32
    %107 = vector.broadcast %cst_71 : f32 to vector<24x8xf32>
    %108 = arith.mulf %106, %107 : vector<24x8xf32>
    %c2_72 = arith.constant 2 : index
    %c0_73 = arith.constant 0 : index
    %c0_74 = arith.constant 0 : index
    %109 = vector.load %arg5[%c2_72, %c0_73, %c0_74] : memref<4x32x8xbf16, #tpu.memory_space<vmem>>, vector<1x32x8xbf16>
    %110 = vector.shape_cast %109 : vector<1x32x8xbf16> to vector<32x8xbf16>
    %cst_75 = arith.constant dense<0.000000e+00> : vector<24x8xf32>
    %111 = tpu.matmul %3, %110, %cst_75 {dimension_numbers = #tpu.dot_dimension_numbers<[1], [0], [0], [1], [0, 0, 1, 1], [], []>} : vector<24x32xbf16>, vector<32x8xbf16>, vector<24x8xf32> -> vector<24x8xf32>
    %c2_76 = arith.constant 2 : index
    %c0_77 = arith.constant 0 : index
    %c0_78 = arith.constant 0 : index
    %112 = vector.load %arg8[%c2_76, %c0_77, %c0_78] : memref<4x1x8xf32, #tpu.memory_space<vmem>>, vector<1x1x8xf32>
    %113 = vector.shape_cast %112 : vector<1x1x8xf32> to vector<1x8xf32>
    %114 = vector.broadcast %113 : vector<1x8xf32> to vector<24x8xf32>
    %115 = arith.addf %111, %114 : vector<24x8xf32>
    %c2_79 = arith.constant 2 : index
    %c0_80 = arith.constant 0 : index
    %c0_81 = arith.constant 0 : index
    %116 = vector.load %arg6[%c2_79, %c0_80, %c0_81] : memref<4x32x8xbf16, #tpu.memory_space<vmem>>, vector<1x32x8xbf16>
    %117 = vector.shape_cast %116 : vector<1x32x8xbf16> to vector<32x8xbf16>
    %cst_82 = arith.constant dense<0.000000e+00> : vector<24x8xf32>
    %118 = tpu.matmul %3, %117, %cst_82 {dimension_numbers = #tpu.dot_dimension_numbers<[1], [0], [0], [1], [0, 0, 1, 1], [], []>} : vector<24x32xbf16>, vector<32x8xbf16>, vector<24x8xf32> -> vector<24x8xf32>
    %c2_83 = arith.constant 2 : index
    %c0_84 = arith.constant 0 : index
    %c0_85 = arith.constant 0 : index
    %119 = vector.load %arg9[%c2_83, %c0_84, %c0_85] : memref<4x1x8xf32, #tpu.memory_space<vmem>>, vector<1x1x8xf32>
    %120 = vector.shape_cast %119 : vector<1x1x8xf32> to vector<1x8xf32>
    %121 = vector.broadcast %120 : vector<1x8xf32> to vector<24x8xf32>
    %122 = arith.addf %118, %121 : vector<24x8xf32>
    %123 = arith.truncf %108 : vector<24x8xf32> to vector<24x8xbf16>
    %124 = arith.truncf %115 : vector<24x8xf32> to vector<24x8xbf16>
    %cst_86 = arith.constant dense<0.000000e+00> : vector<24x24xf32>
    %125 = tpu.matmul %123, %124, %cst_86 {dimension_numbers = #tpu.dot_dimension_numbers<[1], [1], [0], [0], [0, 0, 1, 0], [], []>} : vector<24x8xbf16>, vector<24x8xbf16>, vector<24x24xf32> -> vector<24x24xf32>
    %cst_87 = arith.constant dense<0xFF800000> : vector<24xf32>
    %126 = vector.multi_reduction <maximumf>, %125, %cst_87 [1] : vector<24x24xf32> to vector<24xf32>
    %127 = vector.shape_cast %126 : vector<24xf32> to vector<24x1xf32>
    %128 = vector.broadcast %127 : vector<24x1xf32> to vector<24x24xf32>
    %129 = arith.subf %125, %128 : vector<24x24xf32>
    %130 = math.exp %129 : vector<24x24xf32>
    %cst_88 = arith.constant dense<0.000000e+00> : vector<24xf32>
    %131 = vector.multi_reduction <add>, %130, %cst_88 [1] : vector<24x24xf32> to vector<24xf32>
    %132 = vector.shape_cast %131 : vector<24xf32> to vector<24x1xf32>
    %cst_89 = arith.constant 1.000000e+00 : f32
    %133 = vector.broadcast %cst_89 : f32 to vector<24x1xf32>
    %134 = arith.divf %133, %132 : vector<24x1xf32>
    %135 = vector.broadcast %134 : vector<24x1xf32> to vector<24x24xf32>
    %136 = arith.mulf %130, %135 : vector<24x24xf32>
    %137 = arith.addf %91, %136 : vector<24x24xf32>
    %138 = arith.truncf %136 : vector<24x24xf32> to vector<24x24xbf16>
    %139 = arith.truncf %122 : vector<24x8xf32> to vector<24x8xbf16>
    %cst_90 = arith.constant dense<0.000000e+00> : vector<24x8xf32>
    %140 = tpu.matmul %138, %139, %cst_90 {dimension_numbers = #tpu.dot_dimension_numbers<[1], [0], [0], [1], [0, 0, 1, 1], [], []>} : vector<24x24xbf16>, vector<24x8xbf16>, vector<24x8xf32> -> vector<24x8xf32>
    %141 = arith.truncf %140 : vector<24x8xf32> to vector<24x8xbf16>
    %c2_91 = arith.constant 2 : index
    %c0_92 = arith.constant 0 : index
    %c0_93 = arith.constant 0 : index
    %142 = vector.load %arg10[%c2_91, %c0_92, %c0_93] : memref<4x8x32xbf16, #tpu.memory_space<vmem>>, vector<1x8x32xbf16>
    %143 = vector.shape_cast %142 : vector<1x8x32xbf16> to vector<8x32xbf16>
    %cst_94 = arith.constant dense<0.000000e+00> : vector<24x32xf32>
    %144 = tpu.matmul %141, %143, %cst_94 {dimension_numbers = #tpu.dot_dimension_numbers<[1], [0], [0], [1], [0, 0, 1, 1], [], []>} : vector<24x8xbf16>, vector<8x32xbf16>, vector<24x32xf32> -> vector<24x32xf32>
    %145 = arith.addf %99, %144 : vector<24x32xf32>
    %c3 = arith.constant 3 : index
    %c0_95 = arith.constant 0 : index
    %c0_96 = arith.constant 0 : index
    %146 = vector.load %arg4[%c3, %c0_95, %c0_96] : memref<4x32x8xbf16, #tpu.memory_space<vmem>>, vector<1x32x8xbf16>
    %147 = vector.shape_cast %146 : vector<1x32x8xbf16> to vector<32x8xbf16>
    %cst_97 = arith.constant dense<0.000000e+00> : vector<24x8xf32>
    %148 = tpu.matmul %3, %147, %cst_97 {dimension_numbers = #tpu.dot_dimension_numbers<[1], [0], [0], [1], [0, 0, 1, 1], [], []>} : vector<24x32xbf16>, vector<32x8xbf16>, vector<24x8xf32> -> vector<24x8xf32>
    %c3_98 = arith.constant 3 : index
    %c0_99 = arith.constant 0 : index
    %c0_100 = arith.constant 0 : index
    %149 = vector.load %arg7[%c3_98, %c0_99, %c0_100] : memref<4x1x8xf32, #tpu.memory_space<vmem>>, vector<1x1x8xf32>
    %150 = vector.shape_cast %149 : vector<1x1x8xf32> to vector<1x8xf32>
    %151 = vector.broadcast %150 : vector<1x8xf32> to vector<24x8xf32>
    %152 = arith.addf %148, %151 : vector<24x8xf32>
    %cst_101 = arith.constant 0.353553385 : f32
    %153 = vector.broadcast %cst_101 : f32 to vector<24x8xf32>
    %154 = arith.mulf %152, %153 : vector<24x8xf32>
    %c3_102 = arith.constant 3 : index
    %c0_103 = arith.constant 0 : index
    %c0_104 = arith.constant 0 : index
    %155 = vector.load %arg5[%c3_102, %c0_103, %c0_104] : memref<4x32x8xbf16, #tpu.memory_space<vmem>>, vector<1x32x8xbf16>
    %156 = vector.shape_cast %155 : vector<1x32x8xbf16> to vector<32x8xbf16>
    %cst_105 = arith.constant dense<0.000000e+00> : vector<24x8xf32>
    %157 = tpu.matmul %3, %156, %cst_105 {dimension_numbers = #tpu.dot_dimension_numbers<[1], [0], [0], [1], [0, 0, 1, 1], [], []>} : vector<24x32xbf16>, vector<32x8xbf16>, vector<24x8xf32> -> vector<24x8xf32>
    %c3_106 = arith.constant 3 : index
    %c0_107 = arith.constant 0 : index
    %c0_108 = arith.constant 0 : index
    %158 = vector.load %arg8[%c3_106, %c0_107, %c0_108] : memref<4x1x8xf32, #tpu.memory_space<vmem>>, vector<1x1x8xf32>
    %159 = vector.shape_cast %158 : vector<1x1x8xf32> to vector<1x8xf32>
    %160 = vector.broadcast %159 : vector<1x8xf32> to vector<24x8xf32>
    %161 = arith.addf %157, %160 : vector<24x8xf32>
    %c3_109 = arith.constant 3 : index
    %c0_110 = arith.constant 0 : index
    %c0_111 = arith.constant 0 : index
    %162 = vector.load %arg6[%c3_109, %c0_110, %c0_111] : memref<4x32x8xbf16, #tpu.memory_space<vmem>>, vector<1x32x8xbf16>
    %163 = vector.shape_cast %162 : vector<1x32x8xbf16> to vector<32x8xbf16>
    %cst_112 = arith.constant dense<0.000000e+00> : vector<24x8xf32>
    %164 = tpu.matmul %3, %163, %cst_112 {dimension_numbers = #tpu.dot_dimension_numbers<[1], [0], [0], [1], [0, 0, 1, 1], [], []>} : vector<24x32xbf16>, vector<32x8xbf16>, vector<24x8xf32> -> vector<24x8xf32>
    %c3_113 = arith.constant 3 : index
    %c0_114 = arith.constant 0 : index
    %c0_115 = arith.constant 0 : index
    %165 = vector.load %arg9[%c3_113, %c0_114, %c0_115] : memref<4x1x8xf32, #tpu.memory_space<vmem>>, vector<1x1x8xf32>
    %166 = vector.shape_cast %165 : vector<1x1x8xf32> to vector<1x8xf32>
    %167 = vector.broadcast %166 : vector<1x8xf32> to vector<24x8xf32>
    %168 = arith.addf %164, %167 : vector<24x8xf32>
    %169 = arith.truncf %154 : vector<24x8xf32> to vector<24x8xbf16>
    %170 = arith.truncf %161 : vector<24x8xf32> to vector<24x8xbf16>
    %cst_116 = arith.constant dense<0.000000e+00> : vector<24x24xf32>
    %171 = tpu.matmul %169, %170, %cst_116 {dimension_numbers = #tpu.dot_dimension_numbers<[1], [1], [0], [0], [0, 0, 1, 0], [], []>} : vector<24x8xbf16>, vector<24x8xbf16>, vector<24x24xf32> -> vector<24x24xf32>
    %cst_117 = arith.constant dense<0xFF800000> : vector<24xf32>
    %172 = vector.multi_reduction <maximumf>, %171, %cst_117 [1] : vector<24x24xf32> to vector<24xf32>
    %173 = vector.shape_cast %172 : vector<24xf32> to vector<24x1xf32>
    %174 = vector.broadcast %173 : vector<24x1xf32> to vector<24x24xf32>
    %175 = arith.subf %171, %174 : vector<24x24xf32>
    %176 = math.exp %175 : vector<24x24xf32>
    %cst_118 = arith.constant dense<0.000000e+00> : vector<24xf32>
    %177 = vector.multi_reduction <add>, %176, %cst_118 [1] : vector<24x24xf32> to vector<24xf32>
    %178 = vector.shape_cast %177 : vector<24xf32> to vector<24x1xf32>
    %cst_119 = arith.constant 1.000000e+00 : f32
    %179 = vector.broadcast %cst_119 : f32 to vector<24x1xf32>
    %180 = arith.divf %179, %178 : vector<24x1xf32>
    %181 = vector.broadcast %180 : vector<24x1xf32> to vector<24x24xf32>
    %182 = arith.mulf %176, %181 : vector<24x24xf32>
    %183 = arith.addf %137, %182 : vector<24x24xf32>
    %184 = arith.truncf %182 : vector<24x24xf32> to vector<24x24xbf16>
    %185 = arith.truncf %168 : vector<24x8xf32> to vector<24x8xbf16>
    %cst_120 = arith.constant dense<0.000000e+00> : vector<24x8xf32>
    %186 = tpu.matmul %184, %185, %cst_120 {dimension_numbers = #tpu.dot_dimension_numbers<[1], [0], [0], [1], [0, 0, 1, 1], [], []>} : vector<24x24xbf16>, vector<24x8xbf16>, vector<24x8xf32> -> vector<24x8xf32>
    %187 = arith.truncf %186 : vector<24x8xf32> to vector<24x8xbf16>
    %c3_121 = arith.constant 3 : index
    %c0_122 = arith.constant 0 : index
    %c0_123 = arith.constant 0 : index
    %188 = vector.load %arg10[%c3_121, %c0_122, %c0_123] : memref<4x8x32xbf16, #tpu.memory_space<vmem>>, vector<1x8x32xbf16>
    %189 = vector.shape_cast %188 : vector<1x8x32xbf16> to vector<8x32xbf16>
    %cst_124 = arith.constant dense<0.000000e+00> : vector<24x32xf32>
    %190 = tpu.matmul %187, %189, %cst_124 {dimension_numbers = #tpu.dot_dimension_numbers<[1], [0], [0], [1], [0, 0, 1, 1], [], []>} : vector<24x8xbf16>, vector<8x32xbf16>, vector<24x32xf32> -> vector<24x32xf32>
    %191 = arith.addf %145, %190 : vector<24x32xf32>
    %cst_125 = arith.constant 2.500000e-01 : f32
    %192 = vector.broadcast %cst_125 : f32 to vector<24x24xf32>
    %193 = arith.mulf %183, %192 : vector<24x24xf32>
    %194 = arith.truncf %193 : vector<24x24xf32> to vector<24x24xbf16>
    %c0_126 = arith.constant 0 : index
    %c0_127 = arith.constant 0 : index
    %c0_128 = arith.constant 0 : index
    %195 = vector.load %arg21[%c0_126, %c0_127, %c0_128] : memref<1x24x24xbf16, #tpu.memory_space<vmem>>, vector<1x24x24xbf16>
    %196 = vector.shape_cast %195 : vector<1x24x24xbf16> to vector<24x24xbf16>
    %197 = vector.shape_cast %194 : vector<24x24xbf16> to vector<1x24x24xbf16>
    tpu.vector_store %arg21[%c0_126, %c0_127, %c0_128], %197 {strides = array<i32>} : memref<1x24x24xbf16, #tpu.memory_space<vmem>>, vector<1x24x24xbf16>,
    %c0_129 = arith.constant 0 : index
    %c0_130 = arith.constant 0 : index
    %198 = vector.load %arg12[%c0_129, %c0_130] : memref<1x32xf32, #tpu.memory_space<vmem>>, vector<1x32xf32>
    %c0_131 = arith.constant 0 : index
    %c0_132 = arith.constant 0 : index
    %199 = vector.load %arg13[%c0_131, %c0_132] : memref<1x32xf32, #tpu.memory_space<vmem>>, vector<1x32xf32>
    %cst_133 = arith.constant dense<0.000000e+00> : vector<24xf32>
    %200 = vector.multi_reduction <add>, %191, %cst_133 [1] : vector<24x32xf32> to vector<24xf32>
    %201 = vector.shape_cast %200 : vector<24xf32> to vector<24x1xf32>
    %cst_134 = arith.constant 3.200000e+01 : f32
    %202 = vector.broadcast %cst_134 : f32 to vector<24x1xf32>
    %203 = arith.divf %201, %202 : vector<24x1xf32>
    %204 = vector.broadcast %203 : vector<24x1xf32> to vector<24x32xf32>
    %205 = arith.subf %191, %204 : vector<24x32xf32>
    %206 = arith.mulf %205, %205 : vector<24x32xf32>
    %cst_135 = arith.constant dense<0.000000e+00> : vector<24xf32>
    %207 = vector.multi_reduction <add>, %206, %cst_135 [1] : vector<24x32xf32> to vector<24xf32>
    %208 = vector.shape_cast %207 : vector<24xf32> to vector<24x1xf32>
    %cst_136 = arith.constant 3.200000e+01 : f32
    %209 = vector.broadcast %cst_136 : f32 to vector<24x1xf32>
    %210 = arith.divf %208, %209 : vector<24x1xf32>
    %cst_137 = arith.constant 9.99999974E-6 : f32
    %211 = vector.broadcast %cst_137 : f32 to vector<24x1xf32>
    %212 = arith.addf %210, %211 : vector<24x1xf32>
    %213 = math.rsqrt %212 : vector<24x1xf32>
    %214 = vector.broadcast %213 : vector<24x1xf32> to vector<24x32xf32>
    %215 = arith.mulf %205, %214 : vector<24x32xf32>
    %216 = vector.broadcast %198 : vector<1x32xf32> to vector<24x32xf32>
    %217 = arith.mulf %215, %216 : vector<24x32xf32>
    %218 = vector.broadcast %199 : vector<1x32xf32> to vector<24x32xf32>
    %219 = arith.addf %217, %218 : vector<24x32xf32>
    %220 = arith.truncf %219 : vector<24x32xf32> to vector<24x32xbf16>
    %c0_138 = arith.constant 0 : index
    %c0_139 = arith.constant 0 : index
    %221 = vector.load %arg14[%c0_138, %c0_139] : memref<32x32xbf16, #tpu.memory_space<vmem>>, vector<32x32xbf16>
    %cst_140 = arith.constant dense<0.000000e+00> : vector<24x32xf32>
    %222 = tpu.matmul %220, %221, %cst_140 {dimension_numbers = #tpu.dot_dimension_numbers<[1], [0], [0], [1], [0, 0, 1, 1], [], []>} : vector<24x32xbf16>, vector<32x32xbf16>, vector<24x32xf32> -> vector<24x32xf32>
    %c0_141 = arith.constant 0 : index
    %c0_142 = arith.constant 0 : index
    %223 = vector.load %arg15[%c0_141, %c0_142] : memref<1x32xf32, #tpu.memory_space<vmem>>, vector<1x32xf32>
    %224 = vector.broadcast %223 : vector<1x32xf32> to vector<24x32xf32>
    %225 = arith.addf %222, %224 : vector<24x32xf32>
    %cst_143 = arith.constant 0.000000e+00 : f32
    %226 = vector.broadcast %cst_143 : f32 to vector<24x32xf32>
    %227 = arith.maximumf %225, %226 : vector<24x32xf32>
    %228 = arith.truncf %227 : vector<24x32xf32> to vector<24x32xbf16>
    %c0_144 = arith.constant 0 : index
    %c0_145 = arith.constant 0 : index
    %229 = vector.load %arg16[%c0_144, %c0_145] : memref<32x32xbf16, #tpu.memory_space<vmem>>, vector<32x32xbf16>
    %cst_146 = arith.constant dense<0.000000e+00> : vector<24x32xf32>
    %230 = tpu.matmul %228, %229, %cst_146 {dimension_numbers = #tpu.dot_dimension_numbers<[1], [0], [0], [1], [0, 0, 1, 1], [], []>} : vector<24x32xbf16>, vector<32x32xbf16>, vector<24x32xf32> -> vector<24x32xf32>
    %c0_147 = arith.constant 0 : index
    %c0_148 = arith.constant 0 : index
    %231 = vector.load %arg17[%c0_147, %c0_148] : memref<1x32xf32, #tpu.memory_space<vmem>>, vector<1x32xf32>
    %232 = vector.broadcast %231 : vector<1x32xf32> to vector<24x32xf32>
    %233 = arith.addf %230, %232 : vector<24x32xf32>
    %234 = arith.addf %233, %219 : vector<24x32xf32>
    %c0_149 = arith.constant 0 : index
    %c0_150 = arith.constant 0 : index
    %235 = vector.load %arg18[%c0_149, %c0_150] : memref<1x32xf32, #tpu.memory_space<vmem>>, vector<1x32xf32>
    %c0_151 = arith.constant 0 : index
    %c0_152 = arith.constant 0 : index
    %236 = vector.load %arg19[%c0_151, %c0_152] : memref<1x32xf32, #tpu.memory_space<vmem>>, vector<1x32xf32>
    %cst_153 = arith.constant dense<0.000000e+00> : vector<24xf32>
    %237 = vector.multi_reduction <add>, %234, %cst_153 [1] : vector<24x32xf32> to vector<24xf32>
    %238 = vector.shape_cast %237 : vector<24xf32> to vector<24x1xf32>
    %cst_154 = arith.constant 3.200000e+01 : f32
    %239 = vector.broadcast %cst_154 : f32 to vector<24x1xf32>
    %240 = arith.divf %238, %239 : vector<24x1xf32>
    %241 = vector.broadcast %240 : vector<24x1xf32> to vector<24x32xf32>
    %242 = arith.subf %234, %241 : vector<24x32xf32>
    %243 = arith.mulf %242, %242 : vector<24x32xf32>
    %cst_155 = arith.constant dense<0.000000e+00> : vector<24xf32>
    %244 = vector.multi_reduction <add>, %243, %cst_155 [1] : vector<24x32xf32> to vector<24xf32>
    %245 = vector.shape_cast %244 : vector<24xf32> to vector<24x1xf32>
    %cst_156 = arith.constant 3.200000e+01 : f32
    %246 = vector.broadcast %cst_156 : f32 to vector<24x1xf32>
    %247 = arith.divf %245, %246 : vector<24x1xf32>
    %cst_157 = arith.constant 9.99999974E-6 : f32
    %248 = vector.broadcast %cst_157 : f32 to vector<24x1xf32>
    %249 = arith.addf %247, %248 : vector<24x1xf32>
    %250 = math.rsqrt %249 : vector<24x1xf32>
    %251 = vector.broadcast %250 : vector<24x1xf32> to vector<24x32xf32>
    %252 = arith.mulf %242, %251 : vector<24x32xf32>
    %253 = vector.broadcast %235 : vector<1x32xf32> to vector<24x32xf32>
    %254 = arith.mulf %252, %253 : vector<24x32xf32>
    %255 = vector.broadcast %236 : vector<1x32xf32> to vector<24x32xf32>
    %256 = arith.addf %254, %255 : vector<24x32xf32>
    %257 = arith.truncf %256 : vector<24x32xf32> to vector<24x32xbf16>
    %c0_158 = arith.constant 0 : index
    %c0_159 = arith.constant 0 : index
    %c0_160 = arith.constant 0 : index
    %258 = vector.load %arg20[%c0_158, %c0_159, %c0_160] : memref<1x24x32xbf16, #tpu.memory_space<vmem>>, vector<1x24x32xbf16>
    %259 = vector.shape_cast %258 : vector<1x24x32xbf16> to vector<24x32xbf16>
    %260 = vector.shape_cast %257 : vector<24x32xbf16> to vector<1x24x32xbf16>
    tpu.vector_store %arg20[%c0_158, %c0_159, %c0_160], %260 {strides = array<i32>} : memref<1x24x32xbf16, #tpu.memory_space<vmem>>, vector<1x24x32xbf16>,
    return
  }
  func.func @transform_0(%arg0: i32) -> (i32, i32, i32) {
    %c0_i32 = arith.constant 0 : i32
    %c0_i32_0 = arith.constant 0 : i32
    %c0_i32_1 = arith.constant 0 : i32
    return %arg0, %c0_i32, %c0_i32_0 : i32, i32, i32
  }
  func.func @transform_1(%arg0: i32) -> (i32, i32) {
    %c0_i32 = arith.constant 0 : i32
    %c0_i32_0 = arith.constant 0 : i32
    %c0_i32_1 = arith.constant 0 : i32
    return %c0_i32, %c0_i32_0 : i32, i32
  }
  func.func @transform_2(%arg0: i32) -> (i32, i32) {
    %c0_i32 = arith.constant 0 : i32
    %c0_i32_0 = arith.constant 0 : i32
    %c0_i32_1 = arith.constant 0 : i32
    return %c0_i32, %c0_i32_0 : i32, i32
  }
  func.func @transform_3(%arg0: i32) -> (i32, i32, i32) {
    %c0_i32 = arith.constant 0 : i32
    %c0_i32_0 = arith.constant 0 : i32
    %c0_i32_1 = arith.constant 0 : i32
    %c0_i32_2 = arith.constant 0 : i32
    return %c0_i32, %c0_i32_0, %c0_i32_1 : i32, i32, i32
  }
  func.func @transform_4(%arg0: i32) -> (i32, i32, i32) {
    %c0_i32 = arith.constant 0 : i32
    %c0_i32_0 = arith.constant 0 : i32
    %c0_i32_1 = arith.constant 0 : i32
    %c0_i32_2 = arith.constant 0 : i32
    return %c0_i32, %c0_i32_0, %c0_i32_1 : i32, i32, i32
  }
  func.func @transform_5(%arg0: i32) -> (i32, i32, i32) {
    %c0_i32 = arith.constant 0 : i32
    %c0_i32_0 = arith.constant 0 : i32
    %c0_i32_1 = arith.constant 0 : i32
    %c0_i32_2 = arith.constant 0 : i32
    return %c0_i32, %c0_i32_0, %c0_i32_1 : i32, i32, i32
  }
  func.func @transform_6(%arg0: i32) -> (i32, i32, i32) {
    %c0_i32 = arith.constant 0 : i32
    %c0_i32_0 = arith.constant 0 : i32
    %c0_i32_1 = arith.constant 0 : i32
    %c0_i32_2 = arith.constant 0 : i32
    return %c0_i32, %c0_i32_0, %c0_i32_1 : i32, i32, i32
  }
  func.func @transform_7(%arg0: i32) -> (i32, i32, i32) {
    %c0_i32 = arith.constant 0 : i32
    %c0_i32_0 = arith.constant 0 : i32
    %c0_i32_1 = arith.constant 0 : i32
    %c0_i32_2 = arith.constant 0 : i32
    return %c0_i32, %c0_i32_0, %c0_i32_1 : i32, i32, i32
  }
  func.func @transform_8(%arg0: i32) -> (i32, i32, i32) {
    %c0_i32 = arith.constant 0 : i32
    %c0_i32_0 = arith.constant 0 : i32
    %c0_i32_1 = arith.constant 0 : i32
    %c0_i32_2 = arith.constant 0 : i32
    return %c0_i32, %c0_i32_0, %c0_i32_1 : i32, i32, i32
  }
  func.func @transform_9(%arg0: i32) -> (i32, i32, i32) {
    %c0_i32 = arith.constant 0 : i32
    %c0_i32_0 = arith.constant 0 : i32
    %c0_i32_1 = arith.constant 0 : i32
    %c0_i32_2 = arith.constant 0 : i32
    return %c0_i32, %c0_i32_0, %c0_i32_1 : i32, i32, i32
  }
  func.func @transform_10(%arg0: i32) -> (i32, i32) {
    %c0_i32 = arith.constant 0 : i32
    %c0_i32_0 = arith.constant 0 : i32
    %c0_i32_1 = arith.constant 0 : i32
    return %c0_i32, %c0_i32_0 : i32, i32
  }
  func.func @transform_11(%arg0: i32) -> (i32, i32) {
    %c0_i32 = arith.constant 0 : i32
    %c0_i32_0 = arith.constant 0 : i32
    %c0_i32_1 = arith.constant 0 : i32
    return %c0_i32, %c0_i32_0 : i32, i32
  }
  func.func @transform_12(%arg0: i32) -> (i32, i32) {
    %c0_i32 = arith.constant 0 : i32
    %c0_i32_0 = arith.constant 0 : i32
    %c0_i32_1 = arith.constant 0 : i32
    return %c0_i32, %c0_i32_0 : i32, i32
  }
  func.func @transform_13(%arg0: i32) -> (i32, i32) {
    %c0_i32 = arith.constant 0 : i32
    %c0_i32_0 = arith.constant 0 : i32
    %c0_i32_1 = arith.constant 0 : i32
    return %c0_i32, %c0_i32_0 : i32, i32
  }
  func.func @transform_14(%arg0: i32) -> (i32, i32) {
    %c0_i32 = arith.constant 0 : i32
    %c0_i32_0 = arith.constant 0 : i32
    %c0_i32_1 = arith.constant 0 : i32
    return %c0_i32, %c0_i32_0 : i32, i32
  }
  func.func @transform_15(%arg0: i32) -> (i32, i32) {
    %c0_i32 = arith.constant 0 : i32
    %c0_i32_0 = arith.constant 0 : i32
    %c0_i32_1 = arith.constant 0 : i32
    return %c0_i32, %c0_i32_0 : i32, i32
  }
  func.func @transform_16(%arg0: i32) -> (i32, i32) {
    %c0_i32 = arith.constant 0 : i32
    %c0_i32_0 = arith.constant 0 : i32
    %c0_i32_1 = arith.constant 0 : i32
    return %c0_i32, %c0_i32_0 : i32, i32
  }
  func.func @transform_17(%arg0: i32) -> (i32, i32) {
    %c0_i32 = arith.constant 0 : i32
    %c0_i32_0 = arith.constant 0 : i32
    %c0_i32_1 = arith.constant 0 : i32
    return %c0_i32, %c0_i32_0 : i32, i32
  }
  func.func @transform_18(%arg0: i32) -> (i32, i32) {
    %c0_i32 = arith.constant 0 : i32
    %c0_i32_0 = arith.constant 0 : i32
    %c0_i32_1 = arith.constant 0 : i32
    return %c0_i32, %c0_i32_0 : i32, i32
  }
  func.func @transform_19(%arg0: i32) -> (i32, i32, i32) {
    %c0_i32 = arith.constant 0 : i32
    %c0_i32_0 = arith.constant 0 : i32
    %c0_i32_1 = arith.constant 0 : i32
    return %arg0, %c0_i32, %c0_i32_0 : i32, i32, i32
  }
  func.func @transform_20(%arg0: i32) -> (i32, i32, i32) {
    %c0_i32 = arith.constant 0 : i32
    %c0_i32_0 = arith.constant 0 : i32
    %c0_i32_1 = arith.constant 0 : i32
    return %arg0, %c0_i32, %c0_i32_0 : i32, i32, i32
  }
}

module attributes {stable_mosaic.version = 11 : i64} {
  func.func @_layer_kernel(%arg0: i32, %arg1: memref<1x24x32xbf16, #tpu.memory_space<vmem>>, %arg2: memref<1x32xf32, #tpu.memory_space<vmem>>, %arg3: memref<1x32xf32, #tpu.memory_space<vmem>>, %arg4: memref<4x32x8xbf16, #tpu.memory_space<vmem>>, %arg5: memref<4x32x8xbf16, #tpu.memory_space<vmem>>, %arg6: memref<4x32x8xbf16, #tpu.memory_space<vmem>>, %arg7: memref<4x1x8xf32, #tpu.memory_space<vmem>>, %arg8: memref<4x1x8xf32, #tpu.memory_space<vmem>>, %arg9: memref<4x1x8xf32, #tpu.memory_space<vmem>>, %arg10: memref<4x8x32xbf16, #tpu.memory_space<vmem>>, %arg11: memref<1x32xf32, #tpu.memory_space<vmem>>, %arg12: memref<1x32xf32, #tpu.memory_space<vmem>>, %arg13: memref<1x32xf32, #tpu.memory_space<vmem>>, %arg14: memref<32x32xbf16, #tpu.memory_space<vmem>>, %arg15: memref<1x32xf32, #tpu.memory_space<vmem>>, %arg16: memref<32x32xbf16, #tpu.memory_space<vmem>>, %arg17: memref<1x32xf32, #tpu.memory_space<vmem>>, %arg18: memref<1x32xf32, #tpu.memory_space<vmem>>, %arg19: memref<1x32xf32, #tpu.memory_space<vmem>>, %arg20: memref<1x24x32xbf16, #tpu.memory_space<vmem>>, %arg21: memref<1x24x24xbf16, #tpu.memory_space<vmem>>) attributes {dimension_semantics = [#tpu.dimension_semantics<parallel>], iteration_bounds = array<i64: 2>, scalar_prefetch = 0 : i64, scratch_operands = 0 : i64, tpu.core_type = #tpu.core_type<tc>, window_params = [{transform_indices = @transform_0, window_bounds = array<i64: 1, 24, 32>}, {pipeline_mode = #tpu.pipeline_mode<synchronous>, transform_indices = @transform_1, window_bounds = array<i64: 1, 32>}, {pipeline_mode = #tpu.pipeline_mode<synchronous>, transform_indices = @transform_2, window_bounds = array<i64: 1, 32>}, {pipeline_mode = #tpu.pipeline_mode<synchronous>, transform_indices = @transform_3, window_bounds = array<i64: 4, 32, 8>}, {pipeline_mode = #tpu.pipeline_mode<synchronous>, transform_indices = @transform_4, window_bounds = array<i64: 4, 32, 8>}, {pipeline_mode = #tpu.pipeline_mode<synchronous>, transform_indices = @transform_5, window_bounds = array<i64: 4, 32, 8>}, {pipeline_mode = #tpu.pipeline_mode<synchronous>, transform_indices = @transform_6, window_bounds = array<i64: 4, 1, 8>}, {pipeline_mode = #tpu.pipeline_mode<synchronous>, transform_indices = @transform_7, window_bounds = array<i64: 4, 1, 8>}, {pipeline_mode = #tpu.pipeline_mode<synchronous>, transform_indices = @transform_8, window_bounds = array<i64: 4, 1, 8>}, {pipeline_mode = #tpu.pipeline_mode<synchronous>, transform_indices = @transform_9, window_bounds = array<i64: 4, 8, 32>}, {pipeline_mode = #tpu.pipeline_mode<synchronous>, transform_indices = @transform_10, window_bounds = array<i64: 1, 32>}, {pipeline_mode = #tpu.pipeline_mode<synchronous>, transform_indices = @transform_11, window_bounds = array<i64: 1, 32>}, {pipeline_mode = #tpu.pipeline_mode<synchronous>, transform_indices = @transform_12, window_bounds = array<i64: 1, 32>}, {pipeline_mode = #tpu.pipeline_mode<synchronous>, transform_indices = @transform_13, window_bounds = array<i64: 32, 32>}, {pipeline_mode = #tpu.pipeline_mode<synchronous>, transform_indices = @transform_14, window_bounds = array<i64: 1, 32>}, {pipeline_mode = #tpu.pipeline_mode<synchronous>, transform_indices = @transform_15, window_bounds = array<i64: 32, 32>}, {pipeline_mode = #tpu.pipeline_mode<synchronous>, transform_indices = @transform_16, window_bounds = array<i64: 1, 32>}, {pipeline_mode = #tpu.pipeline_mode<synchronous>, transform_indices = @transform_17, window_bounds = array<i64: 1, 32>}, {pipeline_mode = #tpu.pipeline_mode<synchronous>, transform_indices = @transform_18, window_bounds = array<i64: 1, 32>}, {transform_indices = @transform_19, window_bounds = array<i64: 1, 24, 32>}, {transform_indices = @transform_20, window_bounds = array<i64: 1, 24, 24>}]} {
    %c0 = arith.constant 0 : index
    %c0_0 = arith.constant 0 : index
    %c0_1 = arith.constant 0 : index
    %0 = vector.load %arg1[%c0, %c0_0, %c0_1] : memref<1x24x32xbf16, #tpu.memory_space<vmem>>, vector<1x24x32xbf16>
    %1 = vector.shape_cast %0 : vector<1x24x32xbf16> to vector<24x32xbf16>
    %2 = arith.extf %1 : vector<24x32xbf16> to vector<24x32xf32>
    %c0_2 = arith.constant 0 : index
    %c0_3 = arith.constant 0 : index
    %3 = vector.load %arg2[%c0_2, %c0_3] : memref<1x32xf32, #tpu.memory_space<vmem>>, vector<1x32xf32>
    %c0_4 = arith.constant 0 : index
    %c0_5 = arith.constant 0 : index
    %4 = vector.load %arg3[%c0_4, %c0_5] : memref<1x32xf32, #tpu.memory_space<vmem>>, vector<1x32xf32>
    %cst = arith.constant dense<0.000000e+00> : vector<24xf32>
    %5 = vector.multi_reduction <add>, %2, %cst [1] : vector<24x32xf32> to vector<24xf32>
    %6 = vector.shape_cast %5 : vector<24xf32> to vector<24x1xf32>
    %cst_6 = arith.constant 3.200000e+01 : f32
    %7 = vector.broadcast %cst_6 : f32 to vector<24x1xf32>
    %8 = arith.divf %6, %7 : vector<24x1xf32>
    %9 = vector.broadcast %8 : vector<24x1xf32> to vector<24x32xf32>
    %10 = arith.subf %2, %9 : vector<24x32xf32>
    %11 = arith.mulf %10, %10 : vector<24x32xf32>
    %cst_7 = arith.constant dense<0.000000e+00> : vector<24xf32>
    %12 = vector.multi_reduction <add>, %11, %cst_7 [1] : vector<24x32xf32> to vector<24xf32>
    %13 = vector.shape_cast %12 : vector<24xf32> to vector<24x1xf32>
    %cst_8 = arith.constant 3.200000e+01 : f32
    %14 = vector.broadcast %cst_8 : f32 to vector<24x1xf32>
    %15 = arith.divf %13, %14 : vector<24x1xf32>
    %cst_9 = arith.constant 9.99999974E-6 : f32
    %16 = vector.broadcast %cst_9 : f32 to vector<24x1xf32>
    %17 = arith.addf %15, %16 : vector<24x1xf32>
    %18 = math.rsqrt %17 : vector<24x1xf32>
    %19 = vector.broadcast %18 : vector<24x1xf32> to vector<24x32xf32>
    %20 = arith.mulf %10, %19 : vector<24x32xf32>
    %21 = vector.broadcast %3 : vector<1x32xf32> to vector<24x32xf32>
    %22 = arith.mulf %20, %21 : vector<24x32xf32>
    %23 = vector.broadcast %4 : vector<1x32xf32> to vector<24x32xf32>
    %24 = arith.addf %22, %23 : vector<24x32xf32>
    %25 = arith.truncf %24 : vector<24x32xf32> to vector<24x32xbf16>
    %cst_10 = arith.constant 0.000000e+00 : f32
    %26 = vector.broadcast %cst_10 : f32 to vector<24x24xf32>
    %c0_11 = arith.constant 0 : index
    %c0_12 = arith.constant 0 : index
    %27 = vector.load %arg11[%c0_11, %c0_12] : memref<1x32xf32, #tpu.memory_space<vmem>>, vector<1x32xf32>
    %28 = vector.broadcast %27 : vector<1x32xf32> to vector<24x32xf32>
    %29 = arith.addf %28, %24 : vector<24x32xf32>
    %c0_13 = arith.constant 0 : index
    %c0_14 = arith.constant 0 : index
    %c0_15 = arith.constant 0 : index
    %30 = vector.load %arg4[%c0_13, %c0_14, %c0_15] : memref<4x32x8xbf16, #tpu.memory_space<vmem>>, vector<1x32x8xbf16>
    %31 = vector.shape_cast %30 : vector<1x32x8xbf16> to vector<32x8xbf16>
    %cst_16 = arith.constant dense<0.000000e+00> : vector<24x8xf32>
    %32 = tpu.matmul %25, %31, %cst_16 {dimension_numbers = #tpu.dot_dimension_numbers<[1], [0], [0], [1], [0, 0, 1, 1], [], []>} : vector<24x32xbf16>, vector<32x8xbf16>, vector<24x8xf32> -> vector<24x8xf32>
    %c0_17 = arith.constant 0 : index
    %c0_18 = arith.constant 0 : index
    %c0_19 = arith.constant 0 : index
    %33 = vector.load %arg7[%c0_17, %c0_18, %c0_19] : memref<4x1x8xf32, #tpu.memory_space<vmem>>, vector<1x1x8xf32>
    %34 = vector.shape_cast %33 : vector<1x1x8xf32> to vector<1x8xf32>
    %35 = vector.broadcast %34 : vector<1x8xf32> to vector<24x8xf32>
    %36 = arith.addf %32, %35 : vector<24x8xf32>
    %cst_20 = arith.constant 0.353553385 : f32
    %37 = vector.broadcast %cst_20 : f32 to vector<24x8xf32>
    %38 = arith.mulf %36, %37 : vector<24x8xf32>
    %c0_21 = arith.constant 0 : index
    %c0_22 = arith.constant 0 : index
    %c0_23 = arith.constant 0 : index
    %39 = vector.load %arg5[%c0_21, %c0_22, %c0_23] : memref<4x32x8xbf16, #tpu.memory_space<vmem>>, vector<1x32x8xbf16>
    %40 = vector.shape_cast %39 : vector<1x32x8xbf16> to vector<32x8xbf16>
    %cst_24 = arith.constant dense<0.000000e+00> : vector<24x8xf32>
    %41 = tpu.matmul %25, %40, %cst_24 {dimension_numbers = #tpu.dot_dimension_numbers<[1], [0], [0], [1], [0, 0, 1, 1], [], []>} : vector<24x32xbf16>, vector<32x8xbf16>, vector<24x8xf32> -> vector<24x8xf32>
    %c0_25 = arith.constant 0 : index
    %c0_26 = arith.constant 0 : index
    %c0_27 = arith.constant 0 : index
    %42 = vector.load %arg8[%c0_25, %c0_26, %c0_27] : memref<4x1x8xf32, #tpu.memory_space<vmem>>, vector<1x1x8xf32>
    %43 = vector.shape_cast %42 : vector<1x1x8xf32> to vector<1x8xf32>
    %44 = vector.broadcast %43 : vector<1x8xf32> to vector<24x8xf32>
    %45 = arith.addf %41, %44 : vector<24x8xf32>
    %c0_28 = arith.constant 0 : index
    %c0_29 = arith.constant 0 : index
    %c0_30 = arith.constant 0 : index
    %46 = vector.load %arg6[%c0_28, %c0_29, %c0_30] : memref<4x32x8xbf16, #tpu.memory_space<vmem>>, vector<1x32x8xbf16>
    %47 = vector.shape_cast %46 : vector<1x32x8xbf16> to vector<32x8xbf16>
    %cst_31 = arith.constant dense<0.000000e+00> : vector<24x8xf32>
    %48 = tpu.matmul %25, %47, %cst_31 {dimension_numbers = #tpu.dot_dimension_numbers<[1], [0], [0], [1], [0, 0, 1, 1], [], []>} : vector<24x32xbf16>, vector<32x8xbf16>, vector<24x8xf32> -> vector<24x8xf32>
    %c0_32 = arith.constant 0 : index
    %c0_33 = arith.constant 0 : index
    %c0_34 = arith.constant 0 : index
    %49 = vector.load %arg9[%c0_32, %c0_33, %c0_34] : memref<4x1x8xf32, #tpu.memory_space<vmem>>, vector<1x1x8xf32>
    %50 = vector.shape_cast %49 : vector<1x1x8xf32> to vector<1x8xf32>
    %51 = vector.broadcast %50 : vector<1x8xf32> to vector<24x8xf32>
    %52 = arith.addf %48, %51 : vector<24x8xf32>
    %53 = arith.truncf %38 : vector<24x8xf32> to vector<24x8xbf16>
    %54 = arith.truncf %45 : vector<24x8xf32> to vector<24x8xbf16>
    %cst_35 = arith.constant dense<0.000000e+00> : vector<24x24xf32>
    %55 = tpu.matmul %53, %54, %cst_35 {dimension_numbers = #tpu.dot_dimension_numbers<[1], [1], [0], [0], [0, 0, 1, 0], [], []>} : vector<24x8xbf16>, vector<24x8xbf16>, vector<24x24xf32> -> vector<24x24xf32>
    %cst_36 = arith.constant dense<0xFF800000> : vector<24xf32>
    %56 = vector.multi_reduction <maximumf>, %55, %cst_36 [1] : vector<24x24xf32> to vector<24xf32>
    %57 = vector.shape_cast %56 : vector<24xf32> to vector<24x1xf32>
    %58 = vector.broadcast %57 : vector<24x1xf32> to vector<24x24xf32>
    %59 = arith.subf %55, %58 : vector<24x24xf32>
    %60 = math.exp %59 : vector<24x24xf32>
    %cst_37 = arith.constant dense<0.000000e+00> : vector<24xf32>
    %61 = vector.multi_reduction <add>, %60, %cst_37 [1] : vector<24x24xf32> to vector<24xf32>
    %62 = vector.shape_cast %61 : vector<24xf32> to vector<24x1xf32>
    %cst_38 = arith.constant 1.000000e+00 : f32
    %63 = vector.broadcast %cst_38 : f32 to vector<24x1xf32>
    %64 = arith.divf %63, %62 : vector<24x1xf32>
    %65 = vector.broadcast %64 : vector<24x1xf32> to vector<24x24xf32>
    %66 = arith.mulf %60, %65 : vector<24x24xf32>
    %67 = arith.addf %26, %66 : vector<24x24xf32>
    %68 = arith.truncf %66 : vector<24x24xf32> to vector<24x24xbf16>
    %69 = arith.truncf %52 : vector<24x8xf32> to vector<24x8xbf16>
    %cst_39 = arith.constant dense<0.000000e+00> : vector<24x8xf32>
    %70 = tpu.matmul %68, %69, %cst_39 {dimension_numbers = #tpu.dot_dimension_numbers<[1], [0], [0], [1], [0, 0, 1, 1], [], []>} : vector<24x24xbf16>, vector<24x8xbf16>, vector<24x8xf32> -> vector<24x8xf32>
    %71 = arith.truncf %70 : vector<24x8xf32> to vector<24x8xbf16>
    %c0_40 = arith.constant 0 : index
    %c0_41 = arith.constant 0 : index
    %c0_42 = arith.constant 0 : index
    %72 = vector.load %arg10[%c0_40, %c0_41, %c0_42] : memref<4x8x32xbf16, #tpu.memory_space<vmem>>, vector<1x8x32xbf16>
    %73 = vector.shape_cast %72 : vector<1x8x32xbf16> to vector<8x32xbf16>
    %cst_43 = arith.constant dense<0.000000e+00> : vector<24x32xf32>
    %74 = tpu.matmul %71, %73, %cst_43 {dimension_numbers = #tpu.dot_dimension_numbers<[1], [0], [0], [1], [0, 0, 1, 1], [], []>} : vector<24x8xbf16>, vector<8x32xbf16>, vector<24x32xf32> -> vector<24x32xf32>
    %75 = arith.addf %29, %74 : vector<24x32xf32>
    %c1 = arith.constant 1 : index
    %c0_44 = arith.constant 0 : index
    %c0_45 = arith.constant 0 : index
    %76 = vector.load %arg4[%c1, %c0_44, %c0_45] : memref<4x32x8xbf16, #tpu.memory_space<vmem>>, vector<1x32x8xbf16>
    %77 = vector.shape_cast %76 : vector<1x32x8xbf16> to vector<32x8xbf16>
    %cst_46 = arith.constant dense<0.000000e+00> : vector<24x8xf32>
    %78 = tpu.matmul %25, %77, %cst_46 {dimension_numbers = #tpu.dot_dimension_numbers<[1], [0], [0], [1], [0, 0, 1, 1], [], []>} : vector<24x32xbf16>, vector<32x8xbf16>, vector<24x8xf32> -> vector<24x8xf32>
    %c1_47 = arith.constant 1 : index
    %c0_48 = arith.constant 0 : index
    %c0_49 = arith.constant 0 : index
    %79 = vector.load %arg7[%c1_47, %c0_48, %c0_49] : memref<4x1x8xf32, #tpu.memory_space<vmem>>, vector<1x1x8xf32>
    %80 = vector.shape_cast %79 : vector<1x1x8xf32> to vector<1x8xf32>
    %81 = vector.broadcast %80 : vector<1x8xf32> to vector<24x8xf32>
    %82 = arith.addf %78, %81 : vector<24x8xf32>
    %cst_50 = arith.constant 0.353553385 : f32
    %83 = vector.broadcast %cst_50 : f32 to vector<24x8xf32>
    %84 = arith.mulf %82, %83 : vector<24x8xf32>
    %c1_51 = arith.constant 1 : index
    %c0_52 = arith.constant 0 : index
    %c0_53 = arith.constant 0 : index
    %85 = vector.load %arg5[%c1_51, %c0_52, %c0_53] : memref<4x32x8xbf16, #tpu.memory_space<vmem>>, vector<1x32x8xbf16>
    %86 = vector.shape_cast %85 : vector<1x32x8xbf16> to vector<32x8xbf16>
    %cst_54 = arith.constant dense<0.000000e+00> : vector<24x8xf32>
    %87 = tpu.matmul %25, %86, %cst_54 {dimension_numbers = #tpu.dot_dimension_numbers<[1], [0], [0], [1], [0, 0, 1, 1], [], []>} : vector<24x32xbf16>, vector<32x8xbf16>, vector<24x8xf32> -> vector<24x8xf32>
    %c1_55 = arith.constant 1 : index
    %c0_56 = arith.constant 0 : index
    %c0_57 = arith.constant 0 : index
    %88 = vector.load %arg8[%c1_55, %c0_56, %c0_57] : memref<4x1x8xf32, #tpu.memory_space<vmem>>, vector<1x1x8xf32>
    %89 = vector.shape_cast %88 : vector<1x1x8xf32> to vector<1x8xf32>
    %90 = vector.broadcast %89 : vector<1x8xf32> to vector<24x8xf32>
    %91 = arith.addf %87, %90 : vector<24x8xf32>
    %c1_58 = arith.constant 1 : index
    %c0_59 = arith.constant 0 : index
    %c0_60 = arith.constant 0 : index
    %92 = vector.load %arg6[%c1_58, %c0_59, %c0_60] : memref<4x32x8xbf16, #tpu.memory_space<vmem>>, vector<1x32x8xbf16>
    %93 = vector.shape_cast %92 : vector<1x32x8xbf16> to vector<32x8xbf16>
    %cst_61 = arith.constant dense<0.000000e+00> : vector<24x8xf32>
    %94 = tpu.matmul %25, %93, %cst_61 {dimension_numbers = #tpu.dot_dimension_numbers<[1], [0], [0], [1], [0, 0, 1, 1], [], []>} : vector<24x32xbf16>, vector<32x8xbf16>, vector<24x8xf32> -> vector<24x8xf32>
    %c1_62 = arith.constant 1 : index
    %c0_63 = arith.constant 0 : index
    %c0_64 = arith.constant 0 : index
    %95 = vector.load %arg9[%c1_62, %c0_63, %c0_64] : memref<4x1x8xf32, #tpu.memory_space<vmem>>, vector<1x1x8xf32>
    %96 = vector.shape_cast %95 : vector<1x1x8xf32> to vector<1x8xf32>
    %97 = vector.broadcast %96 : vector<1x8xf32> to vector<24x8xf32>
    %98 = arith.addf %94, %97 : vector<24x8xf32>
    %99 = arith.truncf %84 : vector<24x8xf32> to vector<24x8xbf16>
    %100 = arith.truncf %91 : vector<24x8xf32> to vector<24x8xbf16>
    %cst_65 = arith.constant dense<0.000000e+00> : vector<24x24xf32>
    %101 = tpu.matmul %99, %100, %cst_65 {dimension_numbers = #tpu.dot_dimension_numbers<[1], [1], [0], [0], [0, 0, 1, 0], [], []>} : vector<24x8xbf16>, vector<24x8xbf16>, vector<24x24xf32> -> vector<24x24xf32>
    %cst_66 = arith.constant dense<0xFF800000> : vector<24xf32>
    %102 = vector.multi_reduction <maximumf>, %101, %cst_66 [1] : vector<24x24xf32> to vector<24xf32>
    %103 = vector.shape_cast %102 : vector<24xf32> to vector<24x1xf32>
    %104 = vector.broadcast %103 : vector<24x1xf32> to vector<24x24xf32>
    %105 = arith.subf %101, %104 : vector<24x24xf32>
    %106 = math.exp %105 : vector<24x24xf32>
    %cst_67 = arith.constant dense<0.000000e+00> : vector<24xf32>
    %107 = vector.multi_reduction <add>, %106, %cst_67 [1] : vector<24x24xf32> to vector<24xf32>
    %108 = vector.shape_cast %107 : vector<24xf32> to vector<24x1xf32>
    %cst_68 = arith.constant 1.000000e+00 : f32
    %109 = vector.broadcast %cst_68 : f32 to vector<24x1xf32>
    %110 = arith.divf %109, %108 : vector<24x1xf32>
    %111 = vector.broadcast %110 : vector<24x1xf32> to vector<24x24xf32>
    %112 = arith.mulf %106, %111 : vector<24x24xf32>
    %113 = arith.addf %67, %112 : vector<24x24xf32>
    %114 = arith.truncf %112 : vector<24x24xf32> to vector<24x24xbf16>
    %115 = arith.truncf %98 : vector<24x8xf32> to vector<24x8xbf16>
    %cst_69 = arith.constant dense<0.000000e+00> : vector<24x8xf32>
    %116 = tpu.matmul %114, %115, %cst_69 {dimension_numbers = #tpu.dot_dimension_numbers<[1], [0], [0], [1], [0, 0, 1, 1], [], []>} : vector<24x24xbf16>, vector<24x8xbf16>, vector<24x8xf32> -> vector<24x8xf32>
    %117 = arith.truncf %116 : vector<24x8xf32> to vector<24x8xbf16>
    %c1_70 = arith.constant 1 : index
    %c0_71 = arith.constant 0 : index
    %c0_72 = arith.constant 0 : index
    %118 = vector.load %arg10[%c1_70, %c0_71, %c0_72] : memref<4x8x32xbf16, #tpu.memory_space<vmem>>, vector<1x8x32xbf16>
    %119 = vector.shape_cast %118 : vector<1x8x32xbf16> to vector<8x32xbf16>
    %cst_73 = arith.constant dense<0.000000e+00> : vector<24x32xf32>
    %120 = tpu.matmul %117, %119, %cst_73 {dimension_numbers = #tpu.dot_dimension_numbers<[1], [0], [0], [1], [0, 0, 1, 1], [], []>} : vector<24x8xbf16>, vector<8x32xbf16>, vector<24x32xf32> -> vector<24x32xf32>
    %121 = arith.addf %75, %120 : vector<24x32xf32>
    %c2 = arith.constant 2 : index
    %c0_74 = arith.constant 0 : index
    %c0_75 = arith.constant 0 : index
    %122 = vector.load %arg4[%c2, %c0_74, %c0_75] : memref<4x32x8xbf16, #tpu.memory_space<vmem>>, vector<1x32x8xbf16>
    %123 = vector.shape_cast %122 : vector<1x32x8xbf16> to vector<32x8xbf16>
    %cst_76 = arith.constant dense<0.000000e+00> : vector<24x8xf32>
    %124 = tpu.matmul %25, %123, %cst_76 {dimension_numbers = #tpu.dot_dimension_numbers<[1], [0], [0], [1], [0, 0, 1, 1], [], []>} : vector<24x32xbf16>, vector<32x8xbf16>, vector<24x8xf32> -> vector<24x8xf32>
    %c2_77 = arith.constant 2 : index
    %c0_78 = arith.constant 0 : index
    %c0_79 = arith.constant 0 : index
    %125 = vector.load %arg7[%c2_77, %c0_78, %c0_79] : memref<4x1x8xf32, #tpu.memory_space<vmem>>, vector<1x1x8xf32>
    %126 = vector.shape_cast %125 : vector<1x1x8xf32> to vector<1x8xf32>
    %127 = vector.broadcast %126 : vector<1x8xf32> to vector<24x8xf32>
    %128 = arith.addf %124, %127 : vector<24x8xf32>
    %cst_80 = arith.constant 0.353553385 : f32
    %129 = vector.broadcast %cst_80 : f32 to vector<24x8xf32>
    %130 = arith.mulf %128, %129 : vector<24x8xf32>
    %c2_81 = arith.constant 2 : index
    %c0_82 = arith.constant 0 : index
    %c0_83 = arith.constant 0 : index
    %131 = vector.load %arg5[%c2_81, %c0_82, %c0_83] : memref<4x32x8xbf16, #tpu.memory_space<vmem>>, vector<1x32x8xbf16>
    %132 = vector.shape_cast %131 : vector<1x32x8xbf16> to vector<32x8xbf16>
    %cst_84 = arith.constant dense<0.000000e+00> : vector<24x8xf32>
    %133 = tpu.matmul %25, %132, %cst_84 {dimension_numbers = #tpu.dot_dimension_numbers<[1], [0], [0], [1], [0, 0, 1, 1], [], []>} : vector<24x32xbf16>, vector<32x8xbf16>, vector<24x8xf32> -> vector<24x8xf32>
    %c2_85 = arith.constant 2 : index
    %c0_86 = arith.constant 0 : index
    %c0_87 = arith.constant 0 : index
    %134 = vector.load %arg8[%c2_85, %c0_86, %c0_87] : memref<4x1x8xf32, #tpu.memory_space<vmem>>, vector<1x1x8xf32>
    %135 = vector.shape_cast %134 : vector<1x1x8xf32> to vector<1x8xf32>
    %136 = vector.broadcast %135 : vector<1x8xf32> to vector<24x8xf32>
    %137 = arith.addf %133, %136 : vector<24x8xf32>
    %c2_88 = arith.constant 2 : index
    %c0_89 = arith.constant 0 : index
    %c0_90 = arith.constant 0 : index
    %138 = vector.load %arg6[%c2_88, %c0_89, %c0_90] : memref<4x32x8xbf16, #tpu.memory_space<vmem>>, vector<1x32x8xbf16>
    %139 = vector.shape_cast %138 : vector<1x32x8xbf16> to vector<32x8xbf16>
    %cst_91 = arith.constant dense<0.000000e+00> : vector<24x8xf32>
    %140 = tpu.matmul %25, %139, %cst_91 {dimension_numbers = #tpu.dot_dimension_numbers<[1], [0], [0], [1], [0, 0, 1, 1], [], []>} : vector<24x32xbf16>, vector<32x8xbf16>, vector<24x8xf32> -> vector<24x8xf32>
    %c2_92 = arith.constant 2 : index
    %c0_93 = arith.constant 0 : index
    %c0_94 = arith.constant 0 : index
    %141 = vector.load %arg9[%c2_92, %c0_93, %c0_94] : memref<4x1x8xf32, #tpu.memory_space<vmem>>, vector<1x1x8xf32>
    %142 = vector.shape_cast %141 : vector<1x1x8xf32> to vector<1x8xf32>
    %143 = vector.broadcast %142 : vector<1x8xf32> to vector<24x8xf32>
    %144 = arith.addf %140, %143 : vector<24x8xf32>
    %145 = arith.truncf %130 : vector<24x8xf32> to vector<24x8xbf16>
    %146 = arith.truncf %137 : vector<24x8xf32> to vector<24x8xbf16>
    %cst_95 = arith.constant dense<0.000000e+00> : vector<24x24xf32>
    %147 = tpu.matmul %145, %146, %cst_95 {dimension_numbers = #tpu.dot_dimension_numbers<[1], [1], [0], [0], [0, 0, 1, 0], [], []>} : vector<24x8xbf16>, vector<24x8xbf16>, vector<24x24xf32> -> vector<24x24xf32>
    %cst_96 = arith.constant dense<0xFF800000> : vector<24xf32>
    %148 = vector.multi_reduction <maximumf>, %147, %cst_96 [1] : vector<24x24xf32> to vector<24xf32>
    %149 = vector.shape_cast %148 : vector<24xf32> to vector<24x1xf32>
    %150 = vector.broadcast %149 : vector<24x1xf32> to vector<24x24xf32>
    %151 = arith.subf %147, %150 : vector<24x24xf32>
    %152 = math.exp %151 : vector<24x24xf32>
    %cst_97 = arith.constant dense<0.000000e+00> : vector<24xf32>
    %153 = vector.multi_reduction <add>, %152, %cst_97 [1] : vector<24x24xf32> to vector<24xf32>
    %154 = vector.shape_cast %153 : vector<24xf32> to vector<24x1xf32>
    %cst_98 = arith.constant 1.000000e+00 : f32
    %155 = vector.broadcast %cst_98 : f32 to vector<24x1xf32>
    %156 = arith.divf %155, %154 : vector<24x1xf32>
    %157 = vector.broadcast %156 : vector<24x1xf32> to vector<24x24xf32>
    %158 = arith.mulf %152, %157 : vector<24x24xf32>
    %159 = arith.addf %113, %158 : vector<24x24xf32>
    %160 = arith.truncf %158 : vector<24x24xf32> to vector<24x24xbf16>
    %161 = arith.truncf %144 : vector<24x8xf32> to vector<24x8xbf16>
    %cst_99 = arith.constant dense<0.000000e+00> : vector<24x8xf32>
    %162 = tpu.matmul %160, %161, %cst_99 {dimension_numbers = #tpu.dot_dimension_numbers<[1], [0], [0], [1], [0, 0, 1, 1], [], []>} : vector<24x24xbf16>, vector<24x8xbf16>, vector<24x8xf32> -> vector<24x8xf32>
    %163 = arith.truncf %162 : vector<24x8xf32> to vector<24x8xbf16>
    %c2_100 = arith.constant 2 : index
    %c0_101 = arith.constant 0 : index
    %c0_102 = arith.constant 0 : index
    %164 = vector.load %arg10[%c2_100, %c0_101, %c0_102] : memref<4x8x32xbf16, #tpu.memory_space<vmem>>, vector<1x8x32xbf16>
    %165 = vector.shape_cast %164 : vector<1x8x32xbf16> to vector<8x32xbf16>
    %cst_103 = arith.constant dense<0.000000e+00> : vector<24x32xf32>
    %166 = tpu.matmul %163, %165, %cst_103 {dimension_numbers = #tpu.dot_dimension_numbers<[1], [0], [0], [1], [0, 0, 1, 1], [], []>} : vector<24x8xbf16>, vector<8x32xbf16>, vector<24x32xf32> -> vector<24x32xf32>
    %167 = arith.addf %121, %166 : vector<24x32xf32>
    %c3 = arith.constant 3 : index
    %c0_104 = arith.constant 0 : index
    %c0_105 = arith.constant 0 : index
    %168 = vector.load %arg4[%c3, %c0_104, %c0_105] : memref<4x32x8xbf16, #tpu.memory_space<vmem>>, vector<1x32x8xbf16>
    %169 = vector.shape_cast %168 : vector<1x32x8xbf16> to vector<32x8xbf16>
    %cst_106 = arith.constant dense<0.000000e+00> : vector<24x8xf32>
    %170 = tpu.matmul %25, %169, %cst_106 {dimension_numbers = #tpu.dot_dimension_numbers<[1], [0], [0], [1], [0, 0, 1, 1], [], []>} : vector<24x32xbf16>, vector<32x8xbf16>, vector<24x8xf32> -> vector<24x8xf32>
    %c3_107 = arith.constant 3 : index
    %c0_108 = arith.constant 0 : index
    %c0_109 = arith.constant 0 : index
    %171 = vector.load %arg7[%c3_107, %c0_108, %c0_109] : memref<4x1x8xf32, #tpu.memory_space<vmem>>, vector<1x1x8xf32>
    %172 = vector.shape_cast %171 : vector<1x1x8xf32> to vector<1x8xf32>
    %173 = vector.broadcast %172 : vector<1x8xf32> to vector<24x8xf32>
    %174 = arith.addf %170, %173 : vector<24x8xf32>
    %cst_110 = arith.constant 0.353553385 : f32
    %175 = vector.broadcast %cst_110 : f32 to vector<24x8xf32>
    %176 = arith.mulf %174, %175 : vector<24x8xf32>
    %c3_111 = arith.constant 3 : index
    %c0_112 = arith.constant 0 : index
    %c0_113 = arith.constant 0 : index
    %177 = vector.load %arg5[%c3_111, %c0_112, %c0_113] : memref<4x32x8xbf16, #tpu.memory_space<vmem>>, vector<1x32x8xbf16>
    %178 = vector.shape_cast %177 : vector<1x32x8xbf16> to vector<32x8xbf16>
    %cst_114 = arith.constant dense<0.000000e+00> : vector<24x8xf32>
    %179 = tpu.matmul %25, %178, %cst_114 {dimension_numbers = #tpu.dot_dimension_numbers<[1], [0], [0], [1], [0, 0, 1, 1], [], []>} : vector<24x32xbf16>, vector<32x8xbf16>, vector<24x8xf32> -> vector<24x8xf32>
    %c3_115 = arith.constant 3 : index
    %c0_116 = arith.constant 0 : index
    %c0_117 = arith.constant 0 : index
    %180 = vector.load %arg8[%c3_115, %c0_116, %c0_117] : memref<4x1x8xf32, #tpu.memory_space<vmem>>, vector<1x1x8xf32>
    %181 = vector.shape_cast %180 : vector<1x1x8xf32> to vector<1x8xf32>
    %182 = vector.broadcast %181 : vector<1x8xf32> to vector<24x8xf32>
    %183 = arith.addf %179, %182 : vector<24x8xf32>
    %c3_118 = arith.constant 3 : index
    %c0_119 = arith.constant 0 : index
    %c0_120 = arith.constant 0 : index
    %184 = vector.load %arg6[%c3_118, %c0_119, %c0_120] : memref<4x32x8xbf16, #tpu.memory_space<vmem>>, vector<1x32x8xbf16>
    %185 = vector.shape_cast %184 : vector<1x32x8xbf16> to vector<32x8xbf16>
    %cst_121 = arith.constant dense<0.000000e+00> : vector<24x8xf32>
    %186 = tpu.matmul %25, %185, %cst_121 {dimension_numbers = #tpu.dot_dimension_numbers<[1], [0], [0], [1], [0, 0, 1, 1], [], []>} : vector<24x32xbf16>, vector<32x8xbf16>, vector<24x8xf32> -> vector<24x8xf32>
    %c3_122 = arith.constant 3 : index
    %c0_123 = arith.constant 0 : index
    %c0_124 = arith.constant 0 : index
    %187 = vector.load %arg9[%c3_122, %c0_123, %c0_124] : memref<4x1x8xf32, #tpu.memory_space<vmem>>, vector<1x1x8xf32>
    %188 = vector.shape_cast %187 : vector<1x1x8xf32> to vector<1x8xf32>
    %189 = vector.broadcast %188 : vector<1x8xf32> to vector<24x8xf32>
    %190 = arith.addf %186, %189 : vector<24x8xf32>
    %191 = arith.truncf %176 : vector<24x8xf32> to vector<24x8xbf16>
    %192 = arith.truncf %183 : vector<24x8xf32> to vector<24x8xbf16>
    %cst_125 = arith.constant dense<0.000000e+00> : vector<24x24xf32>
    %193 = tpu.matmul %191, %192, %cst_125 {dimension_numbers = #tpu.dot_dimension_numbers<[1], [1], [0], [0], [0, 0, 1, 0], [], []>} : vector<24x8xbf16>, vector<24x8xbf16>, vector<24x24xf32> -> vector<24x24xf32>
    %cst_126 = arith.constant dense<0xFF800000> : vector<24xf32>
    %194 = vector.multi_reduction <maximumf>, %193, %cst_126 [1] : vector<24x24xf32> to vector<24xf32>
    %195 = vector.shape_cast %194 : vector<24xf32> to vector<24x1xf32>
    %196 = vector.broadcast %195 : vector<24x1xf32> to vector<24x24xf32>
    %197 = arith.subf %193, %196 : vector<24x24xf32>
    %198 = math.exp %197 : vector<24x24xf32>
    %cst_127 = arith.constant dense<0.000000e+00> : vector<24xf32>
    %199 = vector.multi_reduction <add>, %198, %cst_127 [1] : vector<24x24xf32> to vector<24xf32>
    %200 = vector.shape_cast %199 : vector<24xf32> to vector<24x1xf32>
    %cst_128 = arith.constant 1.000000e+00 : f32
    %201 = vector.broadcast %cst_128 : f32 to vector<24x1xf32>
    %202 = arith.divf %201, %200 : vector<24x1xf32>
    %203 = vector.broadcast %202 : vector<24x1xf32> to vector<24x24xf32>
    %204 = arith.mulf %198, %203 : vector<24x24xf32>
    %205 = arith.addf %159, %204 : vector<24x24xf32>
    %206 = arith.truncf %204 : vector<24x24xf32> to vector<24x24xbf16>
    %207 = arith.truncf %190 : vector<24x8xf32> to vector<24x8xbf16>
    %cst_129 = arith.constant dense<0.000000e+00> : vector<24x8xf32>
    %208 = tpu.matmul %206, %207, %cst_129 {dimension_numbers = #tpu.dot_dimension_numbers<[1], [0], [0], [1], [0, 0, 1, 1], [], []>} : vector<24x24xbf16>, vector<24x8xbf16>, vector<24x8xf32> -> vector<24x8xf32>
    %209 = arith.truncf %208 : vector<24x8xf32> to vector<24x8xbf16>
    %c3_130 = arith.constant 3 : index
    %c0_131 = arith.constant 0 : index
    %c0_132 = arith.constant 0 : index
    %210 = vector.load %arg10[%c3_130, %c0_131, %c0_132] : memref<4x8x32xbf16, #tpu.memory_space<vmem>>, vector<1x8x32xbf16>
    %211 = vector.shape_cast %210 : vector<1x8x32xbf16> to vector<8x32xbf16>
    %cst_133 = arith.constant dense<0.000000e+00> : vector<24x32xf32>
    %212 = tpu.matmul %209, %211, %cst_133 {dimension_numbers = #tpu.dot_dimension_numbers<[1], [0], [0], [1], [0, 0, 1, 1], [], []>} : vector<24x8xbf16>, vector<8x32xbf16>, vector<24x32xf32> -> vector<24x32xf32>
    %213 = arith.addf %167, %212 : vector<24x32xf32>
    %cst_134 = arith.constant 2.500000e-01 : f32
    %214 = vector.broadcast %cst_134 : f32 to vector<24x24xf32>
    %215 = arith.mulf %205, %214 : vector<24x24xf32>
    %216 = arith.truncf %215 : vector<24x24xf32> to vector<24x24xbf16>
    %c0_135 = arith.constant 0 : index
    %c0_136 = arith.constant 0 : index
    %c0_137 = arith.constant 0 : index
    %217 = vector.load %arg21[%c0_135, %c0_136, %c0_137] : memref<1x24x24xbf16, #tpu.memory_space<vmem>>, vector<1x24x24xbf16>
    %218 = vector.shape_cast %217 : vector<1x24x24xbf16> to vector<24x24xbf16>
    %219 = vector.shape_cast %216 : vector<24x24xbf16> to vector<1x24x24xbf16>
    tpu.vector_store %arg21[%c0_135, %c0_136, %c0_137], %219 {strides = array<i32>} : memref<1x24x24xbf16, #tpu.memory_space<vmem>>, vector<1x24x24xbf16>,
    %c0_138 = arith.constant 0 : index
    %c0_139 = arith.constant 0 : index
    %220 = vector.load %arg12[%c0_138, %c0_139] : memref<1x32xf32, #tpu.memory_space<vmem>>, vector<1x32xf32>
    %c0_140 = arith.constant 0 : index
    %c0_141 = arith.constant 0 : index
    %221 = vector.load %arg13[%c0_140, %c0_141] : memref<1x32xf32, #tpu.memory_space<vmem>>, vector<1x32xf32>
    %cst_142 = arith.constant dense<0.000000e+00> : vector<24xf32>
    %222 = vector.multi_reduction <add>, %213, %cst_142 [1] : vector<24x32xf32> to vector<24xf32>
    %223 = vector.shape_cast %222 : vector<24xf32> to vector<24x1xf32>
    %cst_143 = arith.constant 3.200000e+01 : f32
    %224 = vector.broadcast %cst_143 : f32 to vector<24x1xf32>
    %225 = arith.divf %223, %224 : vector<24x1xf32>
    %226 = vector.broadcast %225 : vector<24x1xf32> to vector<24x32xf32>
    %227 = arith.subf %213, %226 : vector<24x32xf32>
    %228 = arith.mulf %227, %227 : vector<24x32xf32>
    %cst_144 = arith.constant dense<0.000000e+00> : vector<24xf32>
    %229 = vector.multi_reduction <add>, %228, %cst_144 [1] : vector<24x32xf32> to vector<24xf32>
    %230 = vector.shape_cast %229 : vector<24xf32> to vector<24x1xf32>
    %cst_145 = arith.constant 3.200000e+01 : f32
    %231 = vector.broadcast %cst_145 : f32 to vector<24x1xf32>
    %232 = arith.divf %230, %231 : vector<24x1xf32>
    %cst_146 = arith.constant 9.99999974E-6 : f32
    %233 = vector.broadcast %cst_146 : f32 to vector<24x1xf32>
    %234 = arith.addf %232, %233 : vector<24x1xf32>
    %235 = math.rsqrt %234 : vector<24x1xf32>
    %236 = vector.broadcast %235 : vector<24x1xf32> to vector<24x32xf32>
    %237 = arith.mulf %227, %236 : vector<24x32xf32>
    %238 = vector.broadcast %220 : vector<1x32xf32> to vector<24x32xf32>
    %239 = arith.mulf %237, %238 : vector<24x32xf32>
    %240 = vector.broadcast %221 : vector<1x32xf32> to vector<24x32xf32>
    %241 = arith.addf %239, %240 : vector<24x32xf32>
    %242 = arith.truncf %241 : vector<24x32xf32> to vector<24x32xbf16>
    %c0_147 = arith.constant 0 : index
    %c0_148 = arith.constant 0 : index
    %243 = vector.load %arg14[%c0_147, %c0_148] : memref<32x32xbf16, #tpu.memory_space<vmem>>, vector<32x32xbf16>
    %cst_149 = arith.constant dense<0.000000e+00> : vector<24x32xf32>
    %244 = tpu.matmul %242, %243, %cst_149 {dimension_numbers = #tpu.dot_dimension_numbers<[1], [0], [0], [1], [0, 0, 1, 1], [], []>} : vector<24x32xbf16>, vector<32x32xbf16>, vector<24x32xf32> -> vector<24x32xf32>
    %c0_150 = arith.constant 0 : index
    %c0_151 = arith.constant 0 : index
    %245 = vector.load %arg15[%c0_150, %c0_151] : memref<1x32xf32, #tpu.memory_space<vmem>>, vector<1x32xf32>
    %246 = vector.broadcast %245 : vector<1x32xf32> to vector<24x32xf32>
    %247 = arith.addf %244, %246 : vector<24x32xf32>
    %cst_152 = arith.constant 0.000000e+00 : f32
    %248 = vector.broadcast %cst_152 : f32 to vector<24x32xf32>
    %249 = arith.maximumf %247, %248 : vector<24x32xf32>
    %250 = arith.truncf %249 : vector<24x32xf32> to vector<24x32xbf16>
    %c0_153 = arith.constant 0 : index
    %c0_154 = arith.constant 0 : index
    %251 = vector.load %arg16[%c0_153, %c0_154] : memref<32x32xbf16, #tpu.memory_space<vmem>>, vector<32x32xbf16>
    %cst_155 = arith.constant dense<0.000000e+00> : vector<24x32xf32>
    %252 = tpu.matmul %250, %251, %cst_155 {dimension_numbers = #tpu.dot_dimension_numbers<[1], [0], [0], [1], [0, 0, 1, 1], [], []>} : vector<24x32xbf16>, vector<32x32xbf16>, vector<24x32xf32> -> vector<24x32xf32>
    %c0_156 = arith.constant 0 : index
    %c0_157 = arith.constant 0 : index
    %253 = vector.load %arg17[%c0_156, %c0_157] : memref<1x32xf32, #tpu.memory_space<vmem>>, vector<1x32xf32>
    %254 = vector.broadcast %253 : vector<1x32xf32> to vector<24x32xf32>
    %255 = arith.addf %252, %254 : vector<24x32xf32>
    %256 = arith.addf %255, %241 : vector<24x32xf32>
    %c0_158 = arith.constant 0 : index
    %c0_159 = arith.constant 0 : index
    %257 = vector.load %arg18[%c0_158, %c0_159] : memref<1x32xf32, #tpu.memory_space<vmem>>, vector<1x32xf32>
    %c0_160 = arith.constant 0 : index
    %c0_161 = arith.constant 0 : index
    %258 = vector.load %arg19[%c0_160, %c0_161] : memref<1x32xf32, #tpu.memory_space<vmem>>, vector<1x32xf32>
    %cst_162 = arith.constant dense<0.000000e+00> : vector<24xf32>
    %259 = vector.multi_reduction <add>, %256, %cst_162 [1] : vector<24x32xf32> to vector<24xf32>
    %260 = vector.shape_cast %259 : vector<24xf32> to vector<24x1xf32>
    %cst_163 = arith.constant 3.200000e+01 : f32
    %261 = vector.broadcast %cst_163 : f32 to vector<24x1xf32>
    %262 = arith.divf %260, %261 : vector<24x1xf32>
    %263 = vector.broadcast %262 : vector<24x1xf32> to vector<24x32xf32>
    %264 = arith.subf %256, %263 : vector<24x32xf32>
    %265 = arith.mulf %264, %264 : vector<24x32xf32>
    %cst_164 = arith.constant dense<0.000000e+00> : vector<24xf32>
    %266 = vector.multi_reduction <add>, %265, %cst_164 [1] : vector<24x32xf32> to vector<24xf32>
    %267 = vector.shape_cast %266 : vector<24xf32> to vector<24x1xf32>
    %cst_165 = arith.constant 3.200000e+01 : f32
    %268 = vector.broadcast %cst_165 : f32 to vector<24x1xf32>
    %269 = arith.divf %267, %268 : vector<24x1xf32>
    %cst_166 = arith.constant 9.99999974E-6 : f32
    %270 = vector.broadcast %cst_166 : f32 to vector<24x1xf32>
    %271 = arith.addf %269, %270 : vector<24x1xf32>
    %272 = math.rsqrt %271 : vector<24x1xf32>
    %273 = vector.broadcast %272 : vector<24x1xf32> to vector<24x32xf32>
    %274 = arith.mulf %264, %273 : vector<24x32xf32>
    %275 = vector.broadcast %257 : vector<1x32xf32> to vector<24x32xf32>
    %276 = arith.mulf %274, %275 : vector<24x32xf32>
    %277 = vector.broadcast %258 : vector<1x32xf32> to vector<24x32xf32>
    %278 = arith.addf %276, %277 : vector<24x32xf32>
    %279 = arith.truncf %278 : vector<24x32xf32> to vector<24x32xbf16>
    %c0_167 = arith.constant 0 : index
    %c0_168 = arith.constant 0 : index
    %c0_169 = arith.constant 0 : index
    %280 = vector.load %arg20[%c0_167, %c0_168, %c0_169] : memref<1x24x32xbf16, #tpu.memory_space<vmem>>, vector<1x24x32xbf16>
    %281 = vector.shape_cast %280 : vector<1x24x32xbf16> to vector<24x32xbf16>
    %282 = vector.shape_cast %279 : vector<24x32xbf16> to vector<1x24x32xbf16>
    tpu.vector_store %arg20[%c0_167, %c0_168, %c0_169], %282 {strides = array<i32>} : memref<1x24x32xbf16, #tpu.memory_space<vmem>>, vector<1x24x32xbf16>,
    return
  }
  func.func @transform_0(%arg0: i32) -> (i32, i32, i32) {
    %c0_i32 = arith.constant 0 : i32
    %c0_i32_0 = arith.constant 0 : i32
    %c0_i32_1 = arith.constant 0 : i32
    return %arg0, %c0_i32, %c0_i32_0 : i32, i32, i32
  }
  func.func @transform_1(%arg0: i32) -> (i32, i32) {
    %c0_i32 = arith.constant 0 : i32
    %c0_i32_0 = arith.constant 0 : i32
    %c0_i32_1 = arith.constant 0 : i32
    return %c0_i32, %c0_i32_0 : i32, i32
  }
  func.func @transform_2(%arg0: i32) -> (i32, i32) {
    %c0_i32 = arith.constant 0 : i32
    %c0_i32_0 = arith.constant 0 : i32
    %c0_i32_1 = arith.constant 0 : i32
    return %c0_i32, %c0_i32_0 : i32, i32
  }
  func.func @transform_3(%arg0: i32) -> (i32, i32, i32) {
    %c0_i32 = arith.constant 0 : i32
    %c0_i32_0 = arith.constant 0 : i32
    %c0_i32_1 = arith.constant 0 : i32
    %c0_i32_2 = arith.constant 0 : i32
    return %c0_i32, %c0_i32_0, %c0_i32_1 : i32, i32, i32
  }
  func.func @transform_4(%arg0: i32) -> (i32, i32, i32) {
    %c0_i32 = arith.constant 0 : i32
    %c0_i32_0 = arith.constant 0 : i32
    %c0_i32_1 = arith.constant 0 : i32
    %c0_i32_2 = arith.constant 0 : i32
    return %c0_i32, %c0_i32_0, %c0_i32_1 : i32, i32, i32
  }
  func.func @transform_5(%arg0: i32) -> (i32, i32, i32) {
    %c0_i32 = arith.constant 0 : i32
    %c0_i32_0 = arith.constant 0 : i32
    %c0_i32_1 = arith.constant 0 : i32
    %c0_i32_2 = arith.constant 0 : i32
    return %c0_i32, %c0_i32_0, %c0_i32_1 : i32, i32, i32
  }
  func.func @transform_6(%arg0: i32) -> (i32, i32, i32) {
    %c0_i32 = arith.constant 0 : i32
    %c0_i32_0 = arith.constant 0 : i32
    %c0_i32_1 = arith.constant 0 : i32
    %c0_i32_2 = arith.constant 0 : i32
    return %c0_i32, %c0_i32_0, %c0_i32_1 : i32, i32, i32
  }
  func.func @transform_7(%arg0: i32) -> (i32, i32, i32) {
    %c0_i32 = arith.constant 0 : i32
    %c0_i32_0 = arith.constant 0 : i32
    %c0_i32_1 = arith.constant 0 : i32
    %c0_i32_2 = arith.constant 0 : i32
    return %c0_i32, %c0_i32_0, %c0_i32_1 : i32, i32, i32
  }
  func.func @transform_8(%arg0: i32) -> (i32, i32, i32) {
    %c0_i32 = arith.constant 0 : i32
    %c0_i32_0 = arith.constant 0 : i32
    %c0_i32_1 = arith.constant 0 : i32
    %c0_i32_2 = arith.constant 0 : i32
    return %c0_i32, %c0_i32_0, %c0_i32_1 : i32, i32, i32
  }
  func.func @transform_9(%arg0: i32) -> (i32, i32, i32) {
    %c0_i32 = arith.constant 0 : i32
    %c0_i32_0 = arith.constant 0 : i32
    %c0_i32_1 = arith.constant 0 : i32
    %c0_i32_2 = arith.constant 0 : i32
    return %c0_i32, %c0_i32_0, %c0_i32_1 : i32, i32, i32
  }
  func.func @transform_10(%arg0: i32) -> (i32, i32) {
    %c0_i32 = arith.constant 0 : i32
    %c0_i32_0 = arith.constant 0 : i32
    %c0_i32_1 = arith.constant 0 : i32
    return %c0_i32, %c0_i32_0 : i32, i32
  }
  func.func @transform_11(%arg0: i32) -> (i32, i32) {
    %c0_i32 = arith.constant 0 : i32
    %c0_i32_0 = arith.constant 0 : i32
    %c0_i32_1 = arith.constant 0 : i32
    return %c0_i32, %c0_i32_0 : i32, i32
  }
  func.func @transform_12(%arg0: i32) -> (i32, i32) {
    %c0_i32 = arith.constant 0 : i32
    %c0_i32_0 = arith.constant 0 : i32
    %c0_i32_1 = arith.constant 0 : i32
    return %c0_i32, %c0_i32_0 : i32, i32
  }
  func.func @transform_13(%arg0: i32) -> (i32, i32) {
    %c0_i32 = arith.constant 0 : i32
    %c0_i32_0 = arith.constant 0 : i32
    %c0_i32_1 = arith.constant 0 : i32
    return %c0_i32, %c0_i32_0 : i32, i32
  }
  func.func @transform_14(%arg0: i32) -> (i32, i32) {
    %c0_i32 = arith.constant 0 : i32
    %c0_i32_0 = arith.constant 0 : i32
    %c0_i32_1 = arith.constant 0 : i32
    return %c0_i32, %c0_i32_0 : i32, i32
  }
  func.func @transform_15(%arg0: i32) -> (i32, i32) {
    %c0_i32 = arith.constant 0 : i32
    %c0_i32_0 = arith.constant 0 : i32
    %c0_i32_1 = arith.constant 0 : i32
    return %c0_i32, %c0_i32_0 : i32, i32
  }
  func.func @transform_16(%arg0: i32) -> (i32, i32) {
    %c0_i32 = arith.constant 0 : i32
    %c0_i32_0 = arith.constant 0 : i32
    %c0_i32_1 = arith.constant 0 : i32
    return %c0_i32, %c0_i32_0 : i32, i32
  }
  func.func @transform_17(%arg0: i32) -> (i32, i32) {
    %c0_i32 = arith.constant 0 : i32
    %c0_i32_0 = arith.constant 0 : i32
    %c0_i32_1 = arith.constant 0 : i32
    return %c0_i32, %c0_i32_0 : i32, i32
  }
  func.func @transform_18(%arg0: i32) -> (i32, i32) {
    %c0_i32 = arith.constant 0 : i32
    %c0_i32_0 = arith.constant 0 : i32
    %c0_i32_1 = arith.constant 0 : i32
    return %c0_i32, %c0_i32_0 : i32, i32
  }
  func.func @transform_19(%arg0: i32) -> (i32, i32, i32) {
    %c0_i32 = arith.constant 0 : i32
    %c0_i32_0 = arith.constant 0 : i32
    %c0_i32_1 = arith.constant 0 : i32
    return %arg0, %c0_i32, %c0_i32_0 : i32, i32, i32
  }
  func.func @transform_20(%arg0: i32) -> (i32, i32, i32) {
    %c0_i32 = arith.constant 0 : i32
    %c0_i32_0 = arith.constant 0 : i32
    %c0_i32_1 = arith.constant 0 : i32
    return %arg0, %c0_i32, %c0_i32_0 : i32, i32, i32
  }
}

</mosaic_0001>

<llo_original>
// kernel: ctran_forward.4
$region0: #{ctran_forward.4}
  #allocation0 [shape = 'u32[]', space=smem, size = 0x4, offset = 0x4, fixed_abs, tag = 'smem constant byte address 0x4 - core index']
  #allocation1 [shape = 'u32[144,128]{1,0:T(1,128)}', space=vmem, size = 0x12000, scoped, tag = 'internal scratch']
  #allocation2 [shape = 'f32[32,32]{1,0:T(8,128)}', space=vmem, size = 0x4000, scoped, tag = 'scratch operand']
  %s0 = inlined_call_operand.hbm [shape: f32[32,3], index: 0, kind: input, shape index: {}]
  %s1 = inlined_call_operand.hbm [shape: bf16[3,32], index: 1, kind: input, shape index: {}]
  %s2 = inlined_call_operand.hbm [shape: f32[1,32], index: 2, kind: input, shape index: {}]
  %s3 = inlined_call_operand.hbm [shape: bf16[32,32], index: 3, kind: output, shape index: {}]
  %s4 = sld [smem:[#allocation0]]
  $region42: #{ctran_forward.4} parent=0
    _
  %s6 = ssub.s32 1, %s4
  %s7 = scalar_select 0, %s6, %s4
  $region1: #{ctran_forward.4} parent=0
    #allocation3 [shape = 'u8[16384]{0}', space=vmem, size = 0x4000, scoped, tag = 'input window, operand 0, single buffered']
    #allocation4 [shape = 's32[1]{0}', space=sflag, size = 0x4, scoped, tag = 'scoped memory for ctran_forward.4']
    #allocation5 [shape = 's32[1]{0}', space=sflag, size = 0x4, scoped, tag = 'scoped memory for ctran_forward.4']
    #allocation6 [shape = 'u8[1024]{0}', space=vmem, size = 0x400, scoped, tag = 'input window, operand 1, single buffered']
    #allocation7 [shape = 's32[1]{0}', space=sflag, size = 0x4, scoped, tag = 'scoped memory for ctran_forward.4']
    #allocation8 [shape = 'u8[512]{0}', space=vmem, size = 0x400, scoped, tag = 'input window, operand 2, single buffered']
    #allocation9 [shape = 'u8[8192]{0}', space=vmem, size = 0x2000, scoped, tag = 'output window, operand 0, single buffered']
    %8 = vsyncpa [#allocation4], 0
    %9 = vsyncpa [#allocation7], 0
    %10 = vsyncpa [#allocation5], 0
    // Predicated region
    $region2: #{ctran_forward.4} parent=1 // pred_check
      _
    $region3: #{ctran_forward.4} parent=1 // pred_check_branch
      %12 = sbr.rel (0) target = $region5
    $region4: #{ctran_forward.4} parent=1 // pred_region
      %s14 = ssub.s32 512, 512
      %15 = vsyncadd [#allocation4], %s14
      %s16 = sshll.u32 [#allocation3], 4
      %s17 = int_to_ptr.vmem [resolvable:$true] %s16
      %22 = dma.hbm_to_vmem [thread:$0]  %s0, 512, %s17, [#allocation4], 128, 128, 8
    $region5: #{ctran_forward.4} parent=1 // pred_fallthru
      _
    // Predicated region
    $region6: #{ctran_forward.4} parent=1 // pred_check
      _
    $region7: #{ctran_forward.4} parent=1 // pred_check_branch
      %24 = sbr.rel (0) target = $region9
    $region8: #{ctran_forward.4} parent=1 // pred_region
      %s26 = ssub.s32 32, 32
      %27 = vsyncadd [#allocation7], %s26
      %s29 = sshll.u32 [#allocation6], 4
      %s30 = int_to_ptr.vmem [resolvable:$true] %s29
      %32 = dma.hbm_to_vmem [thread:$0]  %s1, 32, %s30, [#allocation7]
    $region9: #{ctran_forward.4} parent=1 // pred_fallthru
      _
    // Predicated region
    $region10: #{ctran_forward.4} parent=1 // pred_check
      _
    $region11: #{ctran_forward.4} parent=1 // pred_check_branch
      %34 = sbr.rel (0) target = $region13
    $region12: #{ctran_forward.4} parent=1 // pred_region
      %s36 = ssub.s32 16, 16
      %37 = vsyncadd [#allocation7], %s36
      %s39 = sshll.u32 [#allocation8], 4
      %s40 = int_to_ptr.vmem [resolvable:$true] %s39
      %42 = dma.hbm_to_vmem [thread:$0]  %s2, 16, %s40, [#allocation7]
    $region13: #{ctran_forward.4} parent=1 // pred_fallthru
      _
    // Predicated region
    $region14: #{ctran_forward.4} parent=1 // pred_check
      _
    $region15: #{ctran_forward.4} parent=1 // pred_check_branch
      %44 = sbr.rel (0) target = $region17
    $region16: #{ctran_forward.4} parent=1 // pred_region
      %45 = dma.done [#allocation4], 512
    $region17: #{ctran_forward.4} parent=1 // pred_fallthru
      _
    // Predicated region
    $region18: #{ctran_forward.4} parent=1 // pred_check
      _
    $region19: #{ctran_forward.4} parent=1 // pred_check_branch
      %47 = sbr.rel (0) target = $region21
    $region20: #{ctran_forward.4} parent=1 // pred_region
      %48 = dma.done [#allocation7], 32
    $region21: #{ctran_forward.4} parent=1 // pred_fallthru
      _
    // Predicated region
    $region22: #{ctran_forward.4} parent=1 // pred_check
      _
    $region23: #{ctran_forward.4} parent=1 // pred_check_branch
      %50 = sbr.rel (0) target = $region25
    $region24: #{ctran_forward.4} parent=1 // pred_region
      %51 = dma.done [#allocation7], 16
    $region25: #{ctran_forward.4} parent=1 // pred_fallthru
      _
    %p53 = scmp.eq.s32.totalorder 0, 0
    // Predicated region
    $region26: #{ctran_forward.4} parent=1 // pred_check
      %p54 = pneg %p53
    $region27: #{ctran_forward.4} parent=1 // pred_check_branch
      %56 = sbr.rel (%p54) target = $region29
    $region28: #{ctran_forward.4} parent=1 // pred_region
      %vm57 = vcmask 261120
      %58 = vst.msk [vmem:[#allocation2] sm:$0xff] %vm57, 0.0
      %59 = vst.msk [vmem:[#allocation2 + $0x8] sm:$0xff] %vm57, 0.0
      %60 = vst.msk [vmem:[#allocation2 + $0x10] sm:$0xff] %vm57, 0.0
      %61 = vst.msk [vmem:[#allocation2 + $0x18] sm:$0xff] %vm57, 0.0
    $region29: #{ctran_forward.4} parent=1 // pred_fallthru
      _
    %v62 = vld [vmem:[#allocation2] sm:$0xff]
    %v63 = vld [vmem:[#allocation2 + $0x8] sm:$0xff]
    %v64 = vld [vmem:[#allocation2 + $0x10] sm:$0xff]
    %v65 = vld [vmem:[#allocation2 + $0x18] sm:$0xff]
    %v66 = vld [vmem:[#allocation3] sm:$0xff]
    %v67 = vld [vmem:[#allocation3 + $0x8] sm:$0xff]
    %v68 = vld [vmem:[#allocation3 + $0x10] sm:$0xff]
    %v69 = vld [vmem:[#allocation3 + $0x18] sm:$0xff]
    %v70 = vpack.c.bf16 %v67, %v66
    %v71 = vpack.c.bf16 %v69, %v68
    %v72 = vld [vmem:[#allocation6] sm:$0x3]
    %vm73 = vcmask 23552
    %v75 = vsel %vm73, %v70, 0
    %v78 = vsel %vm73, %v71, 0
    %vm80 = vcmask 1040384
    %vm81 = vcmask 1041408
    %v82 = vsel %vm80, 4294967295, 65535
    %v83 = vsel %vm81, %v82, 0
    %v85 = vand.u32 %v72, %v83
    %87 = vmatprep.subr.bf16.mxu0 0
    %88 = vmatpush1.bf16.msra.mxu0 %v85
    %89 = vmatprep.subr.bf16.mxu0 0
    %90 = vmatpush1.bf16.msra.mxu0 0
    %91 = vmatprep.subr.bf16.mxu0 0
    %92 = vmatpush1.bf16.msra.mxu0 0
    %93 = vmatprep.subr.bf16.mxu0 0
    %94 = vmatpush1.bf16.msra.mxu0 0
    %95 = vmatprep.subr.bf16.mxu0 0
    %96 = vmatpush1.bf16.msra.mxu0 0
    %97 = vmatprep.subr.bf16.mxu0 0
    %98 = vmatpush1.bf16.msra.mxu0 0
    %99 = vmatprep.subr.bf16.mxu0 0
    %100 = vmatpush1.bf16.msra.mxu0 0
    %101 = vmatprep.subr.bf16.mxu0 0
    %102 = vmatpush1.bf16.msra.mxu0 0
    %103 = vmatprep.subr.bf16.mxu0 0
    %104 = vmatpush1.bf16.msra.mxu0 0
    %105 = vmatprep.subr.bf16.mxu0 0
    %106 = vmatpush1.bf16.msra.mxu0 0
    %107 = vmatprep.subr.bf16.mxu0 0
    %108 = vmatpush1.bf16.msra.mxu0 0
    %109 = vmatprep.subr.bf16.mxu0 0
    %110 = vmatpush1.bf16.msra.mxu0 0
    %111 = vmatprep.subr.bf16.mxu0 0
    %112 = vmatpush1.bf16.msra.mxu0 0
    %113 = vmatprep.subr.bf16.mxu0 0
    %114 = vmatpush1.bf16.msra.mxu0 0
    %115 = vmatprep.subr.bf16.mxu0 0
    %116 = vmatpush1.bf16.msra.mxu0 0
    %117 = vmatprep.subr.bf16.mxu0 0
    %118 = vmatpush1.bf16.msra.mxu0 0
    %119 = vmatprep.mubr.bf16.mxu0 0
    %120 = vmatmul.mubr.bf16.gmra.mrb[0].mxu0 %v75
    %v121 = vpop.f32.mrb[0].mxu0
    %v122 = vadd.f32 0.0, %v121
    %v123 = vpop.f32.mrb[0].mxu0
    %v124 = vpop.f32.mrb[0].mxu0
    %v125 = vadd.f32 0.0, %v124
    %v126 = vpop.f32.mrb[0].mxu0
    %127 = vmatprep.mubr.bf16.mxu0 0
    %128 = vmatmul.mubr.bf16.gmra.mrb[0].mxu0 %v78
    %v129 = vpop.f32.mrb[0].mxu0
    %v130 = vadd.f32 0.0, %v129
    %v131 = vpop.f32.mrb[0].mxu0
    %v132 = vpop.f32.mrb[0].mxu0
    %v133 = vadd.f32 0.0, %v132
    %v134 = vpop.f32.mrb[0].mxu0
    %135 = vdwg.mxu0
    %v136 = vadd.f32 %v62, %v122
    %v137 = vadd.f32 %v63, %v125
    %v138 = vadd.f32 %v64, %v130
    %v139 = vadd.f32 %v65, %v133
    %vm140 = vcmask 261120
    %141 = vst.msk [vmem:[#allocation2] sm:$0xff] %vm140, %v136
    %142 = vst.msk [vmem:[#allocation2 + $0x8] sm:$0xff] %vm140, %v137
    %143 = vst.msk [vmem:[#allocation2 + $0x10] sm:$0xff] %vm140, %v138
    %144 = vst.msk [vmem:[#allocation2 + $0x18] sm:$0xff] %vm140, %v139
    // Predicated region
    $region30: #{ctran_forward.4} parent=1 // pred_check
      %p145 = pneg %p53
    $region31: #{ctran_forward.4} parent=1 // pred_check_branch
      %147 = sbr.rel (%p145) target = $region33
    $region32: #{ctran_forward.4} parent=1 // pred_region
      %v148 = vld [vmem:[#allocation2] sm:$0xff]
      %v149 = vld [vmem:[#allocation2 + $0x8] sm:$0xff]
      %v150 = vld [vmem:[#allocation2 + $0x10] sm:$0xff]
      %v151 = vld [vmem:[#allocation2 + $0x18] sm:$0xff]
      %v152 = vld [vmem:[#allocation8] sm:$0x1]
      %v154 = vlaneseq
      %v155 = vshrl.u32 %v154, 7
      %v156 = vsub.s32 0, %v155
      %v157 = vrot.slane %v152, %v156
      %v159 = vadd.f32 %v148, %v157
      %v160 = vadd.f32 %v149, %v157
      %v161 = vadd.f32 %v150, %v157
      %v162 = vadd.f32 %v151, %v157
      %v163 = vpack.c.bf16 %v160, %v159
      %v164 = vpack.c.bf16 %v162, %v161
      %v167 = vunpack.c.l.b16 %v163
      %v168 = vunpack.c.h.b16 %v163
      %v169 = vunpack.c.l.b16 %v164
      %v170 = vunpack.c.h.b16 %v164
      %v171 = vpack.c.b16 %v167, %v167
      %v172 = vpack.c.b16 %v168, %v168
      %v173 = vpack.c.b16 %v169, %v169
      %v174 = vpack.c.b16 %v170, %v170
      %vm179 = vcmask 257024
      %180 = vst.msk [vmem:[#allocation9] sm:$0xf] %vm179, %v171
      %181 = vst.msk [vmem:[#allocation9 + $0x4] sm:$0xf] %vm179, %v172
      %182 = vst.msk [vmem:[#allocation9 + $0x8] sm:$0xf] %vm179, %v173
      %183 = vst.msk [vmem:[#allocation9 + $0xc] sm:$0xf] %vm179, %v174
    $region33: #{ctran_forward.4} parent=1 // pred_fallthru
      _
    // Predicated region
    $region34: #{ctran_forward.4} parent=1 // pred_check
      _
    $region35: #{ctran_forward.4} parent=1 // pred_check_branch
      %185 = sbr.rel (0) target = $region37
    $region36: #{ctran_forward.4} parent=1 // pred_region
      %s187 = ssub.s32 256, 256
      %188 = vsyncadd [#allocation5], %s187
      %s189 = sshll.u32 [#allocation9], 4
      %s190 = int_to_ptr.vmem [resolvable:$true] %s189
      %195 = dma.vmem_to_hbm [thread:$0]  %s190, 256, %s3, [#allocation5], 64, 64, 4
    $region37: #{ctran_forward.4} parent=1 // pred_fallthru
      _
    // Predicated region
    $region38: #{ctran_forward.4} parent=1 // pred_check
      _
    $region39: #{ctran_forward.4} parent=1 // pred_check_branch
      %197 = sbr.rel (0) target = $region41
    $region40: #{ctran_forward.4} parent=1 // pred_region
      %198 = dma.done [#allocation5], 256
    $region41: #{ctran_forward.4} parent=1 // pred_fallthru
      _
    %199 = vsyncpa [#allocation4], 1
    %200 = vsyncpa [#allocation7], 1
    %201 = vsyncpa [#allocation5], 1

// kernel: ctran_forward.6
$region0: #{ctran_forward.6}
  #allocation0 [shape = 'u32[]', space=smem, size = 0x4, offset = 0x4, fixed_abs, tag = 'smem constant byte address 0x4 - core index']
  #allocation1 [shape = 'u32[144,128]{1,0:T(1,128)}', space=vmem, size = 0x12000, scoped, tag = 'internal scratch']
  %s0 = inlined_call_operand.hbm [shape: bf16[2,24,32], index: 0, kind: input, shape index: {}]
  %s1 = inlined_call_operand.hbm [shape: f32[1,32], index: 1, kind: input, shape index: {}]
  %s2 = inlined_call_operand.hbm [shape: f32[1,32], index: 2, kind: input, shape index: {}]
  %s3 = inlined_call_operand.hbm [shape: bf16[4,32,8], index: 3, kind: input, shape index: {}]
  %s4 = inlined_call_operand.hbm [shape: bf16[4,32,8], index: 4, kind: input, shape index: {}]
  %s5 = inlined_call_operand.hbm [shape: bf16[4,32,8], index: 5, kind: input, shape index: {}]
  %s6 = inlined_call_operand.hbm [shape: f32[4,1,8], index: 6, kind: input, shape index: {}]
  %s7 = inlined_call_operand.hbm [shape: f32[4,1,8], index: 7, kind: input, shape index: {}]
  %s8 = inlined_call_operand.hbm [shape: f32[4,1,8], index: 8, kind: input, shape index: {}]
  %s9 = inlined_call_operand.hbm [shape: bf16[4,8,32], index: 9, kind: input, shape index: {}]
  %s10 = inlined_call_operand.hbm [shape: f32[1,32], index: 10, kind: input, shape index: {}]
  %s11 = inlined_call_operand.hbm [shape: f32[1,32], index: 11, kind: input, shape index: {}]
  %s12 = inlined_call_operand.hbm [shape: f32[1,32], index: 12, kind: input, shape index: {}]
  %s13 = inlined_call_operand.hbm [shape: bf16[32,32], index: 13, kind: input, shape index: {}]
  %s14 = inlined_call_operand.hbm [shape: f32[1,32], index: 14, kind: input, shape index: {}]
  %s15 = inlined_call_operand.hbm [shape: bf16[32,32], index: 15, kind: input, shape index: {}]
  %s16 = inlined_call_operand.hbm [shape: f32[1,32], index: 16, kind: input, shape index: {}]
  %s17 = inlined_call_operand.hbm [shape: f32[1,32], index: 17, kind: input, shape index: {}]
  %s18 = inlined_call_operand.hbm [shape: f32[1,32], index: 18, kind: input, shape index: {}]
  %s19 = inlined_call_operand.hbm [shape: bf16[2,24,32], index: 19, kind: output, shape index: {0}]
  %s20 = inlined_call_operand.hbm [shape: bf16[2,24,24], index: 20, kind: output, shape index: {1}]
  %21 = xla_tuple %s19, %s20
  %s22 = sld [smem:[#allocation0]]
  $region193: #{ctran_forward.6} parent=0
    _
  %s24 = ssub.s32 1, %s22
  %s25 = scalar_select 0, %s24, %s22
  $region1: #{ctran_forward.6} parent=0
    #allocation2 [shape = 'u8[12288]{0}', space=vmem, size = 0x3000, scoped, tag = 'input window, operand 0']
    #allocation3 [shape = 's32[2]{0}', space=sflag, size = 0x8, scoped, tag = 'scoped memory for ctran_forward.6']
    #allocation4 [shape = 's32[2]{0}', space=sflag, size = 0x8, scoped, tag = 'scoped memory for ctran_forward.6']
    #allocation5 [shape = 'u8[512]{0}', space=vmem, size = 0x400, scoped, tag = 'input window, operand 1, single buffered']
    #allocation6 [shape = 's32[1]{0}', space=sflag, size = 0x4, scoped, tag = 'scoped memory for ctran_forward.6']
    #allocation7 [shape = 'u8[512]{0}', space=vmem, size = 0x400, scoped, tag = 'input window, operand 2, single buffered']
    #allocation8 [shape = 'u8[32768]{0}', space=vmem, size = 0x8000, scoped, tag = 'input window, operand 3, single buffered']
    #allocation9 [shape = 's32[1]{0}', space=sflag, size = 0x4, scoped, tag = 'scoped memory for ctran_forward.6']
    #allocation10 [shape = 'u8[32768]{0}', space=vmem, size = 0x8000, scoped, tag = 'input window, operand 4, single buffered']
    #allocation11 [shape = 'u8[32768]{0}', space=vmem, size = 0x8000, scoped, tag = 'input window, operand 5, single buffered']
    #allocation12 [shape = 's32[1]{0}', space=sflag, size = 0x4, scoped, tag = 'scoped memory for ctran_forward.6']
    #allocation13 [shape = 'u8[2048]{0}', space=vmem, size = 0x800, scoped, tag = 'input window, operand 6, single buffered']
    #allocation14 [shape = 'u8[2048]{0}', space=vmem, size = 0x800, scoped, tag = 'input window, operand 7, single buffered']
    #allocation15 [shape = 's32[1]{0}', space=sflag, size = 0x4, scoped, tag = 'scoped memory for ctran_forward.6']
    #allocation16 [shape = 'u8[2048]{0}', space=vmem, size = 0x800, scoped, tag = 'input window, operand 8, single buffered']
    #allocation17 [shape = 'u8[8192]{0}', space=vmem, size = 0x2000, scoped, tag = 'input window, operand 9, single buffered']
    #allocation18 [shape = 's32[1]{0}', space=sflag, size = 0x4, scoped, tag = 'scoped memory for ctran_forward.6']
    #allocation19 [shape = 'u8[512]{0}', space=vmem, size = 0x400, scoped, tag = 'input window, operand 10, single buffered']
    #allocation20 [shape = 'u8[512]{0}', space=vmem, size = 0x400, scoped, tag = 'input window, operand 11, single buffered']
    #allocation21 [shape = 's32[1]{0}', space=sflag, size = 0x4, scoped, tag = 'scoped memory for ctran_forward.6']
    #allocation22 [shape = 'u8[512]{0}', space=vmem, size = 0x400, scoped, tag = 'input window, operand 12, single buffered']
    #allocation23 [shape = 'u8[8192]{0}', space=vmem, size = 0x2000, scoped, tag = 'input window, operand 13, single buffered']
    #allocation24 [shape = 's32[1]{0}', space=sflag, size = 0x4, scoped, tag = 'scoped memory for ctran_forward.6']
    #allocation25 [shape = 'u8[512]{0}', space=vmem, size = 0x400, scoped, tag = 'input window, operand 14, single buffered']
    #allocation26 [shape = 'u8[8192]{0}', space=vmem, size = 0x2000, scoped, tag = 'input window, operand 15, single buffered']
    #allocation27 [shape = 's32[1]{0}', space=sflag, size = 0x4, scoped, tag = 'scoped memory for ctran_forward.6']
    #allocation28 [shape = 'u8[512]{0}', space=vmem, size = 0x400, scoped, tag = 'input window, operand 16, single buffered']
    #allocation29 [shape = 'u8[512]{0}', space=vmem, size = 0x400, scoped, tag = 'input window, operand 17, single buffered']
    #allocation30 [shape = 's32[1]{0}', space=sflag, size = 0x4, scoped, tag = 'scoped memory for ctran_forward.6']
    #allocation31 [shape = 'u8[512]{0}', space=vmem, size = 0x400, scoped, tag = 'input window, operand 18, single buffered']
    #allocation32 [shape = 'u8[12288]{0}', space=vmem, size = 0x3000, scoped, tag = 'output window, operand 0']
    #allocation33 [shape = 'u8[12288]{0}', space=vmem, size = 0x3000, scoped, tag = 'output window, operand 1']
    #allocation34 [shape = 's32[2]{0}', space=sflag, size = 0x8, scoped, tag = 'scoped memory for ctran_forward.6']
    %26 = vsyncpa [#allocation3], 0
    %s27 = scalar_lea.sflag [#allocation3], 1
    %28 = vsyncpa %s27, 0
    %29 = vsyncpa [#allocation6], 0
    %30 = vsyncpa [#allocation9], 0
    %31 = vsyncpa [#allocation12], 0
    %32 = vsyncpa [#allocation15], 0
    %33 = vsyncpa [#allocation18], 0
    %34 = vsyncpa [#allocation21], 0
    %35 = vsyncpa [#allocation24], 0
    %36 = vsyncpa [#allocation27], 0
    %37 = vsyncpa [#allocation30], 0
    %38 = vsyncpa [#allocation4], 0
    %s39 = scalar_lea.sflag [#allocation4], 1
    %40 = vsyncpa %s39, 0
    %41 = vsyncpa [#allocation34], 0
    %s42 = scalar_lea.sflag [#allocation34], 1
    %43 = vsyncpa %s42, 0
    loop: start=0, step=1, limit=4
    $region2: #{ctran_forward.6} parent=1 // loop_pre_header
      _
    $region3: #{ctran_forward.6} parent=1 // loop_header
      %s45 = sphi 0, %s49
      %p46 = scmp.ge.s32.totalorder %s45, 4
      %s55 = sphi 0, %s57
      %s58 = sphi 0, %s55
      %s59 = sphi 0, %s58
      %s75 = sphi 0, %s59
      %s79 = sphi 0, %s79
      %s81 = sphi 0, %s79
      %s82 = sphi 0, %s81
      %s96 = sphi 0, %s82
      %s100 = sphi 0, %s100
      %s102 = sphi 0, %s100
      %s103 = sphi 0, %s102
      %s117 = sphi 0, %s103
      %s121 = sphi 0, %s121
      %s123 = sphi 0, %s121
      %s124 = sphi 0, %s123
      %s138 = sphi 0, %s124
      %s142 = sphi 0, %s142
      %s144 = sphi 0, %s142
      %s145 = sphi 0, %s144
      %s159 = sphi 0, %s145
      %s163 = sphi 0, %s163
      %s165 = sphi 0, %s163
      %s166 = sphi 0, %s165
      %s180 = sphi 0, %s166
      %s184 = sphi 0, %s184
      %s186 = sphi 0, %s184
      %s187 = sphi 0, %s186
      %s201 = sphi 0, %s187
      %s205 = sphi 0, %s205
      %s207 = sphi 0, %s205
      %s208 = sphi 0, %s207
      %s222 = sphi 0, %s208
      %s226 = sphi 0, %s226
      %s228 = sphi 0, %s226
      %s229 = sphi 0, %s228
      %s243 = sphi 0, %s229
      %s247 = sphi 0, %s247
      %s249 = sphi 0, %s247
      %s250 = sphi 0, %s249
      %s264 = sphi 0, %s250
      %s268 = sphi 0, %s268
      %s270 = sphi 0, %s268
      %s271 = sphi 0, %s270
      %s285 = sphi 0, %s271
      %s289 = sphi 0, %s289
      %s291 = sphi 0, %s289
      %s292 = sphi 0, %s291
      %s306 = sphi 0, %s292
      %s310 = sphi 0, %s310
      %s312 = sphi 0, %s310
      %s313 = sphi 0, %s312
      %s327 = sphi 0, %s313
      %s331 = sphi 0, %s331
      %s333 = sphi 0, %s331
      %s334 = sphi 0, %s333
      %s348 = sphi 0, %s334
      %s352 = sphi 0, %s352
      %s354 = sphi 0, %s352
      %s355 = sphi 0, %s354
      %s369 = sphi 0, %s355
      %s373 = sphi 0, %s373
      %s375 = sphi 0, %s373
      %s376 = sphi 0, %s375
      %s390 = sphi 0, %s376
      %s394 = sphi 0, %s394
      %s396 = sphi 0, %s394
      %s397 = sphi 0, %s396
      %s411 = sphi 0, %s397
      %s415 = sphi 0, %s415
      %s417 = sphi 0, %s415
      %s418 = sphi 0, %s417
      %s432 = sphi 0, %s418
      %s436 = sphi 0, %s436
      %s438 = sphi 0, %s436
      %s439 = sphi 0, %s438
      %s453 = sphi 0, %s439
      %s459 = sphi 0, %s461
      %s462 = sphi 0, %s459
      %s463 = sphi 0, %s462
      %s479 = sphi 0, %s463
      %s485 = sphi 0, %s487
      %s488 = sphi 0, %s485
      %s489 = sphi 0, %s488
      %s505 = sphi 0, %s489
    $region4: #{ctran_forward.6} parent=1 // loop_header_branch
      %48 = sbr.rel (%p46) target = $region8
    $region5: #{ctran_forward.6} parent=1 // loop_body
      %s50 = ssub.s32 %s45, 1
      %s51 = ssub.s32 %s45, 2
      %s52 = sadd.s32 %s45, 1
      %s53 = ssub.s32 %s45, %s52
      %p54 = scmp.eq.s32.totalorder %s53, 0
      %s56 = sadd.s32 %s55, 1
      %s57 = scalar_select %p54, %s55, %s56
      %p60 = pneg %p54
      %p61 = scmp.eq.s32.totalorder %s45, 1
      %p62 = por %p60, %p61
      %p63 = scmp.ne.s32.totalorder %s55, %s58
      %p64 = scmp.eq.s32.totalorder %s45, 0
      %p65 = por %p63, %p64
      %p66 = scmp.ne.s32.totalorder %s55, %s58
      %p67 = scmp.eq.s32.totalorder %s50, 1
      %p68 = por %p66, %p67
      %p69 = scmp.ne.s32.totalorder %s58, %s59
      %p70 = scmp.eq.s32.totalorder %s50, 0
      %p71 = por %p69, %p70
      %p72 = scmp.ne.s32.totalorder %s58, %s59
      %p73 = scmp.eq.s32.totalorder %s51, 1
      %p74 = por %p72, %p73
      %p76 = scmp.ne.s32.totalorder %s59, %s75
      %p77 = scmp.eq.s32.totalorder %s51, 0
      %p78 = por %p76, %p77
      %s80 = sadd.s32 %s79, 1
      %p83 = scmp.eq.s32.totalorder %s45, 1
      %p84 = scmp.ne.s32.totalorder %s79, %s81
      %p85 = scmp.eq.s32.totalorder %s45, 0
      %p86 = por %p84, %p85
      %p87 = scmp.ne.s32.totalorder %s79, %s81
      %p88 = scmp.eq.s32.totalorder %s50, 1
      %p89 = por %p87, %p88
      %p90 = scmp.ne.s32.totalorder %s81, %s82
      %p91 = scmp.eq.s32.totalorder %s50, 0
      %p92 = por %p90, %p91
      %p93 = scmp.ne.s32.totalorder %s81, %s82
      %p94 = scmp.eq.s32.totalorder %s51, 1
      %p95 = por %p93, %p94
      %p97 = scmp.ne.s32.totalorder %s82, %s96
      %p98 = scmp.eq.s32.totalorder %s51, 0
      %p99 = por %p97, %p98
      %s101 = sadd.s32 %s100, 1
      %p104 = scmp.eq.s32.totalorder %s45, 1
      %p105 = scmp.ne.s32.totalorder %s100, %s102
      %p106 = scmp.eq.s32.totalorder %s45, 0
      %p107 = por %p105, %p106
      %p108 = scmp.ne.s32.totalorder %s100, %s102
      %p109 = scmp.eq.s32.totalorder %s50, 1
      %p110 = por %p108, %p109
      %p111 = scmp.ne.s32.totalorder %s102, %s103
      %p112 = scmp.eq.s32.totalorder %s50, 0
      %p113 = por %p111, %p112
      %p114 = scmp.ne.s32.totalorder %s102, %s103
      %p115 = scmp.eq.s32.totalorder %s51, 1
      %p116 = por %p114, %p115
      %p118 = scmp.ne.s32.totalorder %s103, %s117
      %p119 = scmp.eq.s32.totalorder %s51, 0
      %p120 = por %p118, %p119
      %s122 = sadd.s32 %s121, 1
      %p125 = scmp.eq.s32.totalorder %s45, 1
      %p126 = scmp.ne.s32.totalorder %s121, %s123
      %p127 = scmp.eq.s32.totalorder %s45, 0
      %p128 = por %p126, %p127
      %p129 = scmp.ne.s32.totalorder %s121, %s123
      %p130 = scmp.eq.s32.totalorder %s50, 1
      %p131 = por %p129, %p130
      %p132 = scmp.ne.s32.totalorder %s123, %s124
      %p133 = scmp.eq.s32.totalorder %s50, 0
      %p134 = por %p132, %p133
      %p135 = scmp.ne.s32.totalorder %s123, %s124
      %p136 = scmp.eq.s32.totalorder %s51, 1
      %p137 = por %p135, %p136
      %p139 = scmp.ne.s32.totalorder %s124, %s138
      %p140 = scmp.eq.s32.totalorder %s51, 0
      %p141 = por %p139, %p140
      %s143 = sadd.s32 %s142, 1
      %p146 = scmp.eq.s32.totalorder %s45, 1
      %p147 = scmp.ne.s32.totalorder %s142, %s144
      %p148 = scmp.eq.s32.totalorder %s45, 0
      %p149 = por %p147, %p148
      %p150 = scmp.ne.s32.totalorder %s142, %s144
      %p151 = scmp.eq.s32.totalorder %s50, 1
      %p152 = por %p150, %p151
      %p153 = scmp.ne.s32.totalorder %s144, %s145
      %p154 = scmp.eq.s32.totalorder %s50, 0
      %p155 = por %p153, %p154
      %p156 = scmp.ne.s32.totalorder %s144, %s145
      %p157 = scmp.eq.s32.totalorder %s51, 1
      %p158 = por %p156, %p157
      %p160 = scmp.ne.s32.totalorder %s145, %s159
      %p161 = scmp.eq.s32.totalorder %s51, 0
      %p162 = por %p160, %p161
      %s164 = sadd.s32 %s163, 1
      %p167 = scmp.eq.s32.totalorder %s45, 1
      %p168 = scmp.ne.s32.totalorder %s163, %s165
      %p169 = scmp.eq.s32.totalorder %s45, 0
      %p170 = por %p168, %p169
      %p171 = scmp.ne.s32.totalorder %s163, %s165
      %p172 = scmp.eq.s32.totalorder %s50, 1
      %p173 = por %p171, %p172
      %p174 = scmp.ne.s32.totalorder %s165, %s166
      %p175 = scmp.eq.s32.totalorder %s50, 0
      %p176 = por %p174, %p175
      %p177 = scmp.ne.s32.totalorder %s165, %s166
      %p178 = scmp.eq.s32.totalorder %s51, 1
      %p179 = por %p177, %p178
      %p181 = scmp.ne.s32.totalorder %s166, %s180
      %p182 = scmp.eq.s32.totalorder %s51, 0
      %p183 = por %p181, %p182
      %s185 = sadd.s32 %s184, 1
      %p188 = scmp.eq.s32.totalorder %s45, 1
      %p189 = scmp.ne.s32.totalorder %s184, %s186
      %p190 = scmp.eq.s32.totalorder %s45, 0
      %p191 = por %p189, %p190
      %p192 = scmp.ne.s32.totalorder %s184, %s186
      %p193 = scmp.eq.s32.totalorder %s50, 1
      %p194 = por %p192, %p193
      %p195 = scmp.ne.s32.totalorder %s186, %s187
      %p196 = scmp.eq.s32.totalorder %s50, 0
      %p197 = por %p195, %p196
      %p198 = scmp.ne.s32.totalorder %s186, %s187
      %p199 = scmp.eq.s32.totalorder %s51, 1
      %p200 = por %p198, %p199
      %p202 = scmp.ne.s32.totalorder %s187, %s201
      %p203 = scmp.eq.s32.totalorder %s51, 0
      %p204 = por %p202, %p203
      %s206 = sadd.s32 %s205, 1
      %p209 = scmp.eq.s32.totalorder %s45, 1
      %p210 = scmp.ne.s32.totalorder %s205, %s207
      %p211 = scmp.eq.s32.totalorder %s45, 0
      %p212 = por %p210, %p211
      %p213 = scmp.ne.s32.totalorder %s205, %s207
      %p214 = scmp.eq.s32.totalorder %s50, 1
      %p215 = por %p213, %p214
      %p216 = scmp.ne.s32.totalorder %s207, %s208
      %p217 = scmp.eq.s32.totalorder %s50, 0
      %p218 = por %p216, %p217
      %p219 = scmp.ne.s32.totalorder %s207, %s208
      %p220 = scmp.eq.s32.totalorder %s51, 1
      %p221 = por %p219, %p220
      %p223 = scmp.ne.s32.totalorder %s208, %s222
      %p224 = scmp.eq.s32.totalorder %s51, 0
      %p225 = por %p223, %p224
      %s227 = sadd.s32 %s226, 1
      %p230 = scmp.eq.s32.totalorder %s45, 1
      %p231 = scmp.ne.s32.totalorder %s226, %s228
      %p232 = scmp.eq.s32.totalorder %s45, 0
      %p233 = por %p231, %p232
      %p234 = scmp.ne.s32.totalorder %s226, %s228
      %p235 = scmp.eq.s32.totalorder %s50, 1
      %p236 = por %p234, %p235
      %p237 = scmp.ne.s32.totalorder %s228, %s229
      %p238 = scmp.eq.s32.totalorder %s50, 0
      %p239 = por %p237, %p238
      %p240 = scmp.ne.s32.totalorder %s228, %s229
      %p241 = scmp.eq.s32.totalorder %s51, 1
      %p242 = por %p240, %p241
      %p244 = scmp.ne.s32.totalorder %s229, %s243
      %p245 = scmp.eq.s32.totalorder %s51, 0
      %p246 = por %p244, %p245
      %s248 = sadd.s32 %s247, 1
      %p251 = scmp.eq.s32.totalorder %s45, 1
      %p252 = scmp.ne.s32.totalorder %s247, %s249
      %p253 = scmp.eq.s32.totalorder %s45, 0
      %p254 = por %p252, %p253
      %p255 = scmp.ne.s32.totalorder %s247, %s249
      %p256 = scmp.eq.s32.totalorder %s50, 1
      %p257 = por %p255, %p256
      %p258 = scmp.ne.s32.totalorder %s249, %s250
      %p259 = scmp.eq.s32.totalorder %s50, 0
      %p260 = por %p258, %p259
      %p261 = scmp.ne.s32.totalorder %s249, %s250
      %p262 = scmp.eq.s32.totalorder %s51, 1
      %p263 = por %p261, %p262
      %p265 = scmp.ne.s32.totalorder %s250, %s264
      %p266 = scmp.eq.s32.totalorder %s51, 0
      %p267 = por %p265, %p266
      %s269 = sadd.s32 %s268, 1
      %p272 = scmp.eq.s32.totalorder %s45, 1
      %p273 = scmp.ne.s32.totalorder %s268, %s270
      %p274 = scmp.eq.s32.totalorder %s45, 0
      %p275 = por %p273, %p274
      %p276 = scmp.ne.s32.totalorder %s268, %s270
      %p277 = scmp.eq.s32.totalorder %s50, 1
      %p278 = por %p276, %p277
      %p279 = scmp.ne.s32.totalorder %s270, %s271
      %p280 = scmp.eq.s32.totalorder %s50, 0
      %p281 = por %p279, %p280
      %p282 = scmp.ne.s32.totalorder %s270, %s271
      %p283 = scmp.eq.s32.totalorder %s51, 1
      %p284 = por %p282, %p283
      %p286 = scmp.ne.s32.totalorder %s271, %s285
      %p287 = scmp.eq.s32.totalorder %s51, 0
      %p288 = por %p286, %p287
      %s290 = sadd.s32 %s289, 1
      %p293 = scmp.eq.s32.totalorder %s45, 1
      %p294 = scmp.ne.s32.totalorder %s289, %s291
      %p295 = scmp.eq.s32.totalorder %s45, 0
      %p296 = por %p294, %p295
      %p297 = scmp.ne.s32.totalorder %s289, %s291
      %p298 = scmp.eq.s32.totalorder %s50, 1
      %p299 = por %p297, %p298
      %p300 = scmp.ne.s32.totalorder %s291, %s292
      %p301 = scmp.eq.s32.totalorder %s50, 0
      %p302 = por %p300, %p301
      %p303 = scmp.ne.s32.totalorder %s291, %s292
      %p304 = scmp.eq.s32.totalorder %s51, 1
      %p305 = por %p303, %p304
      %p307 = scmp.ne.s32.totalorder %s292, %s306
      %p308 = scmp.eq.s32.totalorder %s51, 0
      %p309 = por %p307, %p308
      %s311 = sadd.s32 %s310, 1
      %p314 = scmp.eq.s32.totalorder %s45, 1
      %p315 = scmp.ne.s32.totalorder %s310, %s312
      %p316 = scmp.eq.s32.totalorder %s45, 0
      %p317 = por %p315, %p316
      %p318 = scmp.ne.s32.totalorder %s310, %s312
      %p319 = scmp.eq.s32.totalorder %s50, 1
      %p320 = por %p318, %p319
      %p321 = scmp.ne.s32.totalorder %s312, %s313
      %p322 = scmp.eq.s32.totalorder %s50, 0
      %p323 = por %p321, %p322
      %p324 = scmp.ne.s32.totalorder %s312, %s313
      %p325 = scmp.eq.s32.totalorder %s51, 1
      %p326 = por %p324, %p325
      %p328 = scmp.ne.s32.totalorder %s313, %s327
      %p329 = scmp.eq.s32.totalorder %s51, 0
      %p330 = por %p328, %p329
      %s332 = sadd.s32 %s331, 1
      %p335 = scmp.eq.s32.totalorder %s45, 1
      %p336 = scmp.ne.s32.totalorder %s331, %s333
      %p337 = scmp.eq.s32.totalorder %s45, 0
      %p338 = por %p336, %p337
      %p339 = scmp.ne.s32.totalorder %s331, %s333
      %p340 = scmp.eq.s32.totalorder %s50, 1
      %p341 = por %p339, %p340
      %p342 = scmp.ne.s32.totalorder %s333, %s334
      %p343 = scmp.eq.s32.totalorder %s50, 0
      %p344 = por %p342, %p343
      %p345 = scmp.ne.s32.totalorder %s333, %s334
      %p346 = scmp.eq.s32.totalorder %s51, 1
      %p347 = por %p345, %p346
      %p349 = scmp.ne.s32.totalorder %s334, %s348
      %p350 = scmp.eq.s32.totalorder %s51, 0
      %p351 = por %p349, %p350
      %s353 = sadd.s32 %s352, 1
      %p356 = scmp.eq.s32.totalorder %s45, 1
      %p357 = scmp.ne.s32.totalorder %s352, %s354
      %p358 = scmp.eq.s32.totalorder %s45, 0
      %p359 = por %p357, %p358
      %p360 = scmp.ne.s32.totalorder %s352, %s354
      %p361 = scmp.eq.s32.totalorder %s50, 1
      %p362 = por %p360, %p361
      %p363 = scmp.ne.s32.totalorder %s354, %s355
      %p364 = scmp.eq.s32.totalorder %s50, 0
      %p365 = por %p363, %p364
      %p366 = scmp.ne.s32.totalorder %s354, %s355
      %p367 = scmp.eq.s32.totalorder %s51, 1
      %p368 = por %p366, %p367
      %p370 = scmp.ne.s32.totalorder %s355, %s369
      %p371 = scmp.eq.s32.totalorder %s51, 0
      %p372 = por %p370, %p371
      %s374 = sadd.s32 %s373, 1
      %p377 = scmp.eq.s32.totalorder %s45, 1
      %p378 = scmp.ne.s32.totalorder %s373, %s375
      %p379 = scmp.eq.s32.totalorder %s45, 0
      %p380 = por %p378, %p379
      %p381 = scmp.ne.s32.totalorder %s373, %s375
      %p382 = scmp.eq.s32.totalorder %s50, 1
      %p383 = por %p381, %p382
      %p384 = scmp.ne.s32.totalorder %s375, %s376
      %p385 = scmp.eq.s32.totalorder %s50, 0
      %p386 = por %p384, %p385
      %p387 = scmp.ne.s32.totalorder %s375, %s376
      %p388 = scmp.eq.s32.totalorder %s51, 1
      %p389 = por %p387, %p388
      %p391 = scmp.ne.s32.totalorder %s376, %s390
      %p392 = scmp.eq.s32.totalorder %s51, 0
      %p393 = por %p391, %p392
      %s395 = sadd.s32 %s394, 1
      %p398 = scmp.eq.s32.totalorder %s45, 1
      %p399 = scmp.ne.s32.totalorder %s394, %s396
      %p400 = scmp.eq.s32.totalorder %s45, 0
      %p401 = por %p399, %p400
      %p402 = scmp.ne.s32.totalorder %s394, %s396
      %p403 = scmp.eq.s32.totalorder %s50, 1
      %p404 = por %p402, %p403
      %p405 = scmp.ne.s32.totalorder %s396, %s397
      %p406 = scmp.eq.s32.totalorder %s50, 0
      %p407 = por %p405, %p406
      %p408 = scmp.ne.s32.totalorder %s396, %s397
      %p409 = scmp.eq.s32.totalorder %s51, 1
      %p410 = por %p408, %p409
      %p412 = scmp.ne.s32.totalorder %s397, %s411
      %p413 = scmp.eq.s32.totalorder %s51, 0
      %p414 = por %p412, %p413
      %s416 = sadd.s32 %s415, 1
      %p419 = scmp.eq.s32.totalorder %s45, 1
      %p420 = scmp.ne.s32.totalorder %s415, %s417
      %p421 = scmp.eq.s32.totalorder %s45, 0
      %p422 = por %p420, %p421
      %p423 = scmp.ne.s32.totalorder %s415, %s417
      %p424 = scmp.eq.s32.totalorder %s50, 1
      %p425 = por %p423, %p424
      %p426 = scmp.ne.s32.totalorder %s417, %s418
      %p427 = scmp.eq.s32.totalorder %s50, 0
      %p428 = por %p426, %p427
      %p429 = scmp.ne.s32.totalorder %s417, %s418
      %p430 = scmp.eq.s32.totalorder %s51, 1
      %p431 = por %p429, %p430
      %p433 = scmp.ne.s32.totalorder %s418, %s432
      %p434 = scmp.eq.s32.totalorder %s51, 0
      %p435 = por %p433, %p434
      %s437 = sadd.s32 %s436, 1
      %p440 = scmp.eq.s32.totalorder %s45, 1
      %p441 = scmp.ne.s32.totalorder %s436, %s438
      %p442 = scmp.eq.s32.totalorder %s45, 0
      %p443 = por %p441, %p442
      %p444 = scmp.ne.s32.totalorder %s436, %s438
      %p445 = scmp.eq.s32.totalorder %s50, 1
      %p446 = por %p444, %p445
      %p447 = scmp.ne.s32.totalorder %s438, %s439
      %p448 = scmp.eq.s32.totalorder %s50, 0
      %p449 = por %p447, %p448
      %p450 = scmp.ne.s32.totalorder %s438, %s439
      %p451 = scmp.eq.s32.totalorder %s51, 1
      %p452 = por %p450, %p451
      %p454 = scmp.ne.s32.totalorder %s439, %s453
      %p455 = scmp.eq.s32.totalorder %s51, 0
      %p456 = por %p454, %p455
      %s457 = ssub.s32 %s45, %s52
      %p458 = scmp.eq.s32.totalorder %s457, 0
      %s460 = sadd.s32 %s459, 1
      %s461 = scalar_select %p458, %s459, %s460
      %p464 = pneg %p458
      %p465 = scmp.eq.s32.totalorder %s45, 1
      %p466 = por %p464, %p465
      %p467 = scmp.ne.s32.totalorder %s459, %s462
      %p468 = scmp.eq.s32.totalorder %s45, 0
      %p469 = por %p467, %p468
      %p470 = scmp.ne.s32.totalorder %s459, %s462
      %p471 = scmp.eq.s32.totalorder %s50, 1
      %p472 = por %p470, %p471
      %p473 = scmp.ne.s32.totalorder %s462, %s463
      %p474 = scmp.eq.s32.totalorder %s50, 0
      %p475 = por %p473, %p474
      %p476 = scmp.ne.s32.totalorder %s462, %s463
      %p477 = scmp.eq.s32.totalorder %s51, 1
      %p478 = por %p476, %p477
      %p480 = scmp.ne.s32.totalorder %s463, %s479
      %p481 = scmp.eq.s32.totalorder %s51, 0
      %p482 = por %p480, %p481
      %s483 = ssub.s32 %s45, %s52
      %p484 = scmp.eq.s32.totalorder %s483, 0
      %s486 = sadd.s32 %s485, 1
      %s487 = scalar_select %p484, %s485, %s486
      %p490 = pneg %p484
      %p491 = scmp.eq.s32.totalorder %s45, 1
      %p492 = por %p490, %p491
      %p493 = scmp.ne.s32.totalorder %s485, %s488
      %p494 = scmp.eq.s32.totalorder %s45, 0
      %p495 = por %p493, %p494
      %p496 = scmp.ne.s32.totalorder %s485, %s488
      %p497 = scmp.eq.s32.totalorder %s50, 1
      %p498 = por %p496, %p497
      %p499 = scmp.ne.s32.totalorder %s488, %s489
      %p500 = scmp.eq.s32.totalorder %s50, 0
      %p501 = por %p499, %p500
      %p502 = scmp.ne.s32.totalorder %s488, %s489
      %p503 = scmp.eq.s32.totalorder %s51, 1
      %p504 = por %p502, %p503
      %p506 = scmp.ne.s32.totalorder %s489, %s505
      %p507 = scmp.eq.s32.totalorder %s51, 0
      %p508 = por %p506, %p507
      %p509 = scmp.le.s32.totalorder 1, %s45
      %p510 = scmp.lt.s32.totalorder %s45, 3
      %p511 = pnand %p509, %p510
      %p512 = pneg %p511
      // Predicated region
      $region9: #{ctran_forward.6} parent=5 // pred_check
        _
      $region10: #{ctran_forward.6} parent=5 // pred_check_branch
        %514 = sbr.rel (%p511) target = $region12
      $region11: #{ctran_forward.6} parent=5 // pred_region
        %s515 = ssub.s32 %s45, 1
        // Predicated region
        $region13: #{ctran_forward.6} parent=11 // pred_check
          %p516 = pneg %p92
        $region14: #{ctran_forward.6} parent=11 // pred_check_branch
          %518 = sbr.rel (%p516) target = $region16
        $region15: #{ctran_forward.6} parent=11 // pred_region
          %s520 = ssub.s32 16, 16
          %521 = vsyncadd [#allocation6], %s520
          %s523 = sshll.u32 [#allocation5], 4
          %s524 = int_to_ptr.vmem [resolvable:$true] %s523
          %526 = dma.hbm_to_vmem [thread:$0]  %s1, 16, %s524, [#allocation6]
        $region16: #{ctran_forward.6} parent=11 // pred_fallthru
          _
        // Predicated region
        $region17: #{ctran_forward.6} parent=11 // pred_check
          %p527 = pneg %p113
        $region18: #{ctran_forward.6} parent=11 // pred_check_branch
          %529 = sbr.rel (%p527) target = $region20
        $region19: #{ctran_forward.6} parent=11 // pred_region
          %s531 = ssub.s32 16, 16
          %532 = vsyncadd [#allocation6], %s531
          %s534 = sshll.u32 [#allocation7], 4
          %s535 = int_to_ptr.vmem [resolvable:$true] %s534
          %537 = dma.hbm_to_vmem [thread:$0]  %s2, 16, %s535, [#allocation6]
        $region20: #{ctran_forward.6} parent=11 // pred_fallthru
          _
        // Predicated region
        $region21: #{ctran_forward.6} parent=11 // pred_check
          %p538 = pneg %p134
        $region22: #{ctran_forward.6} parent=11 // pred_check_branch
          %540 = sbr.rel (%p538) target = $region24
        $region23: #{ctran_forward.6} parent=11 // pred_region
          %s542 = ssub.s32 1024, 1024
          %543 = vsyncadd [#allocation9], %s542
          %s544 = sshll.u32 [#allocation8], 4
          %s545 = int_to_ptr.vmem [resolvable:$true] %s544
          %550 = dma.hbm_to_vmem [thread:$0]  %s3, 1024, %s545, [#allocation9], 64, 64, 4
        $region24: #{ctran_forward.6} parent=11 // pred_fallthru
          _
        // Predicated region
        $region25: #{ctran_forward.6} parent=11 // pred_check
          %p551 = pneg %p155
        $region26: #{ctran_forward.6} parent=11 // pred_check_branch
          %553 = sbr.rel (%p551) target = $region28
        $region27: #{ctran_forward.6} parent=11 // pred_region
          %s555 = ssub.s32 1024, 1024
          %556 = vsyncadd [#allocation9], %s555
          %s557 = sshll.u32 [#allocation10], 4
          %s558 = int_to_ptr.vmem [resolvable:$true] %s557
          %563 = dma.hbm_to_vmem [thread:$0]  %s4, 1024, %s558, [#allocation9], 64, 64, 4
        $region28: #{ctran_forward.6} parent=11 // pred_fallthru
          _
        // Predicated region
        $region29: #{ctran_forward.6} parent=11 // pred_check
          %p564 = pneg %p176
        $region30: #{ctran_forward.6} parent=11 // pred_check_branch
          %566 = sbr.rel (%p564) target = $region32
        $region31: #{ctran_forward.6} parent=11 // pred_region
          %s568 = ssub.s32 1024, 1024
          %569 = vsyncadd [#allocation12], %s568
          %s570 = sshll.u32 [#allocation11], 4
          %s571 = int_to_ptr.vmem [resolvable:$true] %s570
          %576 = dma.hbm_to_vmem [thread:$0]  %s5, 1024, %s571, [#allocation12], 64, 64, 4
        $region32: #{ctran_forward.6} parent=11 // pred_fallthru
          _
        // Predicated region
        $region33: #{ctran_forward.6} parent=11 // pred_check
          %p577 = pneg %p197
        $region34: #{ctran_forward.6} parent=11 // pred_check_branch
          %579 = sbr.rel (%p577) target = $region36
        $region35: #{ctran_forward.6} parent=11 // pred_region
          %s581 = ssub.s32 64, 64
          %582 = vsyncadd [#allocation12], %s581
          %s583 = sshll.u32 [#allocation13], 4
          %s584 = int_to_ptr.vmem [resolvable:$true] %s583
          %589 = dma.hbm_to_vmem [thread:$0]  %s6, 64, %s584, [#allocation12], 16, 16, 1
        $region36: #{ctran_forward.6} parent=11 // pred_fallthru
          _
        // Predicated region
        $region37: #{ctran_forward.6} parent=11 // pred_check
          %p590 = pneg %p218
        $region38: #{ctran_forward.6} parent=11 // pred_check_branch
          %592 = sbr.rel (%p590) target = $region40
        $region39: #{ctran_forward.6} parent=11 // pred_region
          %s594 = ssub.s32 64, 64
          %595 = vsyncadd [#allocation15], %s594
          %s596 = sshll.u32 [#allocation14], 4
          %s597 = int_to_ptr.vmem [resolvable:$true] %s596
          %602 = dma.hbm_to_vmem [thread:$0]  %s7, 64, %s597, [#allocation15], 16, 16, 1
        $region40: #{ctran_forward.6} parent=11 // pred_fallthru
          _
        // Predicated region
        $region41: #{ctran_forward.6} parent=11 // pred_check
          %p603 = pneg %p239
        $region42: #{ctran_forward.6} parent=11 // pred_check_branch
          %605 = sbr.rel (%p603) target = $region44
        $region43: #{ctran_forward.6} parent=11 // pred_region
          %s607 = ssub.s32 64, 64
          %608 = vsyncadd [#allocation15], %s607
          %s609 = sshll.u32 [#allocation16], 4
          %s610 = int_to_ptr.vmem [resolvable:$true] %s609
          %615 = dma.hbm_to_vmem [thread:$0]  %s8, 64, %s610, [#allocation15], 16, 16, 1
        $region44: #{ctran_forward.6} parent=11 // pred_fallthru
          _
        // Predicated region
        $region45: #{ctran_forward.6} parent=11 // pred_check
          %p616 = pneg %p260
        $region46: #{ctran_forward.6} parent=11 // pred_check_branch
          %618 = sbr.rel (%p616) target = $region48
        $region47: #{ctran_forward.6} parent=11 // pred_region
          %s620 = ssub.s32 256, 256
          %621 = vsyncadd [#allocation18], %s620
          %s622 = sshll.u32 [#allocation17], 4
          %s623 = int_to_ptr.vmem [resolvable:$true] %s622
          %628 = dma.hbm_to_vmem [thread:$0]  %s9, 256, %s623, [#allocation18], 64, 64, 4
        $region48: #{ctran_forward.6} parent=11 // pred_fallthru
          _
        // Predicated region
        $region49: #{ctran_forward.6} parent=11 // pred_check
          %p629 = pneg %p281
        $region50: #{ctran_forward.6} parent=11 // pred_check_branch
          %631 = sbr.rel (%p629) target = $region52
        $region51: #{ctran_forward.6} parent=11 // pred_region
          %s633 = ssub.s32 16, 16
          %634 = vsyncadd [#allocation18], %s633
          %s636 = sshll.u32 [#allocation19], 4
          %s637 = int_to_ptr.vmem [resolvable:$true] %s636
          %639 = dma.hbm_to_vmem [thread:$0]  %s10, 16, %s637, [#allocation18]
        $region52: #{ctran_forward.6} parent=11 // pred_fallthru
          _
        // Predicated region
        $region53: #{ctran_forward.6} parent=11 // pred_check
          %p640 = pneg %p302
        $region54: #{ctran_forward.6} parent=11 // pred_check_branch
          %642 = sbr.rel (%p640) target = $region56
        $region55: #{ctran_forward.6} parent=11 // pred_region
          %s644 = ssub.s32 16, 16
          %645 = vsyncadd [#allocation21], %s644
          %s647 = sshll.u32 [#allocation20], 4
          %s648 = int_to_ptr.vmem [resolvable:$true] %s647
          %650 = dma.hbm_to_vmem [thread:$0]  %s11, 16, %s648, [#allocation21]
        $region56: #{ctran_forward.6} parent=11 // pred_fallthru
          _
        // Predicated region
        $region57: #{ctran_forward.6} parent=11 // pred_check
          %p651 = pneg %p323
        $region58: #{ctran_forward.6} parent=11 // pred_check_branch
          %653 = sbr.rel (%p651) target = $region60
        $region59: #{ctran_forward.6} parent=11 // pred_region
          %s655 = ssub.s32 16, 16
          %656 = vsyncadd [#allocation21], %s655
          %s658 = sshll.u32 [#allocation22], 4
          %s659 = int_to_ptr.vmem [resolvable:$true] %s658
          %661 = dma.hbm_to_vmem [thread:$0]  %s12, 16, %s659, [#allocation21]
        $region60: #{ctran_forward.6} parent=11 // pred_fallthru
          _
        // Predicated region
        $region61: #{ctran_forward.6} parent=11 // pred_check
          %p662 = pneg %p344
        $region62: #{ctran_forward.6} parent=11 // pred_check_branch
          %664 = sbr.rel (%p662) target = $region64
        $region63: #{ctran_forward.6} parent=11 // pred_region
          %s666 = ssub.s32 256, 256
          %667 = vsyncadd [#allocation24], %s666
          %s668 = sshll.u32 [#allocation23], 4
          %s669 = int_to_ptr.vmem [resolvable:$true] %s668
          %674 = dma.hbm_to_vmem [thread:$0]  %s13, 256, %s669, [#allocation24], 64, 64, 4
        $region64: #{ctran_forward.6} parent=11 // pred_fallthru
          _
        // Predicated region
        $region65: #{ctran_forward.6} parent=11 // pred_check
          %p675 = pneg %p365
        $region66: #{ctran_forward.6} parent=11 // pred_check_branch
          %677 = sbr.rel (%p675) target = $region68
        $region67: #{ctran_forward.6} parent=11 // pred_region
          %s679 = ssub.s32 16, 16
          %680 = vsyncadd [#allocation24], %s679
          %s682 = sshll.u32 [#allocation25], 4
          %s683 = int_to_ptr.vmem [resolvable:$true] %s682
          %685 = dma.hbm_to_vmem [thread:$0]  %s14, 16, %s683, [#allocation24]
        $region68: #{ctran_forward.6} parent=11 // pred_fallthru
          _
        // Predicated region
        $region69: #{ctran_forward.6} parent=11 // pred_check
          %p686 = pneg %p386
        $region70: #{ctran_forward.6} parent=11 // pred_check_branch
          %688 = sbr.rel (%p686) target = $region72
        $region71: #{ctran_forward.6} parent=11 // pred_region
          %s690 = ssub.s32 256, 256
          %691 = vsyncadd [#allocation27], %s690
          %s692 = sshll.u32 [#allocation26], 4
          %s693 = int_to_ptr.vmem [resolvable:$true] %s692
          %698 = dma.hbm_to_vmem [thread:$0]  %s15, 256, %s693, [#allocation27], 64, 64, 4
        $region72: #{ctran_forward.6} parent=11 // pred_fallthru
          _
        // Predicated region
        $region73: #{ctran_forward.6} parent=11 // pred_check
          %p699 = pneg %p407
        $region74: #{ctran_forward.6} parent=11 // pred_check_branch
          %701 = sbr.rel (%p699) target = $region76
        $region75: #{ctran_forward.6} parent=11 // pred_region
          %s703 = ssub.s32 16, 16
          %704 = vsyncadd [#allocation27], %s703
          %s706 = sshll.u32 [#allocation28], 4
          %s707 = int_to_ptr.vmem [resolvable:$true] %s706
          %709 = dma.hbm_to_vmem [thread:$0]  %s16, 16, %s707, [#allocation27]
        $region76: #{ctran_forward.6} parent=11 // pred_fallthru
          _
        // Predicated region
        $region77: #{ctran_forward.6} parent=11 // pred_check
          %p710 = pneg %p428
        $region78: #{ctran_forward.6} parent=11 // pred_check_branch
          %712 = sbr.rel (%p710) target = $region80
        $region79: #{ctran_forward.6} parent=11 // pred_region
          %s714 = ssub.s32 16, 16
          %715 = vsyncadd [#allocation30], %s714
          %s717 = sshll.u32 [#allocation29], 4
          %s718 = int_to_ptr.vmem [resolvable:$true] %s717
          %720 = dma.hbm_to_vmem [thread:$0]  %s17, 16, %s718, [#allocation30]
        $region80: #{ctran_forward.6} parent=11 // pred_fallthru
          _
        // Predicated region
        $region81: #{ctran_forward.6} parent=11 // pred_check
          %p721 = pneg %p449
        $region82: #{ctran_forward.6} parent=11 // pred_check_branch
          %723 = sbr.rel (%p721) target = $region84
        $region83: #{ctran_forward.6} parent=11 // pred_region
          %s725 = ssub.s32 16, 16
          %726 = vsyncadd [#allocation30], %s725
          %s728 = sshll.u32 [#allocation31], 4
          %s729 = int_to_ptr.vmem [resolvable:$true] %s728
          %731 = dma.hbm_to_vmem [thread:$0]  %s18, 16, %s729, [#allocation30]
        $region84: #{ctran_forward.6} parent=11 // pred_fallthru
          _
      $region12: #{ctran_forward.6} parent=5 // pred_fallthru
        _
      %p732 = scmp.lt.s32.totalorder %s45, 2
      // Predicated region
      $region85: #{ctran_forward.6} parent=5 // pred_check
        %p733 = pneg %p732
      $region86: #{ctran_forward.6} parent=5 // pred_check_branch
        %735 = sbr.rel (%p733) target = $region88
      $region87: #{ctran_forward.6} parent=5 // pred_region
        // Predicated region
        $region89: #{ctran_forward.6} parent=87 // pred_check
          %p736 = pneg %p65
        $region90: #{ctran_forward.6} parent=87 // pred_check_branch
          %738 = sbr.rel (%p736) target = $region92
        $region91: #{ctran_forward.6} parent=87 // pred_region
          %s739 = sand.u32 %s55, 1
          %s740 = scalar_lea.sflag [#allocation3], %s739
          %s741 = sand.u32 %s55, 1
          %s742 = smul.addr %s741, 12
          %s743 = scalar_lea.vmem [#allocation2], %s742
          %s745 = ssub.s32 192, 192
          %746 = vsyncadd %s740, %s745
          %s747 = smul.addr %s45, 3
          %s748 = smul.addr %s747, 64
          %s749 = scalar_lea.hbm %s0, %s748
          %s750 = sshll.u32 %s743, 4
          %s751 = int_to_ptr.vmem [resolvable:$true] %s750
          %756 = dma.hbm_to_vmem [thread:$0]  %s749, 192, %s751, %s740, 64, 64, 4
        $region92: #{ctran_forward.6} parent=87 // pred_fallthru
          _
      $region88: #{ctran_forward.6} parent=5 // pred_fallthru
        _
      %p757 = scmp.le.s32.totalorder 1, %s45
      %p758 = scmp.lt.s32.totalorder %s45, 3
      %p759 = pnand %p757, %p758
      %p760 = pneg %p759
      // Predicated region
      $region93: #{ctran_forward.6} parent=5 // pred_check
        _
      $region94: #{ctran_forward.6} parent=5 // pred_check_branch
        %762 = sbr.rel (%p759) target = $region96
      $region95: #{ctran_forward.6} parent=5 // pred_region
        %s763 = ssub.s32 %s45, 1
        %s764 = sand.u32 %s58, 1
        %s765 = scalar_lea.sflag [#allocation3], %s764
        %s766 = sand.u32 %s58, 1
        %s767 = smul.addr %s766, 12
        %s768 = scalar_lea.vmem [#allocation2], %s767
        // Predicated region
        $region97: #{ctran_forward.6} parent=95 // pred_check
          %p769 = pneg %p71
        $region98: #{ctran_forward.6} parent=95 // pred_check_branch
          %771 = sbr.rel (%p769) target = $region100
        $region99: #{ctran_forward.6} parent=95 // pred_region
          %772 = dma.done %s765, 192
        $region100: #{ctran_forward.6} parent=95 // pred_fallthru
          _
        // Predicated region
        $region101: #{ctran_forward.6} parent=95 // pred_check
          %p773 = pneg %p92
        $region102: #{ctran_forward.6} parent=95 // pred_check_branch
          %775 = sbr.rel (%p773) target = $region104
        $region103: #{ctran_forward.6} parent=95 // pred_region
          %776 = dma.done [#allocation6], 16
        $region104: #{ctran_forward.6} parent=95 // pred_fallthru
          _
        // Predicated region
        $region105: #{ctran_forward.6} parent=95 // pred_check
          %p777 = pneg %p113
        $region106: #{ctran_forward.6} parent=95 // pred_check_branch
          %779 = sbr.rel (%p777) target = $region108
        $region107: #{ctran_forward.6} parent=95 // pred_region
          %780 = dma.done [#allocation6], 16
        $region108: #{ctran_forward.6} parent=95 // pred_fallthru
          _
        // Predicated region
        $region109: #{ctran_forward.6} parent=95 // pred_check
          %p781 = pneg %p134
        $region110: #{ctran_forward.6} parent=95 // pred_check_branch
          %783 = sbr.rel (%p781) target = $region112
        $region111: #{ctran_forward.6} parent=95 // pred_region
          %784 = dma.done [#allocation9], 1024
        $region112: #{ctran_forward.6} parent=95 // pred_fallthru
          _
        // Predicated region
        $region113: #{ctran_forward.6} parent=95 // pred_check
          %p785 = pneg %p155
        $region114: #{ctran_forward.6} parent=95 // pred_check_branch
          %787 = sbr.rel (%p785) target = $region116
        $region115: #{ctran_forward.6} parent=95 // pred_region
          %788 = dma.done [#allocation9], 1024
        $region116: #{ctran_forward.6} parent=95 // pred_fallthru
          _
        // Predicated region
        $region117: #{ctran_forward.6} parent=95 // pred_check
          %p789 = pneg %p176
        $region118: #{ctran_forward.6} parent=95 // pred_check_branch
          %791 = sbr.rel (%p789) target = $region120
        $region119: #{ctran_forward.6} parent=95 // pred_region
          %792 = dma.done [#allocation12], 1024
        $region120: #{ctran_forward.6} parent=95 // pred_fallthru
          _
        // Predicated region
        $region121: #{ctran_forward.6} parent=95 // pred_check
          %p793 = pneg %p197
        $region122: #{ctran_forward.6} parent=95 // pred_check_branch
          %795 = sbr.rel (%p793) target = $region124
        $region123: #{ctran_forward.6} parent=95 // pred_region
          %796 = dma.done [#allocation12], 64
        $region124: #{ctran_forward.6} parent=95 // pred_fallthru
          _
        // Predicated region
        $region125: #{ctran_forward.6} parent=95 // pred_check
          %p797 = pneg %p218
        $region126: #{ctran_forward.6} parent=95 // pred_check_branch
          %799 = sbr.rel (%p797) target = $region128
        $region127: #{ctran_forward.6} parent=95 // pred_region
          %800 = dma.done [#allocation15], 64
        $region128: #{ctran_forward.6} parent=95 // pred_fallthru
          _
        // Predicated region
        $region129: #{ctran_forward.6} parent=95 // pred_check
          %p801 = pneg %p239
        $region130: #{ctran_forward.6} parent=95 // pred_check_branch
          %803 = sbr.rel (%p801) target = $region132
        $region131: #{ctran_forward.6} parent=95 // pred_region
          %804 = dma.done [#allocation15], 64
        $region132: #{ctran_forward.6} parent=95 // pred_fallthru
          _
        // Predicated region
        $region133: #{ctran_forward.6} parent=95 // pred_check
          %p805 = pneg %p260
        $region134: #{ctran_forward.6} parent=95 // pred_check_branch
          %807 = sbr.rel (%p805) target = $region136
        $region135: #{ctran_forward.6} parent=95 // pred_region
          %808 = dma.done [#allocation18], 256
        $region136: #{ctran_forward.6} parent=95 // pred_fallthru
          _
        // Predicated region
        $region137: #{ctran_forward.6} parent=95 // pred_check
          %p809 = pneg %p281
        $region138: #{ctran_forward.6} parent=95 // pred_check_branch
          %811 = sbr.rel (%p809) target = $region140
        $region139: #{ctran_forward.6} parent=95 // pred_region
          %812 = dma.done [#allocation18], 16
        $region140: #{ctran_forward.6} parent=95 // pred_fallthru
          _
        // Predicated region
        $region141: #{ctran_forward.6} parent=95 // pred_check
          %p813 = pneg %p302
        $region142: #{ctran_forward.6} parent=95 // pred_check_branch
          %815 = sbr.rel (%p813) target = $region144
        $region143: #{ctran_forward.6} parent=95 // pred_region
          %816 = dma.done [#allocation21], 16
        $region144: #{ctran_forward.6} parent=95 // pred_fallthru
          _
        // Predicated region
        $region145: #{ctran_forward.6} parent=95 // pred_check
          %p817 = pneg %p323
        $region146: #{ctran_forward.6} parent=95 // pred_check_branch
          %819 = sbr.rel (%p817) target = $region148
        $region147: #{ctran_forward.6} parent=95 // pred_region
          %820 = dma.done [#allocation21], 16
        $region148: #{ctran_forward.6} parent=95 // pred_fallthru
          _
        // Predicated region
        $region149: #{ctran_forward.6} parent=95 // pred_check
          %p821 = pneg %p344
        $region150: #{ctran_forward.6} parent=95 // pred_check_branch
          %823 = sbr.rel (%p821) target = $region152
        $region151: #{ctran_forward.6} parent=95 // pred_region
          %824 = dma.done [#allocation24], 256
        $region152: #{ctran_forward.6} parent=95 // pred_fallthru
          _
        // Predicated region
        $region153: #{ctran_forward.6} parent=95 // pred_check
          %p825 = pneg %p365
        $region154: #{ctran_forward.6} parent=95 // pred_check_branch
          %827 = sbr.rel (%p825) target = $region156
        $region155: #{ctran_forward.6} parent=95 // pred_region
          %828 = dma.done [#allocation24], 16
        $region156: #{ctran_forward.6} parent=95 // pred_fallthru
          _
        // Predicated region
        $region157: #{ctran_forward.6} parent=95 // pred_check
          %p829 = pneg %p386
        $region158: #{ctran_forward.6} parent=95 // pred_check_branch
          %831 = sbr.rel (%p829) target = $region160
        $region159: #{ctran_forward.6} parent=95 // pred_region
          %832 = dma.done [#allocation27], 256
        $region160: #{ctran_forward.6} parent=95 // pred_fallthru
          _
        // Predicated region
        $region161: #{ctran_forward.6} parent=95 // pred_check
          %p833 = pneg %p407
        $region162: #{ctran_forward.6} parent=95 // pred_check_branch
          %835 = sbr.rel (%p833) target = $region164
        $region163: #{ctran_forward.6} parent=95 // pred_region
          %836 = dma.done [#allocation27], 16
        $region164: #{ctran_forward.6} parent=95 // pred_fallthru
          _
        // Predicated region
        $region165: #{ctran_forward.6} parent=95 // pred_check
          %p837 = pneg %p428
        $region166: #{ctran_forward.6} parent=95 // pred_check_branch
          %839 = sbr.rel (%p837) target = $region168
        $region167: #{ctran_forward.6} parent=95 // pred_region
          %840 = dma.done [#allocation30], 16
        $region168: #{ctran_forward.6} parent=95 // pred_fallthru
          _
        // Predicated region
        $region169: #{ctran_forward.6} parent=95 // pred_check
          %p841 = pneg %p449
        $region170: #{ctran_forward.6} parent=95 // pred_check_branch
          %843 = sbr.rel (%p841) target = $region172
        $region171: #{ctran_forward.6} parent=95 // pred_region
          %844 = dma.done [#allocation30], 16
        $region172: #{ctran_forward.6} parent=95 // pred_fallthru
          _
        %s845 = sand.u32 %s58, 1
        %s846 = scalar_lea.sflag [#allocation3], %s845
        %s847 = sand.u32 %s58, 1
        %s848 = smul.addr %s847, 12
        %s849 = scalar_lea.vmem [#allocation2], %s848
        %p850 = pneg %p71
        %p851 = pneg %p68
        %p852 = pneg %p92
        %p853 = pneg %p89
        %p854 = pneg %p113
        %p855 = pneg %p110
        %p856 = pneg %p134
        %p857 = pneg %p131
        %p858 = pneg %p155
        %p859 = pneg %p152
        %p860 = pneg %p176
        %p861 = pneg %p173
        %p862 = pneg %p197
        %p863 = pneg %p194
        %p864 = pneg %p218
        %p865 = pneg %p215
        %p866 = pneg %p239
        %p867 = pneg %p236
        %p868 = pneg %p260
        %p869 = pneg %p257
        %p870 = pneg %p281
        %p871 = pneg %p278
        %p872 = pneg %p302
        %p873 = pneg %p299
        %p874 = pneg %p323
        %p875 = pneg %p320
        %p876 = pneg %p344
        %p877 = pneg %p341
        %p878 = pneg %p365
        %p879 = pneg %p362
        %p880 = pneg %p386
        %p881 = pneg %p383
        %p882 = pneg %p407
        %p883 = pneg %p404
        %p884 = pneg %p428
        %p885 = pneg %p425
        %p886 = pneg %p449
        %p887 = pneg %p446
        %p888 = pneg %p475
        %p889 = pneg %p472
        %s890 = sand.u32 %s462, 1
        %s891 = scalar_lea.sflag [#allocation4], %s890
        %s892 = sand.u32 %s462, 1
        %s893 = smul.addr %s892, 12
        %s894 = scalar_lea.vmem [#allocation32], %s893
        %p895 = pneg %p501
        %p896 = pneg %p498
        %s897 = sand.u32 %s488, 1
        %s898 = scalar_lea.sflag [#allocation34], %s897
        %s899 = sand.u32 %s488, 1
        %s900 = smul.addr %s899, 12
        %s901 = scalar_lea.vmem [#allocation33], %s900
        %v903 = vld [vmem:[%s768] sm:$0xf]
        %v904 = vld [vmem:[%s768 + $0x4] sm:$0xf]
        %v905 = vld [vmem:[%s768 + $0x8] sm:$0xf]
        %v906 = vunpack.c.l.bf16 %v903
        %v907 = vunpack.c.l.bf16 %v904
        %v908 = vunpack.c.l.bf16 %v905
        %v909 = vld [vmem:[#allocation19] sm:$0x1]
        %v911 = vlaneseq
        %v912 = vshrl.u32 %v911, 7
        %v913 = vsub.s32 0, %v912
        %v914 = vrot.slane %v909, %v913
        %v916 = vadd.f32 %v914, %v906
        %v917 = vadd.f32 %v914, %v907
        %v918 = vadd.f32 %v914, %v908
        %v919 = vld [vmem:[#allocation8] sm:$0xf]
        %v920 = vld [vmem:[#allocation8 + $0x4] sm:$0xf]
        %v921 = vld [vmem:[#allocation8 + $0x8] sm:$0xf]
        %v922 = vld [vmem:[#allocation8 + $0xc] sm:$0xf]
        %v923 = vld [vmem:[#allocation13] sm:$0x1]
        %v925 = vlaneseq
        %v926 = vshrl.u32 %v925, 7
        %v927 = vsub.s32 0, %v926
        %v928 = vrot.slane %v923, %v927
        %v933 = vunpack.c.l.b16 %v903
        %v934 = vunpack.c.l.b16 %v904
        %v935 = vunpack.c.l.b16 %v905
        %v936 = vpack.c.b16 %v934, %v933
        %v937 = vpack.c.b16 %v935, %v935
        %v942 = vunpack.c.l.b16 %v919
        %v943 = vunpack.c.l.b16 %v920
        %v944 = vunpack.c.l.b16 %v921
        %v945 = vunpack.c.l.b16 %v922
        %v946 = vpack.c.b16 %v943, %v942
        %v947 = vpack.c.b16 %v945, %v944
        %vm950 = vcmask 261120
        %v952 = vsel %vm950, %v936, 0
        %v955 = vsel %vm950, %v937, 0
        %957 = vmatprep.subr.bf16.mxu0 0
        %958 = vmatpush1.bf16.msra.mxu0 %v946
        %959 = vmatprep.subr.bf16.mxu0 0
        %960 = vmatpush1.bf16.msra.mxu0 %v947
        %961 = vmatprep.subr.bf16.mxu0 0
        %962 = vmatpush1.bf16.msra.mxu0 0
        %963 = vmatprep.subr.bf16.mxu0 0
        %964 = vmatpush1.bf16.msra.mxu0 0
        %965 = vmatprep.subr.bf16.mxu0 0
        %966 = vmatpush1.bf16.msra.mxu0 0
        %967 = vmatprep.subr.bf16.mxu0 0
        %968 = vmatpush1.bf16.msra.mxu0 0
        %969 = vmatprep.subr.bf16.mxu0 0
        %970 = vmatpush1.bf16.msra.mxu0 0
        %971 = vmatprep.subr.bf16.mxu0 0
        %972 = vmatpush1.bf16.msra.mxu0 0
        %973 = vmatprep.subr.bf16.mxu0 0
        %974 = vmatpush1.bf16.msra.mxu0 0
        %975 = vmatprep.subr.bf16.mxu0 0
        %976 = vmatpush1.bf16.msra.mxu0 0
        %977 = vmatprep.subr.bf16.mxu0 0
        %978 = vmatpush1.bf16.msra.mxu0 0
        %979 = vmatprep.subr.bf16.mxu0 0
        %980 = vmatpush1.bf16.msra.mxu0 0
        %981 = vmatprep.subr.bf16.mxu0 0
        %982 = vmatpush1.bf16.msra.mxu0 0
        %983 = vmatprep.subr.bf16.mxu0 0
        %984 = vmatpush1.bf16.msra.mxu0 0
        %985 = vmatprep.subr.bf16.mxu0 0
        %986 = vmatpush1.bf16.msra.mxu0 0
        %987 = vmatprep.subr.bf16.mxu0 0
        %988 = vmatpush1.bf16.msra.mxu0 0
        %989 = vmatprep.mubr.bf16.mxu0 0
        %990 = vmatmul.mubr.bf16.gmra.mrb[0].mxu0 %v952
        %v991 = vpop.f32.mrb[0].mxu0
        %v992 = vadd.f32 %v928, %v991
        %v993 = vpop.f32.mrb[0].mxu0
        %v994 = vpop.f32.mrb[0].mxu0
        %v995 = vadd.f32 %v928, %v994
        %v996 = vpop.f32.mrb[0].mxu0
        %997 = vmatprep.mubr.bf16.mxu0 0
        %998 = vmatmul.mubr.bf16.gmra.mrb[0].mxu0 %v955
        %v999 = vpop.f32.mrb[0].mxu0
        %v1000 = vadd.f32 %v928, %v999
        %v1001 = vpop.f32.mrb[0].mxu0
        %v1002 = vpop.f32.mrb[0].mxu0
        %v1003 = vpop.f32.mrb[0].mxu0
        %1004 = vdwg.mxu0
        %v1005 = vmul.f32 %v992, 0.35355338
        %v1006 = vmul.f32 %v995, 0.35355338
        %v1007 = vmul.f32 %v1000, 0.35355338
        %v1008 = vld [vmem:[#allocation10] sm:$0xf]
        %v1009 = vld [vmem:[#allocation10 + $0x4] sm:$0xf]
        %v1010 = vld [vmem:[#allocation10 + $0x8] sm:$0xf]
        %v1011 = vld [vmem:[#allocation10 + $0xc] sm:$0xf]
        %v1012 = vld [vmem:[#allocation14] sm:$0x1]
        %v1014 = vlaneseq
        %v1015 = vshrl.u32 %v1014, 7
        %v1016 = vsub.s32 0, %v1015
        %v1017 = vrot.slane %v1012, %v1016
        %v1023 = vunpack.c.l.b16 %v1008
        %v1024 = vunpack.c.l.b16 %v1009
        %v1025 = vunpack.c.l.b16 %v1010
        %v1026 = vunpack.c.l.b16 %v1011
        %v1027 = vpack.c.b16 %v1024, %v1023
        %v1028 = vpack.c.b16 %v1026, %v1025
        %1031 = vmatprep.subr.bf16.mxu0 0
        %1032 = vmatpush1.bf16.msra.mxu0 %v1027
        %1033 = vmatprep.subr.bf16.mxu0 0
        %1034 = vmatpush1.bf16.msra.mxu0 %v1028
        %1035 = vmatprep.subr.bf16.mxu0 0
        %1036 = vmatpush1.bf16.msra.mxu0 0
        %1037 = vmatprep.subr.bf16.mxu0 0
        %1038 = vmatpush1.bf16.msra.mxu0 0
        %1039 = vmatprep.subr.bf16.mxu0 0
        %1040 = vmatpush1.bf16.msra.mxu0 0
        %1041 = vmatprep.subr.bf16.mxu0 0
        %1042 = vmatpush1.bf16.msra.mxu0 0
        %1043 = vmatprep.subr.bf16.mxu0 0
        %1044 = vmatpush1.bf16.msra.mxu0 0
        %1045 = vmatprep.subr.bf16.mxu0 0
        %1046 = vmatpush1.bf16.msra.mxu0 0
        %1047 = vmatprep.subr.bf16.mxu0 0
        %1048 = vmatpush1.bf16.msra.mxu0 0
        %1049 = vmatprep.subr.bf16.mxu0 0
        %1050 = vmatpush1.bf16.msra.mxu0 0
        %1051 = vmatprep.subr.bf16.mxu0 0
        %1052 = vmatpush1.bf16.msra.mxu0 0
        %1053 = vmatprep.subr.bf16.mxu0 0
        %1054 = vmatpush1.bf16.msra.mxu0 0
        %1055 = vmatprep.subr.bf16.mxu0 0
        %1056 = vmatpush1.bf16.msra.mxu0 0
        %1057 = vmatprep.subr.bf16.mxu0 0
        %1058 = vmatpush1.bf16.msra.mxu0 0
        %1059 = vmatprep.subr.bf16.mxu0 0
        %1060 = vmatpush1.bf16.msra.mxu0 0
        %1061 = vmatprep.subr.bf16.mxu0 0
        %1062 = vmatpush1.bf16.msra.mxu0 0
        %1063 = vmatprep.mubr.bf16.mxu0 0
        %1064 = vmatmul.mubr.bf16.gmra.mrb[0].mxu0 %v952
        %v1065 = vpop.f32.mrb[0].mxu0
        %v1066 = vadd.f32 %v1017, %v1065
        %v1067 = vpop.f32.mrb[0].mxu0
        %v1068 = vpop.f32.mrb[0].mxu0
        %v1069 = vadd.f32 %v1017, %v1068
        %v1070 = vpop.f32.mrb[0].mxu0
        %1071 = vmatprep.mubr.bf16.mxu0 0
        %1072 = vmatmul.mubr.bf16.gmra.mrb[0].mxu0 %v955
        %v1073 = vpop.f32.mrb[0].mxu0
        %v1074 = vadd.f32 %v1017, %v1073
        %v1075 = vpop.f32.mrb[0].mxu0
        %v1076 = vpop.f32.mrb[0].mxu0
        %v1077 = vpop.f32.mrb[0].mxu0
        %1078 = vdwg.mxu0
        %v1079 = vld [vmem:[#allocation11] sm:$0xf]
        %v1080 = vld [vmem:[#allocation11 + $0x4] sm:$0xf]
        %v1081 = vld [vmem:[#allocation11 + $0x8] sm:$0xf]
        %v1082 = vld [vmem:[#allocation11 + $0xc] sm:$0xf]
        %v1083 = vld [vmem:[#allocation16] sm:$0x1]
        %v1085 = vlaneseq
        %v1086 = vshrl.u32 %v1085, 7
        %v1087 = vsub.s32 0, %v1086
        %v1088 = vrot.slane %v1083, %v1087
        %v1094 = vunpack.c.l.b16 %v1079
        %v1095 = vunpack.c.l.b16 %v1080
        %v1096 = vunpack.c.l.b16 %v1081
        %v1097 = vunpack.c.l.b16 %v1082
        %v1098 = vpack.c.b16 %v1095, %v1094
        %v1099 = vpack.c.b16 %v1097, %v1096
        %1102 = vmatprep.subr.bf16.mxu0 0
        %1103 = vmatpush1.bf16.msra.mxu0 %v1098
        %1104 = vmatprep.subr.bf16.mxu0 0
        %1105 = vmatpush1.bf16.msra.mxu0 %v1099
        %1106 = vmatprep.subr.bf16.mxu0 0
        %1107 = vmatpush1.bf16.msra.mxu0 0
        %1108 = vmatprep.subr.bf16.mxu0 0
        %1109 = vmatpush1.bf16.msra.mxu0 0
        %1110 = vmatprep.subr.bf16.mxu0 0
        %1111 = vmatpush1.bf16.msra.mxu0 0
        %1112 = vmatprep.subr.bf16.mxu0 0
        %1113 = vmatpush1.bf16.msra.mxu0 0
        %1114 = vmatprep.subr.bf16.mxu0 0
        %1115 = vmatpush1.bf16.msra.mxu0 0
        %1116 = vmatprep.subr.bf16.mxu0 0
        %1117 = vmatpush1.bf16.msra.mxu0 0
        %1118 = vmatprep.subr.bf16.mxu0 0
        %1119 = vmatpush1.bf16.msra.mxu0 0
        %1120 = vmatprep.subr.bf16.mxu0 0
        %1121 = vmatpush1.bf16.msra.mxu0 0
        %1122 = vmatprep.subr.bf16.mxu0 0
        %1123 = vmatpush1.bf16.msra.mxu0 0
        %1124 = vmatprep.subr.bf16.mxu0 0
        %1125 = vmatpush1.bf16.msra.mxu0 0
        %1126 = vmatprep.subr.bf16.mxu0 0
        %1127 = vmatpush1.bf16.msra.mxu0 0
        %1128 = vmatprep.subr.bf16.mxu0 0
        %1129 = vmatpush1.bf16.msra.mxu0 0
        %1130 = vmatprep.subr.bf16.mxu0 0
        %1131 = vmatpush1.bf16.msra.mxu0 0
        %1132 = vmatprep.subr.bf16.mxu0 0
        %1133 = vmatpush1.bf16.msra.mxu0 0
        %1134 = vmatprep.mubr.bf16.mxu0 0
        %1135 = vmatmul.mubr.bf16.gmra.mrb[0].mxu0 %v952
        %v1136 = vpop.f32.mrb[0].mxu0
        %v1137 = vadd.f32 %v1088, %v1136
        %v1138 = vpop.f32.mrb[0].mxu0
        %v1139 = vpop.f32.mrb[0].mxu0
        %v1140 = vadd.f32 %v1088, %v1139
        %v1141 = vpop.f32.mrb[0].mxu0
        %1142 = vmatprep.mubr.bf16.mxu0 0
        %1143 = vmatmul.mubr.bf16.gmra.mrb[0].mxu0 %v955
        %v1144 = vpop.f32.mrb[0].mxu0
        %v1145 = vadd.f32 %v1088, %v1144
        %v1146 = vpop.f32.mrb[0].mxu0
        %v1147 = vpop.f32.mrb[0].mxu0
        %v1148 = vpop.f32.mrb[0].mxu0
        %1149 = vdwg.mxu0
        %v1150 = vpack.c.bf16 %v1006, %v1005
        %v1151 = vpack.c.bf16 %v1007, %v1007
        %v1152 = vpack.c.bf16 %v1069, %v1066
        %v1153 = vpack.c.bf16 %v1074, %v1074
        %vm1154 = vcmask 64512
        %v1156 = vsel %vm1154, %v1150, 0
        %v1159 = vsel %vm1154, %v1151, 0
        %v1162 = vsel %vm1154, %v1152, 0
        %v1165 = vsel %vm1154, %v1153, 0
        %1167 = vmatprep.subr.bf16.mxu0 0
        %1168 = vmatpush1.bf16.xpose.msra.mxu0 %v1162
        %1169 = vmatprep.subr.bf16.mxu0 0
        %1170 = vmatpush1.bf16.xpose.msra.mxu0 %v1165
        %1171 = vmatprep.subr.bf16.mxu0 0
        %1172 = vmatpush1.bf16.xpose.msra.mxu0 0
        %1173 = vmatprep.subr.bf16.mxu0 0
        %1174 = vmatpush1.bf16.xpose.msra.mxu0 0
        %1175 = vmatprep.subr.bf16.mxu0 0
        %1176 = vmatpush1.bf16.xpose.msra.mxu0 0
        %1177 = vmatprep.subr.bf16.mxu0 0
        %1178 = vmatpush1.bf16.xpose.msra.mxu0 0
        %1179 = vmatprep.subr.bf16.mxu0 0
        %1180 = vmatpush1.bf16.xpose.msra.mxu0 0
        %1181 = vmatprep.subr.bf16.mxu0 0
        %1182 = vmatpush1.bf16.xpose.msra.mxu0 0
        %1183 = vmatprep.subr.bf16.mxu0 0
        %1184 = vmatpush1.bf16.xpose.msra.mxu0 0
        %1185 = vmatprep.subr.bf16.mxu0 0
        %1186 = vmatpush1.bf16.xpose.msra.mxu0 0
        %1187 = vmatprep.subr.bf16.mxu0 0
        %1188 = vmatpush1.bf16.xpose.msra.mxu0 0
        %1189 = vmatprep.subr.bf16.mxu0 0
        %1190 = vmatpush1.bf16.xpose.msra.mxu0 0
        %1191 = vmatprep.subr.bf16.mxu0 0
        %1192 = vmatpush1.bf16.xpose.msra.mxu0 0
        %1193 = vmatprep.subr.bf16.mxu0 0
        %1194 = vmatpush1.bf16.xpose.msra.mxu0 0
        %1195 = vmatprep.subr.bf16.mxu0 0
        %1196 = vmatpush1.bf16.xpose.msra.mxu0 0
        %1197 = vmatprep.subr.bf16.mxu0 0
        %1198 = vmatpush1.bf16.xpose.msra.mxu0 0
        %1199 = vmatprep.mubr.bf16.mxu0 0
        %1200 = vmatmul.mubr.bf16.gmra.mrb[0].mxu0 %v1156
        %v1201 = vpop.f32.mrb[0].mxu0
        %v1202 = vadd.f32 0.0, %v1201
        %v1203 = vpop.f32.mrb[0].mxu0
        %v1204 = vpop.f32.mrb[0].mxu0
        %v1205 = vadd.f32 0.0, %v1204
        %v1206 = vpop.f32.mrb[0].mxu0
        %1207 = vmatprep.mubr.bf16.mxu0 0
        %1208 = vmatmul.mubr.bf16.gmra.mrb[0].mxu0 %v1159
        %v1209 = vpop.f32.mrb[0].mxu0
        %v1210 = vadd.f32 0.0, %v1209
        %v1211 = vpop.f32.mrb[0].mxu0
        %v1212 = vpop.f32.mrb[0].mxu0
        %v1213 = vpop.f32.mrb[0].mxu0
        %1214 = vdwg.mxu0
        %vm1215 = vcmask 195584
        %v1216 = vsel %vm1215, %v1202, -inf
        %1217 = vmax.xlane.f32.xlu0 %v1216
        %v1218 = vpop.xlane.xlu0 %1217
        %v1219 = vsel %vm1215, %v1205, -inf
        %1220 = vmax.xlane.f32.xlu0 %v1219
        %v1221 = vpop.xlane.xlu0 %1220
        %v1222 = vsel %vm1215, %v1210, -inf
        %1223 = vmax.xlane.f32.xlu0 %v1222
        %v1224 = vpop.xlane.xlu0 %1223
        %v1225 = vsub.f32 %v1202, %v1218
        %v1226 = vsub.f32 %v1205, %v1221
        %v1227 = vsub.f32 %v1210, %v1224
        %v1228 = vmul.f32 %v1225, 1.442695
        %v1229 = vpow.pop %v1228
        %v1230 = vmul.f32 %v1226, 1.442695
        %v1231 = vpow.pop %v1230
        %v1232 = vmul.f32 %v1227, 1.442695
        %v1233 = vpow.pop %v1232
        %v1234 = vsel %vm1215, %v1229, 0.0
        %1235 = vadd.xlane.f32.xlu0 %v1234
        %v1236 = vpop.xlane.xlu0 %1235
        %v1237 = vsel %vm1215, %v1231, 0.0
        %1238 = vadd.xlane.f32.xlu0 %v1237
        %v1239 = vpop.xlane.xlu0 %1238
        %v1240 = vsel %vm1215, %v1233, 0.0
        %1241 = vadd.xlane.f32.xlu0 %v1240
        %v1242 = vpop.xlane.xlu0 %1241
        %v1243 = vrcp.pop %v1236
        %v1244 = vmul.f32 1.0, %v1243
        %v1245 = vrcp.pop %v1239
        %v1246 = vmul.f32 1.0, %v1245
        %v1247 = vrcp.pop %v1242
        %v1248 = vmul.f32 1.0, %v1247
        %v1249 = vmul.f32 %v1229, %v1244
        %v1250 = vmul.f32 %v1231, %v1246
        %v1251 = vmul.f32 %v1233, %v1248
        %v1252 = vadd.f32 %v1249, 0.0
        %v1253 = vadd.f32 %v1250, 0.0
        %v1254 = vadd.f32 %v1251, 0.0
        %v1255 = vpack.c.bf16 %v1250, %v1249
        %v1256 = vpack.c.bf16 %v1251, %v1251
        %v1257 = vpack.c.bf16 %v1140, %v1137
        %v1258 = vpack.c.bf16 %v1145, %v1145
        %v1260 = vsel %vm1215, %v1255, 0
        %v1263 = vsel %vm1215, %v1256, 0
        %vm1265 = vcmask 1043456
        %v1267 = vsel %vm1265, %v1258, 0
        %1269 = vmatprep.subr.bf16.mxu0 0
        %1270 = vmatpush1.bf16.msra.mxu0 %v1257
        %1271 = vmatprep.subr.bf16.mxu0 0
        %1272 = vmatpush1.bf16.msra.mxu0 %v1267
        %1273 = vmatprep.subr.bf16.mxu0 0
        %1274 = vmatpush1.bf16.msra.mxu0 0
        %1275 = vmatprep.subr.bf16.mxu0 0
        %1276 = vmatpush1.bf16.msra.mxu0 0
        %1277 = vmatprep.subr.bf16.mxu0 0
        %1278 = vmatpush1.bf16.msra.mxu0 0
        %1279 = vmatprep.subr.bf16.mxu0 0
        %1280 = vmatpush1.bf16.msra.mxu0 0
        %1281 = vmatprep.subr.bf16.mxu0 0
        %1282 = vmatpush1.bf16.msra.mxu0 0
        %1283 = vmatprep.subr.bf16.mxu0 0
        %1284 = vmatpush1.bf16.msra.mxu0 0
        %1285 = vmatprep.subr.bf16.mxu0 0
        %1286 = vmatpush1.bf16.msra.mxu0 0
        %1287 = vmatprep.subr.bf16.mxu0 0
        %1288 = vmatpush1.bf16.msra.mxu0 0
        %1289 = vmatprep.subr.bf16.mxu0 0
        %1290 = vmatpush1.bf16.msra.mxu0 0
        %1291 = vmatprep.subr.bf16.mxu0 0
        %1292 = vmatpush1.bf16.msra.mxu0 0
        %1293 = vmatprep.subr.bf16.mxu0 0
        %1294 = vmatpush1.bf16.msra.mxu0 0
        %1295 = vmatprep.subr.bf16.mxu0 0
        %1296 = vmatpush1.bf16.msra.mxu0 0
        %1297 = vmatprep.subr.bf16.mxu0 0
        %1298 = vmatpush1.bf16.msra.mxu0 0
        %1299 = vmatprep.subr.bf16.mxu0 0
        %1300 = vmatpush1.bf16.msra.mxu0 0
        %1301 = vmatprep.mubr.bf16.mxu0 0
        %1302 = vmatmul.mubr.bf16.gmra.mrb[0].mxu0 %v1260
        %v1303 = vpop.f32.mrb[0].mxu0
        %v1304 = vadd.f32 0.0, %v1303
        %v1305 = vpop.f32.mrb[0].mxu0
        %v1306 = vpop.f32.mrb[0].mxu0
        %v1307 = vadd.f32 0.0, %v1306
        %v1308 = vpop.f32.mrb[0].mxu0
        %1309 = vmatprep.mubr.bf16.mxu0 0
        %1310 = vmatmul.mubr.bf16.gmra.mrb[0].mxu0 %v1263
        %v1311 = vpop.f32.mrb[0].mxu0
        %v1312 = vadd.f32 0.0, %v1311
        %v1313 = vpop.f32.mrb[0].mxu0
        %v1314 = vpop.f32.mrb[0].mxu0
        %v1315 = vpop.f32.mrb[0].mxu0
        %1316 = vdwg.mxu0
        %v1317 = vpack.c.bf16 %v1307, %v1304
        %v1318 = vpack.c.bf16 %v1312, %v1312
        %v1319 = vld [vmem:[#allocation17] sm:$0xf]
        %v1321 = vsel %vm1154, %v1317, 0
        %v1324 = vsel %vm1154, %v1318, 0
        %v1327 = vsel %vm1265, %v1319, 0
        %1329 = vmatprep.subr.bf16.mxu0 0
        %1330 = vmatpush1.bf16.msra.mxu0 %v1327
        %1331 = vmatprep.subr.bf16.mxu0 0
        %1332 = vmatpush1.bf16.msra.mxu0 0
        %1333 = vmatprep.subr.bf16.mxu0 0
        %1334 = vmatpush1.bf16.msra.mxu0 0
        %1335 = vmatprep.subr.bf16.mxu0 0
        %1336 = vmatpush1.bf16.msra.mxu0 0
        %1337 = vmatprep.subr.bf16.mxu0 0
        %1338 = vmatpush1.bf16.msra.mxu0 0
        %1339 = vmatprep.subr.bf16.mxu0 0
        %1340 = vmatpush1.bf16.msra.mxu0 0
        %1341 = vmatprep.subr.bf16.mxu0 0
        %1342 = vmatpush1.bf16.msra.mxu0 0
        %1343 = vmatprep.subr.bf16.mxu0 0
        %1344 = vmatpush1.bf16.msra.mxu0 0
        %1345 = vmatprep.subr.bf16.mxu0 0
        %1346 = vmatpush1.bf16.msra.mxu0 0
        %1347 = vmatprep.subr.bf16.mxu0 0
        %1348 = vmatpush1.bf16.msra.mxu0 0
        %1349 = vmatprep.subr.bf16.mxu0 0
        %1350 = vmatpush1.bf16.msra.mxu0 0
        %1351 = vmatprep.subr.bf16.mxu0 0
        %1352 = vmatpush1.bf16.msra.mxu0 0
        %1353 = vmatprep.subr.bf16.mxu0 0
        %1354 = vmatpush1.bf16.msra.mxu0 0
        %1355 = vmatprep.subr.bf16.mxu0 0
        %1356 = vmatpush1.bf16.msra.mxu0 0
        %1357 = vmatprep.subr.bf16.mxu0 0
        %1358 = vmatpush1.bf16.msra.mxu0 0
        %1359 = vmatprep.subr.bf16.mxu0 0
        %1360 = vmatpush1.bf16.msra.mxu0 0
        %1361 = vmatprep.mubr.bf16.mxu0 0
        %1362 = vmatmul.mubr.bf16.gmra.mrb[0].mxu0 %v1321
        %v1363 = vpop.f32.mrb[0].mxu0
        %v1364 = vadd.f32 0.0, %v1363
        %v1365 = vpop.f32.mrb[0].mxu0
        %v1366 = vpop.f32.mrb[0].mxu0
        %v1367 = vadd.f32 0.0, %v1366
        %v1368 = vpop.f32.mrb[0].mxu0
        %1369 = vmatprep.mubr.bf16.mxu0 0
        %1370 = vmatmul.mubr.bf16.gmra.mrb[0].mxu0 %v1324
        %v1371 = vpop.f32.mrb[0].mxu0
        %v1372 = vadd.f32 0.0, %v1371
        %v1373 = vpop.f32.mrb[0].mxu0
        %v1374 = vpop.f32.mrb[0].mxu0
        %v1375 = vpop.f32.mrb[0].mxu0
        %1376 = vdwg.mxu0
        %v1377 = vadd.f32 %v916, %v1364
        %v1378 = vadd.f32 %v917, %v1367
        %v1379 = vadd.f32 %v918, %v1372
        %s1380 = scalar_lea.vmem [#allocation8], 16
        %v1381 = vld [vmem:[%s1380] sm:$0xf]
        %v1382 = vld [vmem:[%s1380 + $0x4] sm:$0xf]
        %v1383 = vld [vmem:[%s1380 + $0x8] sm:$0xf]
        %v1384 = vld [vmem:[%s1380 + $0xc] sm:$0xf]
        %s1385 = scalar_lea.vmem [#allocation13], 1
        %v1386 = vld [vmem:[%s1385] sm:$0x1]
        %v1388 = vlaneseq
        %v1389 = vshrl.u32 %v1388, 7
        %v1390 = vsub.s32 0, %v1389
        %v1391 = vrot.slane %v1386, %v1390
        %v1397 = vunpack.c.l.b16 %v1381
        %v1398 = vunpack.c.l.b16 %v1382
        %v1399 = vunpack.c.l.b16 %v1383
        %v1400 = vunpack.c.l.b16 %v1384
        %v1401 = vpack.c.b16 %v1398, %v1397
        %v1402 = vpack.c.b16 %v1400, %v1399
        %1405 = vmatprep.subr.bf16.mxu0 0
        %1406 = vmatpush1.bf16.msra.mxu0 %v1401
        %1407 = vmatprep.subr.bf16.mxu0 0
        %1408 = vmatpush1.bf16.msra.mxu0 %v1402
        %1409 = vmatprep.subr.bf16.mxu0 0
        %1410 = vmatpush1.bf16.msra.mxu0 0
        %1411 = vmatprep.subr.bf16.mxu0 0
        %1412 = vmatpush1.bf16.msra.mxu0 0
        %1413 = vmatprep.subr.bf16.mxu0 0
        %1414 = vmatpush1.bf16.msra.mxu0 0
        %1415 = vmatprep.subr.bf16.mxu0 0
        %1416 = vmatpush1.bf16.msra.mxu0 0
        %1417 = vmatprep.subr.bf16.mxu0 0
        %1418 = vmatpush1.bf16.msra.mxu0 0
        %1419 = vmatprep.subr.bf16.mxu0 0
        %1420 = vmatpush1.bf16.msra.mxu0 0
        %1421 = vmatprep.subr.bf16.mxu0 0
        %1422 = vmatpush1.bf16.msra.mxu0 0
        %1423 = vmatprep.subr.bf16.mxu0 0
        %1424 = vmatpush1.bf16.msra.mxu0 0
        %1425 = vmatprep.subr.bf16.mxu0 0
        %1426 = vmatpush1.bf16.msra.mxu0 0
        %1427 = vmatprep.subr.bf16.mxu0 0
        %1428 = vmatpush1.bf16.msra.mxu0 0
        %1429 = vmatprep.subr.bf16.mxu0 0
        %1430 = vmatpush1.bf16.msra.mxu0 0
        %1431 = vmatprep.subr.bf16.mxu0 0
        %1432 = vmatpush1.bf16.msra.mxu0 0
        %1433 = vmatprep.subr.bf16.mxu0 0
        %1434 = vmatpush1.bf16.msra.mxu0 0
        %1435 = vmatprep.subr.bf16.mxu0 0
        %1436 = vmatpush1.bf16.msra.mxu0 0
        %1437 = vmatprep.mubr.bf16.mxu0 0
        %1438 = vmatmul.mubr.bf16.gmra.mrb[0].mxu0 %v952
        %v1439 = vpop.f32.mrb[0].mxu0
        %v1440 = vadd.f32 %v1391, %v1439
        %v1441 = vpop.f32.mrb[0].mxu0
        %v1442 = vpop.f32.mrb[0].mxu0
        %v1443 = vadd.f32 %v1391, %v1442
        %v1444 = vpop.f32.mrb[0].mxu0
        %1445 = vmatprep.mubr.bf16.mxu0 0
        %1446 = vmatmul.mubr.bf16.gmra.mrb[0].mxu0 %v955
        %v1447 = vpop.f32.mrb[0].mxu0
        %v1448 = vadd.f32 %v1391, %v1447
        %v1449 = vpop.f32.mrb[0].mxu0
        %v1450 = vpop.f32.mrb[0].mxu0
        %v1451 = vpop.f32.mrb[0].mxu0
        %1452 = vdwg.mxu0
        %v1453 = vmul.f32 %v1440, 0.35355338
        %v1454 = vmul.f32 %v1443, 0.35355338
        %v1455 = vmul.f32 %v1448, 0.35355338
        %s1456 = scalar_lea.vmem [#allocation10], 16
        %v1457 = vld [vmem:[%s1456] sm:$0xf]
        %v1458 = vld [vmem:[%s1456 + $0x4] sm:$0xf]
        %v1459 = vld [vmem:[%s1456 + $0x8] sm:$0xf]
        %v1460 = vld [vmem:[%s1456 + $0xc] sm:$0xf]
        %s1461 = scalar_lea.vmem [#allocation14], 1
        %v1462 = vld [vmem:[%s1461] sm:$0x1]
        %v1464 = vlaneseq
        %v1465 = vshrl.u32 %v1464, 7
        %v1466 = vsub.s32 0, %v1465
        %v1467 = vrot.slane %v1462, %v1466
        %v1473 = vunpack.c.l.b16 %v1457
        %v1474 = vunpack.c.l.b16 %v1458
        %v1475 = vunpack.c.l.b16 %v1459
        %v1476 = vunpack.c.l.b16 %v1460
        %v1477 = vpack.c.b16 %v1474, %v1473
        %v1478 = vpack.c.b16 %v1476, %v1475
        %1481 = vmatprep.subr.bf16.mxu0 0
        %1482 = vmatpush1.bf16.msra.mxu0 %v1477
        %1483 = vmatprep.subr.bf16.mxu0 0
        %1484 = vmatpush1.bf16.msra.mxu0 %v1478
        %1485 = vmatprep.subr.bf16.mxu0 0
        %1486 = vmatpush1.bf16.msra.mxu0 0
        %1487 = vmatprep.subr.bf16.mxu0 0
        %1488 = vmatpush1.bf16.msra.mxu0 0
        %1489 = vmatprep.subr.bf16.mxu0 0
        %1490 = vmatpush1.bf16.msra.mxu0 0
        %1491 = vmatprep.subr.bf16.mxu0 0
        %1492 = vmatpush1.bf16.msra.mxu0 0
        %1493 = vmatprep.subr.bf16.mxu0 0
        %1494 = vmatpush1.bf16.msra.mxu0 0
        %1495 = vmatprep.subr.bf16.mxu0 0
        %1496 = vmatpush1.bf16.msra.mxu0 0
        %1497 = vmatprep.subr.bf16.mxu0 0
        %1498 = vmatpush1.bf16.msra.mxu0 0
        %1499 = vmatprep.subr.bf16.mxu0 0
        %1500 = vmatpush1.bf16.msra.mxu0 0
        %1501 = vmatprep.subr.bf16.mxu0 0
        %1502 = vmatpush1.bf16.msra.mxu0 0
        %1503 = vmatprep.subr.bf16.mxu0 0
        %1504 = vmatpush1.bf16.msra.mxu0 0
        %1505 = vmatprep.subr.bf16.mxu0 0
        %1506 = vmatpush1.bf16.msra.mxu0 0
        %1507 = vmatprep.subr.bf16.mxu0 0
        %1508 = vmatpush1.bf16.msra.mxu0 0
        %1509 = vmatprep.subr.bf16.mxu0 0
        %1510 = vmatpush1.bf16.msra.mxu0 0
        %1511 = vmatprep.subr.bf16.mxu0 0
        %1512 = vmatpush1.bf16.msra.mxu0 0
        %1513 = vmatprep.mubr.bf16.mxu0 0
        %1514 = vmatmul.mubr.bf16.gmra.mrb[0].mxu0 %v952
        %v1515 = vpop.f32.mrb[0].mxu0
        %v1516 = vadd.f32 %v1467, %v1515
        %v1517 = vpop.f32.mrb[0].mxu0
        %v1518 = vpop.f32.mrb[0].mxu0
        %v1519 = vadd.f32 %v1467, %v1518
        %v1520 = vpop.f32.mrb[0].mxu0
        %1521 = vmatprep.mubr.bf16.mxu0 0
        %1522 = vmatmul.mubr.bf16.gmra.mrb[0].mxu0 %v955
        %v1523 = vpop.f32.mrb[0].mxu0
        %v1524 = vadd.f32 %v1467, %v1523
        %v1525 = vpop.f32.mrb[0].mxu0
        %v1526 = vpop.f32.mrb[0].mxu0
        %v1527 = vpop.f32.mrb[0].mxu0
        %1528 = vdwg.mxu0
        %s1529 = scalar_lea.vmem [#allocation11], 16
        %v1530 = vld [vmem:[%s1529] sm:$0xf]
        %v1531 = vld [vmem:[%s1529 + $0x4] sm:$0xf]
        %v1532 = vld [vmem:[%s1529 + $0x8] sm:$0xf]
        %v1533 = vld [vmem:[%s1529 + $0xc] sm:$0xf]
        %s1534 = scalar_lea.vmem [#allocation16], 1
        %v1535 = vld [vmem:[%s1534] sm:$0x1]
        %v1537 = vlaneseq
        %v1538 = vshrl.u32 %v1537, 7
        %v1539 = vsub.s32 0, %v1538
        %v1540 = vrot.slane %v1535, %v1539
        %v1546 = vunpack.c.l.b16 %v1530
        %v1547 = vunpack.c.l.b16 %v1531
        %v1548 = vunpack.c.l.b16 %v1532
        %v1549 = vunpack.c.l.b16 %v1533
        %v1550 = vpack.c.b16 %v1547, %v1546
        %v1551 = vpack.c.b16 %v1549, %v1548
        %1554 = vmatprep.subr.bf16.mxu0 0
        %1555 = vmatpush1.bf16.msra.mxu0 %v1550
        %1556 = vmatprep.subr.bf16.mxu0 0
        %1557 = vmatpush1.bf16.msra.mxu0 %v1551
        %1558 = vmatprep.subr.bf16.mxu0 0
        %1559 = vmatpush1.bf16.msra.mxu0 0
        %1560 = vmatprep.subr.bf16.mxu0 0
        %1561 = vmatpush1.bf16.msra.mxu0 0
        %1562 = vmatprep.subr.bf16.mxu0 0
        %1563 = vmatpush1.bf16.msra.mxu0 0
        %1564 = vmatprep.subr.bf16.mxu0 0
        %1565 = vmatpush1.bf16.msra.mxu0 0
        %1566 = vmatprep.subr.bf16.mxu0 0
        %1567 = vmatpush1.bf16.msra.mxu0 0
        %1568 = vmatprep.subr.bf16.mxu0 0
        %1569 = vmatpush1.bf16.msra.mxu0 0
        %1570 = vmatprep.subr.bf16.mxu0 0
        %1571 = vmatpush1.bf16.msra.mxu0 0
        %1572 = vmatprep.subr.bf16.mxu0 0
        %1573 = vmatpush1.bf16.msra.mxu0 0
        %1574 = vmatprep.subr.bf16.mxu0 0
        %1575 = vmatpush1.bf16.msra.mxu0 0
        %1576 = vmatprep.subr.bf16.mxu0 0
        %1577 = vmatpush1.bf16.msra.mxu0 0
        %1578 = vmatprep.subr.bf16.mxu0 0
        %1579 = vmatpush1.bf16.msra.mxu0 0
        %1580 = vmatprep.subr.bf16.mxu0 0
        %1581 = vmatpush1.bf16.msra.mxu0 0
        %1582 = vmatprep.subr.bf16.mxu0 0
        %1583 = vmatpush1.bf16.msra.mxu0 0
        %1584 = vmatprep.subr.bf16.mxu0 0
        %1585 = vmatpush1.bf16.msra.mxu0 0
        %1586 = vmatprep.mubr.bf16.mxu0 0
        %1587 = vmatmul.mubr.bf16.gmra.mrb[0].mxu0 %v952
        %v1588 = vpop.f32.mrb[0].mxu0
        %v1589 = vadd.f32 %v1540, %v1588
        %v1590 = vpop.f32.mrb[0].mxu0
        %v1591 = vpop.f32.mrb[0].mxu0
        %v1592 = vadd.f32 %v1540, %v1591
        %v1593 = vpop.f32.mrb[0].mxu0
        %1594 = vmatprep.mubr.bf16.mxu0 0
        %1595 = vmatmul.mubr.bf16.gmra.mrb[0].mxu0 %v955
        %v1596 = vpop.f32.mrb[0].mxu0
        %v1597 = vadd.f32 %v1540, %v1596
        %v1598 = vpop.f32.mrb[0].mxu0
        %v1599 = vpop.f32.mrb[0].mxu0
        %v1600 = vpop.f32.mrb[0].mxu0
        %1601 = vdwg.mxu0
        %v1602 = vpack.c.bf16 %v1454, %v1453
        %v1603 = vpack.c.bf16 %v1455, %v1455
        %v1604 = vpack.c.bf16 %v1519, %v1516
        %v1605 = vpack.c.bf16 %v1524, %v1524
        %v1607 = vsel %vm1154, %v1602, 0
        %v1610 = vsel %vm1154, %v1603, 0
        %v1613 = vsel %vm1154, %v1604, 0
        %v1616 = vsel %vm1154, %v1605, 0
        %1618 = vmatprep.subr.bf16.mxu0 0
        %1619 = vmatpush1.bf16.xpose.msra.mxu0 %v1613
        %1620 = vmatprep.subr.bf16.mxu0 0
        %1621 = vmatpush1.bf16.xpose.msra.mxu0 %v1616
        %1622 = vmatprep.subr.bf16.mxu0 0
        %1623 = vmatpush1.bf16.xpose.msra.mxu0 0
        %1624 = vmatprep.subr.bf16.mxu0 0
        %1625 = vmatpush1.bf16.xpose.msra.mxu0 0
        %1626 = vmatprep.subr.bf16.mxu0 0
        %1627 = vmatpush1.bf16.xpose.msra.mxu0 0
        %1628 = vmatprep.subr.bf16.mxu0 0
        %1629 = vmatpush1.bf16.xpose.msra.mxu0 0
        %1630 = vmatprep.subr.bf16.mxu0 0
        %1631 = vmatpush1.bf16.xpose.msra.mxu0 0
        %1632 = vmatprep.subr.bf16.mxu0 0
        %1633 = vmatpush1.bf16.xpose.msra.mxu0 0
        %1634 = vmatprep.subr.bf16.mxu0 0
        %1635 = vmatpush1.bf16.xpose.msra.mxu0 0
        %1636 = vmatprep.subr.bf16.mxu0 0
        %1637 = vmatpush1.bf16.xpose.msra.mxu0 0
        %1638 = vmatprep.subr.bf16.mxu0 0
        %1639 = vmatpush1.bf16.xpose.msra.mxu0 0
        %1640 = vmatprep.subr.bf16.mxu0 0
        %1641 = vmatpush1.bf16.xpose.msra.mxu0 0
        %1642 = vmatprep.subr.bf16.mxu0 0
        %1643 = vmatpush1.bf16.xpose.msra.mxu0 0
        %1644 = vmatprep.subr.bf16.mxu0 0
        %1645 = vmatpush1.bf16.xpose.msra.mxu0 0
        %1646 = vmatprep.subr.bf16.mxu0 0
        %1647 = vmatpush1.bf16.xpose.msra.mxu0 0
        %1648 = vmatprep.subr.bf16.mxu0 0
        %1649 = vmatpush1.bf16.xpose.msra.mxu0 0
        %1650 = vmatprep.mubr.bf16.mxu0 0
        %1651 = vmatmul.mubr.bf16.gmra.mrb[0].mxu0 %v1607
        %v1652 = vpop.f32.mrb[0].mxu0
        %v1653 = vadd.f32 0.0, %v1652
        %v1654 = vpop.f32.mrb[0].mxu0
        %v1655 = vpop.f32.mrb[0].mxu0
        %v1656 = vadd.f32 0.0, %v1655
        %v1657 = vpop.f32.mrb[0].mxu0
        %1658 = vmatprep.mubr.bf16.mxu0 0
        %1659 = vmatmul.mubr.bf16.gmra.mrb[0].mxu0 %v1610
        %v1660 = vpop.f32.mrb[0].mxu0
        %v1661 = vadd.f32 0.0, %v1660
        %v1662 = vpop.f32.mrb[0].mxu0
        %v1663 = vpop.f32.mrb[0].mxu0
        %v1664 = vpop.f32.mrb[0].mxu0
        %1665 = vdwg.mxu0
        %v1666 = vsel %vm1215, %v1653, -inf
        %1667 = vmax.xlane.f32.xlu0 %v1666
        %v1668 = vpop.xlane.xlu0 %1667
        %v1669 = vsel %vm1215, %v1656, -inf
        %1670 = vmax.xlane.f32.xlu0 %v1669
        %v1671 = vpop.xlane.xlu0 %1670
        %v1672 = vsel %vm1215, %v1661, -inf
        %1673 = vmax.xlane.f32.xlu0 %v1672
        %v1674 = vpop.xlane.xlu0 %1673
        %v1675 = vsub.f32 %v1653, %v1668
        %v1676 = vsub.f32 %v1656, %v1671
        %v1677 = vsub.f32 %v1661, %v1674
        %v1678 = vmul.f32 %v1675, 1.442695
        %v1679 = vpow.pop %v1678
        %v1680 = vmul.f32 %v1676, 1.442695
        %v1681 = vpow.pop %v1680
        %v1682 = vmul.f32 %v1677, 1.442695
        %v1683 = vpow.pop %v1682
        %v1684 = vsel %vm1215, %v1679, 0.0
        %1685 = vadd.xlane.f32.xlu0 %v1684
        %v1686 = vpop.xlane.xlu0 %1685
        %v1687 = vsel %vm1215, %v1681, 0.0
        %1688 = vadd.xlane.f32.xlu0 %v1687
        %v1689 = vpop.xlane.xlu0 %1688
        %v1690 = vsel %vm1215, %v1683, 0.0
        %1691 = vadd.xlane.f32.xlu0 %v1690
        %v1692 = vpop.xlane.xlu0 %1691
        %v1693 = vrcp.pop %v1686
        %v1694 = vmul.f32 1.0, %v1693
        %v1695 = vrcp.pop %v1689
        %v1696 = vmul.f32 1.0, %v1695
        %v1697 = vrcp.pop %v1692
        %v1698 = vmul.f32 1.0, %v1697
        %v1699 = vmul.f32 %v1679, %v1694
        %v1700 = vmul.f32 %v1681, %v1696
        %v1701 = vmul.f32 %v1683, %v1698
        %v1702 = vadd.f32 %v1252, %v1699
        %v1703 = vadd.f32 %v1253, %v1700
        %v1704 = vadd.f32 %v1254, %v1701
        %v1705 = vpack.c.bf16 %v1700, %v1699
        %v1706 = vpack.c.bf16 %v1701, %v1701
        %v1707 = vpack.c.bf16 %v1592, %v1589
        %v1708 = vpack.c.bf16 %v1597, %v1597
        %v1710 = vsel %vm1215, %v1705, 0
        %v1713 = vsel %vm1215, %v1706, 0
        %v1716 = vsel %vm1265, %v1708, 0
        %1718 = vmatprep.subr.bf16.mxu0 0
        %1719 = vmatpush1.bf16.msra.mxu0 %v1707
        %1720 = vmatprep.subr.bf16.mxu0 0
        %1721 = vmatpush1.bf16.msra.mxu0 %v1716
        %1722 = vmatprep.subr.bf16.mxu0 0
        %1723 = vmatpush1.bf16.msra.mxu0 0
        %1724 = vmatprep.subr.bf16.mxu0 0
        %1725 = vmatpush1.bf16.msra.mxu0 0
        %1726 = vmatprep.subr.bf16.mxu0 0
        %1727 = vmatpush1.bf16.msra.mxu0 0
        %1728 = vmatprep.subr.bf16.mxu0 0
        %1729 = vmatpush1.bf16.msra.mxu0 0
        %1730 = vmatprep.subr.bf16.mxu0 0
        %1731 = vmatpush1.bf16.msra.mxu0 0
        %1732 = vmatprep.subr.bf16.mxu0 0
        %1733 = vmatpush1.bf16.msra.mxu0 0
        %1734 = vmatprep.subr.bf16.mxu0 0
        %1735 = vmatpush1.bf16.msra.mxu0 0
        %1736 = vmatprep.subr.bf16.mxu0 0
        %1737 = vmatpush1.bf16.msra.mxu0 0
        %1738 = vmatprep.subr.bf16.mxu0 0
        %1739 = vmatpush1.bf16.msra.mxu0 0
        %1740 = vmatprep.subr.bf16.mxu0 0
        %1741 = vmatpush1.bf16.msra.mxu0 0
        %1742 = vmatprep.subr.bf16.mxu0 0
        %1743 = vmatpush1.bf16.msra.mxu0 0
        %1744 = vmatprep.subr.bf16.mxu0 0
        %1745 = vmatpush1.bf16.msra.mxu0 0
        %1746 = vmatprep.subr.bf16.mxu0 0
        %1747 = vmatpush1.bf16.msra.mxu0 0
        %1748 = vmatprep.subr.bf16.mxu0 0
        %1749 = vmatpush1.bf16.msra.mxu0 0
        %1750 = vmatprep.mubr.bf16.mxu0 0
        %1751 = vmatmul.mubr.bf16.gmra.mrb[0].mxu0 %v1710
        %v1752 = vpop.f32.mrb[0].mxu0
        %v1753 = vadd.f32 0.0, %v1752
        %v1754 = vpop.f32.mrb[0].mxu0
        %v1755 = vpop.f32.mrb[0].mxu0
        %v1756 = vadd.f32 0.0, %v1755
        %v1757 = vpop.f32.mrb[0].mxu0
        %1758 = vmatprep.mubr.bf16.mxu0 0
        %1759 = vmatmul.mubr.bf16.gmra.mrb[0].mxu0 %v1713
        %v1760 = vpop.f32.mrb[0].mxu0
        %v1761 = vadd.f32 0.0, %v1760
        %v1762 = vpop.f32.mrb[0].mxu0
        %v1763 = vpop.f32.mrb[0].mxu0
        %v1764 = vpop.f32.mrb[0].mxu0
        %1765 = vdwg.mxu0
        %v1766 = vpack.c.bf16 %v1756, %v1753
        %v1767 = vpack.c.bf16 %v1761, %v1761
        %s1768 = scalar_lea.vmem [#allocation17], 4
        %v1769 = vld [vmem:[%s1768] sm:$0xf]
        %v1771 = vsel %vm1154, %v1766, 0
        %v1774 = vsel %vm1154, %v1767, 0
        %v1777 = vsel %vm1265, %v1769, 0
        %1779 = vmatprep.subr.bf16.mxu0 0
        %1780 = vmatpush1.bf16.msra.mxu0 %v1777
        %1781 = vmatprep.subr.bf16.mxu0 0
        %1782 = vmatpush1.bf16.msra.mxu0 0
        %1783 = vmatprep.subr.bf16.mxu0 0
        %1784 = vmatpush1.bf16.msra.mxu0 0
        %1785 = vmatprep.subr.bf16.mxu0 0
        %1786 = vmatpush1.bf16.msra.mxu0 0
        %1787 = vmatprep.subr.bf16.mxu0 0
        %1788 = vmatpush1.bf16.msra.mxu0 0
        %1789 = vmatprep.subr.bf16.mxu0 0
        %1790 = vmatpush1.bf16.msra.mxu0 0
        %1791 = vmatprep.subr.bf16.mxu0 0
        %1792 = vmatpush1.bf16.msra.mxu0 0
        %1793 = vmatprep.subr.bf16.mxu0 0
        %1794 = vmatpush1.bf16.msra.mxu0 0
        %1795 = vmatprep.subr.bf16.mxu0 0
        %1796 = vmatpush1.bf16.msra.mxu0 0
        %1797 = vmatprep.subr.bf16.mxu0 0
        %1798 = vmatpush1.bf16.msra.mxu0 0
        %1799 = vmatprep.subr.bf16.mxu0 0
        %1800 = vmatpush1.bf16.msra.mxu0 0
        %1801 = vmatprep.subr.bf16.mxu0 0
        %1802 = vmatpush1.bf16.msra.mxu0 0
        %1803 = vmatprep.subr.bf16.mxu0 0
        %1804 = vmatpush1.bf16.msra.mxu0 0
        %1805 = vmatprep.subr.bf16.mxu0 0
        %1806 = vmatpush1.bf16.msra.mxu0 0
        %1807 = vmatprep.subr.bf16.mxu0 0
        %1808 = vmatpush1.bf16.msra.mxu0 0
        %1809 = vmatprep.subr.bf16.mxu0 0
        %1810 = vmatpush1.bf16.msra.mxu0 0
        %1811 = vmatprep.mubr.bf16.mxu0 0
        %1812 = vmatmul.mubr.bf16.gmra.mrb[0].mxu0 %v1771
        %v1813 = vpop.f32.mrb[0].mxu0
        %v1814 = vadd.f32 0.0, %v1813
        %v1815 = vpop.f32.mrb[0].mxu0
        %v1816 = vpop.f32.mrb[0].mxu0
        %v1817 = vadd.f32 0.0, %v1816
        %v1818 = vpop.f32.mrb[0].mxu0
        %1819 = vmatprep.mubr.bf16.mxu0 0
        %1820 = vmatmul.mubr.bf16.gmra.mrb[0].mxu0 %v1774
        %v1821 = vpop.f32.mrb[0].mxu0
        %v1822 = vadd.f32 0.0, %v1821
        %v1823 = vpop.f32.mrb[0].mxu0
        %v1824 = vpop.f32.mrb[0].mxu0
        %v1825 = vpop.f32.mrb[0].mxu0
        %1826 = vdwg.mxu0
        %v1827 = vadd.f32 %v1377, %v1814
        %v1828 = vadd.f32 %v1378, %v1817
        %v1829 = vadd.f32 %v1379, %v1822
        %s1830 = scalar_lea.vmem [#allocation8], 32
        %v1831 = vld [vmem:[%s1830] sm:$0xf]
        %v1832 = vld [vmem:[%s1830 + $0x4] sm:$0xf]
        %v1833 = vld [vmem:[%s1830 + $0x8] sm:$0xf]
        %v1834 = vld [vmem:[%s1830 + $0xc] sm:$0xf]
        %s1835 = scalar_lea.vmem [#allocation13], 2
        %v1836 = vld [vmem:[%s1835] sm:$0x1]
        %v1838 = vlaneseq
        %v1839 = vshrl.u32 %v1838, 7
        %v1840 = vsub.s32 0, %v1839
        %v1841 = vrot.slane %v1836, %v1840
        %v1847 = vunpack.c.l.b16 %v1831
        %v1848 = vunpack.c.l.b16 %v1832
        %v1849 = vunpack.c.l.b16 %v1833
        %v1850 = vunpack.c.l.b16 %v1834
        %v1851 = vpack.c.b16 %v1848, %v1847
        %v1852 = vpack.c.b16 %v1850, %v1849
        %1855 = vmatprep.subr.bf16.mxu0 0
        %1856 = vmatpush1.bf16.msra.mxu0 %v1851
        %1857 = vmatprep.subr.bf16.mxu0 0
        %1858 = vmatpush1.bf16.msra.mxu0 %v1852
        %1859 = vmatprep.subr.bf16.mxu0 0
        %1860 = vmatpush1.bf16.msra.mxu0 0
        %1861 = vmatprep.subr.bf16.mxu0 0
        %1862 = vmatpush1.bf16.msra.mxu0 0
        %1863 = vmatprep.subr.bf16.mxu0 0
        %1864 = vmatpush1.bf16.msra.mxu0 0
        %1865 = vmatprep.subr.bf16.mxu0 0
        %1866 = vmatpush1.bf16.msra.mxu0 0
        %1867 = vmatprep.subr.bf16.mxu0 0
        %1868 = vmatpush1.bf16.msra.mxu0 0
        %1869 = vmatprep.subr.bf16.mxu0 0
        %1870 = vmatpush1.bf16.msra.mxu0 0
        %1871 = vmatprep.subr.bf16.mxu0 0
        %1872 = vmatpush1.bf16.msra.mxu0 0
        %1873 = vmatprep.subr.bf16.mxu0 0
        %1874 = vmatpush1.bf16.msra.mxu0 0
        %1875 = vmatprep.subr.bf16.mxu0 0
        %1876 = vmatpush1.bf16.msra.mxu0 0
        %1877 = vmatprep.subr.bf16.mxu0 0
        %1878 = vmatpush1.bf16.msra.mxu0 0
        %1879 = vmatprep.subr.bf16.mxu0 0
        %1880 = vmatpush1.bf16.msra.mxu0 0
        %1881 = vmatprep.subr.bf16.mxu0 0
        %1882 = vmatpush1.bf16.msra.mxu0 0
        %1883 = vmatprep.subr.bf16.mxu0 0
        %1884 = vmatpush1.bf16.msra.mxu0 0
        %1885 = vmatprep.subr.bf16.mxu0 0
        %1886 = vmatpush1.bf16.msra.mxu0 0
        %1887 = vmatprep.mubr.bf16.mxu0 0
        %1888 = vmatmul.mubr.bf16.gmra.mrb[0].mxu0 %v952
        %v1889 = vpop.f32.mrb[0].mxu0
        %v1890 = vadd.f32 %v1841, %v1889
        %v1891 = vpop.f32.mrb[0].mxu0
        %v1892 = vpop.f32.mrb[0].mxu0
        %v1893 = vadd.f32 %v1841, %v1892
        %v1894 = vpop.f32.mrb[0].mxu0
        %1895 = vmatprep.mubr.bf16.mxu0 0
        %1896 = vmatmul.mubr.bf16.gmra.mrb[0].mxu0 %v955
        %v1897 = vpop.f32.mrb[0].mxu0
        %v1898 = vadd.f32 %v1841, %v1897
        %v1899 = vpop.f32.mrb[0].mxu0
        %v1900 = vpop.f32.mrb[0].mxu0
        %v1901 = vpop.f32.mrb[0].mxu0
        %1902 = vdwg.mxu0
        %v1903 = vmul.f32 %v1890, 0.35355338
        %v1904 = vmul.f32 %v1893, 0.35355338
        %v1905 = vmul.f32 %v1898, 0.35355338
        %s1906 = scalar_lea.vmem [#allocation10], 32
        %v1907 = vld [vmem:[%s1906] sm:$0xf]
        %v1908 = vld [vmem:[%s1906 + $0x4] sm:$0xf]
        %v1909 = vld [vmem:[%s1906 + $0x8] sm:$0xf]
        %v1910 = vld [vmem:[%s1906 + $0xc] sm:$0xf]
        %s1911 = scalar_lea.vmem [#allocation14], 2
        %v1912 = vld [vmem:[%s1911] sm:$0x1]
        %v1914 = vlaneseq
        %v1915 = vshrl.u32 %v1914, 7
        %v1916 = vsub.s32 0, %v1915
        %v1917 = vrot.slane %v1912, %v1916
        %v1923 = vunpack.c.l.b16 %v1907
        %v1924 = vunpack.c.l.b16 %v1908
        %v1925 = vunpack.c.l.b16 %v1909
        %v1926 = vunpack.c.l.b16 %v1910
        %v1927 = vpack.c.b16 %v1924, %v1923
        %v1928 = vpack.c.b16 %v1926, %v1925
        %1931 = vmatprep.subr.bf16.mxu0 0
        %1932 = vmatpush1.bf16.msra.mxu0 %v1927
        %1933 = vmatprep.subr.bf16.mxu0 0
        %1934 = vmatpush1.bf16.msra.mxu0 %v1928
        %1935 = vmatprep.subr.bf16.mxu0 0
        %1936 = vmatpush1.bf16.msra.mxu0 0
        %1937 = vmatprep.subr.bf16.mxu0 0
        %1938 = vmatpush1.bf16.msra.mxu0 0
        %1939 = vmatprep.subr.bf16.mxu0 0
        %1940 = vmatpush1.bf16.msra.mxu0 0
        %1941 = vmatprep.subr.bf16.mxu0 0
        %1942 = vmatpush1.bf16.msra.mxu0 0
        %1943 = vmatprep.subr.bf16.mxu0 0
        %1944 = vmatpush1.bf16.msra.mxu0 0
        %1945 = vmatprep.subr.bf16.mxu0 0
        %1946 = vmatpush1.bf16.msra.mxu0 0
        %1947 = vmatprep.subr.bf16.mxu0 0
        %1948 = vmatpush1.bf16.msra.mxu0 0
        %1949 = vmatprep.subr.bf16.mxu0 0
        %1950 = vmatpush1.bf16.msra.mxu0 0
        %1951 = vmatprep.subr.bf16.mxu0 0
        %1952 = vmatpush1.bf16.msra.mxu0 0
        %1953 = vmatprep.subr.bf16.mxu0 0
        %1954 = vmatpush1.bf16.msra.mxu0 0
        %1955 = vmatprep.subr.bf16.mxu0 0
        %1956 = vmatpush1.bf16.msra.mxu0 0
        %1957 = vmatprep.subr.bf16.mxu0 0
        %1958 = vmatpush1.bf16.msra.mxu0 0
        %1959 = vmatprep.subr.bf16.mxu0 0
        %1960 = vmatpush1.bf16.msra.mxu0 0
        %1961 = vmatprep.subr.bf16.mxu0 0
        %1962 = vmatpush1.bf16.msra.mxu0 0
        %1963 = vmatprep.mubr.bf16.mxu0 0
        %1964 = vmatmul.mubr.bf16.gmra.mrb[0].mxu0 %v952
        %v1965 = vpop.f32.mrb[0].mxu0
        %v1966 = vadd.f32 %v1917, %v1965
        %v1967 = vpop.f32.mrb[0].mxu0
        %v1968 = vpop.f32.mrb[0].mxu0
        %v1969 = vadd.f32 %v1917, %v1968
        %v1970 = vpop.f32.mrb[0].mxu0
        %1971 = vmatprep.mubr.bf16.mxu0 0
        %1972 = vmatmul.mubr.bf16.gmra.mrb[0].mxu0 %v955
        %v1973 = vpop.f32.mrb[0].mxu0
        %v1974 = vadd.f32 %v1917, %v1973
        %v1975 = vpop.f32.mrb[0].mxu0
        %v1976 = vpop.f32.mrb[0].mxu0
        %v1977 = vpop.f32.mrb[0].mxu0
        %1978 = vdwg.mxu0
        %s1979 = scalar_lea.vmem [#allocation11], 32
        %v1980 = vld [vmem:[%s1979] sm:$0xf]
        %v1981 = vld [vmem:[%s1979 + $0x4] sm:$0xf]
        %v1982 = vld [vmem:[%s1979 + $0x8] sm:$0xf]
        %v1983 = vld [vmem:[%s1979 + $0xc] sm:$0xf]
        %s1984 = scalar_lea.vmem [#allocation16], 2
        %v1985 = vld [vmem:[%s1984] sm:$0x1]
        %v1987 = vlaneseq
        %v1988 = vshrl.u32 %v1987, 7
        %v1989 = vsub.s32 0, %v1988
        %v1990 = vrot.slane %v1985, %v1989
        %v1996 = vunpack.c.l.b16 %v1980
        %v1997 = vunpack.c.l.b16 %v1981
        %v1998 = vunpack.c.l.b16 %v1982
        %v1999 = vunpack.c.l.b16 %v1983
        %v2000 = vpack.c.b16 %v1997, %v1996
        %v2001 = vpack.c.b16 %v1999, %v1998
        %2004 = vmatprep.subr.bf16.mxu0 0
        %2005 = vmatpush1.bf16.msra.mxu0 %v2000
        %2006 = vmatprep.subr.bf16.mxu0 0
        %2007 = vmatpush1.bf16.msra.mxu0 %v2001
        %2008 = vmatprep.subr.bf16.mxu0 0
        %2009 = vmatpush1.bf16.msra.mxu0 0
        %2010 = vmatprep.subr.bf16.mxu0 0
        %2011 = vmatpush1.bf16.msra.mxu0 0
        %2012 = vmatprep.subr.bf16.mxu0 0
        %2013 = vmatpush1.bf16.msra.mxu0 0
        %2014 = vmatprep.subr.bf16.mxu0 0
        %2015 = vmatpush1.bf16.msra.mxu0 0
        %2016 = vmatprep.subr.bf16.mxu0 0
        %2017 = vmatpush1.bf16.msra.mxu0 0
        %2018 = vmatprep.subr.bf16.mxu0 0
        %2019 = vmatpush1.bf16.msra.mxu0 0
        %2020 = vmatprep.subr.bf16.mxu0 0
        %2021 = vmatpush1.bf16.msra.mxu0 0
        %2022 = vmatprep.subr.bf16.mxu0 0
        %2023 = vmatpush1.bf16.msra.mxu0 0
        %2024 = vmatprep.subr.bf16.mxu0 0
        %2025 = vmatpush1.bf16.msra.mxu0 0
        %2026 = vmatprep.subr.bf16.mxu0 0
        %2027 = vmatpush1.bf16.msra.mxu0 0
        %2028 = vmatprep.subr.bf16.mxu0 0
        %2029 = vmatpush1.bf16.msra.mxu0 0
        %2030 = vmatprep.subr.bf16.mxu0 0
        %2031 = vmatpush1.bf16.msra.mxu0 0
        %2032 = vmatprep.subr.bf16.mxu0 0
        %2033 = vmatpush1.bf16.msra.mxu0 0
        %2034 = vmatprep.subr.bf16.mxu0 0
        %2035 = vmatpush1.bf16.msra.mxu0 0
        %2036 = vmatprep.mubr.bf16.mxu0 0
        %2037 = vmatmul.mubr.bf16.gmra.mrb[0].mxu0 %v952
        %v2038 = vpop.f32.mrb[0].mxu0
        %v2039 = vadd.f32 %v1990, %v2038
        %v2040 = vpop.f32.mrb[0].mxu0
        %v2041 = vpop.f32.mrb[0].mxu0
        %v2042 = vadd.f32 %v1990, %v2041
        %v2043 = vpop.f32.mrb[0].mxu0
        %2044 = vmatprep.mubr.bf16.mxu0 0
        %2045 = vmatmul.mubr.bf16.gmra.mrb[0].mxu0 %v955
        %v2046 = vpop.f32.mrb[0].mxu0
        %v2047 = vadd.f32 %v1990, %v2046
        %v2048 = vpop.f32.mrb[0].mxu0
        %v2049 = vpop.f32.mrb[0].mxu0
        %v2050 = vpop.f32.mrb[0].mxu0
        %2051 = vdwg.mxu0
        %v2052 = vpack.c.bf16 %v1904, %v1903
        %v2053 = vpack.c.bf16 %v1905, %v1905
        %v2054 = vpack.c.bf16 %v1969, %v1966
        %v2055 = vpack.c.bf16 %v1974, %v1974
        %v2057 = vsel %vm1154, %v2052, 0
        %v2060 = vsel %vm1154, %v2053, 0
        %v2063 = vsel %vm1154, %v2054, 0
        %v2066 = vsel %vm1154, %v2055, 0
        %2068 = vmatprep.subr.bf16.mxu0 0
        %2069 = vmatpush1.bf16.xpose.msra.mxu0 %v2063
        %2070 = vmatprep.subr.bf16.mxu0 0
        %2071 = vmatpush1.bf16.xpose.msra.mxu0 %v2066
        %2072 = vmatprep.subr.bf16.mxu0 0
        %2073 = vmatpush1.bf16.xpose.msra.mxu0 0
        %2074 = vmatprep.subr.bf16.mxu0 0
        %2075 = vmatpush1.bf16.xpose.msra.mxu0 0
        %2076 = vmatprep.subr.bf16.mxu0 0
        %2077 = vmatpush1.bf16.xpose.msra.mxu0 0
        %2078 = vmatprep.subr.bf16.mxu0 0
        %2079 = vmatpush1.bf16.xpose.msra.mxu0 0
        %2080 = vmatprep.subr.bf16.mxu0 0
        %2081 = vmatpush1.bf16.xpose.msra.mxu0 0
        %2082 = vmatprep.subr.bf16.mxu0 0
        %2083 = vmatpush1.bf16.xpose.msra.mxu0 0
        %2084 = vmatprep.subr.bf16.mxu0 0
        %2085 = vmatpush1.bf16.xpose.msra.mxu0 0
        %2086 = vmatprep.subr.bf16.mxu0 0
        %2087 = vmatpush1.bf16.xpose.msra.mxu0 0
        %2088 = vmatprep.subr.bf16.mxu0 0
        %2089 = vmatpush1.bf16.xpose.msra.mxu0 0
        %2090 = vmatprep.subr.bf16.mxu0 0
        %2091 = vmatpush1.bf16.xpose.msra.mxu0 0
        %2092 = vmatprep.subr.bf16.mxu0 0
        %2093 = vmatpush1.bf16.xpose.msra.mxu0 0
        %2094 = vmatprep.subr.bf16.mxu0 0
        %2095 = vmatpush1.bf16.xpose.msra.mxu0 0
        %2096 = vmatprep.subr.bf16.mxu0 0
        %2097 = vmatpush1.bf16.xpose.msra.mxu0 0
        %2098 = vmatprep.subr.bf16.mxu0 0
        %2099 = vmatpush1.bf16.xpose.msra.mxu0 0
        %2100 = vmatprep.mubr.bf16.mxu0 0
        %2101 = vmatmul.mubr.bf16.gmra.mrb[0].mxu0 %v2057
        %v2102 = vpop.f32.mrb[0].mxu0
        %v2103 = vadd.f32 0.0, %v2102
        %v2104 = vpop.f32.mrb[0].mxu0
        %v2105 = vpop.f32.mrb[0].mxu0
        %v2106 = vadd.f32 0.0, %v2105
        %v2107 = vpop.f32.mrb[0].mxu0
        %2108 = vmatprep.mubr.bf16.mxu0 0
        %2109 = vmatmul.mubr.bf16.gmra.mrb[0].mxu0 %v2060
        %v2110 = vpop.f32.mrb[0].mxu0
        %v2111 = vadd.f32 0.0, %v2110
        %v2112 = vpop.f32.mrb[0].mxu0
        %v2113 = vpop.f32.mrb[0].mxu0
        %v2114 = vpop.f32.mrb[0].mxu0
        %2115 = vdwg.mxu0
        %v2116 = vsel %vm1215, %v2103, -inf
        %2117 = vmax.xlane.f32.xlu0 %v2116
        %v2118 = vpop.xlane.xlu0 %2117
        %v2119 = vsel %vm1215, %v2106, -inf
        %2120 = vmax.xlane.f32.xlu0 %v2119
        %v2121 = vpop.xlane.xlu0 %2120
        %v2122 = vsel %vm1215, %v2111, -inf
        %2123 = vmax.xlane.f32.xlu0 %v2122
        %v2124 = vpop.xlane.xlu0 %2123
        %v2125 = vsub.f32 %v2103, %v2118
        %v2126 = vsub.f32 %v2106, %v2121
        %v2127 = vsub.f32 %v2111, %v2124
        %v2128 = vmul.f32 %v2125, 1.442695
        %v2129 = vpow.pop %v2128
        %v2130 = vmul.f32 %v2126, 1.442695
        %v2131 = vpow.pop %v2130
        %v2132 = vmul.f32 %v2127, 1.442695
        %v2133 = vpow.pop %v2132
        %v2134 = vsel %vm1215, %v2129, 0.0
        %2135 = vadd.xlane.f32.xlu0 %v2134
        %v2136 = vpop.xlane.xlu0 %2135
        %v2137 = vsel %vm1215, %v2131, 0.0
        %2138 = vadd.xlane.f32.xlu0 %v2137
        %v2139 = vpop.xlane.xlu0 %2138
        %v2140 = vsel %vm1215, %v2133, 0.0
        %2141 = vadd.xlane.f32.xlu0 %v2140
        %v2142 = vpop.xlane.xlu0 %2141
        %v2143 = vrcp.pop %v2136
        %v2144 = vmul.f32 1.0, %v2143
        %v2145 = vrcp.pop %v2139
        %v2146 = vmul.f32 1.0, %v2145
        %v2147 = vrcp.pop %v2142
        %v2148 = vmul.f32 1.0, %v2147
        %v2149 = vmul.f32 %v2129, %v2144
        %v2150 = vmul.f32 %v2131, %v2146
        %v2151 = vmul.f32 %v2133, %v2148
        %v2152 = vadd.f32 %v1702, %v2149
        %v2153 = vadd.f32 %v1703, %v2150
        %v2154 = vadd.f32 %v1704, %v2151
        %v2155 = vpack.c.bf16 %v2150, %v2149
        %v2156 = vpack.c.bf16 %v2151, %v2151
        %v2157 = vpack.c.bf16 %v2042, %v2039
        %v2158 = vpack.c.bf16 %v2047, %v2047
        %v2160 = vsel %vm1215, %v2155, 0
        %v2163 = vsel %vm1215, %v2156, 0
        %v2166 = vsel %vm1265, %v2158, 0
        %2168 = vmatprep.subr.bf16.mxu0 0
        %2169 = vmatpush1.bf16.msra.mxu0 %v2157
        %2170 = vmatprep.subr.bf16.mxu0 0
        %2171 = vmatpush1.bf16.msra.mxu0 %v2166
        %2172 = vmatprep.subr.bf16.mxu0 0
        %2173 = vmatpush1.bf16.msra.mxu0 0
        %2174 = vmatprep.subr.bf16.mxu0 0
        %2175 = vmatpush1.bf16.msra.mxu0 0
        %2176 = vmatprep.subr.bf16.mxu0 0
        %2177 = vmatpush1.bf16.msra.mxu0 0
        %2178 = vmatprep.subr.bf16.mxu0 0
        %2179 = vmatpush1.bf16.msra.mxu0 0
        %2180 = vmatprep.subr.bf16.mxu0 0
        %2181 = vmatpush1.bf16.msra.mxu0 0
        %2182 = vmatprep.subr.bf16.mxu0 0
        %2183 = vmatpush1.bf16.msra.mxu0 0
        %2184 = vmatprep.subr.bf16.mxu0 0
        %2185 = vmatpush1.bf16.msra.mxu0 0
        %2186 = vmatprep.subr.bf16.mxu0 0
        %2187 = vmatpush1.bf16.msra.mxu0 0
        %2188 = vmatprep.subr.bf16.mxu0 0
        %2189 = vmatpush1.bf16.msra.mxu0 0
        %2190 = vmatprep.subr.bf16.mxu0 0
        %2191 = vmatpush1.bf16.msra.mxu0 0
        %2192 = vmatprep.subr.bf16.mxu0 0
        %2193 = vmatpush1.bf16.msra.mxu0 0
        %2194 = vmatprep.subr.bf16.mxu0 0
        %2195 = vmatpush1.bf16.msra.mxu0 0
        %2196 = vmatprep.subr.bf16.mxu0 0
        %2197 = vmatpush1.bf16.msra.mxu0 0
        %2198 = vmatprep.subr.bf16.mxu0 0
        %2199 = vmatpush1.bf16.msra.mxu0 0
        %2200 = vmatprep.mubr.bf16.mxu0 0
        %2201 = vmatmul.mubr.bf16.gmra.mrb[0].mxu0 %v2160
        %v2202 = vpop.f32.mrb[0].mxu0
        %v2203 = vadd.f32 0.0, %v2202
        %v2204 = vpop.f32.mrb[0].mxu0
        %v2205 = vpop.f32.mrb[0].mxu0
        %v2206 = vadd.f32 0.0, %v2205
        %v2207 = vpop.f32.mrb[0].mxu0
        %2208 = vmatprep.mubr.bf16.mxu0 0
        %2209 = vmatmul.mubr.bf16.gmra.mrb[0].mxu0 %v2163
        %v2210 = vpop.f32.mrb[0].mxu0
        %v2211 = vadd.f32 0.0, %v2210
        %v2212 = vpop.f32.mrb[0].mxu0
        %v2213 = vpop.f32.mrb[0].mxu0
        %v2214 = vpop.f32.mrb[0].mxu0
        %2215 = vdwg.mxu0
        %v2216 = vpack.c.bf16 %v2206, %v2203
        %v2217 = vpack.c.bf16 %v2211, %v2211
        %s2218 = scalar_lea.vmem [#allocation17], 8
        %v2219 = vld [vmem:[%s2218] sm:$0xf]
        %v2221 = vsel %vm1154, %v2216, 0
        %v2224 = vsel %vm1154, %v2217, 0
        %v2227 = vsel %vm1265, %v2219, 0
        %2229 = vmatprep.subr.bf16.mxu0 0
        %2230 = vmatpush1.bf16.msra.mxu0 %v2227
        %2231 = vmatprep.subr.bf16.mxu0 0
        %2232 = vmatpush1.bf16.msra.mxu0 0
        %2233 = vmatprep.subr.bf16.mxu0 0
        %2234 = vmatpush1.bf16.msra.mxu0 0
        %2235 = vmatprep.subr.bf16.mxu0 0
        %2236 = vmatpush1.bf16.msra.mxu0 0
        %2237 = vmatprep.subr.bf16.mxu0 0
        %2238 = vmatpush1.bf16.msra.mxu0 0
        %2239 = vmatprep.subr.bf16.mxu0 0
        %2240 = vmatpush1.bf16.msra.mxu0 0
        %2241 = vmatprep.subr.bf16.mxu0 0
        %2242 = vmatpush1.bf16.msra.mxu0 0
        %2243 = vmatprep.subr.bf16.mxu0 0
        %2244 = vmatpush1.bf16.msra.mxu0 0
        %2245 = vmatprep.subr.bf16.mxu0 0
        %2246 = vmatpush1.bf16.msra.mxu0 0
        %2247 = vmatprep.subr.bf16.mxu0 0
        %2248 = vmatpush1.bf16.msra.mxu0 0
        %2249 = vmatprep.subr.bf16.mxu0 0
        %2250 = vmatpush1.bf16.msra.mxu0 0
        %2251 = vmatprep.subr.bf16.mxu0 0
        %2252 = vmatpush1.bf16.msra.mxu0 0
        %2253 = vmatprep.subr.bf16.mxu0 0
        %2254 = vmatpush1.bf16.msra.mxu0 0
        %2255 = vmatprep.subr.bf16.mxu0 0
        %2256 = vmatpush1.bf16.msra.mxu0 0
        %2257 = vmatprep.subr.bf16.mxu0 0
        %2258 = vmatpush1.bf16.msra.mxu0 0
        %2259 = vmatprep.subr.bf16.mxu0 0
        %2260 = vmatpush1.bf16.msra.mxu0 0
        %2261 = vmatprep.mubr.bf16.mxu0 0
        %2262 = vmatmul.mubr.bf16.gmra.mrb[0].mxu0 %v2221
        %v2263 = vpop.f32.mrb[0].mxu0
        %v2264 = vadd.f32 0.0, %v2263
        %v2265 = vpop.f32.mrb[0].mxu0
        %v2266 = vpop.f32.mrb[0].mxu0
        %v2267 = vadd.f32 0.0, %v2266
        %v2268 = vpop.f32.mrb[0].mxu0
        %2269 = vmatprep.mubr.bf16.mxu0 0
        %2270 = vmatmul.mubr.bf16.gmra.mrb[0].mxu0 %v2224
        %v2271 = vpop.f32.mrb[0].mxu0
        %v2272 = vadd.f32 0.0, %v2271
        %v2273 = vpop.f32.mrb[0].mxu0
        %v2274 = vpop.f32.mrb[0].mxu0
        %v2275 = vpop.f32.mrb[0].mxu0
        %2276 = vdwg.mxu0
        %v2277 = vadd.f32 %v1827, %v2264
        %v2278 = vadd.f32 %v1828, %v2267
        %v2279 = vadd.f32 %v1829, %v2272
        %s2280 = scalar_lea.vmem [#allocation8], 48
        %v2281 = vld [vmem:[%s2280] sm:$0xf]
        %v2282 = vld [vmem:[%s2280 + $0x4] sm:$0xf]
        %v2283 = vld [vmem:[%s2280 + $0x8] sm:$0xf]
        %v2284 = vld [vmem:[%s2280 + $0xc] sm:$0xf]
        %s2285 = scalar_lea.vmem [#allocation13], 3
        %v2286 = vld [vmem:[%s2285] sm:$0x1]
        %v2288 = vlaneseq
        %v2289 = vshrl.u32 %v2288, 7
        %v2290 = vsub.s32 0, %v2289
        %v2291 = vrot.slane %v2286, %v2290
        %v2297 = vunpack.c.l.b16 %v2281
        %v2298 = vunpack.c.l.b16 %v2282
        %v2299 = vunpack.c.l.b16 %v2283
        %v2300 = vunpack.c.l.b16 %v2284
        %v2301 = vpack.c.b16 %v2298, %v2297
        %v2302 = vpack.c.b16 %v2300, %v2299
        %2305 = vmatprep.subr.bf16.mxu0 0
        %2306 = vmatpush1.bf16.msra.mxu0 %v2301
        %2307 = vmatprep.subr.bf16.mxu0 0
        %2308 = vmatpush1.bf16.msra.mxu0 %v2302
        %2309 = vmatprep.subr.bf16.mxu0 0
        %2310 = vmatpush1.bf16.msra.mxu0 0
        %2311 = vmatprep.subr.bf16.mxu0 0
        %2312 = vmatpush1.bf16.msra.mxu0 0
        %2313 = vmatprep.subr.bf16.mxu0 0
        %2314 = vmatpush1.bf16.msra.mxu0 0
        %2315 = vmatprep.subr.bf16.mxu0 0
        %2316 = vmatpush1.bf16.msra.mxu0 0
        %2317 = vmatprep.subr.bf16.mxu0 0
        %2318 = vmatpush1.bf16.msra.mxu0 0
        %2319 = vmatprep.subr.bf16.mxu0 0
        %2320 = vmatpush1.bf16.msra.mxu0 0
        %2321 = vmatprep.subr.bf16.mxu0 0
        %2322 = vmatpush1.bf16.msra.mxu0 0
        %2323 = vmatprep.subr.bf16.mxu0 0
        %2324 = vmatpush1.bf16.msra.mxu0 0
        %2325 = vmatprep.subr.bf16.mxu0 0
        %2326 = vmatpush1.bf16.msra.mxu0 0
        %2327 = vmatprep.subr.bf16.mxu0 0
        %2328 = vmatpush1.bf16.msra.mxu0 0
        %2329 = vmatprep.subr.bf16.mxu0 0
        %2330 = vmatpush1.bf16.msra.mxu0 0
        %2331 = vmatprep.subr.bf16.mxu0 0
        %2332 = vmatpush1.bf16.msra.mxu0 0
        %2333 = vmatprep.subr.bf16.mxu0 0
        %2334 = vmatpush1.bf16.msra.mxu0 0
        %2335 = vmatprep.subr.bf16.mxu0 0
        %2336 = vmatpush1.bf16.msra.mxu0 0
        %2337 = vmatprep.mubr.bf16.mxu0 0
        %2338 = vmatmul.mubr.bf16.gmra.mrb[0].mxu0 %v952
        %v2339 = vpop.f32.mrb[0].mxu0
        %v2340 = vadd.f32 %v2291, %v2339
        %v2341 = vpop.f32.mrb[0].mxu0
        %v2342 = vpop.f32.mrb[0].mxu0
        %v2343 = vadd.f32 %v2291, %v2342
        %v2344 = vpop.f32.mrb[0].mxu0
        %2345 = vmatprep.mubr.bf16.mxu0 0
        %2346 = vmatmul.mubr.bf16.gmra.mrb[0].mxu0 %v955
        %v2347 = vpop.f32.mrb[0].mxu0
        %v2348 = vadd.f32 %v2291, %v2347
        %v2349 = vpop.f32.mrb[0].mxu0
        %v2350 = vpop.f32.mrb[0].mxu0
        %v2351 = vpop.f32.mrb[0].mxu0
        %2352 = vdwg.mxu0
        %v2353 = vmul.f32 %v2340, 0.35355338
        %v2354 = vmul.f32 %v2343, 0.35355338
        %v2355 = vmul.f32 %v2348, 0.35355338
        %s2356 = scalar_lea.vmem [#allocation10], 48
        %v2357 = vld [vmem:[%s2356] sm:$0xf]
        %v2358 = vld [vmem:[%s2356 + $0x4] sm:$0xf]
        %v2359 = vld [vmem:[%s2356 + $0x8] sm:$0xf]
        %v2360 = vld [vmem:[%s2356 + $0xc] sm:$0xf]
        %s2361 = scalar_lea.vmem [#allocation14], 3
        %v2362 = vld [vmem:[%s2361] sm:$0x1]
        %v2364 = vlaneseq
        %v2365 = vshrl.u32 %v2364, 7
        %v2366 = vsub.s32 0, %v2365
        %v2367 = vrot.slane %v2362, %v2366
        %v2373 = vunpack.c.l.b16 %v2357
        %v2374 = vunpack.c.l.b16 %v2358
        %v2375 = vunpack.c.l.b16 %v2359
        %v2376 = vunpack.c.l.b16 %v2360
        %v2377 = vpack.c.b16 %v2374, %v2373
        %v2378 = vpack.c.b16 %v2376, %v2375
        %2381 = vmatprep.subr.bf16.mxu0 0
        %2382 = vmatpush1.bf16.msra.mxu0 %v2377
        %2383 = vmatprep.subr.bf16.mxu0 0
        %2384 = vmatpush1.bf16.msra.mxu0 %v2378
        %2385 = vmatprep.subr.bf16.mxu0 0
        %2386 = vmatpush1.bf16.msra.mxu0 0
        %2387 = vmatprep.subr.bf16.mxu0 0
        %2388 = vmatpush1.bf16.msra.mxu0 0
        %2389 = vmatprep.subr.bf16.mxu0 0
        %2390 = vmatpush1.bf16.msra.mxu0 0
        %2391 = vmatprep.subr.bf16.mxu0 0
        %2392 = vmatpush1.bf16.msra.mxu0 0
        %2393 = vmatprep.subr.bf16.mxu0 0
        %2394 = vmatpush1.bf16.msra.mxu0 0
        %2395 = vmatprep.subr.bf16.mxu0 0
        %2396 = vmatpush1.bf16.msra.mxu0 0
        %2397 = vmatprep.subr.bf16.mxu0 0
        %2398 = vmatpush1.bf16.msra.mxu0 0
        %2399 = vmatprep.subr.bf16.mxu0 0
        %2400 = vmatpush1.bf16.msra.mxu0 0
        %2401 = vmatprep.subr.bf16.mxu0 0
        %2402 = vmatpush1.bf16.msra.mxu0 0
        %2403 = vmatprep.subr.bf16.mxu0 0
        %2404 = vmatpush1.bf16.msra.mxu0 0
        %2405 = vmatprep.subr.bf16.mxu0 0
        %2406 = vmatpush1.bf16.msra.mxu0 0
        %2407 = vmatprep.subr.bf16.mxu0 0
        %2408 = vmatpush1.bf16.msra.mxu0 0
        %2409 = vmatprep.subr.bf16.mxu0 0
        %2410 = vmatpush1.bf16.msra.mxu0 0
        %2411 = vmatprep.subr.bf16.mxu0 0
        %2412 = vmatpush1.bf16.msra.mxu0 0
        %2413 = vmatprep.mubr.bf16.mxu0 0
        %2414 = vmatmul.mubr.bf16.gmra.mrb[0].mxu0 %v952
        %v2415 = vpop.f32.mrb[0].mxu0
        %v2416 = vadd.f32 %v2367, %v2415
        %v2417 = vpop.f32.mrb[0].mxu0
        %v2418 = vpop.f32.mrb[0].mxu0
        %v2419 = vadd.f32 %v2367, %v2418
        %v2420 = vpop.f32.mrb[0].mxu0
        %2421 = vmatprep.mubr.bf16.mxu0 0
        %2422 = vmatmul.mubr.bf16.gmra.mrb[0].mxu0 %v955
        %v2423 = vpop.f32.mrb[0].mxu0
        %v2424 = vadd.f32 %v2367, %v2423
        %v2425 = vpop.f32.mrb[0].mxu0
        %v2426 = vpop.f32.mrb[0].mxu0
        %v2427 = vpop.f32.mrb[0].mxu0
        %2428 = vdwg.mxu0
        %s2429 = scalar_lea.vmem [#allocation11], 48
        %v2430 = vld [vmem:[%s2429] sm:$0xf]
        %v2431 = vld [vmem:[%s2429 + $0x4] sm:$0xf]
        %v2432 = vld [vmem:[%s2429 + $0x8] sm:$0xf]
        %v2433 = vld [vmem:[%s2429 + $0xc] sm:$0xf]
        %s2434 = scalar_lea.vmem [#allocation16], 3
        %v2435 = vld [vmem:[%s2434] sm:$0x1]
        %v2437 = vlaneseq
        %v2438 = vshrl.u32 %v2437, 7
        %v2439 = vsub.s32 0, %v2438
        %v2440 = vrot.slane %v2435, %v2439
        %v2446 = vunpack.c.l.b16 %v2430
        %v2447 = vunpack.c.l.b16 %v2431
        %v2448 = vunpack.c.l.b16 %v2432
        %v2449 = vunpack.c.l.b16 %v2433
        %v2450 = vpack.c.b16 %v2447, %v2446
        %v2451 = vpack.c.b16 %v2449, %v2448
        %2454 = vmatprep.subr.bf16.mxu0 0
        %2455 = vmatpush1.bf16.msra.mxu0 %v2450
        %2456 = vmatprep.subr.bf16.mxu0 0
        %2457 = vmatpush1.bf16.msra.mxu0 %v2451
        %2458 = vmatprep.subr.bf16.mxu0 0
        %2459 = vmatpush1.bf16.msra.mxu0 0
        %2460 = vmatprep.subr.bf16.mxu0 0
        %2461 = vmatpush1.bf16.msra.mxu0 0
        %2462 = vmatprep.subr.bf16.mxu0 0
        %2463 = vmatpush1.bf16.msra.mxu0 0
        %2464 = vmatprep.subr.bf16.mxu0 0
        %2465 = vmatpush1.bf16.msra.mxu0 0
        %2466 = vmatprep.subr.bf16.mxu0 0
        %2467 = vmatpush1.bf16.msra.mxu0 0
        %2468 = vmatprep.subr.bf16.mxu0 0
        %2469 = vmatpush1.bf16.msra.mxu0 0
        %2470 = vmatprep.subr.bf16.mxu0 0
        %2471 = vmatpush1.bf16.msra.mxu0 0
        %2472 = vmatprep.subr.bf16.mxu0 0
        %2473 = vmatpush1.bf16.msra.mxu0 0
        %2474 = vmatprep.subr.bf16.mxu0 0
        %2475 = vmatpush1.bf16.msra.mxu0 0
        %2476 = vmatprep.subr.bf16.mxu0 0
        %2477 = vmatpush1.bf16.msra.mxu0 0
        %2478 = vmatprep.subr.bf16.mxu0 0
        %2479 = vmatpush1.bf16.msra.mxu0 0
        %2480 = vmatprep.subr.bf16.mxu0 0
        %2481 = vmatpush1.bf16.msra.mxu0 0
        %2482 = vmatprep.subr.bf16.mxu0 0
        %2483 = vmatpush1.bf16.msra.mxu0 0
        %2484 = vmatprep.subr.bf16.mxu0 0
        %2485 = vmatpush1.bf16.msra.mxu0 0
        %2486 = vmatprep.mubr.bf16.mxu0 0
        %2487 = vmatmul.mubr.bf16.gmra.mrb[0].mxu0 %v952
        %v2488 = vpop.f32.mrb[0].mxu0
        %v2489 = vadd.f32 %v2440, %v2488
        %v2490 = vpop.f32.mrb[0].mxu0
        %v2491 = vpop.f32.mrb[0].mxu0
        %v2492 = vadd.f32 %v2440, %v2491
        %v2493 = vpop.f32.mrb[0].mxu0
        %2494 = vmatprep.mubr.bf16.mxu0 0
        %2495 = vmatmul.mubr.bf16.gmra.mrb[0].mxu0 %v955
        %v2496 = vpop.f32.mrb[0].mxu0
        %v2497 = vadd.f32 %v2440, %v2496
        %v2498 = vpop.f32.mrb[0].mxu0
        %v2499 = vpop.f32.mrb[0].mxu0
        %v2500 = vpop.f32.mrb[0].mxu0
        %2501 = vdwg.mxu0
        %v2502 = vpack.c.bf16 %v2354, %v2353
        %v2503 = vpack.c.bf16 %v2355, %v2355
        %v2504 = vpack.c.bf16 %v2419, %v2416
        %v2505 = vpack.c.bf16 %v2424, %v2424
        %v2507 = vsel %vm1154, %v2502, 0
        %v2510 = vsel %vm1154, %v2503, 0
        %v2513 = vsel %vm1154, %v2504, 0
        %v2516 = vsel %vm1154, %v2505, 0
        %2518 = vmatprep.subr.bf16.mxu0 0
        %2519 = vmatpush1.bf16.xpose.msra.mxu0 %v2513
        %2520 = vmatprep.subr.bf16.mxu0 0
        %2521 = vmatpush1.bf16.xpose.msra.mxu0 %v2516
        %2522 = vmatprep.subr.bf16.mxu0 0
        %2523 = vmatpush1.bf16.xpose.msra.mxu0 0
        %2524 = vmatprep.subr.bf16.mxu0 0
        %2525 = vmatpush1.bf16.xpose.msra.mxu0 0
        %2526 = vmatprep.subr.bf16.mxu0 0
        %2527 = vmatpush1.bf16.xpose.msra.mxu0 0
        %2528 = vmatprep.subr.bf16.mxu0 0
        %2529 = vmatpush1.bf16.xpose.msra.mxu0 0
        %2530 = vmatprep.subr.bf16.mxu0 0
        %2531 = vmatpush1.bf16.xpose.msra.mxu0 0
        %2532 = vmatprep.subr.bf16.mxu0 0
        %2533 = vmatpush1.bf16.xpose.msra.mxu0 0
        %2534 = vmatprep.subr.bf16.mxu0 0
        %2535 = vmatpush1.bf16.xpose.msra.mxu0 0
        %2536 = vmatprep.subr.bf16.mxu0 0
        %2537 = vmatpush1.bf16.xpose.msra.mxu0 0
        %2538 = vmatprep.subr.bf16.mxu0 0
        %2539 = vmatpush1.bf16.xpose.msra.mxu0 0
        %2540 = vmatprep.subr.bf16.mxu0 0
        %2541 = vmatpush1.bf16.xpose.msra.mxu0 0
        %2542 = vmatprep.subr.bf16.mxu0 0
        %2543 = vmatpush1.bf16.xpose.msra.mxu0 0
        %2544 = vmatprep.subr.bf16.mxu0 0
        %2545 = vmatpush1.bf16.xpose.msra.mxu0 0
        %2546 = vmatprep.subr.bf16.mxu0 0
        %2547 = vmatpush1.bf16.xpose.msra.mxu0 0
        %2548 = vmatprep.subr.bf16.mxu0 0
        %2549 = vmatpush1.bf16.xpose.msra.mxu0 0
        %2550 = vmatprep.mubr.bf16.mxu0 0
        %2551 = vmatmul.mubr.bf16.gmra.mrb[0].mxu0 %v2507
        %v2552 = vpop.f32.mrb[0].mxu0
        %v2553 = vadd.f32 0.0, %v2552
        %v2554 = vpop.f32.mrb[0].mxu0
        %v2555 = vpop.f32.mrb[0].mxu0
        %v2556 = vadd.f32 0.0, %v2555
        %v2557 = vpop.f32.mrb[0].mxu0
        %2558 = vmatprep.mubr.bf16.mxu0 0
        %2559 = vmatmul.mubr.bf16.gmra.mrb[0].mxu0 %v2510
        %v2560 = vpop.f32.mrb[0].mxu0
        %v2561 = vadd.f32 0.0, %v2560
        %v2562 = vpop.f32.mrb[0].mxu0
        %v2563 = vpop.f32.mrb[0].mxu0
        %v2564 = vpop.f32.mrb[0].mxu0
        %2565 = vdwg.mxu0
        %v2566 = vsel %vm1215, %v2553, -inf
        %2567 = vmax.xlane.f32.xlu0 %v2566
        %v2568 = vpop.xlane.xlu0 %2567
        %v2569 = vsel %vm1215, %v2556, -inf
        %2570 = vmax.xlane.f32.xlu0 %v2569
        %v2571 = vpop.xlane.xlu0 %2570
        %v2572 = vsel %vm1215, %v2561, -inf
        %2573 = vmax.xlane.f32.xlu0 %v2572
        %v2574 = vpop.xlane.xlu0 %2573
        %v2575 = vsub.f32 %v2553, %v2568
        %v2576 = vsub.f32 %v2556, %v2571
        %v2577 = vsub.f32 %v2561, %v2574
        %v2578 = vmul.f32 %v2575, 1.442695
        %v2579 = vpow.pop %v2578
        %v2580 = vmul.f32 %v2576, 1.442695
        %v2581 = vpow.pop %v2580
        %v2582 = vmul.f32 %v2577, 1.442695
        %v2583 = vpow.pop %v2582
        %v2584 = vsel %vm1215, %v2579, 0.0
        %2585 = vadd.xlane.f32.xlu0 %v2584
        %v2586 = vpop.xlane.xlu0 %2585
        %v2587 = vsel %vm1215, %v2581, 0.0
        %2588 = vadd.xlane.f32.xlu0 %v2587
        %v2589 = vpop.xlane.xlu0 %2588
        %v2590 = vsel %vm1215, %v2583, 0.0
        %2591 = vadd.xlane.f32.xlu0 %v2590
        %v2592 = vpop.xlane.xlu0 %2591
        %v2593 = vrcp.pop %v2586
        %v2594 = vmul.f32 1.0, %v2593
        %v2595 = vrcp.pop %v2589
        %v2596 = vmul.f32 1.0, %v2595
        %v2597 = vrcp.pop %v2592
        %v2598 = vmul.f32 1.0, %v2597
        %v2599 = vmul.f32 %v2579, %v2594
        %v2600 = vmul.f32 %v2581, %v2596
        %v2601 = vmul.f32 %v2583, %v2598
        %v2602 = vadd.f32 %v2152, %v2599
        %v2603 = vadd.f32 %v2153, %v2600
        %v2604 = vadd.f32 %v2154, %v2601
        %v2605 = vpack.c.bf16 %v2600, %v2599
        %v2606 = vpack.c.bf16 %v2601, %v2601
        %v2607 = vpack.c.bf16 %v2492, %v2489
        %v2608 = vpack.c.bf16 %v2497, %v2497
        %v2610 = vsel %vm1215, %v2605, 0
        %v2613 = vsel %vm1215, %v2606, 0
        %v2616 = vsel %vm1265, %v2608, 0
        %2618 = vmatprep.subr.bf16.mxu0 0
        %2619 = vmatpush1.bf16.msra.mxu0 %v2607
        %2620 = vmatprep.subr.bf16.mxu0 0
        %2621 = vmatpush1.bf16.msra.mxu0 %v2616
        %2622 = vmatprep.subr.bf16.mxu0 0
        %2623 = vmatpush1.bf16.msra.mxu0 0
        %2624 = vmatprep.subr.bf16.mxu0 0
        %2625 = vmatpush1.bf16.msra.mxu0 0
        %2626 = vmatprep.subr.bf16.mxu0 0
        %2627 = vmatpush1.bf16.msra.mxu0 0
        %2628 = vmatprep.subr.bf16.mxu0 0
        %2629 = vmatpush1.bf16.msra.mxu0 0
        %2630 = vmatprep.subr.bf16.mxu0 0
        %2631 = vmatpush1.bf16.msra.mxu0 0
        %2632 = vmatprep.subr.bf16.mxu0 0
        %2633 = vmatpush1.bf16.msra.mxu0 0
        %2634 = vmatprep.subr.bf16.mxu0 0
        %2635 = vmatpush1.bf16.msra.mxu0 0
        %2636 = vmatprep.subr.bf16.mxu0 0
        %2637 = vmatpush1.bf16.msra.mxu0 0
        %2638 = vmatprep.subr.bf16.mxu0 0
        %2639 = vmatpush1.bf16.msra.mxu0 0
        %2640 = vmatprep.subr.bf16.mxu0 0
        %2641 = vmatpush1.bf16.msra.mxu0 0
        %2642 = vmatprep.subr.bf16.mxu0 0
        %2643 = vmatpush1.bf16.msra.mxu0 0
        %2644 = vmatprep.subr.bf16.mxu0 0
        %2645 = vmatpush1.bf16.msra.mxu0 0
        %2646 = vmatprep.subr.bf16.mxu0 0
        %2647 = vmatpush1.bf16.msra.mxu0 0
        %2648 = vmatprep.subr.bf16.mxu0 0
        %2649 = vmatpush1.bf16.msra.mxu0 0
        %2650 = vmatprep.mubr.bf16.mxu0 0
        %2651 = vmatmul.mubr.bf16.gmra.mrb[0].mxu0 %v2610
        %v2652 = vpop.f32.mrb[0].mxu0
        %v2653 = vadd.f32 0.0, %v2652
        %v2654 = vpop.f32.mrb[0].mxu0
        %v2655 = vpop.f32.mrb[0].mxu0
        %v2656 = vadd.f32 0.0, %v2655
        %v2657 = vpop.f32.mrb[0].mxu0
        %2658 = vmatprep.mubr.bf16.mxu0 0
        %2659 = vmatmul.mubr.bf16.gmra.mrb[0].mxu0 %v2613
        %v2660 = vpop.f32.mrb[0].mxu0
        %v2661 = vadd.f32 0.0, %v2660
        %v2662 = vpop.f32.mrb[0].mxu0
        %v2663 = vpop.f32.mrb[0].mxu0
        %v2664 = vpop.f32.mrb[0].mxu0
        %2665 = vdwg.mxu0
        %v2666 = vpack.c.bf16 %v2656, %v2653
        %v2667 = vpack.c.bf16 %v2661, %v2661
        %s2668 = scalar_lea.vmem [#allocation17], 12
        %v2669 = vld [vmem:[%s2668] sm:$0xf]
        %v2671 = vsel %vm1154, %v2666, 0
        %v2674 = vsel %vm1154, %v2667, 0
        %v2677 = vsel %vm1265, %v2669, 0
        %2679 = vmatprep.subr.bf16.mxu0 0
        %2680 = vmatpush1.bf16.msra.mxu0 %v2677
        %2681 = vmatprep.subr.bf16.mxu0 0
        %2682 = vmatpush1.bf16.msra.mxu0 0
        %2683 = vmatprep.subr.bf16.mxu0 0
        %2684 = vmatpush1.bf16.msra.mxu0 0
        %2685 = vmatprep.subr.bf16.mxu0 0
        %2686 = vmatpush1.bf16.msra.mxu0 0
        %2687 = vmatprep.subr.bf16.mxu0 0
        %2688 = vmatpush1.bf16.msra.mxu0 0
        %2689 = vmatprep.subr.bf16.mxu0 0
        %2690 = vmatpush1.bf16.msra.mxu0 0
        %2691 = vmatprep.subr.bf16.mxu0 0
        %2692 = vmatpush1.bf16.msra.mxu0 0
        %2693 = vmatprep.subr.bf16.mxu0 0
        %2694 = vmatpush1.bf16.msra.mxu0 0
        %2695 = vmatprep.subr.bf16.mxu0 0
        %2696 = vmatpush1.bf16.msra.mxu0 0
        %2697 = vmatprep.subr.bf16.mxu0 0
        %2698 = vmatpush1.bf16.msra.mxu0 0
        %2699 = vmatprep.subr.bf16.mxu0 0
        %2700 = vmatpush1.bf16.msra.mxu0 0
        %2701 = vmatprep.subr.bf16.mxu0 0
        %2702 = vmatpush1.bf16.msra.mxu0 0
        %2703 = vmatprep.subr.bf16.mxu0 0
        %2704 = vmatpush1.bf16.msra.mxu0 0
        %2705 = vmatprep.subr.bf16.mxu0 0
        %2706 = vmatpush1.bf16.msra.mxu0 0
        %2707 = vmatprep.subr.bf16.mxu0 0
        %2708 = vmatpush1.bf16.msra.mxu0 0
        %2709 = vmatprep.subr.bf16.mxu0 0
        %2710 = vmatpush1.bf16.msra.mxu0 0
        %2711 = vmatprep.mubr.bf16.mxu0 0
        %2712 = vmatmul.mubr.bf16.gmra.mrb[0].mxu0 %v2671
        %v2713 = vpop.f32.mrb[0].mxu0
        %v2714 = vadd.f32 0.0, %v2713
        %v2715 = vpop.f32.mrb[0].mxu0
        %v2716 = vpop.f32.mrb[0].mxu0
        %v2717 = vadd.f32 0.0, %v2716
        %v2718 = vpop.f32.mrb[0].mxu0
        %2719 = vmatprep.mubr.bf16.mxu0 0
        %2720 = vmatmul.mubr.bf16.gmra.mrb[0].mxu0 %v2674
        %v2721 = vpop.f32.mrb[0].mxu0
        %v2722 = vadd.f32 0.0, %v2721
        %v2723 = vpop.f32.mrb[0].mxu0
        %v2724 = vpop.f32.mrb[0].mxu0
        %v2725 = vpop.f32.mrb[0].mxu0
        %2726 = vdwg.mxu0
        %v2727 = vadd.f32 %v2277, %v2714
        %v2728 = vadd.f32 %v2278, %v2717
        %v2729 = vadd.f32 %v2279, %v2722
        %v2730 = vmul.f32 %v2602, 0.25
        %v2731 = vmul.f32 %v2603, 0.25
        %v2732 = vmul.f32 %v2604, 0.25
        %v2733 = vpack.c.bf16 %v2731, %v2730
        %v2734 = vpack.c.bf16 %v2732, %v2732
        %v2737 = vunpack.c.l.b16 %v2733
        %v2738 = vunpack.c.h.b16 %v2733
        %v2739 = vunpack.c.l.b16 %v2734
        %v2740 = vpack.c.b16 %v2737, %v2737
        %v2741 = vpack.c.b16 %v2738, %v2738
        %v2742 = vpack.c.b16 %v2739, %v2739
        %vm2746 = vcmask 191488
        %2747 = vst.msk [vmem:[%s901] sm:$0xf] %vm2746, %v2740
        %2748 = vst.msk [vmem:[%s901 + $0x4] sm:$0xf] %vm2746, %v2741
        %2749 = vst.msk [vmem:[%s901 + $0x8] sm:$0xf] %vm2746, %v2742
        %v2750 = vld [vmem:[#allocation20] sm:$0x1]
        %v2751 = vld [vmem:[#allocation22] sm:$0x1]
        %v2752 = vsel %vm950, %v2727, 0.0
        %2753 = vadd.xlane.f32.xlu0 %v2752
        %v2754 = vpop.xlane.xlu0 %2753
        %v2755 = vsel %vm950, %v2728, 0.0
        %2756 = vadd.xlane.f32.xlu0 %v2755
        %v2757 = vpop.xlane.xlu0 %2756
        %v2758 = vsel %vm950, %v2729, 0.0
        %2759 = vadd.xlane.f32.xlu0 %v2758
        %v2760 = vpop.xlane.xlu0 %2759
        %v2761 = vrcp.pop 32.0
        %v2762 = vmul.f32 %v2754, %v2761
        %v2763 = vmul.f32 %v2757, %v2761
        %v2764 = vmul.f32 %v2760, %v2761
        %v2765 = vsub.f32 %v2727, %v2762
        %v2766 = vsub.f32 %v2728, %v2763
        %v2767 = vsub.f32 %v2729, %v2764
        %v2768 = vmul.f32 %v2765, %v2765
        %v2769 = vmul.f32 %v2766, %v2766
        %v2770 = vmul.f32 %v2767, %v2767
        %v2771 = vsel %vm950, %v2768, 0.0
        %2772 = vadd.xlane.f32.xlu0 %v2771
        %v2773 = vpop.xlane.xlu0 %2772
        %v2774 = vsel %vm950, %v2769, 0.0
        %2775 = vadd.xlane.f32.xlu0 %v2774
        %v2776 = vpop.xlane.xlu0 %2775
        %v2777 = vsel %vm950, %v2770, 0.0
        %2778 = vadd.xlane.f32.xlu0 %v2777
        %v2779 = vpop.xlane.xlu0 %2778
        %v2780 = vmul.f32 %v2773, %v2761
        %v2781 = vmul.f32 %v2776, %v2761
        %v2782 = vmul.f32 %v2779, %v2761
        %v2783 = vadd.f32 %v2780, 1e-05
        %v2784 = vadd.f32 %v2781, 1e-05
        %v2785 = vadd.f32 %v2782, 1e-05
        %v2786 = vrsqrt.pop %v2783
        %v2787 = vrsqrt.pop %v2784
        %v2788 = vrsqrt.pop %v2785
        %v2789 = vmul.f32 %v2765, %v2786
        %v2790 = vmul.f32 %v2766, %v2787
        %v2791 = vmul.f32 %v2767, %v2788
        %v2793 = vlaneseq
        %v2794 = vshrl.u32 %v2793, 7
        %v2795 = vsub.s32 0, %v2794
        %v2796 = vrot.slane %v2750, %v2795
        %v2798 = vmul.f32 %v2789, %v2796
        %v2799 = vmul.f32 %v2790, %v2796
        %v2800 = vmul.f32 %v2791, %v2796
        %v2802 = vlaneseq
        %v2803 = vshrl.u32 %v2802, 7
        %v2804 = vsub.s32 0, %v2803
        %v2805 = vrot.slane %v2751, %v2804
        %v2807 = vadd.f32 %v2798, %v2805
        %v2808 = vadd.f32 %v2799, %v2805
        %v2809 = vadd.f32 %v2800, %v2805
        %v2810 = vpack.c.bf16 %v2808, %v2807
        %v2811 = vpack.c.bf16 %v2809, %v2809
        %v2812 = vld [vmem:[#allocation23] sm:$0xf]
        %v2813 = vld [vmem:[#allocation23 + $0x4] sm:$0xf]
        %v2814 = vld [vmem:[#allocation23 + $0x8] sm:$0xf]
        %v2815 = vld [vmem:[#allocation23 + $0xc] sm:$0xf]
        %v2816 = vld [vmem:[#allocation25] sm:$0x1]
        %v2818 = vlaneseq
        %v2819 = vshrl.u32 %v2818, 7
        %v2820 = vsub.s32 0, %v2819
        %v2821 = vrot.slane %v2816, %v2820
        %v2827 = vunpack.c.l.b16 %v2812
        %v2828 = vunpack.c.l.b16 %v2813
        %v2829 = vunpack.c.l.b16 %v2814
        %v2830 = vunpack.c.l.b16 %v2815
        %v2831 = vpack.c.b16 %v2828, %v2827
        %v2832 = vpack.c.b16 %v2830, %v2829
        %v2836 = vsel %vm950, %v2810, 0
        %v2839 = vsel %vm950, %v2811, 0
        %2841 = vmatprep.subr.bf16.mxu0 0
        %2842 = vmatpush1.bf16.msra.mxu0 %v2831
        %2843 = vmatprep.subr.bf16.mxu0 0
        %2844 = vmatpush1.bf16.msra.mxu0 %v2832
        %2845 = vmatprep.subr.bf16.mxu0 0
        %2846 = vmatpush1.bf16.msra.mxu0 0
        %2847 = vmatprep.subr.bf16.mxu0 0
        %2848 = vmatpush1.bf16.msra.mxu0 0
        %2849 = vmatprep.subr.bf16.mxu0 0
        %2850 = vmatpush1.bf16.msra.mxu0 0
        %2851 = vmatprep.subr.bf16.mxu0 0
        %2852 = vmatpush1.bf16.msra.mxu0 0
        %2853 = vmatprep.subr.bf16.mxu0 0
        %2854 = vmatpush1.bf16.msra.mxu0 0
        %2855 = vmatprep.subr.bf16.mxu0 0
        %2856 = vmatpush1.bf16.msra.mxu0 0
        %2857 = vmatprep.subr.bf16.mxu0 0
        %2858 = vmatpush1.bf16.msra.mxu0 0
        %2859 = vmatprep.subr.bf16.mxu0 0
        %2860 = vmatpush1.bf16.msra.mxu0 0
        %2861 = vmatprep.subr.bf16.mxu0 0
        %2862 = vmatpush1.bf16.msra.mxu0 0
        %2863 = vmatprep.subr.bf16.mxu0 0
        %2864 = vmatpush1.bf16.msra.mxu0 0
        %2865 = vmatprep.subr.bf16.mxu0 0
        %2866 = vmatpush1.bf16.msra.mxu0 0
        %2867 = vmatprep.subr.bf16.mxu0 0
        %2868 = vmatpush1.bf16.msra.mxu0 0
        %2869 = vmatprep.subr.bf16.mxu0 0
        %2870 = vmatpush1.bf16.msra.mxu0 0
        %2871 = vmatprep.subr.bf16.mxu0 0
        %2872 = vmatpush1.bf16.msra.mxu0 0
        %2873 = vmatprep.mubr.bf16.mxu0 0
        %2874 = vmatmul.mubr.bf16.gmra.mrb[0].mxu0 %v2836
        %v2875 = vpop.f32.mrb[0].mxu0
        %v2876 = vadd.f32 %v2821, %v2875
        %v2877 = vpop.f32.mrb[0].mxu0
        %v2878 = vpop.f32.mrb[0].mxu0
        %v2879 = vadd.f32 %v2821, %v2878
        %v2880 = vpop.f32.mrb[0].mxu0
        %2881 = vmatprep.mubr.bf16.mxu0 0
        %2882 = vmatmul.mubr.bf16.gmra.mrb[0].mxu0 %v2839
        %v2883 = vpop.f32.mrb[0].mxu0
        %v2884 = vadd.f32 %v2821, %v2883
        %v2885 = vpop.f32.mrb[0].mxu0
        %v2886 = vpop.f32.mrb[0].mxu0
        %v2887 = vpop.f32.mrb[0].mxu0
        %2888 = vdwg.mxu0
        %v2889 = vmax.f32 %v2876, 0.0
        %v2890 = vmax.f32 %v2879, 0.0
        %v2891 = vmax.f32 %v2884, 0.0
        %v2892 = vpack.c.bf16 %v2890, %v2889
        %v2893 = vpack.c.bf16 %v2891, %v2891
        %v2894 = vld [vmem:[#allocation26] sm:$0xf]
        %v2895 = vld [vmem:[#allocation26 + $0x4] sm:$0xf]
        %v2896 = vld [vmem:[#allocation26 + $0x8] sm:$0xf]
        %v2897 = vld [vmem:[#allocation26 + $0xc] sm:$0xf]
        %v2898 = vld [vmem:[#allocation28] sm:$0x1]
        %v2900 = vlaneseq
        %v2901 = vshrl.u32 %v2900, 7
        %v2902 = vsub.s32 0, %v2901
        %v2903 = vrot.slane %v2898, %v2902
        %v2909 = vunpack.c.l.b16 %v2894
        %v2910 = vunpack.c.l.b16 %v2895
        %v2911 = vunpack.c.l.b16 %v2896
        %v2912 = vunpack.c.l.b16 %v2897
        %v2913 = vpack.c.b16 %v2910, %v2909
        %v2914 = vpack.c.b16 %v2912, %v2911
        %v2918 = vsel %vm950, %v2892, 0
        %v2921 = vsel %vm950, %v2893, 0
        %2923 = vmatprep.subr.bf16.mxu0 0
        %2924 = vmatpush1.bf16.msra.mxu0 %v2913
        %2925 = vmatprep.subr.bf16.mxu0 0
        %2926 = vmatpush1.bf16.msra.mxu0 %v2914
        %2927 = vmatprep.subr.bf16.mxu0 0
        %2928 = vmatpush1.bf16.msra.mxu0 0
        %2929 = vmatprep.subr.bf16.mxu0 0
        %2930 = vmatpush1.bf16.msra.mxu0 0
        %2931 = vmatprep.subr.bf16.mxu0 0
        %2932 = vmatpush1.bf16.msra.mxu0 0
        %2933 = vmatprep.subr.bf16.mxu0 0
        %2934 = vmatpush1.bf16.msra.mxu0 0
        %2935 = vmatprep.subr.bf16.mxu0 0
        %2936 = vmatpush1.bf16.msra.mxu0 0
        %2937 = vmatprep.subr.bf16.mxu0 0
        %2938 = vmatpush1.bf16.msra.mxu0 0
        %2939 = vmatprep.subr.bf16.mxu0 0
        %2940 = vmatpush1.bf16.msra.mxu0 0
        %2941 = vmatprep.subr.bf16.mxu0 0
        %2942 = vmatpush1.bf16.msra.mxu0 0
        %2943 = vmatprep.subr.bf16.mxu0 0
        %2944 = vmatpush1.bf16.msra.mxu0 0
        %2945 = vmatprep.subr.bf16.mxu0 0
        %2946 = vmatpush1.bf16.msra.mxu0 0
        %2947 = vmatprep.subr.bf16.mxu0 0
        %2948 = vmatpush1.bf16.msra.mxu0 0
        %2949 = vmatprep.subr.bf16.mxu0 0
        %2950 = vmatpush1.bf16.msra.mxu0 0
        %2951 = vmatprep.subr.bf16.mxu0 0
        %2952 = vmatpush1.bf16.msra.mxu0 0
        %2953 = vmatprep.subr.bf16.mxu0 0
        %2954 = vmatpush1.bf16.msra.mxu0 0
        %2955 = vmatprep.mubr.bf16.mxu0 0
        %2956 = vmatmul.mubr.bf16.gmra.mrb[0].mxu0 %v2918
        %v2957 = vpop.f32.mrb[0].mxu0
        %v2958 = vadd.f32 %v2903, %v2957
        %v2959 = vpop.f32.mrb[0].mxu0
        %v2960 = vpop.f32.mrb[0].mxu0
        %v2961 = vadd.f32 %v2903, %v2960
        %v2962 = vpop.f32.mrb[0].mxu0
        %2963 = vmatprep.mubr.bf16.mxu0 0
        %2964 = vmatmul.mubr.bf16.gmra.mrb[0].mxu0 %v2921
        %v2965 = vpop.f32.mrb[0].mxu0
        %v2966 = vadd.f32 %v2903, %v2965
        %v2967 = vpop.f32.mrb[0].mxu0
        %v2968 = vpop.f32.mrb[0].mxu0
        %v2969 = vpop.f32.mrb[0].mxu0
        %2970 = vdwg.mxu0
        %v2971 = vadd.f32 %v2958, %v2807
        %v2972 = vadd.f32 %v2961, %v2808
        %v2973 = vadd.f32 %v2966, %v2809
        %v2974 = vld [vmem:[#allocation29] sm:$0x1]
        %v2975 = vld [vmem:[#allocation31] sm:$0x1]
        %v2976 = vsel %vm950, %v2971, 0.0
        %2977 = vadd.xlane.f32.xlu0 %v2976
        %v2978 = vpop.xlane.xlu0 %2977
        %v2979 = vsel %vm950, %v2972, 0.0
        %2980 = vadd.xlane.f32.xlu0 %v2979
        %v2981 = vpop.xlane.xlu0 %2980
        %v2982 = vsel %vm950, %v2973, 0.0
        %2983 = vadd.xlane.f32.xlu0 %v2982
        %v2984 = vpop.xlane.xlu0 %2983
        %v2985 = vmul.f32 %v2978, %v2761
        %v2986 = vmul.f32 %v2981, %v2761
        %v2987 = vmul.f32 %v2984, %v2761
        %v2988 = vsub.f32 %v2971, %v2985
        %v2989 = vsub.f32 %v2972, %v2986
        %v2990 = vsub.f32 %v2973, %v2987
        %v2991 = vmul.f32 %v2988, %v2988
        %v2992 = vmul.f32 %v2989, %v2989
        %v2993 = vmul.f32 %v2990, %v2990
        %v2994 = vsel %vm950, %v2991, 0.0
        %2995 = vadd.xlane.f32.xlu0 %v2994
        %v2996 = vpop.xlane.xlu0 %2995
        %v2997 = vsel %vm950, %v2992, 0.0
        %2998 = vadd.xlane.f32.xlu0 %v2997
        %v2999 = vpop.xlane.xlu0 %2998
        %v3000 = vsel %vm950, %v2993, 0.0
        %3001 = vadd.xlane.f32.xlu0 %v3000
        %v3002 = vpop.xlane.xlu0 %3001
        %v3003 = vmul.f32 %v2996, %v2761
        %v3004 = vmul.f32 %v2999, %v2761
        %v3005 = vmul.f32 %v3002, %v2761
        %v3006 = vadd.f32 %v3003, 1e-05
        %v3007 = vadd.f32 %v3004, 1e-05
        %v3008 = vadd.f32 %v3005, 1e-05
        %v3009 = vrsqrt.pop %v3006
        %v3010 = vrsqrt.pop %v3007
        %v3011 = vrsqrt.pop %v3008
        %v3012 = vmul.f32 %v2988, %v3009
        %v3013 = vmul.f32 %v2989, %v3010
        %v3014 = vmul.f32 %v2990, %v3011
        %v3016 = vlaneseq
        %v3017 = vshrl.u32 %v3016, 7
        %v3018 = vsub.s32 0, %v3017
        %v3019 = vrot.slane %v2974, %v3018
        %v3021 = vmul.f32 %v3012, %v3019
        %v3022 = vmul.f32 %v3013, %v3019
        %v3023 = vmul.f32 %v3014, %v3019
        %v3025 = vlaneseq
        %v3026 = vshrl.u32 %v3025, 7
        %v3027 = vsub.s32 0, %v3026
        %v3028 = vrot.slane %v2975, %v3027
        %v3030 = vadd.f32 %v3021, %v3028
        %v3031 = vadd.f32 %v3022, %v3028
        %v3032 = vadd.f32 %v3023, %v3028
        %v3033 = vpack.c.bf16 %v3031, %v3030
        %v3034 = vpack.c.bf16 %v3032, %v3032
        %v3037 = vunpack.c.l.b16 %v3033
        %v3038 = vunpack.c.h.b16 %v3033
        %v3039 = vunpack.c.l.b16 %v3034
        %v3040 = vpack.c.b16 %v3037, %v3037
        %v3041 = vpack.c.b16 %v3038, %v3038
        %v3042 = vpack.c.b16 %v3039, %v3039
        %vm3046 = vcmask 257024
        %3047 = vst.msk [vmem:[%s894] sm:$0xf] %vm3046, %v3040
        %3048 = vst.msk [vmem:[%s894 + $0x4] sm:$0xf] %vm3046, %v3041
        %3049 = vst.msk [vmem:[%s894 + $0x8] sm:$0xf] %vm3046, %v3042
        %s3050 = sand.u32 %s462, 1
        %s3051 = scalar_lea.sflag [#allocation4], %s3050
        %s3052 = sand.u32 %s462, 1
        %s3053 = smul.addr %s3052, 12
        %s3054 = scalar_lea.vmem [#allocation32], %s3053
        %s3055 = sand.u32 %s488, 1
        %s3056 = scalar_lea.sflag [#allocation34], %s3055
        %s3057 = sand.u32 %s488, 1
        %s3058 = smul.addr %s3057, 12
        %s3059 = scalar_lea.vmem [#allocation33], %s3058
        // Predicated region
        $region173: #{ctran_forward.6} parent=95 // pred_check
          %p3060 = pneg %p472
        $region174: #{ctran_forward.6} parent=95 // pred_check_branch
          %3062 = sbr.rel (%p3060) target = $region176
        $region175: #{ctran_forward.6} parent=95 // pred_region
          %s3064 = ssub.s32 192, 192
          %3065 = vsyncadd %s3051, %s3064
          %s3066 = smul.addr %s50, 3
          %s3067 = smul.addr %s3066, 64
          %s3068 = scalar_lea.hbm %s19, %s3067
          %s3069 = sshll.u32 %s3054, 4
          %s3070 = int_to_ptr.vmem [resolvable:$true] %s3069
          %3075 = dma.vmem_to_hbm [thread:$0]  %s3070, 192, %s3068, %s3051, 64, 64, 4
        $region176: #{ctran_forward.6} parent=95 // pred_fallthru
          _
        // Predicated region
        $region177: #{ctran_forward.6} parent=95 // pred_check
          %p3076 = pneg %p498
        $region178: #{ctran_forward.6} parent=95 // pred_check_branch
          %3078 = sbr.rel (%p3076) target = $region180
        $region179: #{ctran_forward.6} parent=95 // pred_region
          %s3080 = ssub.s32 192, 192
          %3081 = vsyncadd %s3056, %s3080
          %s3082 = smul.addr %s50, 3
          %s3083 = smul.addr %s3082, 64
          %s3084 = scalar_lea.hbm %s20, %s3083
          %s3085 = sshll.u32 %s3059, 4
          %s3086 = int_to_ptr.vmem [resolvable:$true] %s3085
          %3091 = dma.vmem_to_hbm [thread:$0]  %s3086, 192, %s3084, %s3056, 64, 64, 4
        $region180: #{ctran_forward.6} parent=95 // pred_fallthru
          _
      $region96: #{ctran_forward.6} parent=5 // pred_fallthru
        _
      %p3092 = scmp.le.s32.totalorder 2, %s45
      // Predicated region
      $region181: #{ctran_forward.6} parent=5 // pred_check
        %p3093 = pneg %p3092
      $region182: #{ctran_forward.6} parent=5 // pred_check_branch
        %3095 = sbr.rel (%p3093) target = $region184
      $region183: #{ctran_forward.6} parent=5 // pred_region
        %s3096 = ssub.s32 %s45, 2
        // Predicated region
        $region185: #{ctran_forward.6} parent=183 // pred_check
          %p3097 = pneg %p478
        $region186: #{ctran_forward.6} parent=183 // pred_check_branch
          %3099 = sbr.rel (%p3097) target = $region188
        $region187: #{ctran_forward.6} parent=183 // pred_region
          %s3100 = sand.u32 %s463, 1
          %s3101 = scalar_lea.sflag [#allocation4], %s3100
          %s3102 = sand.u32 %s463, 1
          %s3103 = smul.addr %s3102, 12
          %s3104 = scalar_lea.vmem [#allocation32], %s3103
          %3105 = dma.done %s3101, 192
        $region188: #{ctran_forward.6} parent=183 // pred_fallthru
          _
        // Predicated region
        $region189: #{ctran_forward.6} parent=183 // pred_check
          %p3106 = pneg %p504
        $region190: #{ctran_forward.6} parent=183 // pred_check_branch
          %3108 = sbr.rel (%p3106) target = $region192
        $region191: #{ctran_forward.6} parent=183 // pred_region
          %s3109 = sand.u32 %s489, 1
          %s3110 = scalar_lea.sflag [#allocation34], %s3109
          %s3111 = sand.u32 %s489, 1
          %s3112 = smul.addr %s3111, 12
          %s3113 = scalar_lea.vmem [#allocation33], %s3112
          %3114 = dma.done %s3110, 192
        $region192: #{ctran_forward.6} parent=183 // pred_fallthru
          _
      $region184: #{ctran_forward.6} parent=5 // pred_fallthru
        _
    $region6: #{ctran_forward.6} parent=1 // loop_footer
      %s49 = sadd.s32 1, %s45
    $region7: #{ctran_forward.6} parent=1 // loop_footer_branch
      %44 = sbr.rel target = $region3
    $region8: #{ctran_forward.6} parent=1 // loop_exit
      _
    %3115 = vsyncpa [#allocation3], 1
    %s3116 = scalar_lea.sflag [#allocation3], 1
    %3117 = vsyncpa %s3116, 1
    %3118 = vsyncpa [#allocation6], 1
    %3119 = vsyncpa [#allocation9], 1
    %3120 = vsyncpa [#allocation12], 1
    %3121 = vsyncpa [#allocation15], 1
    %3122 = vsyncpa [#allocation18], 1
    %3123 = vsyncpa [#allocation21], 1
    %3124 = vsyncpa [#allocation24], 1
    %3125 = vsyncpa [#allocation27], 1
    %3126 = vsyncpa [#allocation30], 1
    %3127 = vsyncpa [#allocation4], 1
    %s3128 = scalar_lea.sflag [#allocation4], 1
    %3129 = vsyncpa %s3128, 1
    %3130 = vsyncpa [#allocation34], 1
    %s3131 = scalar_lea.sflag [#allocation34], 1
    %3132 = vsyncpa %s3131, 1

// kernel: ctran_forward.5
$region0: #{ctran_forward.5}
  #allocation0 [shape = 'u32[]', space=smem, size = 0x4, offset = 0x4, fixed_abs, tag = 'smem constant byte address 0x4 - core index']
  #allocation1 [shape = 'u32[144,128]{1,0:T(1,128)}', space=vmem, size = 0x12000, scoped, tag = 'internal scratch']
  %s0 = inlined_call_operand.hbm [shape: bf16[2,24,32], index: 0, kind: input, shape index: {}]
  %s1 = inlined_call_operand.hbm [shape: f32[1,32], index: 1, kind: input, shape index: {}]
  %s2 = inlined_call_operand.hbm [shape: f32[1,32], index: 2, kind: input, shape index: {}]
  %s3 = inlined_call_operand.hbm [shape: bf16[4,32,8], index: 3, kind: input, shape index: {}]
  %s4 = inlined_call_operand.hbm [shape: bf16[4,32,8], index: 4, kind: input, shape index: {}]
  %s5 = inlined_call_operand.hbm [shape: bf16[4,32,8], index: 5, kind: input, shape index: {}]
  %s6 = inlined_call_operand.hbm [shape: f32[4,1,8], index: 6, kind: input, shape index: {}]
  %s7 = inlined_call_operand.hbm [shape: f32[4,1,8], index: 7, kind: input, shape index: {}]
  %s8 = inlined_call_operand.hbm [shape: f32[4,1,8], index: 8, kind: input, shape index: {}]
  %s9 = inlined_call_operand.hbm [shape: bf16[4,8,32], index: 9, kind: input, shape index: {}]
  %s10 = inlined_call_operand.hbm [shape: f32[1,32], index: 10, kind: input, shape index: {}]
  %s11 = inlined_call_operand.hbm [shape: f32[1,32], index: 11, kind: input, shape index: {}]
  %s12 = inlined_call_operand.hbm [shape: f32[1,32], index: 12, kind: input, shape index: {}]
  %s13 = inlined_call_operand.hbm [shape: bf16[32,32], index: 13, kind: input, shape index: {}]
  %s14 = inlined_call_operand.hbm [shape: f32[1,32], index: 14, kind: input, shape index: {}]
  %s15 = inlined_call_operand.hbm [shape: bf16[32,32], index: 15, kind: input, shape index: {}]
  %s16 = inlined_call_operand.hbm [shape: f32[1,32], index: 16, kind: input, shape index: {}]
  %s17 = inlined_call_operand.hbm [shape: f32[1,32], index: 17, kind: input, shape index: {}]
  %s18 = inlined_call_operand.hbm [shape: f32[1,32], index: 18, kind: input, shape index: {}]
  %s19 = inlined_call_operand.hbm [shape: bf16[2,24,32], index: 19, kind: output, shape index: {0}]
  %s20 = inlined_call_operand.hbm [shape: bf16[2,24,24], index: 20, kind: output, shape index: {1}]
  %21 = xla_tuple %s19, %s20
  %s22 = sld [smem:[#allocation0]]
  $region193: #{ctran_forward.5} parent=0
    _
  %s24 = ssub.s32 1, %s22
  %s25 = scalar_select 0, %s24, %s22
  $region1: #{ctran_forward.5} parent=0
    #allocation2 [shape = 'u8[12288]{0}', space=vmem, size = 0x3000, scoped, tag = 'input window, operand 0']
    #allocation3 [shape = 's32[2]{0}', space=sflag, size = 0x8, scoped, tag = 'scoped memory for ctran_forward.5']
    #allocation4 [shape = 's32[2]{0}', space=sflag, size = 0x8, scoped, tag = 'scoped memory for ctran_forward.5']
    #allocation5 [shape = 'u8[512]{0}', space=vmem, size = 0x400, scoped, tag = 'input window, operand 1, single buffered']
    #allocation6 [shape = 's32[1]{0}', space=sflag, size = 0x4, scoped, tag = 'scoped memory for ctran_forward.5']
    #allocation7 [shape = 'u8[512]{0}', space=vmem, size = 0x400, scoped, tag = 'input window, operand 2, single buffered']
    #allocation8 [shape = 'u8[32768]{0}', space=vmem, size = 0x8000, scoped, tag = 'input window, operand 3, single buffered']
    #allocation9 [shape = 's32[1]{0}', space=sflag, size = 0x4, scoped, tag = 'scoped memory for ctran_forward.5']
    #allocation10 [shape = 'u8[32768]{0}', space=vmem, size = 0x8000, scoped, tag = 'input window, operand 4, single buffered']
    #allocation11 [shape = 'u8[32768]{0}', space=vmem, size = 0x8000, scoped, tag = 'input window, operand 5, single buffered']
    #allocation12 [shape = 's32[1]{0}', space=sflag, size = 0x4, scoped, tag = 'scoped memory for ctran_forward.5']
    #allocation13 [shape = 'u8[2048]{0}', space=vmem, size = 0x800, scoped, tag = 'input window, operand 6, single buffered']
    #allocation14 [shape = 'u8[2048]{0}', space=vmem, size = 0x800, scoped, tag = 'input window, operand 7, single buffered']
    #allocation15 [shape = 's32[1]{0}', space=sflag, size = 0x4, scoped, tag = 'scoped memory for ctran_forward.5']
    #allocation16 [shape = 'u8[2048]{0}', space=vmem, size = 0x800, scoped, tag = 'input window, operand 8, single buffered']
    #allocation17 [shape = 'u8[8192]{0}', space=vmem, size = 0x2000, scoped, tag = 'input window, operand 9, single buffered']
    #allocation18 [shape = 's32[1]{0}', space=sflag, size = 0x4, scoped, tag = 'scoped memory for ctran_forward.5']
    #allocation19 [shape = 'u8[512]{0}', space=vmem, size = 0x400, scoped, tag = 'input window, operand 10, single buffered']
    #allocation20 [shape = 'u8[512]{0}', space=vmem, size = 0x400, scoped, tag = 'input window, operand 11, single buffered']
    #allocation21 [shape = 's32[1]{0}', space=sflag, size = 0x4, scoped, tag = 'scoped memory for ctran_forward.5']
    #allocation22 [shape = 'u8[512]{0}', space=vmem, size = 0x400, scoped, tag = 'input window, operand 12, single buffered']
    #allocation23 [shape = 'u8[8192]{0}', space=vmem, size = 0x2000, scoped, tag = 'input window, operand 13, single buffered']
    #allocation24 [shape = 's32[1]{0}', space=sflag, size = 0x4, scoped, tag = 'scoped memory for ctran_forward.5']
    #allocation25 [shape = 'u8[512]{0}', space=vmem, size = 0x400, scoped, tag = 'input window, operand 14, single buffered']
    #allocation26 [shape = 'u8[8192]{0}', space=vmem, size = 0x2000, scoped, tag = 'input window, operand 15, single buffered']
    #allocation27 [shape = 's32[1]{0}', space=sflag, size = 0x4, scoped, tag = 'scoped memory for ctran_forward.5']
    #allocation28 [shape = 'u8[512]{0}', space=vmem, size = 0x400, scoped, tag = 'input window, operand 16, single buffered']
    #allocation29 [shape = 'u8[512]{0}', space=vmem, size = 0x400, scoped, tag = 'input window, operand 17, single buffered']
    #allocation30 [shape = 's32[1]{0}', space=sflag, size = 0x4, scoped, tag = 'scoped memory for ctran_forward.5']
    #allocation31 [shape = 'u8[512]{0}', space=vmem, size = 0x400, scoped, tag = 'input window, operand 18, single buffered']
    #allocation32 [shape = 'u8[12288]{0}', space=vmem, size = 0x3000, scoped, tag = 'output window, operand 0']
    #allocation33 [shape = 'u8[12288]{0}', space=vmem, size = 0x3000, scoped, tag = 'output window, operand 1']
    #allocation34 [shape = 's32[2]{0}', space=sflag, size = 0x8, scoped, tag = 'scoped memory for ctran_forward.5']
    %26 = vsyncpa [#allocation3], 0
    %s27 = scalar_lea.sflag [#allocation3], 1
    %28 = vsyncpa %s27, 0
    %29 = vsyncpa [#allocation6], 0
    %30 = vsyncpa [#allocation9], 0
    %31 = vsyncpa [#allocation12], 0
    %32 = vsyncpa [#allocation15], 0
    %33 = vsyncpa [#allocation18], 0
    %34 = vsyncpa [#allocation21], 0
    %35 = vsyncpa [#allocation24], 0
    %36 = vsyncpa [#allocation27], 0
    %37 = vsyncpa [#allocation30], 0
    %38 = vsyncpa [#allocation4], 0
    %s39 = scalar_lea.sflag [#allocation4], 1
    %40 = vsyncpa %s39, 0
    %41 = vsyncpa [#allocation34], 0
    %s42 = scalar_lea.sflag [#allocation34], 1
    %43 = vsyncpa %s42, 0
    loop: start=0, step=1, limit=4
    $region2: #{ctran_forward.5} parent=1 // loop_pre_header
      _
    $region3: #{ctran_forward.5} parent=1 // loop_header
      %s45 = sphi 0, %s49
      %p46 = scmp.ge.s32.totalorder %s45, 4
      %s55 = sphi 0, %s57
      %s58 = sphi 0, %s55
      %s59 = sphi 0, %s58
      %s75 = sphi 0, %s59
      %s79 = sphi 0, %s79
      %s81 = sphi 0, %s79
      %s82 = sphi 0, %s81
      %s96 = sphi 0, %s82
      %s100 = sphi 0, %s100
      %s102 = sphi 0, %s100
      %s103 = sphi 0, %s102
      %s117 = sphi 0, %s103
      %s121 = sphi 0, %s121
      %s123 = sphi 0, %s121
      %s124 = sphi 0, %s123
      %s138 = sphi 0, %s124
      %s142 = sphi 0, %s142
      %s144 = sphi 0, %s142
      %s145 = sphi 0, %s144
      %s159 = sphi 0, %s145
      %s163 = sphi 0, %s163
      %s165 = sphi 0, %s163
      %s166 = sphi 0, %s165
      %s180 = sphi 0, %s166
      %s184 = sphi 0, %s184
      %s186 = sphi 0, %s184
      %s187 = sphi 0, %s186
      %s201 = sphi 0, %s187
      %s205 = sphi 0, %s205
      %s207 = sphi 0, %s205
      %s208 = sphi 0, %s207
      %s222 = sphi 0, %s208
      %s226 = sphi 0, %s226
      %s228 = sphi 0, %s226
      %s229 = sphi 0, %s228
      %s243 = sphi 0, %s229
      %s247 = sphi 0, %s247
      %s249 = sphi 0, %s247
      %s250 = sphi 0, %s249
      %s264 = sphi 0, %s250
      %s268 = sphi 0, %s268
      %s270 = sphi 0, %s268
      %s271 = sphi 0, %s270
      %s285 = sphi 0, %s271
      %s289 = sphi 0, %s289
      %s291 = sphi 0, %s289
      %s292 = sphi 0, %s291
      %s306 = sphi 0, %s292
      %s310 = sphi 0, %s310
      %s312 = sphi 0, %s310
      %s313 = sphi 0, %s312
      %s327 = sphi 0, %s313
      %s331 = sphi 0, %s331
      %s333 = sphi 0, %s331
      %s334 = sphi 0, %s333
      %s348 = sphi 0, %s334
      %s352 = sphi 0, %s352
      %s354 = sphi 0, %s352
      %s355 = sphi 0, %s354
      %s369 = sphi 0, %s355
      %s373 = sphi 0, %s373
      %s375 = sphi 0, %s373
      %s376 = sphi 0, %s375
      %s390 = sphi 0, %s376
      %s394 = sphi 0, %s394
      %s396 = sphi 0, %s394
      %s397 = sphi 0, %s396
      %s411 = sphi 0, %s397
      %s415 = sphi 0, %s415
      %s417 = sphi 0, %s415
      %s418 = sphi 0, %s417
      %s432 = sphi 0, %s418
      %s436 = sphi 0, %s436
      %s438 = sphi 0, %s436
      %s439 = sphi 0, %s438
      %s453 = sphi 0, %s439
      %s459 = sphi 0, %s461
      %s462 = sphi 0, %s459
      %s463 = sphi 0, %s462
      %s479 = sphi 0, %s463
      %s485 = sphi 0, %s487
      %s488 = sphi 0, %s485
      %s489 = sphi 0, %s488
      %s505 = sphi 0, %s489
    $region4: #{ctran_forward.5} parent=1 // loop_header_branch
      %48 = sbr.rel (%p46) target = $region8
    $region5: #{ctran_forward.5} parent=1 // loop_body
      %s50 = ssub.s32 %s45, 1
      %s51 = ssub.s32 %s45, 2
      %s52 = sadd.s32 %s45, 1
      %s53 = ssub.s32 %s45, %s52
      %p54 = scmp.eq.s32.totalorder %s53, 0
      %s56 = sadd.s32 %s55, 1
      %s57 = scalar_select %p54, %s55, %s56
      %p60 = pneg %p54
      %p61 = scmp.eq.s32.totalorder %s45, 1
      %p62 = por %p60, %p61
      %p63 = scmp.ne.s32.totalorder %s55, %s58
      %p64 = scmp.eq.s32.totalorder %s45, 0
      %p65 = por %p63, %p64
      %p66 = scmp.ne.s32.totalorder %s55, %s58
      %p67 = scmp.eq.s32.totalorder %s50, 1
      %p68 = por %p66, %p67
      %p69 = scmp.ne.s32.totalorder %s58, %s59
      %p70 = scmp.eq.s32.totalorder %s50, 0
      %p71 = por %p69, %p70
      %p72 = scmp.ne.s32.totalorder %s58, %s59
      %p73 = scmp.eq.s32.totalorder %s51, 1
      %p74 = por %p72, %p73
      %p76 = scmp.ne.s32.totalorder %s59, %s75
      %p77 = scmp.eq.s32.totalorder %s51, 0
      %p78 = por %p76, %p77
      %s80 = sadd.s32 %s79, 1
      %p83 = scmp.eq.s32.totalorder %s45, 1
      %p84 = scmp.ne.s32.totalorder %s79, %s81
      %p85 = scmp.eq.s32.totalorder %s45, 0
      %p86 = por %p84, %p85
      %p87 = scmp.ne.s32.totalorder %s79, %s81
      %p88 = scmp.eq.s32.totalorder %s50, 1
      %p89 = por %p87, %p88
      %p90 = scmp.ne.s32.totalorder %s81, %s82
      %p91 = scmp.eq.s32.totalorder %s50, 0
      %p92 = por %p90, %p91
      %p93 = scmp.ne.s32.totalorder %s81, %s82
      %p94 = scmp.eq.s32.totalorder %s51, 1
      %p95 = por %p93, %p94
      %p97 = scmp.ne.s32.totalorder %s82, %s96
      %p98 = scmp.eq.s32.totalorder %s51, 0
      %p99 = por %p97, %p98
      %s101 = sadd.s32 %s100, 1
      %p104 = scmp.eq.s32.totalorder %s45, 1
      %p105 = scmp.ne.s32.totalorder %s100, %s102
      %p106 = scmp.eq.s32.totalorder %s45, 0
      %p107 = por %p105, %p106
      %p108 = scmp.ne.s32.totalorder %s100, %s102
      %p109 = scmp.eq.s32.totalorder %s50, 1
      %p110 = por %p108, %p109
      %p111 = scmp.ne.s32.totalorder %s102, %s103
      %p112 = scmp.eq.s32.totalorder %s50, 0
      %p113 = por %p111, %p112
      %p114 = scmp.ne.s32.totalorder %s102, %s103
      %p115 = scmp.eq.s32.totalorder %s51, 1
      %p116 = por %p114, %p115
      %p118 = scmp.ne.s32.totalorder %s103, %s117
      %p119 = scmp.eq.s32.totalorder %s51, 0
      %p120 = por %p118, %p119
      %s122 = sadd.s32 %s121, 1
      %p125 = scmp.eq.s32.totalorder %s45, 1
      %p126 = scmp.ne.s32.totalorder %s121, %s123
      %p127 = scmp.eq.s32.totalorder %s45, 0
      %p128 = por %p126, %p127
      %p129 = scmp.ne.s32.totalorder %s121, %s123
      %p130 = scmp.eq.s32.totalorder %s50, 1
      %p131 = por %p129, %p130
      %p132 = scmp.ne.s32.totalorder %s123, %s124
      %p133 = scmp.eq.s32.totalorder %s50, 0
      %p134 = por %p132, %p133
      %p135 = scmp.ne.s32.totalorder %s123, %s124
      %p136 = scmp.eq.s32.totalorder %s51, 1
      %p137 = por %p135, %p136
      %p139 = scmp.ne.s32.totalorder %s124, %s138
      %p140 = scmp.eq.s32.totalorder %s51, 0
      %p141 = por %p139, %p140
      %s143 = sadd.s32 %s142, 1
      %p146 = scmp.eq.s32.totalorder %s45, 1
      %p147 = scmp.ne.s32.totalorder %s142, %s144
      %p148 = scmp.eq.s32.totalorder %s45, 0
      %p149 = por %p147, %p148
      %p150 = scmp.ne.s32.totalorder %s142, %s144
      %p151 = scmp.eq.s32.totalorder %s50, 1
      %p152 = por %p150, %p151
      %p153 = scmp.ne.s32.totalorder %s144, %s145
      %p154 = scmp.eq.s32.totalorder %s50, 0
      %p155 = por %p153, %p154
      %p156 = scmp.ne.s32.totalorder %s144, %s145
      %p157 = scmp.eq.s32.totalorder %s51, 1
      %p158 = por %p156, %p157
      %p160 = scmp.ne.s32.totalorder %s145, %s159
      %p161 = scmp.eq.s32.totalorder %s51, 0
      %p162 = por %p160, %p161
      %s164 = sadd.s32 %s163, 1
      %p167 = scmp.eq.s32.totalorder %s45, 1
      %p168 = scmp.ne.s32.totalorder %s163, %s165
      %p169 = scmp.eq.s32.totalorder %s45, 0
      %p170 = por %p168, %p169
      %p171 = scmp.ne.s32.totalorder %s163, %s165
      %p172 = scmp.eq.s32.totalorder %s50, 1
      %p173 = por %p171, %p172
      %p174 = scmp.ne.s32.totalorder %s165, %s166
      %p175 = scmp.eq.s32.totalorder %s50, 0
      %p176 = por %p174, %p175
      %p177 = scmp.ne.s32.totalorder %s165, %s166
      %p178 = scmp.eq.s32.totalorder %s51, 1
      %p179 = por %p177, %p178
      %p181 = scmp.ne.s32.totalorder %s166, %s180
      %p182 = scmp.eq.s32.totalorder %s51, 0
      %p183 = por %p181, %p182
      %s185 = sadd.s32 %s184, 1
      %p188 = scmp.eq.s32.totalorder %s45, 1
      %p189 = scmp.ne.s32.totalorder %s184, %s186
      %p190 = scmp.eq.s32.totalorder %s45, 0
      %p191 = por %p189, %p190
      %p192 = scmp.ne.s32.totalorder %s184, %s186
      %p193 = scmp.eq.s32.totalorder %s50, 1
      %p194 = por %p192, %p193
      %p195 = scmp.ne.s32.totalorder %s186, %s187
      %p196 = scmp.eq.s32.totalorder %s50, 0
      %p197 = por %p195, %p196
      %p198 = scmp.ne.s32.totalorder %s186, %s187
      %p199 = scmp.eq.s32.totalorder %s51, 1
      %p200 = por %p198, %p199
      %p202 = scmp.ne.s32.totalorder %s187, %s201
      %p203 = scmp.eq.s32.totalorder %s51, 0
      %p204 = por %p202, %p203
      %s206 = sadd.s32 %s205, 1
      %p209 = scmp.eq.s32.totalorder %s45, 1
      %p210 = scmp.ne.s32.totalorder %s205, %s207
      %p211 = scmp.eq.s32.totalorder %s45, 0
      %p212 = por %p210, %p211
      %p213 = scmp.ne.s32.totalorder %s205, %s207
      %p214 = scmp.eq.s32.totalorder %s50, 1
      %p215 = por %p213, %p214
      %p216 = scmp.ne.s32.totalorder %s207, %s208
      %p217 = scmp.eq.s32.totalorder %s50, 0
      %p218 = por %p216, %p217
      %p219 = scmp.ne.s32.totalorder %s207, %s208
      %p220 = scmp.eq.s32.totalorder %s51, 1
      %p221 = por %p219, %p220
      %p223 = scmp.ne.s32.totalorder %s208, %s222
      %p224 = scmp.eq.s32.totalorder %s51, 0
      %p225 = por %p223, %p224
      %s227 = sadd.s32 %s226, 1
      %p230 = scmp.eq.s32.totalorder %s45, 1
      %p231 = scmp.ne.s32.totalorder %s226, %s228
      %p232 = scmp.eq.s32.totalorder %s45, 0
      %p233 = por %p231, %p232
      %p234 = scmp.ne.s32.totalorder %s226, %s228
      %p235 = scmp.eq.s32.totalorder %s50, 1
      %p236 = por %p234, %p235
      %p237 = scmp.ne.s32.totalorder %s228, %s229
      %p238 = scmp.eq.s32.totalorder %s50, 0
      %p239 = por %p237, %p238
      %p240 = scmp.ne.s32.totalorder %s228, %s229
      %p241 = scmp.eq.s32.totalorder %s51, 1
      %p242 = por %p240, %p241
      %p244 = scmp.ne.s32.totalorder %s229, %s243
      %p245 = scmp.eq.s32.totalorder %s51, 0
      %p246 = por %p244, %p245
      %s248 = sadd.s32 %s247, 1
      %p251 = scmp.eq.s32.totalorder %s45, 1
      %p252 = scmp.ne.s32.totalorder %s247, %s249
      %p253 = scmp.eq.s32.totalorder %s45, 0
      %p254 = por %p252, %p253
      %p255 = scmp.ne.s32.totalorder %s247, %s249
      %p256 = scmp.eq.s32.totalorder %s50, 1
      %p257 = por %p255, %p256
      %p258 = scmp.ne.s32.totalorder %s249, %s250
      %p259 = scmp.eq.s32.totalorder %s50, 0
      %p260 = por %p258, %p259
      %p261 = scmp.ne.s32.totalorder %s249, %s250
      %p262 = scmp.eq.s32.totalorder %s51, 1
      %p263 = por %p261, %p262
      %p265 = scmp.ne.s32.totalorder %s250, %s264
      %p266 = scmp.eq.s32.totalorder %s51, 0
      %p267 = por %p265, %p266
      %s269 = sadd.s32 %s268, 1
      %p272 = scmp.eq.s32.totalorder %s45, 1
      %p273 = scmp.ne.s32.totalorder %s268, %s270
      %p274 = scmp.eq.s32.totalorder %s45, 0
      %p275 = por %p273, %p274
      %p276 = scmp.ne.s32.totalorder %s268, %s270
      %p277 = scmp.eq.s32.totalorder %s50, 1
      %p278 = por %p276, %p277
      %p279 = scmp.ne.s32.totalorder %s270, %s271
      %p280 = scmp.eq.s32.totalorder %s50, 0
      %p281 = por %p279, %p280
      %p282 = scmp.ne.s32.totalorder %s270, %s271
      %p283 = scmp.eq.s32.totalorder %s51, 1
      %p284 = por %p282, %p283
      %p286 = scmp.ne.s32.totalorder %s271, %s285
      %p287 = scmp.eq.s32.totalorder %s51, 0
      %p288 = por %p286, %p287
      %s290 = sadd.s32 %s289, 1
      %p293 = scmp.eq.s32.totalorder %s45, 1
      %p294 = scmp.ne.s32.totalorder %s289, %s291
      %p295 = scmp.eq.s32.totalorder %s45, 0
      %p296 = por %p294, %p295
      %p297 = scmp.ne.s32.totalorder %s289, %s291
      %p298 = scmp.eq.s32.totalorder %s50, 1
      %p299 = por %p297, %p298
      %p300 = scmp.ne.s32.totalorder %s291, %s292
      %p301 = scmp.eq.s32.totalorder %s50, 0
      %p302 = por %p300, %p301
      %p303 = scmp.ne.s32.totalorder %s291, %s292
      %p304 = scmp.eq.s32.totalorder %s51, 1
      %p305 = por %p303, %p304
      %p307 = scmp.ne.s32.totalorder %s292, %s306
      %p308 = scmp.eq.s32.totalorder %s51, 0
      %p309 = por %p307, %p308
      %s311 = sadd.s32 %s310, 1
      %p314 = scmp.eq.s32.totalorder %s45, 1
      %p315 = scmp.ne.s32.totalorder %s310, %s312
      %p316 = scmp.eq.s32.totalorder %s45, 0
      %p317 = por %p315, %p316
      %p318 = scmp.ne.s32.totalorder %s310, %s312
      %p319 = scmp.eq.s32.totalorder %s50, 1
      %p320 = por %p318, %p319
      %p321 = scmp.ne.s32.totalorder %s312, %s313
      %p322 = scmp.eq.s32.totalorder %s50, 0
      %p323 = por %p321, %p322
      %p324 = scmp.ne.s32.totalorder %s312, %s313
      %p325 = scmp.eq.s32.totalorder %s51, 1
      %p326 = por %p324, %p325
      %p328 = scmp.ne.s32.totalorder %s313, %s327
      %p329 = scmp.eq.s32.totalorder %s51, 0
      %p330 = por %p328, %p329
      %s332 = sadd.s32 %s331, 1
      %p335 = scmp.eq.s32.totalorder %s45, 1
      %p336 = scmp.ne.s32.totalorder %s331, %s333
      %p337 = scmp.eq.s32.totalorder %s45, 0
      %p338 = por %p336, %p337
      %p339 = scmp.ne.s32.totalorder %s331, %s333
      %p340 = scmp.eq.s32.totalorder %s50, 1
      %p341 = por %p339, %p340
      %p342 = scmp.ne.s32.totalorder %s333, %s334
      %p343 = scmp.eq.s32.totalorder %s50, 0
      %p344 = por %p342, %p343
      %p345 = scmp.ne.s32.totalorder %s333, %s334
      %p346 = scmp.eq.s32.totalorder %s51, 1
      %p347 = por %p345, %p346
      %p349 = scmp.ne.s32.totalorder %s334, %s348
      %p350 = scmp.eq.s32.totalorder %s51, 0
      %p351 = por %p349, %p350
      %s353 = sadd.s32 %s352, 1
      %p356 = scmp.eq.s32.totalorder %s45, 1
      %p357 = scmp.ne.s32.totalorder %s352, %s354
      %p358 = scmp.eq.s32.totalorder %s45, 0
      %p359 = por %p357, %p358
      %p360 = scmp.ne.s32.totalorder %s352, %s354
      %p361 = scmp.eq.s32.totalorder %s50, 1
      %p362 = por %p360, %p361
      %p363 = scmp.ne.s32.totalorder %s354, %s355
      %p364 = scmp.eq.s32.totalorder %s50, 0
      %p365 = por %p363, %p364
      %p366 = scmp.ne.s32.totalorder %s354, %s355
      %p367 = scmp.eq.s32.totalorder %s51, 1
      %p368 = por %p366, %p367
      %p370 = scmp.ne.s32.totalorder %s355, %s369
      %p371 = scmp.eq.s32.totalorder %s51, 0
      %p372 = por %p370, %p371
      %s374 = sadd.s32 %s373, 1
      %p377 = scmp.eq.s32.totalorder %s45, 1
      %p378 = scmp.ne.s32.totalorder %s373, %s375
      %p379 = scmp.eq.s32.totalorder %s45, 0
      %p380 = por %p378, %p379
      %p381 = scmp.ne.s32.totalorder %s373, %s375
      %p382 = scmp.eq.s32.totalorder %s50, 1
      %p383 = por %p381, %p382
      %p384 = scmp.ne.s32.totalorder %s375, %s376
      %p385 = scmp.eq.s32.totalorder %s50, 0
      %p386 = por %p384, %p385
      %p387 = scmp.ne.s32.totalorder %s375, %s376
      %p388 = scmp.eq.s32.totalorder %s51, 1
      %p389 = por %p387, %p388
      %p391 = scmp.ne.s32.totalorder %s376, %s390
      %p392 = scmp.eq.s32.totalorder %s51, 0
      %p393 = por %p391, %p392
      %s395 = sadd.s32 %s394, 1
      %p398 = scmp.eq.s32.totalorder %s45, 1
      %p399 = scmp.ne.s32.totalorder %s394, %s396
      %p400 = scmp.eq.s32.totalorder %s45, 0
      %p401 = por %p399, %p400
      %p402 = scmp.ne.s32.totalorder %s394, %s396
      %p403 = scmp.eq.s32.totalorder %s50, 1
      %p404 = por %p402, %p403
      %p405 = scmp.ne.s32.totalorder %s396, %s397
      %p406 = scmp.eq.s32.totalorder %s50, 0
      %p407 = por %p405, %p406
      %p408 = scmp.ne.s32.totalorder %s396, %s397
      %p409 = scmp.eq.s32.totalorder %s51, 1
      %p410 = por %p408, %p409
      %p412 = scmp.ne.s32.totalorder %s397, %s411
      %p413 = scmp.eq.s32.totalorder %s51, 0
      %p414 = por %p412, %p413
      %s416 = sadd.s32 %s415, 1
      %p419 = scmp.eq.s32.totalorder %s45, 1
      %p420 = scmp.ne.s32.totalorder %s415, %s417
      %p421 = scmp.eq.s32.totalorder %s45, 0
      %p422 = por %p420, %p421
      %p423 = scmp.ne.s32.totalorder %s415, %s417
      %p424 = scmp.eq.s32.totalorder %s50, 1
      %p425 = por %p423, %p424
      %p426 = scmp.ne.s32.totalorder %s417, %s418
      %p427 = scmp.eq.s32.totalorder %s50, 0
      %p428 = por %p426, %p427
      %p429 = scmp.ne.s32.totalorder %s417, %s418
      %p430 = scmp.eq.s32.totalorder %s51, 1
      %p431 = por %p429, %p430
      %p433 = scmp.ne.s32.totalorder %s418, %s432
      %p434 = scmp.eq.s32.totalorder %s51, 0
      %p435 = por %p433, %p434
      %s437 = sadd.s32 %s436, 1
      %p440 = scmp.eq.s32.totalorder %s45, 1
      %p441 = scmp.ne.s32.totalorder %s436, %s438
      %p442 = scmp.eq.s32.totalorder %s45, 0
      %p443 = por %p441, %p442
      %p444 = scmp.ne.s32.totalorder %s436, %s438
      %p445 = scmp.eq.s32.totalorder %s50, 1
      %p446 = por %p444, %p445
      %p447 = scmp.ne.s32.totalorder %s438, %s439
      %p448 = scmp.eq.s32.totalorder %s50, 0
      %p449 = por %p447, %p448
      %p450 = scmp.ne.s32.totalorder %s438, %s439
      %p451 = scmp.eq.s32.totalorder %s51, 1
      %p452 = por %p450, %p451
      %p454 = scmp.ne.s32.totalorder %s439, %s453
      %p455 = scmp.eq.s32.totalorder %s51, 0
      %p456 = por %p454, %p455
      %s457 = ssub.s32 %s45, %s52
      %p458 = scmp.eq.s32.totalorder %s457, 0
      %s460 = sadd.s32 %s459, 1
      %s461 = scalar_select %p458, %s459, %s460
      %p464 = pneg %p458
      %p465 = scmp.eq.s32.totalorder %s45, 1
      %p466 = por %p464, %p465
      %p467 = scmp.ne.s32.totalorder %s459, %s462
      %p468 = scmp.eq.s32.totalorder %s45, 0
      %p469 = por %p467, %p468
      %p470 = scmp.ne.s32.totalorder %s459, %s462
      %p471 = scmp.eq.s32.totalorder %s50, 1
      %p472 = por %p470, %p471
      %p473 = scmp.ne.s32.totalorder %s462, %s463
      %p474 = scmp.eq.s32.totalorder %s50, 0
      %p475 = por %p473, %p474
      %p476 = scmp.ne.s32.totalorder %s462, %s463
      %p477 = scmp.eq.s32.totalorder %s51, 1
      %p478 = por %p476, %p477
      %p480 = scmp.ne.s32.totalorder %s463, %s479
      %p481 = scmp.eq.s32.totalorder %s51, 0
      %p482 = por %p480, %p481
      %s483 = ssub.s32 %s45, %s52
      %p484 = scmp.eq.s32.totalorder %s483, 0
      %s486 = sadd.s32 %s485, 1
      %s487 = scalar_select %p484, %s485, %s486
      %p490 = pneg %p484
      %p491 = scmp.eq.s32.totalorder %s45, 1
      %p492 = por %p490, %p491
      %p493 = scmp.ne.s32.totalorder %s485, %s488
      %p494 = scmp.eq.s32.totalorder %s45, 0
      %p495 = por %p493, %p494
      %p496 = scmp.ne.s32.totalorder %s485, %s488
      %p497 = scmp.eq.s32.totalorder %s50, 1
      %p498 = por %p496, %p497
      %p499 = scmp.ne.s32.totalorder %s488, %s489
      %p500 = scmp.eq.s32.totalorder %s50, 0
      %p501 = por %p499, %p500
      %p502 = scmp.ne.s32.totalorder %s488, %s489
      %p503 = scmp.eq.s32.totalorder %s51, 1
      %p504 = por %p502, %p503
      %p506 = scmp.ne.s32.totalorder %s489, %s505
      %p507 = scmp.eq.s32.totalorder %s51, 0
      %p508 = por %p506, %p507
      %p509 = scmp.le.s32.totalorder 1, %s45
      %p510 = scmp.lt.s32.totalorder %s45, 3
      %p511 = pnand %p509, %p510
      %p512 = pneg %p511
      // Predicated region
      $region9: #{ctran_forward.5} parent=5 // pred_check
        _
      $region10: #{ctran_forward.5} parent=5 // pred_check_branch
        %514 = sbr.rel (%p511) target = $region12
      $region11: #{ctran_forward.5} parent=5 // pred_region
        %s515 = ssub.s32 %s45, 1
        // Predicated region
        $region13: #{ctran_forward.5} parent=11 // pred_check
          %p516 = pneg %p92
        $region14: #{ctran_forward.5} parent=11 // pred_check_branch
          %518 = sbr.rel (%p516) target = $region16
        $region15: #{ctran_forward.5} parent=11 // pred_region
          %s520 = ssub.s32 16, 16
          %521 = vsyncadd [#allocation6], %s520
          %s523 = sshll.u32 [#allocation5], 4
          %s524 = int_to_ptr.vmem [resolvable:$true] %s523
          %526 = dma.hbm_to_vmem [thread:$0]  %s1, 16, %s524, [#allocation6]
        $region16: #{ctran_forward.5} parent=11 // pred_fallthru
          _
        // Predicated region
        $region17: #{ctran_forward.5} parent=11 // pred_check
          %p527 = pneg %p113
        $region18: #{ctran_forward.5} parent=11 // pred_check_branch
          %529 = sbr.rel (%p527) target = $region20
        $region19: #{ctran_forward.5} parent=11 // pred_region
          %s531 = ssub.s32 16, 16
          %532 = vsyncadd [#allocation6], %s531
          %s534 = sshll.u32 [#allocation7], 4
          %s535 = int_to_ptr.vmem [resolvable:$true] %s534
          %537 = dma.hbm_to_vmem [thread:$0]  %s2, 16, %s535, [#allocation6]
        $region20: #{ctran_forward.5} parent=11 // pred_fallthru
          _
        // Predicated region
        $region21: #{ctran_forward.5} parent=11 // pred_check
          %p538 = pneg %p134
        $region22: #{ctran_forward.5} parent=11 // pred_check_branch
          %540 = sbr.rel (%p538) target = $region24
        $region23: #{ctran_forward.5} parent=11 // pred_region
          %s542 = ssub.s32 1024, 1024
          %543 = vsyncadd [#allocation9], %s542
          %s544 = sshll.u32 [#allocation8], 4
          %s545 = int_to_ptr.vmem [resolvable:$true] %s544
          %550 = dma.hbm_to_vmem [thread:$0]  %s3, 1024, %s545, [#allocation9], 64, 64, 4
        $region24: #{ctran_forward.5} parent=11 // pred_fallthru
          _
        // Predicated region
        $region25: #{ctran_forward.5} parent=11 // pred_check
          %p551 = pneg %p155
        $region26: #{ctran_forward.5} parent=11 // pred_check_branch
          %553 = sbr.rel (%p551) target = $region28
        $region27: #{ctran_forward.5} parent=11 // pred_region
          %s555 = ssub.s32 1024, 1024
          %556 = vsyncadd [#allocation9], %s555
          %s557 = sshll.u32 [#allocation10], 4
          %s558 = int_to_ptr.vmem [resolvable:$true] %s557
          %563 = dma.hbm_to_vmem [thread:$0]  %s4, 1024, %s558, [#allocation9], 64, 64, 4
        $region28: #{ctran_forward.5} parent=11 // pred_fallthru
          _
        // Predicated region
        $region29: #{ctran_forward.5} parent=11 // pred_check
          %p564 = pneg %p176
        $region30: #{ctran_forward.5} parent=11 // pred_check_branch
          %566 = sbr.rel (%p564) target = $region32
        $region31: #{ctran_forward.5} parent=11 // pred_region
          %s568 = ssub.s32 1024, 1024
          %569 = vsyncadd [#allocation12], %s568
          %s570 = sshll.u32 [#allocation11], 4
          %s571 = int_to_ptr.vmem [resolvable:$true] %s570
          %576 = dma.hbm_to_vmem [thread:$0]  %s5, 1024, %s571, [#allocation12], 64, 64, 4
        $region32: #{ctran_forward.5} parent=11 // pred_fallthru
          _
        // Predicated region
        $region33: #{ctran_forward.5} parent=11 // pred_check
          %p577 = pneg %p197
        $region34: #{ctran_forward.5} parent=11 // pred_check_branch
          %579 = sbr.rel (%p577) target = $region36
        $region35: #{ctran_forward.5} parent=11 // pred_region
          %s581 = ssub.s32 64, 64
          %582 = vsyncadd [#allocation12], %s581
          %s583 = sshll.u32 [#allocation13], 4
          %s584 = int_to_ptr.vmem [resolvable:$true] %s583
          %589 = dma.hbm_to_vmem [thread:$0]  %s6, 64, %s584, [#allocation12], 16, 16, 1
        $region36: #{ctran_forward.5} parent=11 // pred_fallthru
          _
        // Predicated region
        $region37: #{ctran_forward.5} parent=11 // pred_check
          %p590 = pneg %p218
        $region38: #{ctran_forward.5} parent=11 // pred_check_branch
          %592 = sbr.rel (%p590) target = $region40
        $region39: #{ctran_forward.5} parent=11 // pred_region
          %s594 = ssub.s32 64, 64
          %595 = vsyncadd [#allocation15], %s594
          %s596 = sshll.u32 [#allocation14], 4
          %s597 = int_to_ptr.vmem [resolvable:$true] %s596
          %602 = dma.hbm_to_vmem [thread:$0]  %s7, 64, %s597, [#allocation15], 16, 16, 1
        $region40: #{ctran_forward.5} parent=11 // pred_fallthru
          _
        // Predicated region
        $region41: #{ctran_forward.5} parent=11 // pred_check
          %p603 = pneg %p239
        $region42: #{ctran_forward.5} parent=11 // pred_check_branch
          %605 = sbr.rel (%p603) target = $region44
        $region43: #{ctran_forward.5} parent=11 // pred_region
          %s607 = ssub.s32 64, 64
          %608 = vsyncadd [#allocation15], %s607
          %s609 = sshll.u32 [#allocation16], 4
          %s610 = int_to_ptr.vmem [resolvable:$true] %s609
          %615 = dma.hbm_to_vmem [thread:$0]  %s8, 64, %s610, [#allocation15], 16, 16, 1
        $region44: #{ctran_forward.5} parent=11 // pred_fallthru
          _
        // Predicated region
        $region45: #{ctran_forward.5} parent=11 // pred_check
          %p616 = pneg %p260
        $region46: #{ctran_forward.5} parent=11 // pred_check_branch
          %618 = sbr.rel (%p616) target = $region48
        $region47: #{ctran_forward.5} parent=11 // pred_region
          %s620 = ssub.s32 256, 256
          %621 = vsyncadd [#allocation18], %s620
          %s622 = sshll.u32 [#allocation17], 4
          %s623 = int_to_ptr.vmem [resolvable:$true] %s622
          %628 = dma.hbm_to_vmem [thread:$0]  %s9, 256, %s623, [#allocation18], 64, 64, 4
        $region48: #{ctran_forward.5} parent=11 // pred_fallthru
          _
        // Predicated region
        $region49: #{ctran_forward.5} parent=11 // pred_check
          %p629 = pneg %p281
        $region50: #{ctran_forward.5} parent=11 // pred_check_branch
          %631 = sbr.rel (%p629) target = $region52
        $region51: #{ctran_forward.5} parent=11 // pred_region
          %s633 = ssub.s32 16, 16
          %634 = vsyncadd [#allocation18], %s633
          %s636 = sshll.u32 [#allocation19], 4
          %s637 = int_to_ptr.vmem [resolvable:$true] %s636
          %639 = dma.hbm_to_vmem [thread:$0]  %s10, 16, %s637, [#allocation18]
        $region52: #{ctran_forward.5} parent=11 // pred_fallthru
          _
        // Predicated region
        $region53: #{ctran_forward.5} parent=11 // pred_check
          %p640 = pneg %p302
        $region54: #{ctran_forward.5} parent=11 // pred_check_branch
          %642 = sbr.rel (%p640) target = $region56
        $region55: #{ctran_forward.5} parent=11 // pred_region
          %s644 = ssub.s32 16, 16
          %645 = vsyncadd [#allocation21], %s644
          %s647 = sshll.u32 [#allocation20], 4
          %s648 = int_to_ptr.vmem [resolvable:$true] %s647
          %650 = dma.hbm_to_vmem [thread:$0]  %s11, 16, %s648, [#allocation21]
        $region56: #{ctran_forward.5} parent=11 // pred_fallthru
          _
        // Predicated region
        $region57: #{ctran_forward.5} parent=11 // pred_check
          %p651 = pneg %p323
        $region58: #{ctran_forward.5} parent=11 // pred_check_branch
          %653 = sbr.rel (%p651) target = $region60
        $region59: #{ctran_forward.5} parent=11 // pred_region
          %s655 = ssub.s32 16, 16
          %656 = vsyncadd [#allocation21], %s655
          %s658 = sshll.u32 [#allocation22], 4
          %s659 = int_to_ptr.vmem [resolvable:$true] %s658
          %661 = dma.hbm_to_vmem [thread:$0]  %s12, 16, %s659, [#allocation21]
        $region60: #{ctran_forward.5} parent=11 // pred_fallthru
          _
        // Predicated region
        $region61: #{ctran_forward.5} parent=11 // pred_check
          %p662 = pneg %p344
        $region62: #{ctran_forward.5} parent=11 // pred_check_branch
          %664 = sbr.rel (%p662) target = $region64
        $region63: #{ctran_forward.5} parent=11 // pred_region
          %s666 = ssub.s32 256, 256
          %667 = vsyncadd [#allocation24], %s666
          %s668 = sshll.u32 [#allocation23], 4
          %s669 = int_to_ptr.vmem [resolvable:$true] %s668
          %674 = dma.hbm_to_vmem [thread:$0]  %s13, 256, %s669, [#allocation24], 64, 64, 4
        $region64: #{ctran_forward.5} parent=11 // pred_fallthru
          _
        // Predicated region
        $region65: #{ctran_forward.5} parent=11 // pred_check
          %p675 = pneg %p365
        $region66: #{ctran_forward.5} parent=11 // pred_check_branch
          %677 = sbr.rel (%p675) target = $region68
        $region67: #{ctran_forward.5} parent=11 // pred_region
          %s679 = ssub.s32 16, 16
          %680 = vsyncadd [#allocation24], %s679
          %s682 = sshll.u32 [#allocation25], 4
          %s683 = int_to_ptr.vmem [resolvable:$true] %s682
          %685 = dma.hbm_to_vmem [thread:$0]  %s14, 16, %s683, [#allocation24]
        $region68: #{ctran_forward.5} parent=11 // pred_fallthru
          _
        // Predicated region
        $region69: #{ctran_forward.5} parent=11 // pred_check
          %p686 = pneg %p386
        $region70: #{ctran_forward.5} parent=11 // pred_check_branch
          %688 = sbr.rel (%p686) target = $region72
        $region71: #{ctran_forward.5} parent=11 // pred_region
          %s690 = ssub.s32 256, 256
          %691 = vsyncadd [#allocation27], %s690
          %s692 = sshll.u32 [#allocation26], 4
          %s693 = int_to_ptr.vmem [resolvable:$true] %s692
          %698 = dma.hbm_to_vmem [thread:$0]  %s15, 256, %s693, [#allocation27], 64, 64, 4
        $region72: #{ctran_forward.5} parent=11 // pred_fallthru
          _
        // Predicated region
        $region73: #{ctran_forward.5} parent=11 // pred_check
          %p699 = pneg %p407
        $region74: #{ctran_forward.5} parent=11 // pred_check_branch
          %701 = sbr.rel (%p699) target = $region76
        $region75: #{ctran_forward.5} parent=11 // pred_region
          %s703 = ssub.s32 16, 16
          %704 = vsyncadd [#allocation27], %s703
          %s706 = sshll.u32 [#allocation28], 4
          %s707 = int_to_ptr.vmem [resolvable:$true] %s706
          %709 = dma.hbm_to_vmem [thread:$0]  %s16, 16, %s707, [#allocation27]
        $region76: #{ctran_forward.5} parent=11 // pred_fallthru
          _
        // Predicated region
        $region77: #{ctran_forward.5} parent=11 // pred_check
          %p710 = pneg %p428
        $region78: #{ctran_forward.5} parent=11 // pred_check_branch
          %712 = sbr.rel (%p710) target = $region80
        $region79: #{ctran_forward.5} parent=11 // pred_region
          %s714 = ssub.s32 16, 16
          %715 = vsyncadd [#allocation30], %s714
          %s717 = sshll.u32 [#allocation29], 4
          %s718 = int_to_ptr.vmem [resolvable:$true] %s717
          %720 = dma.hbm_to_vmem [thread:$0]  %s17, 16, %s718, [#allocation30]
        $region80: #{ctran_forward.5} parent=11 // pred_fallthru
          _
        // Predicated region
        $region81: #{ctran_forward.5} parent=11 // pred_check
          %p721 = pneg %p449
        $region82: #{ctran_forward.5} parent=11 // pred_check_branch
          %723 = sbr.rel (%p721) target = $region84
        $region83: #{ctran_forward.5} parent=11 // pred_region
          %s725 = ssub.s32 16, 16
          %726 = vsyncadd [#allocation30], %s725
          %s728 = sshll.u32 [#allocation31], 4
          %s729 = int_to_ptr.vmem [resolvable:$true] %s728
          %731 = dma.hbm_to_vmem [thread:$0]  %s18, 16, %s729, [#allocation30]
        $region84: #{ctran_forward.5} parent=11 // pred_fallthru
          _
      $region12: #{ctran_forward.5} parent=5 // pred_fallthru
        _
      %p732 = scmp.lt.s32.totalorder %s45, 2
      // Predicated region
      $region85: #{ctran_forward.5} parent=5 // pred_check
        %p733 = pneg %p732
      $region86: #{ctran_forward.5} parent=5 // pred_check_branch
        %735 = sbr.rel (%p733) target = $region88
      $region87: #{ctran_forward.5} parent=5 // pred_region
        // Predicated region
        $region89: #{ctran_forward.5} parent=87 // pred_check
          %p736 = pneg %p65
        $region90: #{ctran_forward.5} parent=87 // pred_check_branch
          %738 = sbr.rel (%p736) target = $region92
        $region91: #{ctran_forward.5} parent=87 // pred_region
          %s739 = sand.u32 %s55, 1
          %s740 = scalar_lea.sflag [#allocation3], %s739
          %s741 = sand.u32 %s55, 1
          %s742 = smul.addr %s741, 12
          %s743 = scalar_lea.vmem [#allocation2], %s742
          %s745 = ssub.s32 192, 192
          %746 = vsyncadd %s740, %s745
          %s747 = smul.addr %s45, 3
          %s748 = smul.addr %s747, 64
          %s749 = scalar_lea.hbm %s0, %s748
          %s750 = sshll.u32 %s743, 4
          %s751 = int_to_ptr.vmem [resolvable:$true] %s750
          %756 = dma.hbm_to_vmem [thread:$0]  %s749, 192, %s751, %s740, 64, 64, 4
        $region92: #{ctran_forward.5} parent=87 // pred_fallthru
          _
      $region88: #{ctran_forward.5} parent=5 // pred_fallthru
        _
      %p757 = scmp.le.s32.totalorder 1, %s45
      %p758 = scmp.lt.s32.totalorder %s45, 3
      %p759 = pnand %p757, %p758
      %p760 = pneg %p759
      // Predicated region
      $region93: #{ctran_forward.5} parent=5 // pred_check
        _
      $region94: #{ctran_forward.5} parent=5 // pred_check_branch
        %762 = sbr.rel (%p759) target = $region96
      $region95: #{ctran_forward.5} parent=5 // pred_region
        %s763 = ssub.s32 %s45, 1
        %s764 = sand.u32 %s58, 1
        %s765 = scalar_lea.sflag [#allocation3], %s764
        %s766 = sand.u32 %s58, 1
        %s767 = smul.addr %s766, 12
        %s768 = scalar_lea.vmem [#allocation2], %s767
        // Predicated region
        $region97: #{ctran_forward.5} parent=95 // pred_check
          %p769 = pneg %p71
        $region98: #{ctran_forward.5} parent=95 // pred_check_branch
          %771 = sbr.rel (%p769) target = $region100
        $region99: #{ctran_forward.5} parent=95 // pred_region
          %772 = dma.done %s765, 192
        $region100: #{ctran_forward.5} parent=95 // pred_fallthru
          _
        // Predicated region
        $region101: #{ctran_forward.5} parent=95 // pred_check
          %p773 = pneg %p92
        $region102: #{ctran_forward.5} parent=95 // pred_check_branch
          %775 = sbr.rel (%p773) target = $region104
        $region103: #{ctran_forward.5} parent=95 // pred_region
          %776 = dma.done [#allocation6], 16
        $region104: #{ctran_forward.5} parent=95 // pred_fallthru
          _
        // Predicated region
        $region105: #{ctran_forward.5} parent=95 // pred_check
          %p777 = pneg %p113
        $region106: #{ctran_forward.5} parent=95 // pred_check_branch
          %779 = sbr.rel (%p777) target = $region108
        $region107: #{ctran_forward.5} parent=95 // pred_region
          %780 = dma.done [#allocation6], 16
        $region108: #{ctran_forward.5} parent=95 // pred_fallthru
          _
        // Predicated region
        $region109: #{ctran_forward.5} parent=95 // pred_check
          %p781 = pneg %p134
        $region110: #{ctran_forward.5} parent=95 // pred_check_branch
          %783 = sbr.rel (%p781) target = $region112
        $region111: #{ctran_forward.5} parent=95 // pred_region
          %784 = dma.done [#allocation9], 1024
        $region112: #{ctran_forward.5} parent=95 // pred_fallthru
          _
        // Predicated region
        $region113: #{ctran_forward.5} parent=95 // pred_check
          %p785 = pneg %p155
        $region114: #{ctran_forward.5} parent=95 // pred_check_branch
          %787 = sbr.rel (%p785) target = $region116
        $region115: #{ctran_forward.5} parent=95 // pred_region
          %788 = dma.done [#allocation9], 1024
        $region116: #{ctran_forward.5} parent=95 // pred_fallthru
          _
        // Predicated region
        $region117: #{ctran_forward.5} parent=95 // pred_check
          %p789 = pneg %p176
        $region118: #{ctran_forward.5} parent=95 // pred_check_branch
          %791 = sbr.rel (%p789) target = $region120
        $region119: #{ctran_forward.5} parent=95 // pred_region
          %792 = dma.done [#allocation12], 1024
        $region120: #{ctran_forward.5} parent=95 // pred_fallthru
          _
        // Predicated region
        $region121: #{ctran_forward.5} parent=95 // pred_check
          %p793 = pneg %p197
        $region122: #{ctran_forward.5} parent=95 // pred_check_branch
          %795 = sbr.rel (%p793) target = $region124
        $region123: #{ctran_forward.5} parent=95 // pred_region
          %796 = dma.done [#allocation12], 64
        $region124: #{ctran_forward.5} parent=95 // pred_fallthru
          _
        // Predicated region
        $region125: #{ctran_forward.5} parent=95 // pred_check
          %p797 = pneg %p218
        $region126: #{ctran_forward.5} parent=95 // pred_check_branch
          %799 = sbr.rel (%p797) target = $region128
        $region127: #{ctran_forward.5} parent=95 // pred_region
          %800 = dma.done [#allocation15], 64
        $region128: #{ctran_forward.5} parent=95 // pred_fallthru
          _
        // Predicated region
        $region129: #{ctran_forward.5} parent=95 // pred_check
          %p801 = pneg %p239
        $region130: #{ctran_forward.5} parent=95 // pred_check_branch
          %803 = sbr.rel (%p801) target = $region132
        $region131: #{ctran_forward.5} parent=95 // pred_region
          %804 = dma.done [#allocation15], 64
        $region132: #{ctran_forward.5} parent=95 // pred_fallthru
          _
        // Predicated region
        $region133: #{ctran_forward.5} parent=95 // pred_check
          %p805 = pneg %p260
        $region134: #{ctran_forward.5} parent=95 // pred_check_branch
          %807 = sbr.rel (%p805) target = $region136
        $region135: #{ctran_forward.5} parent=95 // pred_region
          %808 = dma.done [#allocation18], 256
        $region136: #{ctran_forward.5} parent=95 // pred_fallthru
          _
        // Predicated region
        $region137: #{ctran_forward.5} parent=95 // pred_check
          %p809 = pneg %p281
        $region138: #{ctran_forward.5} parent=95 // pred_check_branch
          %811 = sbr.rel (%p809) target = $region140
        $region139: #{ctran_forward.5} parent=95 // pred_region
          %812 = dma.done [#allocation18], 16
        $region140: #{ctran_forward.5} parent=95 // pred_fallthru
          _
        // Predicated region
        $region141: #{ctran_forward.5} parent=95 // pred_check
          %p813 = pneg %p302
        $region142: #{ctran_forward.5} parent=95 // pred_check_branch
          %815 = sbr.rel (%p813) target = $region144
        $region143: #{ctran_forward.5} parent=95 // pred_region
          %816 = dma.done [#allocation21], 16
        $region144: #{ctran_forward.5} parent=95 // pred_fallthru
          _
        // Predicated region
        $region145: #{ctran_forward.5} parent=95 // pred_check
          %p817 = pneg %p323
        $region146: #{ctran_forward.5} parent=95 // pred_check_branch
          %819 = sbr.rel (%p817) target = $region148
        $region147: #{ctran_forward.5} parent=95 // pred_region
          %820 = dma.done [#allocation21], 16
        $region148: #{ctran_forward.5} parent=95 // pred_fallthru
          _
        // Predicated region
        $region149: #{ctran_forward.5} parent=95 // pred_check
          %p821 = pneg %p344
        $region150: #{ctran_forward.5} parent=95 // pred_check_branch
          %823 = sbr.rel (%p821) target = $region152
        $region151: #{ctran_forward.5} parent=95 // pred_region
          %824 = dma.done [#allocation24], 256
        $region152: #{ctran_forward.5} parent=95 // pred_fallthru
          _
        // Predicated region
        $region153: #{ctran_forward.5} parent=95 // pred_check
          %p825 = pneg %p365
        $region154: #{ctran_forward.5} parent=95 // pred_check_branch
          %827 = sbr.rel (%p825) target = $region156
        $region155: #{ctran_forward.5} parent=95 // pred_region
          %828 = dma.done [#allocation24], 16
        $region156: #{ctran_forward.5} parent=95 // pred_fallthru
          _
        // Predicated region
        $region157: #{ctran_forward.5} parent=95 // pred_check
          %p829 = pneg %p386
        $region158: #{ctran_forward.5} parent=95 // pred_check_branch
          %831 = sbr.rel (%p829) target = $region160
        $region159: #{ctran_forward.5} parent=95 // pred_region
          %832 = dma.done [#allocation27], 256
        $region160: #{ctran_forward.5} parent=95 // pred_fallthru
          _
        // Predicated region
        $region161: #{ctran_forward.5} parent=95 // pred_check
          %p833 = pneg %p407
        $region162: #{ctran_forward.5} parent=95 // pred_check_branch
          %835 = sbr.rel (%p833) target = $region164
        $region163: #{ctran_forward.5} parent=95 // pred_region
          %836 = dma.done [#allocation27], 16
        $region164: #{ctran_forward.5} parent=95 // pred_fallthru
          _
        // Predicated region
        $region165: #{ctran_forward.5} parent=95 // pred_check
          %p837 = pneg %p428
        $region166: #{ctran_forward.5} parent=95 // pred_check_branch
          %839 = sbr.rel (%p837) target = $region168
        $region167: #{ctran_forward.5} parent=95 // pred_region
          %840 = dma.done [#allocation30], 16
        $region168: #{ctran_forward.5} parent=95 // pred_fallthru
          _
        // Predicated region
        $region169: #{ctran_forward.5} parent=95 // pred_check
          %p841 = pneg %p449
        $region170: #{ctran_forward.5} parent=95 // pred_check_branch
          %843 = sbr.rel (%p841) target = $region172
        $region171: #{ctran_forward.5} parent=95 // pred_region
          %844 = dma.done [#allocation30], 16
        $region172: #{ctran_forward.5} parent=95 // pred_fallthru
          _
        %s845 = sand.u32 %s58, 1
        %s846 = scalar_lea.sflag [#allocation3], %s845
        %s847 = sand.u32 %s58, 1
        %s848 = smul.addr %s847, 12
        %s849 = scalar_lea.vmem [#allocation2], %s848
        %p850 = pneg %p71
        %p851 = pneg %p68
        %p852 = pneg %p92
        %p853 = pneg %p89
        %p854 = pneg %p113
        %p855 = pneg %p110
        %p856 = pneg %p134
        %p857 = pneg %p131
        %p858 = pneg %p155
        %p859 = pneg %p152
        %p860 = pneg %p176
        %p861 = pneg %p173
        %p862 = pneg %p197
        %p863 = pneg %p194
        %p864 = pneg %p218
        %p865 = pneg %p215
        %p866 = pneg %p239
        %p867 = pneg %p236
        %p868 = pneg %p260
        %p869 = pneg %p257
        %p870 = pneg %p281
        %p871 = pneg %p278
        %p872 = pneg %p302
        %p873 = pneg %p299
        %p874 = pneg %p323
        %p875 = pneg %p320
        %p876 = pneg %p344
        %p877 = pneg %p341
        %p878 = pneg %p365
        %p879 = pneg %p362
        %p880 = pneg %p386
        %p881 = pneg %p383
        %p882 = pneg %p407
        %p883 = pneg %p404
        %p884 = pneg %p428
        %p885 = pneg %p425
        %p886 = pneg %p449
        %p887 = pneg %p446
        %p888 = pneg %p475
        %p889 = pneg %p472
        %s890 = sand.u32 %s462, 1
        %s891 = scalar_lea.sflag [#allocation4], %s890
        %s892 = sand.u32 %s462, 1
        %s893 = smul.addr %s892, 12
        %s894 = scalar_lea.vmem [#allocation32], %s893
        %p895 = pneg %p501
        %p896 = pneg %p498
        %s897 = sand.u32 %s488, 1
        %s898 = scalar_lea.sflag [#allocation34], %s897
        %s899 = sand.u32 %s488, 1
        %s900 = smul.addr %s899, 12
        %s901 = scalar_lea.vmem [#allocation33], %s900
        %v903 = vld [vmem:[%s768] sm:$0xf]
        %v904 = vld [vmem:[%s768 + $0x4] sm:$0xf]
        %v905 = vld [vmem:[%s768 + $0x8] sm:$0xf]
        %v906 = vunpack.c.l.bf16 %v903
        %v907 = vunpack.c.l.bf16 %v904
        %v908 = vunpack.c.l.bf16 %v905
        %v909 = vld [vmem:[#allocation5] sm:$0x1]
        %v910 = vld [vmem:[#allocation7] sm:$0x1]
        %vm911 = vcmask 261120
        %v912 = vsel %vm911, %v906, 0.0
        %913 = vadd.xlane.f32.xlu0 %v912
        %v914 = vpop.xlane.xlu0 %913
        %v915 = vsel %vm911, %v907, 0.0
        %916 = vadd.xlane.f32.xlu0 %v915
        %v917 = vpop.xlane.xlu0 %916
        %v918 = vsel %vm911, %v908, 0.0
        %919 = vadd.xlane.f32.xlu0 %v918
        %v920 = vpop.xlane.xlu0 %919
        %v921 = vrcp.pop 32.0
        %v922 = vmul.f32 %v914, %v921
        %v923 = vmul.f32 %v917, %v921
        %v924 = vmul.f32 %v920, %v921
        %v925 = vsub.f32 %v906, %v922
        %v926 = vsub.f32 %v907, %v923
        %v927 = vsub.f32 %v908, %v924
        %v928 = vmul.f32 %v925, %v925
        %v929 = vmul.f32 %v926, %v926
        %v930 = vmul.f32 %v927, %v927
        %v931 = vsel %vm911, %v928, 0.0
        %932 = vadd.xlane.f32.xlu0 %v931
        %v933 = vpop.xlane.xlu0 %932
        %v934 = vsel %vm911, %v929, 0.0
        %935 = vadd.xlane.f32.xlu0 %v934
        %v936 = vpop.xlane.xlu0 %935
        %v937 = vsel %vm911, %v930, 0.0
        %938 = vadd.xlane.f32.xlu0 %v937
        %v939 = vpop.xlane.xlu0 %938
        %v940 = vmul.f32 %v933, %v921
        %v941 = vmul.f32 %v936, %v921
        %v942 = vmul.f32 %v939, %v921
        %v943 = vadd.f32 %v940, 1e-05
        %v944 = vadd.f32 %v941, 1e-05
        %v945 = vadd.f32 %v942, 1e-05
        %v946 = vrsqrt.pop %v943
        %v947 = vrsqrt.pop %v944
        %v948 = vrsqrt.pop %v945
        %v949 = vmul.f32 %v925, %v946
        %v950 = vmul.f32 %v926, %v947
        %v951 = vmul.f32 %v927, %v948
        %v953 = vlaneseq
        %v954 = vshrl.u32 %v953, 7
        %v955 = vsub.s32 0, %v954
        %v956 = vrot.slane %v909, %v955
        %v958 = vmul.f32 %v949, %v956
        %v959 = vmul.f32 %v950, %v956
        %v960 = vmul.f32 %v951, %v956
        %v962 = vlaneseq
        %v963 = vshrl.u32 %v962, 7
        %v964 = vsub.s32 0, %v963
        %v965 = vrot.slane %v910, %v964
        %v967 = vadd.f32 %v958, %v965
        %v968 = vadd.f32 %v959, %v965
        %v969 = vadd.f32 %v960, %v965
        %v970 = vpack.c.bf16 %v968, %v967
        %v971 = vpack.c.bf16 %v969, %v969
        %v972 = vld [vmem:[#allocation19] sm:$0x1]
        %v974 = vlaneseq
        %v975 = vshrl.u32 %v974, 7
        %v976 = vsub.s32 0, %v975
        %v977 = vrot.slane %v972, %v976
        %v979 = vadd.f32 %v977, %v967
        %v980 = vadd.f32 %v977, %v968
        %v981 = vadd.f32 %v977, %v969
        %v982 = vld [vmem:[#allocation8] sm:$0xf]
        %v983 = vld [vmem:[#allocation8 + $0x4] sm:$0xf]
        %v984 = vld [vmem:[#allocation8 + $0x8] sm:$0xf]
        %v985 = vld [vmem:[#allocation8 + $0xc] sm:$0xf]
        %v986 = vld [vmem:[#allocation13] sm:$0x1]
        %v988 = vlaneseq
        %v989 = vshrl.u32 %v988, 7
        %v990 = vsub.s32 0, %v989
        %v991 = vrot.slane %v986, %v990
        %v997 = vunpack.c.l.b16 %v982
        %v998 = vunpack.c.l.b16 %v983
        %v999 = vunpack.c.l.b16 %v984
        %v1000 = vunpack.c.l.b16 %v985
        %v1001 = vpack.c.b16 %v998, %v997
        %v1002 = vpack.c.b16 %v1000, %v999
        %v1006 = vsel %vm911, %v970, 0
        %v1009 = vsel %vm911, %v971, 0
        %1011 = vmatprep.subr.bf16.mxu0 0
        %1012 = vmatpush1.bf16.msra.mxu0 %v1001
        %1013 = vmatprep.subr.bf16.mxu0 0
        %1014 = vmatpush1.bf16.msra.mxu0 %v1002
        %1015 = vmatprep.subr.bf16.mxu0 0
        %1016 = vmatpush1.bf16.msra.mxu0 0
        %1017 = vmatprep.subr.bf16.mxu0 0
        %1018 = vmatpush1.bf16.msra.mxu0 0
        %1019 = vmatprep.subr.bf16.mxu0 0
        %1020 = vmatpush1.bf16.msra.mxu0 0
        %1021 = vmatprep.subr.bf16.mxu0 0
        %1022 = vmatpush1.bf16.msra.mxu0 0
        %1023 = vmatprep.subr.bf16.mxu0 0
        %1024 = vmatpush1.bf16.msra.mxu0 0
        %1025 = vmatprep.subr.bf16.mxu0 0
        %1026 = vmatpush1.bf16.msra.mxu0 0
        %1027 = vmatprep.subr.bf16.mxu0 0
        %1028 = vmatpush1.bf16.msra.mxu0 0
        %1029 = vmatprep.subr.bf16.mxu0 0
        %1030 = vmatpush1.bf16.msra.mxu0 0
        %1031 = vmatprep.subr.bf16.mxu0 0
        %1032 = vmatpush1.bf16.msra.mxu0 0
        %1033 = vmatprep.subr.bf16.mxu0 0
        %1034 = vmatpush1.bf16.msra.mxu0 0
        %1035 = vmatprep.subr.bf16.mxu0 0
        %1036 = vmatpush1.bf16.msra.mxu0 0
        %1037 = vmatprep.subr.bf16.mxu0 0
        %1038 = vmatpush1.bf16.msra.mxu0 0
        %1039 = vmatprep.subr.bf16.mxu0 0
        %1040 = vmatpush1.bf16.msra.mxu0 0
        %1041 = vmatprep.subr.bf16.mxu0 0
        %1042 = vmatpush1.bf16.msra.mxu0 0
        %1043 = vmatprep.mubr.bf16.mxu0 0
        %1044 = vmatmul.mubr.bf16.gmra.mrb[0].mxu0 %v1006
        %v1045 = vpop.f32.mrb[0].mxu0
        %v1046 = vadd.f32 %v991, %v1045
        %v1047 = vpop.f32.mrb[0].mxu0
        %v1048 = vpop.f32.mrb[0].mxu0
        %v1049 = vadd.f32 %v991, %v1048
        %v1050 = vpop.f32.mrb[0].mxu0
        %1051 = vmatprep.mubr.bf16.mxu0 0
        %1052 = vmatmul.mubr.bf16.gmra.mrb[0].mxu0 %v1009
        %v1053 = vpop.f32.mrb[0].mxu0
        %v1054 = vadd.f32 %v991, %v1053
        %v1055 = vpop.f32.mrb[0].mxu0
        %v1056 = vpop.f32.mrb[0].mxu0
        %v1057 = vpop.f32.mrb[0].mxu0
        %1058 = vdwg.mxu0
        %v1059 = vmul.f32 %v1046, 0.35355338
        %v1060 = vmul.f32 %v1049, 0.35355338
        %v1061 = vmul.f32 %v1054, 0.35355338
        %v1062 = vld [vmem:[#allocation10] sm:$0xf]
        %v1063 = vld [vmem:[#allocation10 + $0x4] sm:$0xf]
        %v1064 = vld [vmem:[#allocation10 + $0x8] sm:$0xf]
        %v1065 = vld [vmem:[#allocation10 + $0xc] sm:$0xf]
        %v1066 = vld [vmem:[#allocation14] sm:$0x1]
        %v1068 = vlaneseq
        %v1069 = vshrl.u32 %v1068, 7
        %v1070 = vsub.s32 0, %v1069
        %v1071 = vrot.slane %v1066, %v1070
        %v1077 = vunpack.c.l.b16 %v1062
        %v1078 = vunpack.c.l.b16 %v1063
        %v1079 = vunpack.c.l.b16 %v1064
        %v1080 = vunpack.c.l.b16 %v1065
        %v1081 = vpack.c.b16 %v1078, %v1077
        %v1082 = vpack.c.b16 %v1080, %v1079
        %1085 = vmatprep.subr.bf16.mxu0 0
        %1086 = vmatpush1.bf16.msra.mxu0 %v1081
        %1087 = vmatprep.subr.bf16.mxu0 0
        %1088 = vmatpush1.bf16.msra.mxu0 %v1082
        %1089 = vmatprep.subr.bf16.mxu0 0
        %1090 = vmatpush1.bf16.msra.mxu0 0
        %1091 = vmatprep.subr.bf16.mxu0 0
        %1092 = vmatpush1.bf16.msra.mxu0 0
        %1093 = vmatprep.subr.bf16.mxu0 0
        %1094 = vmatpush1.bf16.msra.mxu0 0
        %1095 = vmatprep.subr.bf16.mxu0 0
        %1096 = vmatpush1.bf16.msra.mxu0 0
        %1097 = vmatprep.subr.bf16.mxu0 0
        %1098 = vmatpush1.bf16.msra.mxu0 0
        %1099 = vmatprep.subr.bf16.mxu0 0
        %1100 = vmatpush1.bf16.msra.mxu0 0
        %1101 = vmatprep.subr.bf16.mxu0 0
        %1102 = vmatpush1.bf16.msra.mxu0 0
        %1103 = vmatprep.subr.bf16.mxu0 0
        %1104 = vmatpush1.bf16.msra.mxu0 0
        %1105 = vmatprep.subr.bf16.mxu0 0
        %1106 = vmatpush1.bf16.msra.mxu0 0
        %1107 = vmatprep.subr.bf16.mxu0 0
        %1108 = vmatpush1.bf16.msra.mxu0 0
        %1109 = vmatprep.subr.bf16.mxu0 0
        %1110 = vmatpush1.bf16.msra.mxu0 0
        %1111 = vmatprep.subr.bf16.mxu0 0
        %1112 = vmatpush1.bf16.msra.mxu0 0
        %1113 = vmatprep.subr.bf16.mxu0 0
        %1114 = vmatpush1.bf16.msra.mxu0 0
        %1115 = vmatprep.subr.bf16.mxu0 0
        %1116 = vmatpush1.bf16.msra.mxu0 0
        %1117 = vmatprep.mubr.bf16.mxu0 0
        %1118 = vmatmul.mubr.bf16.gmra.mrb[0].mxu0 %v1006
        %v1119 = vpop.f32.mrb[0].mxu0
        %v1120 = vadd.f32 %v1071, %v1119
        %v1121 = vpop.f32.mrb[0].mxu0
        %v1122 = vpop.f32.mrb[0].mxu0
        %v1123 = vadd.f32 %v1071, %v1122
        %v1124 = vpop.f32.mrb[0].mxu0
        %1125 = vmatprep.mubr.bf16.mxu0 0
        %1126 = vmatmul.mubr.bf16.gmra.mrb[0].mxu0 %v1009
        %v1127 = vpop.f32.mrb[0].mxu0
        %v1128 = vadd.f32 %v1071, %v1127
        %v1129 = vpop.f32.mrb[0].mxu0
        %v1130 = vpop.f32.mrb[0].mxu0
        %v1131 = vpop.f32.mrb[0].mxu0
        %1132 = vdwg.mxu0
        %v1133 = vld [vmem:[#allocation11] sm:$0xf]
        %v1134 = vld [vmem:[#allocation11 + $0x4] sm:$0xf]
        %v1135 = vld [vmem:[#allocation11 + $0x8] sm:$0xf]
        %v1136 = vld [vmem:[#allocation11 + $0xc] sm:$0xf]
        %v1137 = vld [vmem:[#allocation16] sm:$0x1]
        %v1139 = vlaneseq
        %v1140 = vshrl.u32 %v1139, 7
        %v1141 = vsub.s32 0, %v1140
        %v1142 = vrot.slane %v1137, %v1141
        %v1148 = vunpack.c.l.b16 %v1133
        %v1149 = vunpack.c.l.b16 %v1134
        %v1150 = vunpack.c.l.b16 %v1135
        %v1151 = vunpack.c.l.b16 %v1136
        %v1152 = vpack.c.b16 %v1149, %v1148
        %v1153 = vpack.c.b16 %v1151, %v1150
        %1156 = vmatprep.subr.bf16.mxu0 0
        %1157 = vmatpush1.bf16.msra.mxu0 %v1152
        %1158 = vmatprep.subr.bf16.mxu0 0
        %1159 = vmatpush1.bf16.msra.mxu0 %v1153
        %1160 = vmatprep.subr.bf16.mxu0 0
        %1161 = vmatpush1.bf16.msra.mxu0 0
        %1162 = vmatprep.subr.bf16.mxu0 0
        %1163 = vmatpush1.bf16.msra.mxu0 0
        %1164 = vmatprep.subr.bf16.mxu0 0
        %1165 = vmatpush1.bf16.msra.mxu0 0
        %1166 = vmatprep.subr.bf16.mxu0 0
        %1167 = vmatpush1.bf16.msra.mxu0 0
        %1168 = vmatprep.subr.bf16.mxu0 0
        %1169 = vmatpush1.bf16.msra.mxu0 0
        %1170 = vmatprep.subr.bf16.mxu0 0
        %1171 = vmatpush1.bf16.msra.mxu0 0
        %1172 = vmatprep.subr.bf16.mxu0 0
        %1173 = vmatpush1.bf16.msra.mxu0 0
        %1174 = vmatprep.subr.bf16.mxu0 0
        %1175 = vmatpush1.bf16.msra.mxu0 0
        %1176 = vmatprep.subr.bf16.mxu0 0
        %1177 = vmatpush1.bf16.msra.mxu0 0
        %1178 = vmatprep.subr.bf16.mxu0 0
        %1179 = vmatpush1.bf16.msra.mxu0 0
        %1180 = vmatprep.subr.bf16.mxu0 0
        %1181 = vmatpush1.bf16.msra.mxu0 0
        %1182 = vmatprep.subr.bf16.mxu0 0
        %1183 = vmatpush1.bf16.msra.mxu0 0
        %1184 = vmatprep.subr.bf16.mxu0 0
        %1185 = vmatpush1.bf16.msra.mxu0 0
        %1186 = vmatprep.subr.bf16.mxu0 0
        %1187 = vmatpush1.bf16.msra.mxu0 0
        %1188 = vmatprep.mubr.bf16.mxu0 0
        %1189 = vmatmul.mubr.bf16.gmra.mrb[0].mxu0 %v1006
        %v1190 = vpop.f32.mrb[0].mxu0
        %v1191 = vadd.f32 %v1142, %v1190
        %v1192 = vpop.f32.mrb[0].mxu0
        %v1193 = vpop.f32.mrb[0].mxu0
        %v1194 = vadd.f32 %v1142, %v1193
        %v1195 = vpop.f32.mrb[0].mxu0
        %1196 = vmatprep.mubr.bf16.mxu0 0
        %1197 = vmatmul.mubr.bf16.gmra.mrb[0].mxu0 %v1009
        %v1198 = vpop.f32.mrb[0].mxu0
        %v1199 = vadd.f32 %v1142, %v1198
        %v1200 = vpop.f32.mrb[0].mxu0
        %v1201 = vpop.f32.mrb[0].mxu0
        %v1202 = vpop.f32.mrb[0].mxu0
        %1203 = vdwg.mxu0
        %v1204 = vpack.c.bf16 %v1060, %v1059
        %v1205 = vpack.c.bf16 %v1061, %v1061
        %v1206 = vpack.c.bf16 %v1123, %v1120
        %v1207 = vpack.c.bf16 %v1128, %v1128
        %vm1208 = vcmask 64512
        %v1210 = vsel %vm1208, %v1204, 0
        %v1213 = vsel %vm1208, %v1205, 0
        %v1216 = vsel %vm1208, %v1206, 0
        %v1219 = vsel %vm1208, %v1207, 0
        %1221 = vmatprep.subr.bf16.mxu0 0
        %1222 = vmatpush1.bf16.xpose.msra.mxu0 %v1216
        %1223 = vmatprep.subr.bf16.mxu0 0
        %1224 = vmatpush1.bf16.xpose.msra.mxu0 %v1219
        %1225 = vmatprep.subr.bf16.mxu0 0
        %1226 = vmatpush1.bf16.xpose.msra.mxu0 0
        %1227 = vmatprep.subr.bf16.mxu0 0
        %1228 = vmatpush1.bf16.xpose.msra.mxu0 0
        %1229 = vmatprep.subr.bf16.mxu0 0
        %1230 = vmatpush1.bf16.xpose.msra.mxu0 0
        %1231 = vmatprep.subr.bf16.mxu0 0
        %1232 = vmatpush1.bf16.xpose.msra.mxu0 0
        %1233 = vmatprep.subr.bf16.mxu0 0
        %1234 = vmatpush1.bf16.xpose.msra.mxu0 0
        %1235 = vmatprep.subr.bf16.mxu0 0
        %1236 = vmatpush1.bf16.xpose.msra.mxu0 0
        %1237 = vmatprep.subr.bf16.mxu0 0
        %1238 = vmatpush1.bf16.xpose.msra.mxu0 0
        %1239 = vmatprep.subr.bf16.mxu0 0
        %1240 = vmatpush1.bf16.xpose.msra.mxu0 0
        %1241 = vmatprep.subr.bf16.mxu0 0
        %1242 = vmatpush1.bf16.xpose.msra.mxu0 0
        %1243 = vmatprep.subr.bf16.mxu0 0
        %1244 = vmatpush1.bf16.xpose.msra.mxu0 0
        %1245 = vmatprep.subr.bf16.mxu0 0
        %1246 = vmatpush1.bf16.xpose.msra.mxu0 0
        %1247 = vmatprep.subr.bf16.mxu0 0
        %1248 = vmatpush1.bf16.xpose.msra.mxu0 0
        %1249 = vmatprep.subr.bf16.mxu0 0
        %1250 = vmatpush1.bf16.xpose.msra.mxu0 0
        %1251 = vmatprep.subr.bf16.mxu0 0
        %1252 = vmatpush1.bf16.xpose.msra.mxu0 0
        %1253 = vmatprep.mubr.bf16.mxu0 0
        %1254 = vmatmul.mubr.bf16.gmra.mrb[0].mxu0 %v1210
        %v1255 = vpop.f32.mrb[0].mxu0
        %v1256 = vadd.f32 0.0, %v1255
        %v1257 = vpop.f32.mrb[0].mxu0
        %v1258 = vpop.f32.mrb[0].mxu0
        %v1259 = vadd.f32 0.0, %v1258
        %v1260 = vpop.f32.mrb[0].mxu0
        %1261 = vmatprep.mubr.bf16.mxu0 0
        %1262 = vmatmul.mubr.bf16.gmra.mrb[0].mxu0 %v1213
        %v1263 = vpop.f32.mrb[0].mxu0
        %v1264 = vadd.f32 0.0, %v1263
        %v1265 = vpop.f32.mrb[0].mxu0
        %v1266 = vpop.f32.mrb[0].mxu0
        %v1267 = vpop.f32.mrb[0].mxu0
        %1268 = vdwg.mxu0
        %vm1269 = vcmask 195584
        %v1270 = vsel %vm1269, %v1256, -inf
        %1271 = vmax.xlane.f32.xlu0 %v1270
        %v1272 = vpop.xlane.xlu0 %1271
        %v1273 = vsel %vm1269, %v1259, -inf
        %1274 = vmax.xlane.f32.xlu0 %v1273
        %v1275 = vpop.xlane.xlu0 %1274
        %v1276 = vsel %vm1269, %v1264, -inf
        %1277 = vmax.xlane.f32.xlu0 %v1276
        %v1278 = vpop.xlane.xlu0 %1277
        %v1279 = vsub.f32 %v1256, %v1272
        %v1280 = vsub.f32 %v1259, %v1275
        %v1281 = vsub.f32 %v1264, %v1278
        %v1282 = vmul.f32 %v1279, 1.442695
        %v1283 = vpow.pop %v1282
        %v1284 = vmul.f32 %v1280, 1.442695
        %v1285 = vpow.pop %v1284
        %v1286 = vmul.f32 %v1281, 1.442695
        %v1287 = vpow.pop %v1286
        %v1288 = vsel %vm1269, %v1283, 0.0
        %1289 = vadd.xlane.f32.xlu0 %v1288
        %v1290 = vpop.xlane.xlu0 %1289
        %v1291 = vsel %vm1269, %v1285, 0.0
        %1292 = vadd.xlane.f32.xlu0 %v1291
        %v1293 = vpop.xlane.xlu0 %1292
        %v1294 = vsel %vm1269, %v1287, 0.0
        %1295 = vadd.xlane.f32.xlu0 %v1294
        %v1296 = vpop.xlane.xlu0 %1295
        %v1297 = vrcp.pop %v1290
        %v1298 = vmul.f32 1.0, %v1297
        %v1299 = vrcp.pop %v1293
        %v1300 = vmul.f32 1.0, %v1299
        %v1301 = vrcp.pop %v1296
        %v1302 = vmul.f32 1.0, %v1301
        %v1303 = vmul.f32 %v1283, %v1298
        %v1304 = vmul.f32 %v1285, %v1300
        %v1305 = vmul.f32 %v1287, %v1302
        %v1306 = vadd.f32 %v1303, 0.0
        %v1307 = vadd.f32 %v1304, 0.0
        %v1308 = vadd.f32 %v1305, 0.0
        %v1309 = vpack.c.bf16 %v1304, %v1303
        %v1310 = vpack.c.bf16 %v1305, %v1305
        %v1311 = vpack.c.bf16 %v1194, %v1191
        %v1312 = vpack.c.bf16 %v1199, %v1199
        %v1314 = vsel %vm1269, %v1309, 0
        %v1317 = vsel %vm1269, %v1310, 0
        %vm1319 = vcmask 1043456
        %v1321 = vsel %vm1319, %v1312, 0
        %1323 = vmatprep.subr.bf16.mxu0 0
        %1324 = vmatpush1.bf16.msra.mxu0 %v1311
        %1325 = vmatprep.subr.bf16.mxu0 0
        %1326 = vmatpush1.bf16.msra.mxu0 %v1321
        %1327 = vmatprep.subr.bf16.mxu0 0
        %1328 = vmatpush1.bf16.msra.mxu0 0
        %1329 = vmatprep.subr.bf16.mxu0 0
        %1330 = vmatpush1.bf16.msra.mxu0 0
        %1331 = vmatprep.subr.bf16.mxu0 0
        %1332 = vmatpush1.bf16.msra.mxu0 0
        %1333 = vmatprep.subr.bf16.mxu0 0
        %1334 = vmatpush1.bf16.msra.mxu0 0
        %1335 = vmatprep.subr.bf16.mxu0 0
        %1336 = vmatpush1.bf16.msra.mxu0 0
        %1337 = vmatprep.subr.bf16.mxu0 0
        %1338 = vmatpush1.bf16.msra.mxu0 0
        %1339 = vmatprep.subr.bf16.mxu0 0
        %1340 = vmatpush1.bf16.msra.mxu0 0
        %1341 = vmatprep.subr.bf16.mxu0 0
        %1342 = vmatpush1.bf16.msra.mxu0 0
        %1343 = vmatprep.subr.bf16.mxu0 0
        %1344 = vmatpush1.bf16.msra.mxu0 0
        %1345 = vmatprep.subr.bf16.mxu0 0
        %1346 = vmatpush1.bf16.msra.mxu0 0
        %1347 = vmatprep.subr.bf16.mxu0 0
        %1348 = vmatpush1.bf16.msra.mxu0 0
        %1349 = vmatprep.subr.bf16.mxu0 0
        %1350 = vmatpush1.bf16.msra.mxu0 0
        %1351 = vmatprep.subr.bf16.mxu0 0
        %1352 = vmatpush1.bf16.msra.mxu0 0
        %1353 = vmatprep.subr.bf16.mxu0 0
        %1354 = vmatpush1.bf16.msra.mxu0 0
        %1355 = vmatprep.mubr.bf16.mxu0 0
        %1356 = vmatmul.mubr.bf16.gmra.mrb[0].mxu0 %v1314
        %v1357 = vpop.f32.mrb[0].mxu0
        %v1358 = vadd.f32 0.0, %v1357
        %v1359 = vpop.f32.mrb[0].mxu0
        %v1360 = vpop.f32.mrb[0].mxu0
        %v1361 = vadd.f32 0.0, %v1360
        %v1362 = vpop.f32.mrb[0].mxu0
        %1363 = vmatprep.mubr.bf16.mxu0 0
        %1364 = vmatmul.mubr.bf16.gmra.mrb[0].mxu0 %v1317
        %v1365 = vpop.f32.mrb[0].mxu0
        %v1366 = vadd.f32 0.0, %v1365
        %v1367 = vpop.f32.mrb[0].mxu0
        %v1368 = vpop.f32.mrb[0].mxu0
        %v1369 = vpop.f32.mrb[0].mxu0
        %1370 = vdwg.mxu0
        %v1371 = vpack.c.bf16 %v1361, %v1358
        %v1372 = vpack.c.bf16 %v1366, %v1366
        %v1373 = vld [vmem:[#allocation17] sm:$0xf]
        %v1375 = vsel %vm1208, %v1371, 0
        %v1378 = vsel %vm1208, %v1372, 0
        %v1381 = vsel %vm1319, %v1373, 0
        %1383 = vmatprep.subr.bf16.mxu0 0
        %1384 = vmatpush1.bf16.msra.mxu0 %v1381
        %1385 = vmatprep.subr.bf16.mxu0 0
        %1386 = vmatpush1.bf16.msra.mxu0 0
        %1387 = vmatprep.subr.bf16.mxu0 0
        %1388 = vmatpush1.bf16.msra.mxu0 0
        %1389 = vmatprep.subr.bf16.mxu0 0
        %1390 = vmatpush1.bf16.msra.mxu0 0
        %1391 = vmatprep.subr.bf16.mxu0 0
        %1392 = vmatpush1.bf16.msra.mxu0 0
        %1393 = vmatprep.subr.bf16.mxu0 0
        %1394 = vmatpush1.bf16.msra.mxu0 0
        %1395 = vmatprep.subr.bf16.mxu0 0
        %1396 = vmatpush1.bf16.msra.mxu0 0
        %1397 = vmatprep.subr.bf16.mxu0 0
        %1398 = vmatpush1.bf16.msra.mxu0 0
        %1399 = vmatprep.subr.bf16.mxu0 0
        %1400 = vmatpush1.bf16.msra.mxu0 0
        %1401 = vmatprep.subr.bf16.mxu0 0
        %1402 = vmatpush1.bf16.msra.mxu0 0
        %1403 = vmatprep.subr.bf16.mxu0 0
        %1404 = vmatpush1.bf16.msra.mxu0 0
        %1405 = vmatprep.subr.bf16.mxu0 0
        %1406 = vmatpush1.bf16.msra.mxu0 0
        %1407 = vmatprep.subr.bf16.mxu0 0
        %1408 = vmatpush1.bf16.msra.mxu0 0
        %1409 = vmatprep.subr.bf16.mxu0 0
        %1410 = vmatpush1.bf16.msra.mxu0 0
        %1411 = vmatprep.subr.bf16.mxu0 0
        %1412 = vmatpush1.bf16.msra.mxu0 0
        %1413 = vmatprep.subr.bf16.mxu0 0
        %1414 = vmatpush1.bf16.msra.mxu0 0
        %1415 = vmatprep.mubr.bf16.mxu0 0
        %1416 = vmatmul.mubr.bf16.gmra.mrb[0].mxu0 %v1375
        %v1417 = vpop.f32.mrb[0].mxu0
        %v1418 = vadd.f32 0.0, %v1417
        %v1419 = vpop.f32.mrb[0].mxu0
        %v1420 = vpop.f32.mrb[0].mxu0
        %v1421 = vadd.f32 0.0, %v1420
        %v1422 = vpop.f32.mrb[0].mxu0
        %1423 = vmatprep.mubr.bf16.mxu0 0
        %1424 = vmatmul.mubr.bf16.gmra.mrb[0].mxu0 %v1378
        %v1425 = vpop.f32.mrb[0].mxu0
        %v1426 = vadd.f32 0.0, %v1425
        %v1427 = vpop.f32.mrb[0].mxu0
        %v1428 = vpop.f32.mrb[0].mxu0
        %v1429 = vpop.f32.mrb[0].mxu0
        %1430 = vdwg.mxu0
        %v1431 = vadd.f32 %v979, %v1418
        %v1432 = vadd.f32 %v980, %v1421
        %v1433 = vadd.f32 %v981, %v1426
        %s1434 = scalar_lea.vmem [#allocation8], 16
        %v1435 = vld [vmem:[%s1434] sm:$0xf]
        %v1436 = vld [vmem:[%s1434 + $0x4] sm:$0xf]
        %v1437 = vld [vmem:[%s1434 + $0x8] sm:$0xf]
        %v1438 = vld [vmem:[%s1434 + $0xc] sm:$0xf]
        %s1439 = scalar_lea.vmem [#allocation13], 1
        %v1440 = vld [vmem:[%s1439] sm:$0x1]
        %v1442 = vlaneseq
        %v1443 = vshrl.u32 %v1442, 7
        %v1444 = vsub.s32 0, %v1443
        %v1445 = vrot.slane %v1440, %v1444
        %v1451 = vunpack.c.l.b16 %v1435
        %v1452 = vunpack.c.l.b16 %v1436
        %v1453 = vunpack.c.l.b16 %v1437
        %v1454 = vunpack.c.l.b16 %v1438
        %v1455 = vpack.c.b16 %v1452, %v1451
        %v1456 = vpack.c.b16 %v1454, %v1453
        %1459 = vmatprep.subr.bf16.mxu0 0
        %1460 = vmatpush1.bf16.msra.mxu0 %v1455
        %1461 = vmatprep.subr.bf16.mxu0 0
        %1462 = vmatpush1.bf16.msra.mxu0 %v1456
        %1463 = vmatprep.subr.bf16.mxu0 0
        %1464 = vmatpush1.bf16.msra.mxu0 0
        %1465 = vmatprep.subr.bf16.mxu0 0
        %1466 = vmatpush1.bf16.msra.mxu0 0
        %1467 = vmatprep.subr.bf16.mxu0 0
        %1468 = vmatpush1.bf16.msra.mxu0 0
        %1469 = vmatprep.subr.bf16.mxu0 0
        %1470 = vmatpush1.bf16.msra.mxu0 0
        %1471 = vmatprep.subr.bf16.mxu0 0
        %1472 = vmatpush1.bf16.msra.mxu0 0
        %1473 = vmatprep.subr.bf16.mxu0 0
        %1474 = vmatpush1.bf16.msra.mxu0 0
        %1475 = vmatprep.subr.bf16.mxu0 0
        %1476 = vmatpush1.bf16.msra.mxu0 0
        %1477 = vmatprep.subr.bf16.mxu0 0
        %1478 = vmatpush1.bf16.msra.mxu0 0
        %1479 = vmatprep.subr.bf16.mxu0 0
        %1480 = vmatpush1.bf16.msra.mxu0 0
        %1481 = vmatprep.subr.bf16.mxu0 0
        %1482 = vmatpush1.bf16.msra.mxu0 0
        %1483 = vmatprep.subr.bf16.mxu0 0
        %1484 = vmatpush1.bf16.msra.mxu0 0
        %1485 = vmatprep.subr.bf16.mxu0 0
        %1486 = vmatpush1.bf16.msra.mxu0 0
        %1487 = vmatprep.subr.bf16.mxu0 0
        %1488 = vmatpush1.bf16.msra.mxu0 0
        %1489 = vmatprep.subr.bf16.mxu0 0
        %1490 = vmatpush1.bf16.msra.mxu0 0
        %1491 = vmatprep.mubr.bf16.mxu0 0
        %1492 = vmatmul.mubr.bf16.gmra.mrb[0].mxu0 %v1006
        %v1493 = vpop.f32.mrb[0].mxu0
        %v1494 = vadd.f32 %v1445, %v1493
        %v1495 = vpop.f32.mrb[0].mxu0
        %v1496 = vpop.f32.mrb[0].mxu0
        %v1497 = vadd.f32 %v1445, %v1496
        %v1498 = vpop.f32.mrb[0].mxu0
        %1499 = vmatprep.mubr.bf16.mxu0 0
        %1500 = vmatmul.mubr.bf16.gmra.mrb[0].mxu0 %v1009
        %v1501 = vpop.f32.mrb[0].mxu0
        %v1502 = vadd.f32 %v1445, %v1501
        %v1503 = vpop.f32.mrb[0].mxu0
        %v1504 = vpop.f32.mrb[0].mxu0
        %v1505 = vpop.f32.mrb[0].mxu0
        %1506 = vdwg.mxu0
        %v1507 = vmul.f32 %v1494, 0.35355338
        %v1508 = vmul.f32 %v1497, 0.35355338
        %v1509 = vmul.f32 %v1502, 0.35355338
        %s1510 = scalar_lea.vmem [#allocation10], 16
        %v1511 = vld [vmem:[%s1510] sm:$0xf]
        %v1512 = vld [vmem:[%s1510 + $0x4] sm:$0xf]
        %v1513 = vld [vmem:[%s1510 + $0x8] sm:$0xf]
        %v1514 = vld [vmem:[%s1510 + $0xc] sm:$0xf]
        %s1515 = scalar_lea.vmem [#allocation14], 1
        %v1516 = vld [vmem:[%s1515] sm:$0x1]
        %v1518 = vlaneseq
        %v1519 = vshrl.u32 %v1518, 7
        %v1520 = vsub.s32 0, %v1519
        %v1521 = vrot.slane %v1516, %v1520
        %v1527 = vunpack.c.l.b16 %v1511
        %v1528 = vunpack.c.l.b16 %v1512
        %v1529 = vunpack.c.l.b16 %v1513
        %v1530 = vunpack.c.l.b16 %v1514
        %v1531 = vpack.c.b16 %v1528, %v1527
        %v1532 = vpack.c.b16 %v1530, %v1529
        %1535 = vmatprep.subr.bf16.mxu0 0
        %1536 = vmatpush1.bf16.msra.mxu0 %v1531
        %1537 = vmatprep.subr.bf16.mxu0 0
        %1538 = vmatpush1.bf16.msra.mxu0 %v1532
        %1539 = vmatprep.subr.bf16.mxu0 0
        %1540 = vmatpush1.bf16.msra.mxu0 0
        %1541 = vmatprep.subr.bf16.mxu0 0
        %1542 = vmatpush1.bf16.msra.mxu0 0
        %1543 = vmatprep.subr.bf16.mxu0 0
        %1544 = vmatpush1.bf16.msra.mxu0 0
        %1545 = vmatprep.subr.bf16.mxu0 0
        %1546 = vmatpush1.bf16.msra.mxu0 0
        %1547 = vmatprep.subr.bf16.mxu0 0
        %1548 = vmatpush1.bf16.msra.mxu0 0
        %1549 = vmatprep.subr.bf16.mxu0 0
        %1550 = vmatpush1.bf16.msra.mxu0 0
        %1551 = vmatprep.subr.bf16.mxu0 0
        %1552 = vmatpush1.bf16.msra.mxu0 0
        %1553 = vmatprep.subr.bf16.mxu0 0
        %1554 = vmatpush1.bf16.msra.mxu0 0
        %1555 = vmatprep.subr.bf16.mxu0 0
        %1556 = vmatpush1.bf16.msra.mxu0 0
        %1557 = vmatprep.subr.bf16.mxu0 0
        %1558 = vmatpush1.bf16.msra.mxu0 0
        %1559 = vmatprep.subr.bf16.mxu0 0
        %1560 = vmatpush1.bf16.msra.mxu0 0
        %1561 = vmatprep.subr.bf16.mxu0 0
        %1562 = vmatpush1.bf16.msra.mxu0 0
        %1563 = vmatprep.subr.bf16.mxu0 0
        %1564 = vmatpush1.bf16.msra.mxu0 0
        %1565 = vmatprep.subr.bf16.mxu0 0
        %1566 = vmatpush1.bf16.msra.mxu0 0
        %1567 = vmatprep.mubr.bf16.mxu0 0
        %1568 = vmatmul.mubr.bf16.gmra.mrb[0].mxu0 %v1006
        %v1569 = vpop.f32.mrb[0].mxu0
        %v1570 = vadd.f32 %v1521, %v1569
        %v1571 = vpop.f32.mrb[0].mxu0
        %v1572 = vpop.f32.mrb[0].mxu0
        %v1573 = vadd.f32 %v1521, %v1572
        %v1574 = vpop.f32.mrb[0].mxu0
        %1575 = vmatprep.mubr.bf16.mxu0 0
        %1576 = vmatmul.mubr.bf16.gmra.mrb[0].mxu0 %v1009
        %v1577 = vpop.f32.mrb[0].mxu0
        %v1578 = vadd.f32 %v1521, %v1577
        %v1579 = vpop.f32.mrb[0].mxu0
        %v1580 = vpop.f32.mrb[0].mxu0
        %v1581 = vpop.f32.mrb[0].mxu0
        %1582 = vdwg.mxu0
        %s1583 = scalar_lea.vmem [#allocation11], 16
        %v1584 = vld [vmem:[%s1583] sm:$0xf]
        %v1585 = vld [vmem:[%s1583 + $0x4] sm:$0xf]
        %v1586 = vld [vmem:[%s1583 + $0x8] sm:$0xf]
        %v1587 = vld [vmem:[%s1583 + $0xc] sm:$0xf]
        %s1588 = scalar_lea.vmem [#allocation16], 1
        %v1589 = vld [vmem:[%s1588] sm:$0x1]
        %v1591 = vlaneseq
        %v1592 = vshrl.u32 %v1591, 7
        %v1593 = vsub.s32 0, %v1592
        %v1594 = vrot.slane %v1589, %v1593
        %v1600 = vunpack.c.l.b16 %v1584
        %v1601 = vunpack.c.l.b16 %v1585
        %v1602 = vunpack.c.l.b16 %v1586
        %v1603 = vunpack.c.l.b16 %v1587
        %v1604 = vpack.c.b16 %v1601, %v1600
        %v1605 = vpack.c.b16 %v1603, %v1602
        %1608 = vmatprep.subr.bf16.mxu0 0
        %1609 = vmatpush1.bf16.msra.mxu0 %v1604
        %1610 = vmatprep.subr.bf16.mxu0 0
        %1611 = vmatpush1.bf16.msra.mxu0 %v1605
        %1612 = vmatprep.subr.bf16.mxu0 0
        %1613 = vmatpush1.bf16.msra.mxu0 0
        %1614 = vmatprep.subr.bf16.mxu0 0
        %1615 = vmatpush1.bf16.msra.mxu0 0
        %1616 = vmatprep.subr.bf16.mxu0 0
        %1617 = vmatpush1.bf16.msra.mxu0 0
        %1618 = vmatprep.subr.bf16.mxu0 0
        %1619 = vmatpush1.bf16.msra.mxu0 0
        %1620 = vmatprep.subr.bf16.mxu0 0
        %1621 = vmatpush1.bf16.msra.mxu0 0
        %1622 = vmatprep.subr.bf16.mxu0 0
        %1623 = vmatpush1.bf16.msra.mxu0 0
        %1624 = vmatprep.subr.bf16.mxu0 0
        %1625 = vmatpush1.bf16.msra.mxu0 0
        %1626 = vmatprep.subr.bf16.mxu0 0
        %1627 = vmatpush1.bf16.msra.mxu0 0
        %1628 = vmatprep.subr.bf16.mxu0 0
        %1629 = vmatpush1.bf16.msra.mxu0 0
        %1630 = vmatprep.subr.bf16.mxu0 0
        %1631 = vmatpush1.bf16.msra.mxu0 0
        %1632 = vmatprep.subr.bf16.mxu0 0
        %1633 = vmatpush1.bf16.msra.mxu0 0
        %1634 = vmatprep.subr.bf16.mxu0 0
        %1635 = vmatpush1.bf16.msra.mxu0 0
        %1636 = vmatprep.subr.bf16.mxu0 0
        %1637 = vmatpush1.bf16.msra.mxu0 0
        %1638 = vmatprep.subr.bf16.mxu0 0
        %1639 = vmatpush1.bf16.msra.mxu0 0
        %1640 = vmatprep.mubr.bf16.mxu0 0
        %1641 = vmatmul.mubr.bf16.gmra.mrb[0].mxu0 %v1006
        %v1642 = vpop.f32.mrb[0].mxu0
        %v1643 = vadd.f32 %v1594, %v1642
        %v1644 = vpop.f32.mrb[0].mxu0
        %v1645 = vpop.f32.mrb[0].mxu0
        %v1646 = vadd.f32 %v1594, %v1645
        %v1647 = vpop.f32.mrb[0].mxu0
        %1648 = vmatprep.mubr.bf16.mxu0 0
        %1649 = vmatmul.mubr.bf16.gmra.mrb[0].mxu0 %v1009
        %v1650 = vpop.f32.mrb[0].mxu0
        %v1651 = vadd.f32 %v1594, %v1650
        %v1652 = vpop.f32.mrb[0].mxu0
        %v1653 = vpop.f32.mrb[0].mxu0
        %v1654 = vpop.f32.mrb[0].mxu0
        %1655 = vdwg.mxu0
        %v1656 = vpack.c.bf16 %v1508, %v1507
        %v1657 = vpack.c.bf16 %v1509, %v1509
        %v1658 = vpack.c.bf16 %v1573, %v1570
        %v1659 = vpack.c.bf16 %v1578, %v1578
        %v1661 = vsel %vm1208, %v1656, 0
        %v1664 = vsel %vm1208, %v1657, 0
        %v1667 = vsel %vm1208, %v1658, 0
        %v1670 = vsel %vm1208, %v1659, 0
        %1672 = vmatprep.subr.bf16.mxu0 0
        %1673 = vmatpush1.bf16.xpose.msra.mxu0 %v1667
        %1674 = vmatprep.subr.bf16.mxu0 0
        %1675 = vmatpush1.bf16.xpose.msra.mxu0 %v1670
        %1676 = vmatprep.subr.bf16.mxu0 0
        %1677 = vmatpush1.bf16.xpose.msra.mxu0 0
        %1678 = vmatprep.subr.bf16.mxu0 0
        %1679 = vmatpush1.bf16.xpose.msra.mxu0 0
        %1680 = vmatprep.subr.bf16.mxu0 0
        %1681 = vmatpush1.bf16.xpose.msra.mxu0 0
        %1682 = vmatprep.subr.bf16.mxu0 0
        %1683 = vmatpush1.bf16.xpose.msra.mxu0 0
        %1684 = vmatprep.subr.bf16.mxu0 0
        %1685 = vmatpush1.bf16.xpose.msra.mxu0 0
        %1686 = vmatprep.subr.bf16.mxu0 0
        %1687 = vmatpush1.bf16.xpose.msra.mxu0 0
        %1688 = vmatprep.subr.bf16.mxu0 0
        %1689 = vmatpush1.bf16.xpose.msra.mxu0 0
        %1690 = vmatprep.subr.bf16.mxu0 0
        %1691 = vmatpush1.bf16.xpose.msra.mxu0 0
        %1692 = vmatprep.subr.bf16.mxu0 0
        %1693 = vmatpush1.bf16.xpose.msra.mxu0 0
        %1694 = vmatprep.subr.bf16.mxu0 0
        %1695 = vmatpush1.bf16.xpose.msra.mxu0 0
        %1696 = vmatprep.subr.bf16.mxu0 0
        %1697 = vmatpush1.bf16.xpose.msra.mxu0 0
        %1698 = vmatprep.subr.bf16.mxu0 0
        %1699 = vmatpush1.bf16.xpose.msra.mxu0 0
        %1700 = vmatprep.subr.bf16.mxu0 0
        %1701 = vmatpush1.bf16.xpose.msra.mxu0 0
        %1702 = vmatprep.subr.bf16.mxu0 0
        %1703 = vmatpush1.bf16.xpose.msra.mxu0 0
        %1704 = vmatprep.mubr.bf16.mxu0 0
        %1705 = vmatmul.mubr.bf16.gmra.mrb[0].mxu0 %v1661
        %v1706 = vpop.f32.mrb[0].mxu0
        %v1707 = vadd.f32 0.0, %v1706
        %v1708 = vpop.f32.mrb[0].mxu0
        %v1709 = vpop.f32.mrb[0].mxu0
        %v1710 = vadd.f32 0.0, %v1709
        %v1711 = vpop.f32.mrb[0].mxu0
        %1712 = vmatprep.mubr.bf16.mxu0 0
        %1713 = vmatmul.mubr.bf16.gmra.mrb[0].mxu0 %v1664
        %v1714 = vpop.f32.mrb[0].mxu0
        %v1715 = vadd.f32 0.0, %v1714
        %v1716 = vpop.f32.mrb[0].mxu0
        %v1717 = vpop.f32.mrb[0].mxu0
        %v1718 = vpop.f32.mrb[0].mxu0
        %1719 = vdwg.mxu0
        %v1720 = vsel %vm1269, %v1707, -inf
        %1721 = vmax.xlane.f32.xlu0 %v1720
        %v1722 = vpop.xlane.xlu0 %1721
        %v1723 = vsel %vm1269, %v1710, -inf
        %1724 = vmax.xlane.f32.xlu0 %v1723
        %v1725 = vpop.xlane.xlu0 %1724
        %v1726 = vsel %vm1269, %v1715, -inf
        %1727 = vmax.xlane.f32.xlu0 %v1726
        %v1728 = vpop.xlane.xlu0 %1727
        %v1729 = vsub.f32 %v1707, %v1722
        %v1730 = vsub.f32 %v1710, %v1725
        %v1731 = vsub.f32 %v1715, %v1728
        %v1732 = vmul.f32 %v1729, 1.442695
        %v1733 = vpow.pop %v1732
        %v1734 = vmul.f32 %v1730, 1.442695
        %v1735 = vpow.pop %v1734
        %v1736 = vmul.f32 %v1731, 1.442695
        %v1737 = vpow.pop %v1736
        %v1738 = vsel %vm1269, %v1733, 0.0
        %1739 = vadd.xlane.f32.xlu0 %v1738
        %v1740 = vpop.xlane.xlu0 %1739
        %v1741 = vsel %vm1269, %v1735, 0.0
        %1742 = vadd.xlane.f32.xlu0 %v1741
        %v1743 = vpop.xlane.xlu0 %1742
        %v1744 = vsel %vm1269, %v1737, 0.0
        %1745 = vadd.xlane.f32.xlu0 %v1744
        %v1746 = vpop.xlane.xlu0 %1745
        %v1747 = vrcp.pop %v1740
        %v1748 = vmul.f32 1.0, %v1747
        %v1749 = vrcp.pop %v1743
        %v1750 = vmul.f32 1.0, %v1749
        %v1751 = vrcp.pop %v1746
        %v1752 = vmul.f32 1.0, %v1751
        %v1753 = vmul.f32 %v1733, %v1748
        %v1754 = vmul.f32 %v1735, %v1750
        %v1755 = vmul.f32 %v1737, %v1752
        %v1756 = vadd.f32 %v1306, %v1753
        %v1757 = vadd.f32 %v1307, %v1754
        %v1758 = vadd.f32 %v1308, %v1755
        %v1759 = vpack.c.bf16 %v1754, %v1753
        %v1760 = vpack.c.bf16 %v1755, %v1755
        %v1761 = vpack.c.bf16 %v1646, %v1643
        %v1762 = vpack.c.bf16 %v1651, %v1651
        %v1764 = vsel %vm1269, %v1759, 0
        %v1767 = vsel %vm1269, %v1760, 0
        %v1770 = vsel %vm1319, %v1762, 0
        %1772 = vmatprep.subr.bf16.mxu0 0
        %1773 = vmatpush1.bf16.msra.mxu0 %v1761
        %1774 = vmatprep.subr.bf16.mxu0 0
        %1775 = vmatpush1.bf16.msra.mxu0 %v1770
        %1776 = vmatprep.subr.bf16.mxu0 0
        %1777 = vmatpush1.bf16.msra.mxu0 0
        %1778 = vmatprep.subr.bf16.mxu0 0
        %1779 = vmatpush1.bf16.msra.mxu0 0
        %1780 = vmatprep.subr.bf16.mxu0 0
        %1781 = vmatpush1.bf16.msra.mxu0 0
        %1782 = vmatprep.subr.bf16.mxu0 0
        %1783 = vmatpush1.bf16.msra.mxu0 0
        %1784 = vmatprep.subr.bf16.mxu0 0
        %1785 = vmatpush1.bf16.msra.mxu0 0
        %1786 = vmatprep.subr.bf16.mxu0 0
        %1787 = vmatpush1.bf16.msra.mxu0 0
        %1788 = vmatprep.subr.bf16.mxu0 0
        %1789 = vmatpush1.bf16.msra.mxu0 0
        %1790 = vmatprep.subr.bf16.mxu0 0
        %1791 = vmatpush1.bf16.msra.mxu0 0
        %1792 = vmatprep.subr.bf16.mxu0 0
        %1793 = vmatpush1.bf16.msra.mxu0 0
        %1794 = vmatprep.subr.bf16.mxu0 0
        %1795 = vmatpush1.bf16.msra.mxu0 0
        %1796 = vmatprep.subr.bf16.mxu0 0
        %1797 = vmatpush1.bf16.msra.mxu0 0
        %1798 = vmatprep.subr.bf16.mxu0 0
        %1799 = vmatpush1.bf16.msra.mxu0 0
        %1800 = vmatprep.subr.bf16.mxu0 0
        %1801 = vmatpush1.bf16.msra.mxu0 0
        %1802 = vmatprep.subr.bf16.mxu0 0
        %1803 = vmatpush1.bf16.msra.mxu0 0
        %1804 = vmatprep.mubr.bf16.mxu0 0
        %1805 = vmatmul.mubr.bf16.gmra.mrb[0].mxu0 %v1764
        %v1806 = vpop.f32.mrb[0].mxu0
        %v1807 = vadd.f32 0.0, %v1806
        %v1808 = vpop.f32.mrb[0].mxu0
        %v1809 = vpop.f32.mrb[0].mxu0
        %v1810 = vadd.f32 0.0, %v1809
        %v1811 = vpop.f32.mrb[0].mxu0
        %1812 = vmatprep.mubr.bf16.mxu0 0
        %1813 = vmatmul.mubr.bf16.gmra.mrb[0].mxu0 %v1767
        %v1814 = vpop.f32.mrb[0].mxu0
        %v1815 = vadd.f32 0.0, %v1814
        %v1816 = vpop.f32.mrb[0].mxu0
        %v1817 = vpop.f32.mrb[0].mxu0
        %v1818 = vpop.f32.mrb[0].mxu0
        %1819 = vdwg.mxu0
        %v1820 = vpack.c.bf16 %v1810, %v1807
        %v1821 = vpack.c.bf16 %v1815, %v1815
        %s1822 = scalar_lea.vmem [#allocation17], 4
        %v1823 = vld [vmem:[%s1822] sm:$0xf]
        %v1825 = vsel %vm1208, %v1820, 0
        %v1828 = vsel %vm1208, %v1821, 0
        %v1831 = vsel %vm1319, %v1823, 0
        %1833 = vmatprep.subr.bf16.mxu0 0
        %1834 = vmatpush1.bf16.msra.mxu0 %v1831
        %1835 = vmatprep.subr.bf16.mxu0 0
        %1836 = vmatpush1.bf16.msra.mxu0 0
        %1837 = vmatprep.subr.bf16.mxu0 0
        %1838 = vmatpush1.bf16.msra.mxu0 0
        %1839 = vmatprep.subr.bf16.mxu0 0
        %1840 = vmatpush1.bf16.msra.mxu0 0
        %1841 = vmatprep.subr.bf16.mxu0 0
        %1842 = vmatpush1.bf16.msra.mxu0 0
        %1843 = vmatprep.subr.bf16.mxu0 0
        %1844 = vmatpush1.bf16.msra.mxu0 0
        %1845 = vmatprep.subr.bf16.mxu0 0
        %1846 = vmatpush1.bf16.msra.mxu0 0
        %1847 = vmatprep.subr.bf16.mxu0 0
        %1848 = vmatpush1.bf16.msra.mxu0 0
        %1849 = vmatprep.subr.bf16.mxu0 0
        %1850 = vmatpush1.bf16.msra.mxu0 0
        %1851 = vmatprep.subr.bf16.mxu0 0
        %1852 = vmatpush1.bf16.msra.mxu0 0
        %1853 = vmatprep.subr.bf16.mxu0 0
        %1854 = vmatpush1.bf16.msra.mxu0 0
        %1855 = vmatprep.subr.bf16.mxu0 0
        %1856 = vmatpush1.bf16.msra.mxu0 0
        %1857 = vmatprep.subr.bf16.mxu0 0
        %1858 = vmatpush1.bf16.msra.mxu0 0
        %1859 = vmatprep.subr.bf16.mxu0 0
        %1860 = vmatpush1.bf16.msra.mxu0 0
        %1861 = vmatprep.subr.bf16.mxu0 0
        %1862 = vmatpush1.bf16.msra.mxu0 0
        %1863 = vmatprep.subr.bf16.mxu0 0
        %1864 = vmatpush1.bf16.msra.mxu0 0
        %1865 = vmatprep.mubr.bf16.mxu0 0
        %1866 = vmatmul.mubr.bf16.gmra.mrb[0].mxu0 %v1825
        %v1867 = vpop.f32.mrb[0].mxu0
        %v1868 = vadd.f32 0.0, %v1867
        %v1869 = vpop.f32.mrb[0].mxu0
        %v1870 = vpop.f32.mrb[0].mxu0
        %v1871 = vadd.f32 0.0, %v1870
        %v1872 = vpop.f32.mrb[0].mxu0
        %1873 = vmatprep.mubr.bf16.mxu0 0
        %1874 = vmatmul.mubr.bf16.gmra.mrb[0].mxu0 %v1828
        %v1875 = vpop.f32.mrb[0].mxu0
        %v1876 = vadd.f32 0.0, %v1875
        %v1877 = vpop.f32.mrb[0].mxu0
        %v1878 = vpop.f32.mrb[0].mxu0
        %v1879 = vpop.f32.mrb[0].mxu0
        %1880 = vdwg.mxu0
        %v1881 = vadd.f32 %v1431, %v1868
        %v1882 = vadd.f32 %v1432, %v1871
        %v1883 = vadd.f32 %v1433, %v1876
        %s1884 = scalar_lea.vmem [#allocation8], 32
        %v1885 = vld [vmem:[%s1884] sm:$0xf]
        %v1886 = vld [vmem:[%s1884 + $0x4] sm:$0xf]
        %v1887 = vld [vmem:[%s1884 + $0x8] sm:$0xf]
        %v1888 = vld [vmem:[%s1884 + $0xc] sm:$0xf]
        %s1889 = scalar_lea.vmem [#allocation13], 2
        %v1890 = vld [vmem:[%s1889] sm:$0x1]
        %v1892 = vlaneseq
        %v1893 = vshrl.u32 %v1892, 7
        %v1894 = vsub.s32 0, %v1893
        %v1895 = vrot.slane %v1890, %v1894
        %v1901 = vunpack.c.l.b16 %v1885
        %v1902 = vunpack.c.l.b16 %v1886
        %v1903 = vunpack.c.l.b16 %v1887
        %v1904 = vunpack.c.l.b16 %v1888
        %v1905 = vpack.c.b16 %v1902, %v1901
        %v1906 = vpack.c.b16 %v1904, %v1903
        %1909 = vmatprep.subr.bf16.mxu0 0
        %1910 = vmatpush1.bf16.msra.mxu0 %v1905
        %1911 = vmatprep.subr.bf16.mxu0 0
        %1912 = vmatpush1.bf16.msra.mxu0 %v1906
        %1913 = vmatprep.subr.bf16.mxu0 0
        %1914 = vmatpush1.bf16.msra.mxu0 0
        %1915 = vmatprep.subr.bf16.mxu0 0
        %1916 = vmatpush1.bf16.msra.mxu0 0
        %1917 = vmatprep.subr.bf16.mxu0 0
        %1918 = vmatpush1.bf16.msra.mxu0 0
        %1919 = vmatprep.subr.bf16.mxu0 0
        %1920 = vmatpush1.bf16.msra.mxu0 0
        %1921 = vmatprep.subr.bf16.mxu0 0
        %1922 = vmatpush1.bf16.msra.mxu0 0
        %1923 = vmatprep.subr.bf16.mxu0 0
        %1924 = vmatpush1.bf16.msra.mxu0 0
        %1925 = vmatprep.subr.bf16.mxu0 0
        %1926 = vmatpush1.bf16.msra.mxu0 0
        %1927 = vmatprep.subr.bf16.mxu0 0
        %1928 = vmatpush1.bf16.msra.mxu0 0
        %1929 = vmatprep.subr.bf16.mxu0 0
        %1930 = vmatpush1.bf16.msra.mxu0 0
        %1931 = vmatprep.subr.bf16.mxu0 0
        %1932 = vmatpush1.bf16.msra.mxu0 0
        %1933 = vmatprep.subr.bf16.mxu0 0
        %1934 = vmatpush1.bf16.msra.mxu0 0
        %1935 = vmatprep.subr.bf16.mxu0 0
        %1936 = vmatpush1.bf16.msra.mxu0 0
        %1937 = vmatprep.subr.bf16.mxu0 0
        %1938 = vmatpush1.bf16.msra.mxu0 0
        %1939 = vmatprep.subr.bf16.mxu0 0
        %1940 = vmatpush1.bf16.msra.mxu0 0
        %1941 = vmatprep.mubr.bf16.mxu0 0
        %1942 = vmatmul.mubr.bf16.gmra.mrb[0].mxu0 %v1006
        %v1943 = vpop.f32.mrb[0].mxu0
        %v1944 = vadd.f32 %v1895, %v1943
        %v1945 = vpop.f32.mrb[0].mxu0
        %v1946 = vpop.f32.mrb[0].mxu0
        %v1947 = vadd.f32 %v1895, %v1946
        %v1948 = vpop.f32.mrb[0].mxu0
        %1949 = vmatprep.mubr.bf16.mxu0 0
        %1950 = vmatmul.mubr.bf16.gmra.mrb[0].mxu0 %v1009
        %v1951 = vpop.f32.mrb[0].mxu0
        %v1952 = vadd.f32 %v1895, %v1951
        %v1953 = vpop.f32.mrb[0].mxu0
        %v1954 = vpop.f32.mrb[0].mxu0
        %v1955 = vpop.f32.mrb[0].mxu0
        %1956 = vdwg.mxu0
        %v1957 = vmul.f32 %v1944, 0.35355338
        %v1958 = vmul.f32 %v1947, 0.35355338
        %v1959 = vmul.f32 %v1952, 0.35355338
        %s1960 = scalar_lea.vmem [#allocation10], 32
        %v1961 = vld [vmem:[%s1960] sm:$0xf]
        %v1962 = vld [vmem:[%s1960 + $0x4] sm:$0xf]
        %v1963 = vld [vmem:[%s1960 + $0x8] sm:$0xf]
        %v1964 = vld [vmem:[%s1960 + $0xc] sm:$0xf]
        %s1965 = scalar_lea.vmem [#allocation14], 2
        %v1966 = vld [vmem:[%s1965] sm:$0x1]
        %v1968 = vlaneseq
        %v1969 = vshrl.u32 %v1968, 7
        %v1970 = vsub.s32 0, %v1969
        %v1971 = vrot.slane %v1966, %v1970
        %v1977 = vunpack.c.l.b16 %v1961
        %v1978 = vunpack.c.l.b16 %v1962
        %v1979 = vunpack.c.l.b16 %v1963
        %v1980 = vunpack.c.l.b16 %v1964
        %v1981 = vpack.c.b16 %v1978, %v1977
        %v1982 = vpack.c.b16 %v1980, %v1979
        %1985 = vmatprep.subr.bf16.mxu0 0
        %1986 = vmatpush1.bf16.msra.mxu0 %v1981
        %1987 = vmatprep.subr.bf16.mxu0 0
        %1988 = vmatpush1.bf16.msra.mxu0 %v1982
        %1989 = vmatprep.subr.bf16.mxu0 0
        %1990 = vmatpush1.bf16.msra.mxu0 0
        %1991 = vmatprep.subr.bf16.mxu0 0
        %1992 = vmatpush1.bf16.msra.mxu0 0
        %1993 = vmatprep.subr.bf16.mxu0 0
        %1994 = vmatpush1.bf16.msra.mxu0 0
        %1995 = vmatprep.subr.bf16.mxu0 0
        %1996 = vmatpush1.bf16.msra.mxu0 0
        %1997 = vmatprep.subr.bf16.mxu0 0
        %1998 = vmatpush1.bf16.msra.mxu0 0
        %1999 = vmatprep.subr.bf16.mxu0 0
        %2000 = vmatpush1.bf16.msra.mxu0 0
        %2001 = vmatprep.subr.bf16.mxu0 0
        %2002 = vmatpush1.bf16.msra.mxu0 0
        %2003 = vmatprep.subr.bf16.mxu0 0
        %2004 = vmatpush1.bf16.msra.mxu0 0
        %2005 = vmatprep.subr.bf16.mxu0 0
        %2006 = vmatpush1.bf16.msra.mxu0 0
        %2007 = vmatprep.subr.bf16.mxu0 0
        %2008 = vmatpush1.bf16.msra.mxu0 0
        %2009 = vmatprep.subr.bf16.mxu0 0
        %2010 = vmatpush1.bf16.msra.mxu0 0
        %2011 = vmatprep.subr.bf16.mxu0 0
        %2012 = vmatpush1.bf16.msra.mxu0 0
        %2013 = vmatprep.subr.bf16.mxu0 0
        %2014 = vmatpush1.bf16.msra.mxu0 0
        %2015 = vmatprep.subr.bf16.mxu0 0
        %2016 = vmatpush1.bf16.msra.mxu0 0
        %2017 = vmatprep.mubr.bf16.mxu0 0
        %2018 = vmatmul.mubr.bf16.gmra.mrb[0].mxu0 %v1006
        %v2019 = vpop.f32.mrb[0].mxu0
        %v2020 = vadd.f32 %v1971, %v2019
        %v2021 = vpop.f32.mrb[0].mxu0
        %v2022 = vpop.f32.mrb[0].mxu0
        %v2023 = vadd.f32 %v1971, %v2022
        %v2024 = vpop.f32.mrb[0].mxu0
        %2025 = vmatprep.mubr.bf16.mxu0 0
        %2026 = vmatmul.mubr.bf16.gmra.mrb[0].mxu0 %v1009
        %v2027 = vpop.f32.mrb[0].mxu0
        %v2028 = vadd.f32 %v1971, %v2027
        %v2029 = vpop.f32.mrb[0].mxu0
        %v2030 = vpop.f32.mrb[0].mxu0
        %v2031 = vpop.f32.mrb[0].mxu0
        %2032 = vdwg.mxu0
        %s2033 = scalar_lea.vmem [#allocation11], 32
        %v2034 = vld [vmem:[%s2033] sm:$0xf]
        %v2035 = vld [vmem:[%s2033 + $0x4] sm:$0xf]
        %v2036 = vld [vmem:[%s2033 + $0x8] sm:$0xf]
        %v2037 = vld [vmem:[%s2033 + $0xc] sm:$0xf]
        %s2038 = scalar_lea.vmem [#allocation16], 2
        %v2039 = vld [vmem:[%s2038] sm:$0x1]
        %v2041 = vlaneseq
        %v2042 = vshrl.u32 %v2041, 7
        %v2043 = vsub.s32 0, %v2042
        %v2044 = vrot.slane %v2039, %v2043
        %v2050 = vunpack.c.l.b16 %v2034
        %v2051 = vunpack.c.l.b16 %v2035
        %v2052 = vunpack.c.l.b16 %v2036
        %v2053 = vunpack.c.l.b16 %v2037
        %v2054 = vpack.c.b16 %v2051, %v2050
        %v2055 = vpack.c.b16 %v2053, %v2052
        %2058 = vmatprep.subr.bf16.mxu0 0
        %2059 = vmatpush1.bf16.msra.mxu0 %v2054
        %2060 = vmatprep.subr.bf16.mxu0 0
        %2061 = vmatpush1.bf16.msra.mxu0 %v2055
        %2062 = vmatprep.subr.bf16.mxu0 0
        %2063 = vmatpush1.bf16.msra.mxu0 0
        %2064 = vmatprep.subr.bf16.mxu0 0
        %2065 = vmatpush1.bf16.msra.mxu0 0
        %2066 = vmatprep.subr.bf16.mxu0 0
        %2067 = vmatpush1.bf16.msra.mxu0 0
        %2068 = vmatprep.subr.bf16.mxu0 0
        %2069 = vmatpush1.bf16.msra.mxu0 0
        %2070 = vmatprep.subr.bf16.mxu0 0
        %2071 = vmatpush1.bf16.msra.mxu0 0
        %2072 = vmatprep.subr.bf16.mxu0 0
        %2073 = vmatpush1.bf16.msra.mxu0 0
        %2074 = vmatprep.subr.bf16.mxu0 0
        %2075 = vmatpush1.bf16.msra.mxu0 0
        %2076 = vmatprep.subr.bf16.mxu0 0
        %2077 = vmatpush1.bf16.msra.mxu0 0
        %2078 = vmatprep.subr.bf16.mxu0 0
        %2079 = vmatpush1.bf16.msra.mxu0 0
        %2080 = vmatprep.subr.bf16.mxu0 0
        %2081 = vmatpush1.bf16.msra.mxu0 0
        %2082 = vmatprep.subr.bf16.mxu0 0
        %2083 = vmatpush1.bf16.msra.mxu0 0
        %2084 = vmatprep.subr.bf16.mxu0 0
        %2085 = vmatpush1.bf16.msra.mxu0 0
        %2086 = vmatprep.subr.bf16.mxu0 0
        %2087 = vmatpush1.bf16.msra.mxu0 0
        %2088 = vmatprep.subr.bf16.mxu0 0
        %2089 = vmatpush1.bf16.msra.mxu0 0
        %2090 = vmatprep.mubr.bf16.mxu0 0
        %2091 = vmatmul.mubr.bf16.gmra.mrb[0].mxu0 %v1006
        %v2092 = vpop.f32.mrb[0].mxu0
        %v2093 = vadd.f32 %v2044, %v2092
        %v2094 = vpop.f32.mrb[0].mxu0
        %v2095 = vpop.f32.mrb[0].mxu0
        %v2096 = vadd.f32 %v2044, %v2095
        %v2097 = vpop.f32.mrb[0].mxu0
        %2098 = vmatprep.mubr.bf16.mxu0 0
        %2099 = vmatmul.mubr.bf16.gmra.mrb[0].mxu0 %v1009
        %v2100 = vpop.f32.mrb[0].mxu0
        %v2101 = vadd.f32 %v2044, %v2100
        %v2102 = vpop.f32.mrb[0].mxu0
        %v2103 = vpop.f32.mrb[0].mxu0
        %v2104 = vpop.f32.mrb[0].mxu0
        %2105 = vdwg.mxu0
        %v2106 = vpack.c.bf16 %v1958, %v1957
        %v2107 = vpack.c.bf16 %v1959, %v1959
        %v2108 = vpack.c.bf16 %v2023, %v2020
        %v2109 = vpack.c.bf16 %v2028, %v2028
        %v2111 = vsel %vm1208, %v2106, 0
        %v2114 = vsel %vm1208, %v2107, 0
        %v2117 = vsel %vm1208, %v2108, 0
        %v2120 = vsel %vm1208, %v2109, 0
        %2122 = vmatprep.subr.bf16.mxu0 0
        %2123 = vmatpush1.bf16.xpose.msra.mxu0 %v2117
        %2124 = vmatprep.subr.bf16.mxu0 0
        %2125 = vmatpush1.bf16.xpose.msra.mxu0 %v2120
        %2126 = vmatprep.subr.bf16.mxu0 0
        %2127 = vmatpush1.bf16.xpose.msra.mxu0 0
        %2128 = vmatprep.subr.bf16.mxu0 0
        %2129 = vmatpush1.bf16.xpose.msra.mxu0 0
        %2130 = vmatprep.subr.bf16.mxu0 0
        %2131 = vmatpush1.bf16.xpose.msra.mxu0 0
        %2132 = vmatprep.subr.bf16.mxu0 0
        %2133 = vmatpush1.bf16.xpose.msra.mxu0 0
        %2134 = vmatprep.subr.bf16.mxu0 0
        %2135 = vmatpush1.bf16.xpose.msra.mxu0 0
        %2136 = vmatprep.subr.bf16.mxu0 0
        %2137 = vmatpush1.bf16.xpose.msra.mxu0 0
        %2138 = vmatprep.subr.bf16.mxu0 0
        %2139 = vmatpush1.bf16.xpose.msra.mxu0 0
        %2140 = vmatprep.subr.bf16.mxu0 0
        %2141 = vmatpush1.bf16.xpose.msra.mxu0 0
        %2142 = vmatprep.subr.bf16.mxu0 0
        %2143 = vmatpush1.bf16.xpose.msra.mxu0 0
        %2144 = vmatprep.subr.bf16.mxu0 0
        %2145 = vmatpush1.bf16.xpose.msra.mxu0 0
        %2146 = vmatprep.subr.bf16.mxu0 0
        %2147 = vmatpush1.bf16.xpose.msra.mxu0 0
        %2148 = vmatprep.subr.bf16.mxu0 0
        %2149 = vmatpush1.bf16.xpose.msra.mxu0 0
        %2150 = vmatprep.subr.bf16.mxu0 0
        %2151 = vmatpush1.bf16.xpose.msra.mxu0 0
        %2152 = vmatprep.subr.bf16.mxu0 0
        %2153 = vmatpush1.bf16.xpose.msra.mxu0 0
        %2154 = vmatprep.mubr.bf16.mxu0 0
        %2155 = vmatmul.mubr.bf16.gmra.mrb[0].mxu0 %v2111
        %v2156 = vpop.f32.mrb[0].mxu0
        %v2157 = vadd.f32 0.0, %v2156
        %v2158 = vpop.f32.mrb[0].mxu0
        %v2159 = vpop.f32.mrb[0].mxu0
        %v2160 = vadd.f32 0.0, %v2159
        %v2161 = vpop.f32.mrb[0].mxu0
        %2162 = vmatprep.mubr.bf16.mxu0 0
        %2163 = vmatmul.mubr.bf16.gmra.mrb[0].mxu0 %v2114
        %v2164 = vpop.f32.mrb[0].mxu0
        %v2165 = vadd.f32 0.0, %v2164
        %v2166 = vpop.f32.mrb[0].mxu0
        %v2167 = vpop.f32.mrb[0].mxu0
        %v2168 = vpop.f32.mrb[0].mxu0
        %2169 = vdwg.mxu0
        %v2170 = vsel %vm1269, %v2157, -inf
        %2171 = vmax.xlane.f32.xlu0 %v2170
        %v2172 = vpop.xlane.xlu0 %2171
        %v2173 = vsel %vm1269, %v2160, -inf
        %2174 = vmax.xlane.f32.xlu0 %v2173
        %v2175 = vpop.xlane.xlu0 %2174
        %v2176 = vsel %vm1269, %v2165, -inf
        %2177 = vmax.xlane.f32.xlu0 %v2176
        %v2178 = vpop.xlane.xlu0 %2177
        %v2179 = vsub.f32 %v2157, %v2172
        %v2180 = vsub.f32 %v2160, %v2175
        %v2181 = vsub.f32 %v2165, %v2178
        %v2182 = vmul.f32 %v2179, 1.442695
        %v2183 = vpow.pop %v2182
        %v2184 = vmul.f32 %v2180, 1.442695
        %v2185 = vpow.pop %v2184
        %v2186 = vmul.f32 %v2181, 1.442695
        %v2187 = vpow.pop %v2186
        %v2188 = vsel %vm1269, %v2183, 0.0
        %2189 = vadd.xlane.f32.xlu0 %v2188
        %v2190 = vpop.xlane.xlu0 %2189
        %v2191 = vsel %vm1269, %v2185, 0.0
        %2192 = vadd.xlane.f32.xlu0 %v2191
        %v2193 = vpop.xlane.xlu0 %2192
        %v2194 = vsel %vm1269, %v2187, 0.0
        %2195 = vadd.xlane.f32.xlu0 %v2194
        %v2196 = vpop.xlane.xlu0 %2195
        %v2197 = vrcp.pop %v2190
        %v2198 = vmul.f32 1.0, %v2197
        %v2199 = vrcp.pop %v2193
        %v2200 = vmul.f32 1.0, %v2199
        %v2201 = vrcp.pop %v2196
        %v2202 = vmul.f32 1.0, %v2201
        %v2203 = vmul.f32 %v2183, %v2198
        %v2204 = vmul.f32 %v2185, %v2200
        %v2205 = vmul.f32 %v2187, %v2202
        %v2206 = vadd.f32 %v1756, %v2203
        %v2207 = vadd.f32 %v1757, %v2204
        %v2208 = vadd.f32 %v1758, %v2205
        %v2209 = vpack.c.bf16 %v2204, %v2203
        %v2210 = vpack.c.bf16 %v2205, %v2205
        %v2211 = vpack.c.bf16 %v2096, %v2093
        %v2212 = vpack.c.bf16 %v2101, %v2101
        %v2214 = vsel %vm1269, %v2209, 0
        %v2217 = vsel %vm1269, %v2210, 0
        %v2220 = vsel %vm1319, %v2212, 0
        %2222 = vmatprep.subr.bf16.mxu0 0
        %2223 = vmatpush1.bf16.msra.mxu0 %v2211
        %2224 = vmatprep.subr.bf16.mxu0 0
        %2225 = vmatpush1.bf16.msra.mxu0 %v2220
        %2226 = vmatprep.subr.bf16.mxu0 0
        %2227 = vmatpush1.bf16.msra.mxu0 0
        %2228 = vmatprep.subr.bf16.mxu0 0
        %2229 = vmatpush1.bf16.msra.mxu0 0
        %2230 = vmatprep.subr.bf16.mxu0 0
        %2231 = vmatpush1.bf16.msra.mxu0 0
        %2232 = vmatprep.subr.bf16.mxu0 0
        %2233 = vmatpush1.bf16.msra.mxu0 0
        %2234 = vmatprep.subr.bf16.mxu0 0
        %2235 = vmatpush1.bf16.msra.mxu0 0
        %2236 = vmatprep.subr.bf16.mxu0 0
        %2237 = vmatpush1.bf16.msra.mxu0 0
        %2238 = vmatprep.subr.bf16.mxu0 0
        %2239 = vmatpush1.bf16.msra.mxu0 0
        %2240 = vmatprep.subr.bf16.mxu0 0
        %2241 = vmatpush1.bf16.msra.mxu0 0
        %2242 = vmatprep.subr.bf16.mxu0 0
        %2243 = vmatpush1.bf16.msra.mxu0 0
        %2244 = vmatprep.subr.bf16.mxu0 0
        %2245 = vmatpush1.bf16.msra.mxu0 0
        %2246 = vmatprep.subr.bf16.mxu0 0
        %2247 = vmatpush1.bf16.msra.mxu0 0
        %2248 = vmatprep.subr.bf16.mxu0 0
        %2249 = vmatpush1.bf16.msra.mxu0 0
        %2250 = vmatprep.subr.bf16.mxu0 0
        %2251 = vmatpush1.bf16.msra.mxu0 0
        %2252 = vmatprep.subr.bf16.mxu0 0
        %2253 = vmatpush1.bf16.msra.mxu0 0
        %2254 = vmatprep.mubr.bf16.mxu0 0
        %2255 = vmatmul.mubr.bf16.gmra.mrb[0].mxu0 %v2214
        %v2256 = vpop.f32.mrb[0].mxu0
        %v2257 = vadd.f32 0.0, %v2256
        %v2258 = vpop.f32.mrb[0].mxu0
        %v2259 = vpop.f32.mrb[0].mxu0
        %v2260 = vadd.f32 0.0, %v2259
        %v2261 = vpop.f32.mrb[0].mxu0
        %2262 = vmatprep.mubr.bf16.mxu0 0
        %2263 = vmatmul.mubr.bf16.gmra.mrb[0].mxu0 %v2217
        %v2264 = vpop.f32.mrb[0].mxu0
        %v2265 = vadd.f32 0.0, %v2264
        %v2266 = vpop.f32.mrb[0].mxu0
        %v2267 = vpop.f32.mrb[0].mxu0
        %v2268 = vpop.f32.mrb[0].mxu0
        %2269 = vdwg.mxu0
        %v2270 = vpack.c.bf16 %v2260, %v2257
        %v2271 = vpack.c.bf16 %v2265, %v2265
        %s2272 = scalar_lea.vmem [#allocation17], 8
        %v2273 = vld [vmem:[%s2272] sm:$0xf]
        %v2275 = vsel %vm1208, %v2270, 0
        %v2278 = vsel %vm1208, %v2271, 0
        %v2281 = vsel %vm1319, %v2273, 0
        %2283 = vmatprep.subr.bf16.mxu0 0
        %2284 = vmatpush1.bf16.msra.mxu0 %v2281
        %2285 = vmatprep.subr.bf16.mxu0 0
        %2286 = vmatpush1.bf16.msra.mxu0 0
        %2287 = vmatprep.subr.bf16.mxu0 0
        %2288 = vmatpush1.bf16.msra.mxu0 0
        %2289 = vmatprep.subr.bf16.mxu0 0
        %2290 = vmatpush1.bf16.msra.mxu0 0
        %2291 = vmatprep.subr.bf16.mxu0 0
        %2292 = vmatpush1.bf16.msra.mxu0 0
        %2293 = vmatprep.subr.bf16.mxu0 0
        %2294 = vmatpush1.bf16.msra.mxu0 0
        %2295 = vmatprep.subr.bf16.mxu0 0
        %2296 = vmatpush1.bf16.msra.mxu0 0
        %2297 = vmatprep.subr.bf16.mxu0 0
        %2298 = vmatpush1.bf16.msra.mxu0 0
        %2299 = vmatprep.subr.bf16.mxu0 0
        %2300 = vmatpush1.bf16.msra.mxu0 0
        %2301 = vmatprep.subr.bf16.mxu0 0
        %2302 = vmatpush1.bf16.msra.mxu0 0
        %2303 = vmatprep.subr.bf16.mxu0 0
        %2304 = vmatpush1.bf16.msra.mxu0 0
        %2305 = vmatprep.subr.bf16.mxu0 0
        %2306 = vmatpush1.bf16.msra.mxu0 0
        %2307 = vmatprep.subr.bf16.mxu0 0
        %2308 = vmatpush1.bf16.msra.mxu0 0
        %2309 = vmatprep.subr.bf16.mxu0 0
        %2310 = vmatpush1.bf16.msra.mxu0 0
        %2311 = vmatprep.subr.bf16.mxu0 0
        %2312 = vmatpush1.bf16.msra.mxu0 0
        %2313 = vmatprep.subr.bf16.mxu0 0
        %2314 = vmatpush1.bf16.msra.mxu0 0
        %2315 = vmatprep.mubr.bf16.mxu0 0
        %2316 = vmatmul.mubr.bf16.gmra.mrb[0].mxu0 %v2275
        %v2317 = vpop.f32.mrb[0].mxu0
        %v2318 = vadd.f32 0.0, %v2317
        %v2319 = vpop.f32.mrb[0].mxu0
        %v2320 = vpop.f32.mrb[0].mxu0
        %v2321 = vadd.f32 0.0, %v2320
        %v2322 = vpop.f32.mrb[0].mxu0
        %2323 = vmatprep.mubr.bf16.mxu0 0
        %2324 = vmatmul.mubr.bf16.gmra.mrb[0].mxu0 %v2278
        %v2325 = vpop.f32.mrb[0].mxu0
        %v2326 = vadd.f32 0.0, %v2325
        %v2327 = vpop.f32.mrb[0].mxu0
        %v2328 = vpop.f32.mrb[0].mxu0
        %v2329 = vpop.f32.mrb[0].mxu0
        %2330 = vdwg.mxu0
        %v2331 = vadd.f32 %v1881, %v2318
        %v2332 = vadd.f32 %v1882, %v2321
        %v2333 = vadd.f32 %v1883, %v2326
        %s2334 = scalar_lea.vmem [#allocation8], 48
        %v2335 = vld [vmem:[%s2334] sm:$0xf]
        %v2336 = vld [vmem:[%s2334 + $0x4] sm:$0xf]
        %v2337 = vld [vmem:[%s2334 + $0x8] sm:$0xf]
        %v2338 = vld [vmem:[%s2334 + $0xc] sm:$0xf]
        %s2339 = scalar_lea.vmem [#allocation13], 3
        %v2340 = vld [vmem:[%s2339] sm:$0x1]
        %v2342 = vlaneseq
        %v2343 = vshrl.u32 %v2342, 7
        %v2344 = vsub.s32 0, %v2343
        %v2345 = vrot.slane %v2340, %v2344
        %v2351 = vunpack.c.l.b16 %v2335
        %v2352 = vunpack.c.l.b16 %v2336
        %v2353 = vunpack.c.l.b16 %v2337
        %v2354 = vunpack.c.l.b16 %v2338
        %v2355 = vpack.c.b16 %v2352, %v2351
        %v2356 = vpack.c.b16 %v2354, %v2353
        %2359 = vmatprep.subr.bf16.mxu0 0
        %2360 = vmatpush1.bf16.msra.mxu0 %v2355
        %2361 = vmatprep.subr.bf16.mxu0 0
        %2362 = vmatpush1.bf16.msra.mxu0 %v2356
        %2363 = vmatprep.subr.bf16.mxu0 0
        %2364 = vmatpush1.bf16.msra.mxu0 0
        %2365 = vmatprep.subr.bf16.mxu0 0
        %2366 = vmatpush1.bf16.msra.mxu0 0
        %2367 = vmatprep.subr.bf16.mxu0 0
        %2368 = vmatpush1.bf16.msra.mxu0 0
        %2369 = vmatprep.subr.bf16.mxu0 0
        %2370 = vmatpush1.bf16.msra.mxu0 0
        %2371 = vmatprep.subr.bf16.mxu0 0
        %2372 = vmatpush1.bf16.msra.mxu0 0
        %2373 = vmatprep.subr.bf16.mxu0 0
        %2374 = vmatpush1.bf16.msra.mxu0 0
        %2375 = vmatprep.subr.bf16.mxu0 0
        %2376 = vmatpush1.bf16.msra.mxu0 0
        %2377 = vmatprep.subr.bf16.mxu0 0
        %2378 = vmatpush1.bf16.msra.mxu0 0
        %2379 = vmatprep.subr.bf16.mxu0 0
        %2380 = vmatpush1.bf16.msra.mxu0 0
        %2381 = vmatprep.subr.bf16.mxu0 0
        %2382 = vmatpush1.bf16.msra.mxu0 0
        %2383 = vmatprep.subr.bf16.mxu0 0
        %2384 = vmatpush1.bf16.msra.mxu0 0
        %2385 = vmatprep.subr.bf16.mxu0 0
        %2386 = vmatpush1.bf16.msra.mxu0 0
        %2387 = vmatprep.subr.bf16.mxu0 0
        %2388 = vmatpush1.bf16.msra.mxu0 0
        %2389 = vmatprep.subr.bf16.mxu0 0
        %2390 = vmatpush1.bf16.msra.mxu0 0
        %2391 = vmatprep.mubr.bf16.mxu0 0
        %2392 = vmatmul.mubr.bf16.gmra.mrb[0].mxu0 %v1006
        %v2393 = vpop.f32.mrb[0].mxu0
        %v2394 = vadd.f32 %v2345, %v2393
        %v2395 = vpop.f32.mrb[0].mxu0
        %v2396 = vpop.f32.mrb[0].mxu0
        %v2397 = vadd.f32 %v2345, %v2396
        %v2398 = vpop.f32.mrb[0].mxu0
        %2399 = vmatprep.mubr.bf16.mxu0 0
        %2400 = vmatmul.mubr.bf16.gmra.mrb[0].mxu0 %v1009
        %v2401 = vpop.f32.mrb[0].mxu0
        %v2402 = vadd.f32 %v2345, %v2401
        %v2403 = vpop.f32.mrb[0].mxu0
        %v2404 = vpop.f32.mrb[0].mxu0
        %v2405 = vpop.f32.mrb[0].mxu0
        %2406 = vdwg.mxu0
        %v2407 = vmul.f32 %v2394, 0.35355338
        %v2408 = vmul.f32 %v2397, 0.35355338
        %v2409 = vmul.f32 %v2402, 0.35355338
        %s2410 = scalar_lea.vmem [#allocation10], 48
        %v2411 = vld [vmem:[%s2410] sm:$0xf]
        %v2412 = vld [vmem:[%s2410 + $0x4] sm:$0xf]
        %v2413 = vld [vmem:[%s2410 + $0x8] sm:$0xf]
        %v2414 = vld [vmem:[%s2410 + $0xc] sm:$0xf]
        %s2415 = scalar_lea.vmem [#allocation14], 3
        %v2416 = vld [vmem:[%s2415] sm:$0x1]
        %v2418 = vlaneseq
        %v2419 = vshrl.u32 %v2418, 7
        %v2420 = vsub.s32 0, %v2419
        %v2421 = vrot.slane %v2416, %v2420
        %v2427 = vunpack.c.l.b16 %v2411
        %v2428 = vunpack.c.l.b16 %v2412
        %v2429 = vunpack.c.l.b16 %v2413
        %v2430 = vunpack.c.l.b16 %v2414
        %v2431 = vpack.c.b16 %v2428, %v2427
        %v2432 = vpack.c.b16 %v2430, %v2429
        %2435 = vmatprep.subr.bf16.mxu0 0
        %2436 = vmatpush1.bf16.msra.mxu0 %v2431
        %2437 = vmatprep.subr.bf16.mxu0 0
        %2438 = vmatpush1.bf16.msra.mxu0 %v2432
        %2439 = vmatprep.subr.bf16.mxu0 0
        %2440 = vmatpush1.bf16.msra.mxu0 0
        %2441 = vmatprep.subr.bf16.mxu0 0
        %2442 = vmatpush1.bf16.msra.mxu0 0
        %2443 = vmatprep.subr.bf16.mxu0 0
        %2444 = vmatpush1.bf16.msra.mxu0 0
        %2445 = vmatprep.subr.bf16.mxu0 0
        %2446 = vmatpush1.bf16.msra.mxu0 0
        %2447 = vmatprep.subr.bf16.mxu0 0
        %2448 = vmatpush1.bf16.msra.mxu0 0
        %2449 = vmatprep.subr.bf16.mxu0 0
        %2450 = vmatpush1.bf16.msra.mxu0 0
        %2451 = vmatprep.subr.bf16.mxu0 0
        %2452 = vmatpush1.bf16.msra.mxu0 0
        %2453 = vmatprep.subr.bf16.mxu0 0
        %2454 = vmatpush1.bf16.msra.mxu0 0
        %2455 = vmatprep.subr.bf16.mxu0 0
        %2456 = vmatpush1.bf16.msra.mxu0 0
        %2457 = vmatprep.subr.bf16.mxu0 0
        %2458 = vmatpush1.bf16.msra.mxu0 0
        %2459 = vmatprep.subr.bf16.mxu0 0
        %2460 = vmatpush1.bf16.msra.mxu0 0
        %2461 = vmatprep.subr.bf16.mxu0 0
        %2462 = vmatpush1.bf16.msra.mxu0 0
        %2463 = vmatprep.subr.bf16.mxu0 0
        %2464 = vmatpush1.bf16.msra.mxu0 0
        %2465 = vmatprep.subr.bf16.mxu0 0
        %2466 = vmatpush1.bf16.msra.mxu0 0
        %2467 = vmatprep.mubr.bf16.mxu0 0
        %2468 = vmatmul.mubr.bf16.gmra.mrb[0].mxu0 %v1006
        %v2469 = vpop.f32.mrb[0].mxu0
        %v2470 = vadd.f32 %v2421, %v2469
        %v2471 = vpop.f32.mrb[0].mxu0
        %v2472 = vpop.f32.mrb[0].mxu0
        %v2473 = vadd.f32 %v2421, %v2472
        %v2474 = vpop.f32.mrb[0].mxu0
        %2475 = vmatprep.mubr.bf16.mxu0 0
        %2476 = vmatmul.mubr.bf16.gmra.mrb[0].mxu0 %v1009
        %v2477 = vpop.f32.mrb[0].mxu0
        %v2478 = vadd.f32 %v2421, %v2477
        %v2479 = vpop.f32.mrb[0].mxu0
        %v2480 = vpop.f32.mrb[0].mxu0
        %v2481 = vpop.f32.mrb[0].mxu0
        %2482 = vdwg.mxu0
        %s2483 = scalar_lea.vmem [#allocation11], 48
        %v2484 = vld [vmem:[%s2483] sm:$0xf]
        %v2485 = vld [vmem:[%s2483 + $0x4] sm:$0xf]
        %v2486 = vld [vmem:[%s2483 + $0x8] sm:$0xf]
        %v2487 = vld [vmem:[%s2483 + $0xc] sm:$0xf]
        %s2488 = scalar_lea.vmem [#allocation16], 3
        %v2489 = vld [vmem:[%s2488] sm:$0x1]
        %v2491 = vlaneseq
        %v2492 = vshrl.u32 %v2491, 7
        %v2493 = vsub.s32 0, %v2492
        %v2494 = vrot.slane %v2489, %v2493
        %v2500 = vunpack.c.l.b16 %v2484
        %v2501 = vunpack.c.l.b16 %v2485
        %v2502 = vunpack.c.l.b16 %v2486
        %v2503 = vunpack.c.l.b16 %v2487
        %v2504 = vpack.c.b16 %v2501, %v2500
        %v2505 = vpack.c.b16 %v2503, %v2502
        %2508 = vmatprep.subr.bf16.mxu0 0
        %2509 = vmatpush1.bf16.msra.mxu0 %v2504
        %2510 = vmatprep.subr.bf16.mxu0 0
        %2511 = vmatpush1.bf16.msra.mxu0 %v2505
        %2512 = vmatprep.subr.bf16.mxu0 0
        %2513 = vmatpush1.bf16.msra.mxu0 0
        %2514 = vmatprep.subr.bf16.mxu0 0
        %2515 = vmatpush1.bf16.msra.mxu0 0
        %2516 = vmatprep.subr.bf16.mxu0 0
        %2517 = vmatpush1.bf16.msra.mxu0 0
        %2518 = vmatprep.subr.bf16.mxu0 0
        %2519 = vmatpush1.bf16.msra.mxu0 0
        %2520 = vmatprep.subr.bf16.mxu0 0
        %2521 = vmatpush1.bf16.msra.mxu0 0
        %2522 = vmatprep.subr.bf16.mxu0 0
        %2523 = vmatpush1.bf16.msra.mxu0 0
        %2524 = vmatprep.subr.bf16.mxu0 0
        %2525 = vmatpush1.bf16.msra.mxu0 0
        %2526 = vmatprep.subr.bf16.mxu0 0
        %2527 = vmatpush1.bf16.msra.mxu0 0
        %2528 = vmatprep.subr.bf16.mxu0 0
        %2529 = vmatpush1.bf16.msra.mxu0 0
        %2530 = vmatprep.subr.bf16.mxu0 0
        %2531 = vmatpush1.bf16.msra.mxu0 0
        %2532 = vmatprep.subr.bf16.mxu0 0
        %2533 = vmatpush1.bf16.msra.mxu0 0
        %2534 = vmatprep.subr.bf16.mxu0 0
        %2535 = vmatpush1.bf16.msra.mxu0 0
        %2536 = vmatprep.subr.bf16.mxu0 0
        %2537 = vmatpush1.bf16.msra.mxu0 0
        %2538 = vmatprep.subr.bf16.mxu0 0
        %2539 = vmatpush1.bf16.msra.mxu0 0
        %2540 = vmatprep.mubr.bf16.mxu0 0
        %2541 = vmatmul.mubr.bf16.gmra.mrb[0].mxu0 %v1006
        %v2542 = vpop.f32.mrb[0].mxu0
        %v2543 = vadd.f32 %v2494, %v2542
        %v2544 = vpop.f32.mrb[0].mxu0
        %v2545 = vpop.f32.mrb[0].mxu0
        %v2546 = vadd.f32 %v2494, %v2545
        %v2547 = vpop.f32.mrb[0].mxu0
        %2548 = vmatprep.mubr.bf16.mxu0 0
        %2549 = vmatmul.mubr.bf16.gmra.mrb[0].mxu0 %v1009
        %v2550 = vpop.f32.mrb[0].mxu0
        %v2551 = vadd.f32 %v2494, %v2550
        %v2552 = vpop.f32.mrb[0].mxu0
        %v2553 = vpop.f32.mrb[0].mxu0
        %v2554 = vpop.f32.mrb[0].mxu0
        %2555 = vdwg.mxu0
        %v2556 = vpack.c.bf16 %v2408, %v2407
        %v2557 = vpack.c.bf16 %v2409, %v2409
        %v2558 = vpack.c.bf16 %v2473, %v2470
        %v2559 = vpack.c.bf16 %v2478, %v2478
        %v2561 = vsel %vm1208, %v2556, 0
        %v2564 = vsel %vm1208, %v2557, 0
        %v2567 = vsel %vm1208, %v2558, 0
        %v2570 = vsel %vm1208, %v2559, 0
        %2572 = vmatprep.subr.bf16.mxu0 0
        %2573 = vmatpush1.bf16.xpose.msra.mxu0 %v2567
        %2574 = vmatprep.subr.bf16.mxu0 0
        %2575 = vmatpush1.bf16.xpose.msra.mxu0 %v2570
        %2576 = vmatprep.subr.bf16.mxu0 0
        %2577 = vmatpush1.bf16.xpose.msra.mxu0 0
        %2578 = vmatprep.subr.bf16.mxu0 0
        %2579 = vmatpush1.bf16.xpose.msra.mxu0 0
        %2580 = vmatprep.subr.bf16.mxu0 0
        %2581 = vmatpush1.bf16.xpose.msra.mxu0 0
        %2582 = vmatprep.subr.bf16.mxu0 0
        %2583 = vmatpush1.bf16.xpose.msra.mxu0 0
        %2584 = vmatprep.subr.bf16.mxu0 0
        %2585 = vmatpush1.bf16.xpose.msra.mxu0 0
        %2586 = vmatprep.subr.bf16.mxu0 0
        %2587 = vmatpush1.bf16.xpose.msra.mxu0 0
        %2588 = vmatprep.subr.bf16.mxu0 0
        %2589 = vmatpush1.bf16.xpose.msra.mxu0 0
        %2590 = vmatprep.subr.bf16.mxu0 0
        %2591 = vmatpush1.bf16.xpose.msra.mxu0 0
        %2592 = vmatprep.subr.bf16.mxu0 0
        %2593 = vmatpush1.bf16.xpose.msra.mxu0 0
        %2594 = vmatprep.subr.bf16.mxu0 0
        %2595 = vmatpush1.bf16.xpose.msra.mxu0 0
        %2596 = vmatprep.subr.bf16.mxu0 0
        %2597 = vmatpush1.bf16.xpose.msra.mxu0 0
        %2598 = vmatprep.subr.bf16.mxu0 0
        %2599 = vmatpush1.bf16.xpose.msra.mxu0 0
        %2600 = vmatprep.subr.bf16.mxu0 0
        %2601 = vmatpush1.bf16.xpose.msra.mxu0 0
        %2602 = vmatprep.subr.bf16.mxu0 0
        %2603 = vmatpush1.bf16.xpose.msra.mxu0 0
        %2604 = vmatprep.mubr.bf16.mxu0 0
        %2605 = vmatmul.mubr.bf16.gmra.mrb[0].mxu0 %v2561
        %v2606 = vpop.f32.mrb[0].mxu0
        %v2607 = vadd.f32 0.0, %v2606
        %v2608 = vpop.f32.mrb[0].mxu0
        %v2609 = vpop.f32.mrb[0].mxu0
        %v2610 = vadd.f32 0.0, %v2609
        %v2611 = vpop.f32.mrb[0].mxu0
        %2612 = vmatprep.mubr.bf16.mxu0 0
        %2613 = vmatmul.mubr.bf16.gmra.mrb[0].mxu0 %v2564
        %v2614 = vpop.f32.mrb[0].mxu0
        %v2615 = vadd.f32 0.0, %v2614
        %v2616 = vpop.f32.mrb[0].mxu0
        %v2617 = vpop.f32.mrb[0].mxu0
        %v2618 = vpop.f32.mrb[0].mxu0
        %2619 = vdwg.mxu0
        %v2620 = vsel %vm1269, %v2607, -inf
        %2621 = vmax.xlane.f32.xlu0 %v2620
        %v2622 = vpop.xlane.xlu0 %2621
        %v2623 = vsel %vm1269, %v2610, -inf
        %2624 = vmax.xlane.f32.xlu0 %v2623
        %v2625 = vpop.xlane.xlu0 %2624
        %v2626 = vsel %vm1269, %v2615, -inf
        %2627 = vmax.xlane.f32.xlu0 %v2626
        %v2628 = vpop.xlane.xlu0 %2627
        %v2629 = vsub.f32 %v2607, %v2622
        %v2630 = vsub.f32 %v2610, %v2625
        %v2631 = vsub.f32 %v2615, %v2628
        %v2632 = vmul.f32 %v2629, 1.442695
        %v2633 = vpow.pop %v2632
        %v2634 = vmul.f32 %v2630, 1.442695
        %v2635 = vpow.pop %v2634
        %v2636 = vmul.f32 %v2631, 1.442695
        %v2637 = vpow.pop %v2636
        %v2638 = vsel %vm1269, %v2633, 0.0
        %2639 = vadd.xlane.f32.xlu0 %v2638
        %v2640 = vpop.xlane.xlu0 %2639
        %v2641 = vsel %vm1269, %v2635, 0.0
        %2642 = vadd.xlane.f32.xlu0 %v2641
        %v2643 = vpop.xlane.xlu0 %2642
        %v2644 = vsel %vm1269, %v2637, 0.0
        %2645 = vadd.xlane.f32.xlu0 %v2644
        %v2646 = vpop.xlane.xlu0 %2645
        %v2647 = vrcp.pop %v2640
        %v2648 = vmul.f32 1.0, %v2647
        %v2649 = vrcp.pop %v2643
        %v2650 = vmul.f32 1.0, %v2649
        %v2651 = vrcp.pop %v2646
        %v2652 = vmul.f32 1.0, %v2651
        %v2653 = vmul.f32 %v2633, %v2648
        %v2654 = vmul.f32 %v2635, %v2650
        %v2655 = vmul.f32 %v2637, %v2652
        %v2656 = vadd.f32 %v2206, %v2653
        %v2657 = vadd.f32 %v2207, %v2654
        %v2658 = vadd.f32 %v2208, %v2655
        %v2659 = vpack.c.bf16 %v2654, %v2653
        %v2660 = vpack.c.bf16 %v2655, %v2655
        %v2661 = vpack.c.bf16 %v2546, %v2543
        %v2662 = vpack.c.bf16 %v2551, %v2551
        %v2664 = vsel %vm1269, %v2659, 0
        %v2667 = vsel %vm1269, %v2660, 0
        %v2670 = vsel %vm1319, %v2662, 0
        %2672 = vmatprep.subr.bf16.mxu0 0
        %2673 = vmatpush1.bf16.msra.mxu0 %v2661
        %2674 = vmatprep.subr.bf16.mxu0 0
        %2675 = vmatpush1.bf16.msra.mxu0 %v2670
        %2676 = vmatprep.subr.bf16.mxu0 0
        %2677 = vmatpush1.bf16.msra.mxu0 0
        %2678 = vmatprep.subr.bf16.mxu0 0
        %2679 = vmatpush1.bf16.msra.mxu0 0
        %2680 = vmatprep.subr.bf16.mxu0 0
        %2681 = vmatpush1.bf16.msra.mxu0 0
        %2682 = vmatprep.subr.bf16.mxu0 0
        %2683 = vmatpush1.bf16.msra.mxu0 0
        %2684 = vmatprep.subr.bf16.mxu0 0
        %2685 = vmatpush1.bf16.msra.mxu0 0
        %2686 = vmatprep.subr.bf16.mxu0 0
        %2687 = vmatpush1.bf16.msra.mxu0 0
        %2688 = vmatprep.subr.bf16.mxu0 0
        %2689 = vmatpush1.bf16.msra.mxu0 0
        %2690 = vmatprep.subr.bf16.mxu0 0
        %2691 = vmatpush1.bf16.msra.mxu0 0
        %2692 = vmatprep.subr.bf16.mxu0 0
        %2693 = vmatpush1.bf16.msra.mxu0 0
        %2694 = vmatprep.subr.bf16.mxu0 0
        %2695 = vmatpush1.bf16.msra.mxu0 0
        %2696 = vmatprep.subr.bf16.mxu0 0
        %2697 = vmatpush1.bf16.msra.mxu0 0
        %2698 = vmatprep.subr.bf16.mxu0 0
        %2699 = vmatpush1.bf16.msra.mxu0 0
        %2700 = vmatprep.subr.bf16.mxu0 0
        %2701 = vmatpush1.bf16.msra.mxu0 0
        %2702 = vmatprep.subr.bf16.mxu0 0
        %2703 = vmatpush1.bf16.msra.mxu0 0
        %2704 = vmatprep.mubr.bf16.mxu0 0
        %2705 = vmatmul.mubr.bf16.gmra.mrb[0].mxu0 %v2664
        %v2706 = vpop.f32.mrb[0].mxu0
        %v2707 = vadd.f32 0.0, %v2706
        %v2708 = vpop.f32.mrb[0].mxu0
        %v2709 = vpop.f32.mrb[0].mxu0
        %v2710 = vadd.f32 0.0, %v2709
        %v2711 = vpop.f32.mrb[0].mxu0
        %2712 = vmatprep.mubr.bf16.mxu0 0
        %2713 = vmatmul.mubr.bf16.gmra.mrb[0].mxu0 %v2667
        %v2714 = vpop.f32.mrb[0].mxu0
        %v2715 = vadd.f32 0.0, %v2714
        %v2716 = vpop.f32.mrb[0].mxu0
        %v2717 = vpop.f32.mrb[0].mxu0
        %v2718 = vpop.f32.mrb[0].mxu0
        %2719 = vdwg.mxu0
        %v2720 = vpack.c.bf16 %v2710, %v2707
        %v2721 = vpack.c.bf16 %v2715, %v2715
        %s2722 = scalar_lea.vmem [#allocation17], 12
        %v2723 = vld [vmem:[%s2722] sm:$0xf]
        %v2725 = vsel %vm1208, %v2720, 0
        %v2728 = vsel %vm1208, %v2721, 0
        %v2731 = vsel %vm1319, %v2723, 0
        %2733 = vmatprep.subr.bf16.mxu0 0
        %2734 = vmatpush1.bf16.msra.mxu0 %v2731
        %2735 = vmatprep.subr.bf16.mxu0 0
        %2736 = vmatpush1.bf16.msra.mxu0 0
        %2737 = vmatprep.subr.bf16.mxu0 0
        %2738 = vmatpush1.bf16.msra.mxu0 0
        %2739 = vmatprep.subr.bf16.mxu0 0
        %2740 = vmatpush1.bf16.msra.mxu0 0
        %2741 = vmatprep.subr.bf16.mxu0 0
        %2742 = vmatpush1.bf16.msra.mxu0 0
        %2743 = vmatprep.subr.bf16.mxu0 0
        %2744 = vmatpush1.bf16.msra.mxu0 0
        %2745 = vmatprep.subr.bf16.mxu0 0
        %2746 = vmatpush1.bf16.msra.mxu0 0
        %2747 = vmatprep.subr.bf16.mxu0 0
        %2748 = vmatpush1.bf16.msra.mxu0 0
        %2749 = vmatprep.subr.bf16.mxu0 0
        %2750 = vmatpush1.bf16.msra.mxu0 0
        %2751 = vmatprep.subr.bf16.mxu0 0
        %2752 = vmatpush1.bf16.msra.mxu0 0
        %2753 = vmatprep.subr.bf16.mxu0 0
        %2754 = vmatpush1.bf16.msra.mxu0 0
        %2755 = vmatprep.subr.bf16.mxu0 0
        %2756 = vmatpush1.bf16.msra.mxu0 0
        %2757 = vmatprep.subr.bf16.mxu0 0
        %2758 = vmatpush1.bf16.msra.mxu0 0
        %2759 = vmatprep.subr.bf16.mxu0 0
        %2760 = vmatpush1.bf16.msra.mxu0 0
        %2761 = vmatprep.subr.bf16.mxu0 0
        %2762 = vmatpush1.bf16.msra.mxu0 0
        %2763 = vmatprep.subr.bf16.mxu0 0
        %2764 = vmatpush1.bf16.msra.mxu0 0
        %2765 = vmatprep.mubr.bf16.mxu0 0
        %2766 = vmatmul.mubr.bf16.gmra.mrb[0].mxu0 %v2725
        %v2767 = vpop.f32.mrb[0].mxu0
        %v2768 = vadd.f32 0.0, %v2767
        %v2769 = vpop.f32.mrb[0].mxu0
        %v2770 = vpop.f32.mrb[0].mxu0
        %v2771 = vadd.f32 0.0, %v2770
        %v2772 = vpop.f32.mrb[0].mxu0
        %2773 = vmatprep.mubr.bf16.mxu0 0
        %2774 = vmatmul.mubr.bf16.gmra.mrb[0].mxu0 %v2728
        %v2775 = vpop.f32.mrb[0].mxu0
        %v2776 = vadd.f32 0.0, %v2775
        %v2777 = vpop.f32.mrb[0].mxu0
        %v2778 = vpop.f32.mrb[0].mxu0
        %v2779 = vpop.f32.mrb[0].mxu0
        %2780 = vdwg.mxu0
        %v2781 = vadd.f32 %v2331, %v2768
        %v2782 = vadd.f32 %v2332, %v2771
        %v2783 = vadd.f32 %v2333, %v2776
        %v2784 = vmul.f32 %v2656, 0.25
        %v2785 = vmul.f32 %v2657, 0.25
        %v2786 = vmul.f32 %v2658, 0.25
        %v2787 = vpack.c.bf16 %v2785, %v2784
        %v2788 = vpack.c.bf16 %v2786, %v2786
        %v2791 = vunpack.c.l.b16 %v2787
        %v2792 = vunpack.c.h.b16 %v2787
        %v2793 = vunpack.c.l.b16 %v2788
        %v2794 = vpack.c.b16 %v2791, %v2791
        %v2795 = vpack.c.b16 %v2792, %v2792
        %v2796 = vpack.c.b16 %v2793, %v2793
        %vm2800 = vcmask 191488
        %2801 = vst.msk [vmem:[%s901] sm:$0xf] %vm2800, %v2794
        %2802 = vst.msk [vmem:[%s901 + $0x4] sm:$0xf] %vm2800, %v2795
        %2803 = vst.msk [vmem:[%s901 + $0x8] sm:$0xf] %vm2800, %v2796
        %v2804 = vld [vmem:[#allocation20] sm:$0x1]
        %v2805 = vld [vmem:[#allocation22] sm:$0x1]
        %v2806 = vsel %vm911, %v2781, 0.0
        %2807 = vadd.xlane.f32.xlu0 %v2806
        %v2808 = vpop.xlane.xlu0 %2807
        %v2809 = vsel %vm911, %v2782, 0.0
        %2810 = vadd.xlane.f32.xlu0 %v2809
        %v2811 = vpop.xlane.xlu0 %2810
        %v2812 = vsel %vm911, %v2783, 0.0
        %2813 = vadd.xlane.f32.xlu0 %v2812
        %v2814 = vpop.xlane.xlu0 %2813
        %v2815 = vmul.f32 %v2808, %v921
        %v2816 = vmul.f32 %v2811, %v921
        %v2817 = vmul.f32 %v2814, %v921
        %v2818 = vsub.f32 %v2781, %v2815
        %v2819 = vsub.f32 %v2782, %v2816
        %v2820 = vsub.f32 %v2783, %v2817
        %v2821 = vmul.f32 %v2818, %v2818
        %v2822 = vmul.f32 %v2819, %v2819
        %v2823 = vmul.f32 %v2820, %v2820
        %v2824 = vsel %vm911, %v2821, 0.0
        %2825 = vadd.xlane.f32.xlu0 %v2824
        %v2826 = vpop.xlane.xlu0 %2825
        %v2827 = vsel %vm911, %v2822, 0.0
        %2828 = vadd.xlane.f32.xlu0 %v2827
        %v2829 = vpop.xlane.xlu0 %2828
        %v2830 = vsel %vm911, %v2823, 0.0
        %2831 = vadd.xlane.f32.xlu0 %v2830
        %v2832 = vpop.xlane.xlu0 %2831
        %v2833 = vmul.f32 %v2826, %v921
        %v2834 = vmul.f32 %v2829, %v921
        %v2835 = vmul.f32 %v2832, %v921
        %v2836 = vadd.f32 %v2833, 1e-05
        %v2837 = vadd.f32 %v2834, 1e-05
        %v2838 = vadd.f32 %v2835, 1e-05
        %v2839 = vrsqrt.pop %v2836
        %v2840 = vrsqrt.pop %v2837
        %v2841 = vrsqrt.pop %v2838
        %v2842 = vmul.f32 %v2818, %v2839
        %v2843 = vmul.f32 %v2819, %v2840
        %v2844 = vmul.f32 %v2820, %v2841
        %v2846 = vlaneseq
        %v2847 = vshrl.u32 %v2846, 7
        %v2848 = vsub.s32 0, %v2847
        %v2849 = vrot.slane %v2804, %v2848
        %v2851 = vmul.f32 %v2842, %v2849
        %v2852 = vmul.f32 %v2843, %v2849
        %v2853 = vmul.f32 %v2844, %v2849
        %v2855 = vlaneseq
        %v2856 = vshrl.u32 %v2855, 7
        %v2857 = vsub.s32 0, %v2856
        %v2858 = vrot.slane %v2805, %v2857
        %v2860 = vadd.f32 %v2851, %v2858
        %v2861 = vadd.f32 %v2852, %v2858
        %v2862 = vadd.f32 %v2853, %v2858
        %v2863 = vpack.c.bf16 %v2861, %v2860
        %v2864 = vpack.c.bf16 %v2862, %v2862
        %v2865 = vld [vmem:[#allocation23] sm:$0xf]
        %v2866 = vld [vmem:[#allocation23 + $0x4] sm:$0xf]
        %v2867 = vld [vmem:[#allocation23 + $0x8] sm:$0xf]
        %v2868 = vld [vmem:[#allocation23 + $0xc] sm:$0xf]
        %v2869 = vld [vmem:[#allocation25] sm:$0x1]
        %v2871 = vlaneseq
        %v2872 = vshrl.u32 %v2871, 7
        %v2873 = vsub.s32 0, %v2872
        %v2874 = vrot.slane %v2869, %v2873
        %v2880 = vunpack.c.l.b16 %v2865
        %v2881 = vunpack.c.l.b16 %v2866
        %v2882 = vunpack.c.l.b16 %v2867
        %v2883 = vunpack.c.l.b16 %v2868
        %v2884 = vpack.c.b16 %v2881, %v2880
        %v2885 = vpack.c.b16 %v2883, %v2882
        %v2889 = vsel %vm911, %v2863, 0
        %v2892 = vsel %vm911, %v2864, 0
        %2894 = vmatprep.subr.bf16.mxu0 0
        %2895 = vmatpush1.bf16.msra.mxu0 %v2884
        %2896 = vmatprep.subr.bf16.mxu0 0
        %2897 = vmatpush1.bf16.msra.mxu0 %v2885
        %2898 = vmatprep.subr.bf16.mxu0 0
        %2899 = vmatpush1.bf16.msra.mxu0 0
        %2900 = vmatprep.subr.bf16.mxu0 0
        %2901 = vmatpush1.bf16.msra.mxu0 0
        %2902 = vmatprep.subr.bf16.mxu0 0
        %2903 = vmatpush1.bf16.msra.mxu0 0
        %2904 = vmatprep.subr.bf16.mxu0 0
        %2905 = vmatpush1.bf16.msra.mxu0 0
        %2906 = vmatprep.subr.bf16.mxu0 0
        %2907 = vmatpush1.bf16.msra.mxu0 0
        %2908 = vmatprep.subr.bf16.mxu0 0
        %2909 = vmatpush1.bf16.msra.mxu0 0
        %2910 = vmatprep.subr.bf16.mxu0 0
        %2911 = vmatpush1.bf16.msra.mxu0 0
        %2912 = vmatprep.subr.bf16.mxu0 0
        %2913 = vmatpush1.bf16.msra.mxu0 0
        %2914 = vmatprep.subr.bf16.mxu0 0
        %2915 = vmatpush1.bf16.msra.mxu0 0
        %2916 = vmatprep.subr.bf16.mxu0 0
        %2917 = vmatpush1.bf16.msra.mxu0 0
        %2918 = vmatprep.subr.bf16.mxu0 0
        %2919 = vmatpush1.bf16.msra.mxu0 0
        %2920 = vmatprep.subr.bf16.mxu0 0
        %2921 = vmatpush1.bf16.msra.mxu0 0
        %2922 = vmatprep.subr.bf16.mxu0 0
        %2923 = vmatpush1.bf16.msra.mxu0 0
        %2924 = vmatprep.subr.bf16.mxu0 0
        %2925 = vmatpush1.bf16.msra.mxu0 0
        %2926 = vmatprep.mubr.bf16.mxu0 0
        %2927 = vmatmul.mubr.bf16.gmra.mrb[0].mxu0 %v2889
        %v2928 = vpop.f32.mrb[0].mxu0
        %v2929 = vadd.f32 %v2874, %v2928
        %v2930 = vpop.f32.mrb[0].mxu0
        %v2931 = vpop.f32.mrb[0].mxu0
        %v2932 = vadd.f32 %v2874, %v2931
        %v2933 = vpop.f32.mrb[0].mxu0
        %2934 = vmatprep.mubr.bf16.mxu0 0
        %2935 = vmatmul.mubr.bf16.gmra.mrb[0].mxu0 %v2892
        %v2936 = vpop.f32.mrb[0].mxu0
        %v2937 = vadd.f32 %v2874, %v2936
        %v2938 = vpop.f32.mrb[0].mxu0
        %v2939 = vpop.f32.mrb[0].mxu0
        %v2940 = vpop.f32.mrb[0].mxu0
        %2941 = vdwg.mxu0
        %v2942 = vmax.f32 %v2929, 0.0
        %v2943 = vmax.f32 %v2932, 0.0
        %v2944 = vmax.f32 %v2937, 0.0
        %v2945 = vpack.c.bf16 %v2943, %v2942
        %v2946 = vpack.c.bf16 %v2944, %v2944
        %v2947 = vld [vmem:[#allocation26] sm:$0xf]
        %v2948 = vld [vmem:[#allocation26 + $0x4] sm:$0xf]
        %v2949 = vld [vmem:[#allocation26 + $0x8] sm:$0xf]
        %v2950 = vld [vmem:[#allocation26 + $0xc] sm:$0xf]
        %v2951 = vld [vmem:[#allocation28] sm:$0x1]
        %v2953 = vlaneseq
        %v2954 = vshrl.u32 %v2953, 7
        %v2955 = vsub.s32 0, %v2954
        %v2956 = vrot.slane %v2951, %v2955
        %v2962 = vunpack.c.l.b16 %v2947
        %v2963 = vunpack.c.l.b16 %v2948
        %v2964 = vunpack.c.l.b16 %v2949
        %v2965 = vunpack.c.l.b16 %v2950
        %v2966 = vpack.c.b16 %v2963, %v2962
        %v2967 = vpack.c.b16 %v2965, %v2964
        %v2971 = vsel %vm911, %v2945, 0
        %v2974 = vsel %vm911, %v2946, 0
        %2976 = vmatprep.subr.bf16.mxu0 0
        %2977 = vmatpush1.bf16.msra.mxu0 %v2966
        %2978 = vmatprep.subr.bf16.mxu0 0
        %2979 = vmatpush1.bf16.msra.mxu0 %v2967
        %2980 = vmatprep.subr.bf16.mxu0 0
        %2981 = vmatpush1.bf16.msra.mxu0 0
        %2982 = vmatprep.subr.bf16.mxu0 0
        %2983 = vmatpush1.bf16.msra.mxu0 0
        %2984 = vmatprep.subr.bf16.mxu0 0
        %2985 = vmatpush1.bf16.msra.mxu0 0
        %2986 = vmatprep.subr.bf16.mxu0 0
        %2987 = vmatpush1.bf16.msra.mxu0 0
        %2988 = vmatprep.subr.bf16.mxu0 0
        %2989 = vmatpush1.bf16.msra.mxu0 0
        %2990 = vmatprep.subr.bf16.mxu0 0
        %2991 = vmatpush1.bf16.msra.mxu0 0
        %2992 = vmatprep.subr.bf16.mxu0 0
        %2993 = vmatpush1.bf16.msra.mxu0 0
        %2994 = vmatprep.subr.bf16.mxu0 0
        %2995 = vmatpush1.bf16.msra.mxu0 0
        %2996 = vmatprep.subr.bf16.mxu0 0
        %2997 = vmatpush1.bf16.msra.mxu0 0
        %2998 = vmatprep.subr.bf16.mxu0 0
        %2999 = vmatpush1.bf16.msra.mxu0 0
        %3000 = vmatprep.subr.bf16.mxu0 0
        %3001 = vmatpush1.bf16.msra.mxu0 0
        %3002 = vmatprep.subr.bf16.mxu0 0
        %3003 = vmatpush1.bf16.msra.mxu0 0
        %3004 = vmatprep.subr.bf16.mxu0 0
        %3005 = vmatpush1.bf16.msra.mxu0 0
        %3006 = vmatprep.subr.bf16.mxu0 0
        %3007 = vmatpush1.bf16.msra.mxu0 0
        %3008 = vmatprep.mubr.bf16.mxu0 0
        %3009 = vmatmul.mubr.bf16.gmra.mrb[0].mxu0 %v2971
        %v3010 = vpop.f32.mrb[0].mxu0
        %v3011 = vadd.f32 %v2956, %v3010
        %v3012 = vpop.f32.mrb[0].mxu0
        %v3013 = vpop.f32.mrb[0].mxu0
        %v3014 = vadd.f32 %v2956, %v3013
        %v3015 = vpop.f32.mrb[0].mxu0
        %3016 = vmatprep.mubr.bf16.mxu0 0
        %3017 = vmatmul.mubr.bf16.gmra.mrb[0].mxu0 %v2974
        %v3018 = vpop.f32.mrb[0].mxu0
        %v3019 = vadd.f32 %v2956, %v3018
        %v3020 = vpop.f32.mrb[0].mxu0
        %v3021 = vpop.f32.mrb[0].mxu0
        %v3022 = vpop.f32.mrb[0].mxu0
        %3023 = vdwg.mxu0
        %v3024 = vadd.f32 %v3011, %v2860
        %v3025 = vadd.f32 %v3014, %v2861
        %v3026 = vadd.f32 %v3019, %v2862
        %v3027 = vld [vmem:[#allocation29] sm:$0x1]
        %v3028 = vld [vmem:[#allocation31] sm:$0x1]
        %v3029 = vsel %vm911, %v3024, 0.0
        %3030 = vadd.xlane.f32.xlu0 %v3029
        %v3031 = vpop.xlane.xlu0 %3030
        %v3032 = vsel %vm911, %v3025, 0.0
        %3033 = vadd.xlane.f32.xlu0 %v3032
        %v3034 = vpop.xlane.xlu0 %3033
        %v3035 = vsel %vm911, %v3026, 0.0
        %3036 = vadd.xlane.f32.xlu0 %v3035
        %v3037 = vpop.xlane.xlu0 %3036
        %v3038 = vmul.f32 %v3031, %v921
        %v3039 = vmul.f32 %v3034, %v921
        %v3040 = vmul.f32 %v3037, %v921
        %v3041 = vsub.f32 %v3024, %v3038
        %v3042 = vsub.f32 %v3025, %v3039
        %v3043 = vsub.f32 %v3026, %v3040
        %v3044 = vmul.f32 %v3041, %v3041
        %v3045 = vmul.f32 %v3042, %v3042
        %v3046 = vmul.f32 %v3043, %v3043
        %v3047 = vsel %vm911, %v3044, 0.0
        %3048 = vadd.xlane.f32.xlu0 %v3047
        %v3049 = vpop.xlane.xlu0 %3048
        %v3050 = vsel %vm911, %v3045, 0.0
        %3051 = vadd.xlane.f32.xlu0 %v3050
        %v3052 = vpop.xlane.xlu0 %3051
        %v3053 = vsel %vm911, %v3046, 0.0
        %3054 = vadd.xlane.f32.xlu0 %v3053
        %v3055 = vpop.xlane.xlu0 %3054
        %v3056 = vmul.f32 %v3049, %v921
        %v3057 = vmul.f32 %v3052, %v921
        %v3058 = vmul.f32 %v3055, %v921
        %v3059 = vadd.f32 %v3056, 1e-05
        %v3060 = vadd.f32 %v3057, 1e-05
        %v3061 = vadd.f32 %v3058, 1e-05
        %v3062 = vrsqrt.pop %v3059
        %v3063 = vrsqrt.pop %v3060
        %v3064 = vrsqrt.pop %v3061
        %v3065 = vmul.f32 %v3041, %v3062
        %v3066 = vmul.f32 %v3042, %v3063
        %v3067 = vmul.f32 %v3043, %v3064
        %v3069 = vlaneseq
        %v3070 = vshrl.u32 %v3069, 7
        %v3071 = vsub.s32 0, %v3070
        %v3072 = vrot.slane %v3027, %v3071
        %v3074 = vmul.f32 %v3065, %v3072
        %v3075 = vmul.f32 %v3066, %v3072
        %v3076 = vmul.f32 %v3067, %v3072
        %v3078 = vlaneseq
        %v3079 = vshrl.u32 %v3078, 7
        %v3080 = vsub.s32 0, %v3079
        %v3081 = vrot.slane %v3028, %v3080
        %v3083 = vadd.f32 %v3074, %v3081
        %v3084 = vadd.f32 %v3075, %v3081
        %v3085 = vadd.f32 %v3076, %v3081
        %v3086 = vpack.c.bf16 %v3084, %v3083
        %v3087 = vpack.c.bf16 %v3085, %v3085
        %v3090 = vunpack.c.l.b16 %v3086
        %v3091 = vunpack.c.h.b16 %v3086
        %v3092 = vunpack.c.l.b16 %v3087
        %v3093 = vpack.c.b16 %v3090, %v3090
        %v3094 = vpack.c.b16 %v3091, %v3091
        %v3095 = vpack.c.b16 %v3092, %v3092
        %vm3099 = vcmask 257024
        %3100 = vst.msk [vmem:[%s894] sm:$0xf] %vm3099, %v3093
        %3101 = vst.msk [vmem:[%s894 + $0x4] sm:$0xf] %vm3099, %v3094
        %3102 = vst.msk [vmem:[%s894 + $0x8] sm:$0xf] %vm3099, %v3095
        %s3103 = sand.u32 %s462, 1
        %s3104 = scalar_lea.sflag [#allocation4], %s3103
        %s3105 = sand.u32 %s462, 1
        %s3106 = smul.addr %s3105, 12
        %s3107 = scalar_lea.vmem [#allocation32], %s3106
        %s3108 = sand.u32 %s488, 1
        %s3109 = scalar_lea.sflag [#allocation34], %s3108
        %s3110 = sand.u32 %s488, 1
        %s3111 = smul.addr %s3110, 12
        %s3112 = scalar_lea.vmem [#allocation33], %s3111
        // Predicated region
        $region173: #{ctran_forward.5} parent=95 // pred_check
          %p3113 = pneg %p472
        $region174: #{ctran_forward.5} parent=95 // pred_check_branch
          %3115 = sbr.rel (%p3113) target = $region176
        $region175: #{ctran_forward.5} parent=95 // pred_region
          %s3117 = ssub.s32 192, 192
          %3118 = vsyncadd %s3104, %s3117
          %s3119 = smul.addr %s50, 3
          %s3120 = smul.addr %s3119, 64
          %s3121 = scalar_lea.hbm %s19, %s3120
          %s3122 = sshll.u32 %s3107, 4
          %s3123 = int_to_ptr.vmem [resolvable:$true] %s3122
          %3128 = dma.vmem_to_hbm [thread:$0]  %s3123, 192, %s3121, %s3104, 64, 64, 4
        $region176: #{ctran_forward.5} parent=95 // pred_fallthru
          _
        // Predicated region
        $region177: #{ctran_forward.5} parent=95 // pred_check
          %p3129 = pneg %p498
        $region178: #{ctran_forward.5} parent=95 // pred_check_branch
          %3131 = sbr.rel (%p3129) target = $region180
        $region179: #{ctran_forward.5} parent=95 // pred_region
          %s3133 = ssub.s32 192, 192
          %3134 = vsyncadd %s3109, %s3133
          %s3135 = smul.addr %s50, 3
          %s3136 = smul.addr %s3135, 64
          %s3137 = scalar_lea.hbm %s20, %s3136
          %s3138 = sshll.u32 %s3112, 4
          %s3139 = int_to_ptr.vmem [resolvable:$true] %s3138
          %3144 = dma.vmem_to_hbm [thread:$0]  %s3139, 192, %s3137, %s3109, 64, 64, 4
        $region180: #{ctran_forward.5} parent=95 // pred_fallthru
          _
      $region96: #{ctran_forward.5} parent=5 // pred_fallthru
        _
      %p3145 = scmp.le.s32.totalorder 2, %s45
      // Predicated region
      $region181: #{ctran_forward.5} parent=5 // pred_check
        %p3146 = pneg %p3145
      $region182: #{ctran_forward.5} parent=5 // pred_check_branch
        %3148 = sbr.rel (%p3146) target = $region184
      $region183: #{ctran_forward.5} parent=5 // pred_region
        %s3149 = ssub.s32 %s45, 2
        // Predicated region
        $region185: #{ctran_forward.5} parent=183 // pred_check
          %p3150 = pneg %p478
        $region186: #{ctran_forward.5} parent=183 // pred_check_branch
          %3152 = sbr.rel (%p3150) target = $region188
        $region187: #{ctran_forward.5} parent=183 // pred_region
          %s3153 = sand.u32 %s463, 1
          %s3154 = scalar_lea.sflag [#allocation4], %s3153
          %s3155 = sand.u32 %s463, 1
          %s3156 = smul.addr %s3155, 12
          %s3157 = scalar_lea.vmem [#allocation32], %s3156
          %3158 = dma.done %s3154, 192
        $region188: #{ctran_forward.5} parent=183 // pred_fallthru
          _
        // Predicated region
        $region189: #{ctran_forward.5} parent=183 // pred_check
          %p3159 = pneg %p504
        $region190: #{ctran_forward.5} parent=183 // pred_check_branch
          %3161 = sbr.rel (%p3159) target = $region192
        $region191: #{ctran_forward.5} parent=183 // pred_region
          %s3162 = sand.u32 %s489, 1
          %s3163 = scalar_lea.sflag [#allocation34], %s3162
          %s3164 = sand.u32 %s489, 1
          %s3165 = smul.addr %s3164, 12
          %s3166 = scalar_lea.vmem [#allocation33], %s3165
          %3167 = dma.done %s3163, 192
        $region192: #{ctran_forward.5} parent=183 // pred_fallthru
          _
      $region184: #{ctran_forward.5} parent=5 // pred_fallthru
        _
    $region6: #{ctran_forward.5} parent=1 // loop_footer
      %s49 = sadd.s32 1, %s45
    $region7: #{ctran_forward.5} parent=1 // loop_footer_branch
      %44 = sbr.rel target = $region3
    $region8: #{ctran_forward.5} parent=1 // loop_exit
      _
    %3168 = vsyncpa [#allocation3], 1
    %s3169 = scalar_lea.sflag [#allocation3], 1
    %3170 = vsyncpa %s3169, 1
    %3171 = vsyncpa [#allocation6], 1
    %3172 = vsyncpa [#allocation9], 1
    %3173 = vsyncpa [#allocation12], 1
    %3174 = vsyncpa [#allocation15], 1
    %3175 = vsyncpa [#allocation18], 1
    %3176 = vsyncpa [#allocation21], 1
    %3177 = vsyncpa [#allocation24], 1
    %3178 = vsyncpa [#allocation27], 1
    %3179 = vsyncpa [#allocation30], 1
    %3180 = vsyncpa [#allocation4], 1
    %s3181 = scalar_lea.sflag [#allocation4], 1
    %3182 = vsyncpa %s3181, 1
    %3183 = vsyncpa [#allocation34], 1
    %s3184 = scalar_lea.sflag [#allocation34], 1
    %3185 = vsyncpa %s3184, 1

</llo_original>
